<compile_context>
chip_gen: v7x
topology: tpu7x:2x2x1
jax: 0.10.0
libtpu: 0.0.40
codegen_flags: <defaults>
</compile_context>

<pallas_src>
import functools

import jax
import jax.numpy as jnp
from jax.experimental import pallas as pl
from jax.experimental.pallas import tpu as pltpu


# ----------------------------------------------------------------------------
# small integer helpers (power-of-two divisors only -> shifts/masks, which are
# guaranteed to lower in Mosaic; all spatial sizes in this net are powers of 2)
# ----------------------------------------------------------------------------
def _div_p2(x, d):
    assert d > 0 and (d & (d - 1)) == 0, "power-of-two divisor expected"
    return x >> (d.bit_length() - 1)


def _mod_p2(x, d):
    assert d > 0 and (d & (d - 1)) == 0, "power-of-two divisor expected"
    return x & (d - 1)


# ----------------------------------------------------------------------------
# one conv / transposed-conv layer, fully inside the kernel
# ----------------------------------------------------------------------------
def _conv_layer(a, w_ref, b_ref, *, mode, stride, pad, H, W, OH, OW, act):
    """a: (IC, H*W) f32 value.  w_ref: (9, OC, IC) VMEM ref (tap t = 3*dy+dx).
    b_ref: (OC, 1) VMEM ref.  Returns (OC, OH*OW) f32 value."""
    OC = w_ref.shape[1]
    m_in, m_out = H * W, OH * OW

    # flat output-pixel index -> (oy, ox); shared across the 9 taps
    col = jax.lax.broadcasted_iota(jnp.int32, (1, m_out), 1)
    oy = _div_p2(col, OW)
    ox = _mod_p2(col, OW)
    # flat input-pixel index, broadcast down the rows of each gather matrix
    row = jax.lax.broadcasted_iota(jnp.int32, (m_in, m_out), 0)

    acc = jnp.zeros((OC, m_out), dtype=jnp.float32)
    for di in range(3):
        for dj in range(3):
            if mode == "conv":
                # out[oy] reads in[s*oy + di - p]
                iy = stride * oy + (di - pad)
                ix = stride * ox + (dj - pad)
                valid = (iy >= 0) & (iy < H) & (ix >= 0) & (ix < W)
            else:
                # transposed conv: out[oy] += w[di] * in[iy] where oy = s*iy + di - p
                # -> iy = (oy + p - di)/s when divisible; +stride keeps numerator >= 0
                ny = oy + (pad - di) + stride
                nx = ox + (pad - dj) + stride
                iy = _div_p2(ny, stride) - 1
                ix = _div_p2(nx, stride) - 1
                valid = ((_mod_p2(ny, stride) == 0) & (iy >= 0) & (iy < H) &
                         (_mod_p2(nx, stride) == 0) & (ix >= 0) & (ix < W))

            tgt = jnp.where(valid, iy * W + ix, -1)              # (1, m_out)
            gather = jnp.where(row == tgt, 1.0, 0.0)             # (m_in, m_out) 0/1
            patch = jnp.dot(a, gather,
                            preferred_element_type=jnp.float32)  # (IC, m_out)
            w_t = w_ref[di * 3 + dj]                             # (OC, IC)
            acc = acc + jnp.dot(w_t, patch,
                                preferred_element_type=jnp.float32)

    acc = acc + b_ref[...]                                       # (OC,1) lane-broadcast

    if act == "relu":
        return jnp.maximum(acc, 0.0)
    # numerically-stable sigmoid; exp and reciprocal both land on the EUP.
    z = jnp.exp(-jnp.abs(acc))                                   # in (0, 1]
    r = pl.reciprocal(1.0 + z, approx=True)
    sig = jnp.where(acc >= 0, r, z * r)
    return jnp.clip(sig, 0.0, 1.0)                               # guard approx-rcp ulps


def _autoencoder_kernel(x_ref, w1_ref, b1_ref, w2_ref, b2_ref,
                        w3_ref, b3_ref, w4_ref, b4_ref, o_ref, *, layers):
    a = x_ref[0, :, :]                                           # (3, H*W), one sample
    w_refs = (w1_ref, w2_ref, w3_ref, w4_ref)
    b_refs = (b1_ref, b2_ref, b3_ref, b4_ref)
    for cfg, w_ref, b_ref in zip(layers, w_refs, b_refs):
        a = _conv_layer(a, w_ref, b_ref, **cfg)
    o_ref[0, :, :] = a                                           # (3, OH*OW) lane-dense


# ----------------------------------------------------------------------------
# host-side wrappers
# ----------------------------------------------------------------------------
def pack_params(params):
    """One-time re-layout of PyTorch-shaped params into the kernel layout."""
    def conv_w(w):      # (OC, IC, 3, 3) -> (9, OC, IC), tap t = 3*ky + kx
        assert w.shape[2] == 3 and w.shape[3] == 3
        return jnp.transpose(w, (2, 3, 0, 1)).reshape(9, w.shape[0], w.shape[1])

    def deconv_w(w):    # (IC, OC, 3, 3) -> (9, OC, IC); no spatial flip needed
        assert w.shape[2] == 3 and w.shape[3] == 3
        return jnp.transpose(w, (2, 3, 1, 0)).reshape(9, w.shape[1], w.shape[0])

    return {
        "w1": conv_w(params["enc1_w"]),   "b1": params["enc1_b"].reshape(-1, 1),
        "w2": conv_w(params["enc2_w"]),   "b2": params["enc2_b"].reshape(-1, 1),
        "w3": deconv_w(params["dec1_w"]), "b3": params["dec1_b"].reshape(-1, 1),
        "w4": deconv_w(params["dec2_w"]), "b4": params["dec2_b"].reshape(-1, 1),
    }


def fast_conv_autoencoder(packed, x):
    """x: (N, 3, H, W) f32 -> (N, 3, H, W) f32 (same semantics as the PyTorch module)."""
    n, c, H, W = x.shape
    assert c == 3

    # static layer geometry
    oh1, ow1 = (H + 2 - 3) // 2 + 1, (W + 2 - 3) // 2 + 1
    oh2, ow2 = (oh1 + 2 - 3) // 2 + 1, (ow1 + 2 - 3) // 2 + 1
    oh3, ow3 = (oh2 - 1) * 2 - 2 + 3 + 1, (ow2 - 1) * 2 - 2 + 3 + 1
    oh4, ow4 = (oh3 - 1) * 2 - 2 + 3 + 1, (ow3 - 1) * 2 - 2 + 3 + 1
    layers = (
        dict(mode="conv",   stride=2, pad=1, H=H,   W=W,   OH=oh1, OW=ow1, act="relu"),
        dict(mode="conv",   stride=2, pad=1, H=oh1, W=ow1, OH=oh2, OW=ow2, act="relu"),
        dict(mode="deconv", stride=2, pad=1, H=oh2, W=ow2, OH=oh3, OW=ow3, act="relu"),
        dict(mode="deconv", stride=2, pad=1, H=oh3, W=ow3, OH=oh4, OW=ow4, act="sigmoid"),
    )

    m_in, m_out = H * W, oh4 * ow4
    x2 = x.reshape(n, c, m_in)          # free reshape: NCHW -> (N, C, H*W)

    def _const_spec(arr):
        zeros = (0,) * arr.ndim
        return pl.BlockSpec(arr.shape, lambda i, zeros=zeros: zeros)

    wb_keys = ("w1", "b1", "w2", "b2", "w3", "b3", "w4", "b4")
    in_specs = [pl.BlockSpec((1, c, m_in), lambda i: (i, 0, 0))]
    in_specs += [_const_spec(packed[k]) for k in wb_keys]
    out_specs = pl.BlockSpec((1, c, m_out), lambda i: (i, 0, 0))

    # advisory cost estimate for XLA's scheduler
    flops = 0
    for wk, cfg in zip(("w1", "w2", "w3", "w4"), layers):
        oc, ic = packed[wk].shape[1], packed[wk].shape[2]
        mi, mo = cfg["H"] * cfg["W"], cfg["OH"] * cfg["OW"]
        flops += n * 9 * 2 * (ic * mi * mo + oc * ic * mo)
    bytes_accessed = 4 * (x2.size + n * c * m_out
                          + sum(int(v.size) for v in packed.values()))
    cost = pl.CostEstimate(flops=flops, transcendentals=n * c * m_out,
                           bytes_accessed=bytes_accessed)

    kernel = functools.partial(_autoencoder_kernel, layers=layers)
    out = pl.pallas_call(
        kernel,
        out_shape=jax.ShapeDtypeStruct((n, c, m_out), jnp.float32),
        grid=(n,),
        in_specs=in_specs,
        out_specs=out_specs,
        compiler_params=pltpu.CompilerParams(
            dimension_semantics=("parallel",)),   # batch split across TCs on v7x
        cost_estimate=cost,
    )(x2, *[packed[k] for k in wb_keys])
    return out.reshape(n, c, oh4, ow4)


# ----------------------------------------------------------------------------
# parameter init (deterministic, PyTorch-default-style uniform bounds)
# ----------------------------------------------------------------------------
def init_params(key):
    def u(k, shape, fan_in):
        bound = 1.0 / jnp.sqrt(jnp.float32(fan_in))
        return jax.random.uniform(k, shape, jnp.float32, -bound, bound)

    ks = jax.random.split(key, 8)
    return {
        # encoder: Conv2d(3->8, k3 s2 p1), Conv2d(8->16, k3 s2 p1)
        "enc1_w": u(ks[0], (8, 3, 3, 3), 3 * 9),
        "enc1_b": u(ks[1], (8,), 3 * 9),
        "enc2_w": u(ks[2], (16, 8, 3, 3), 8 * 9),
        "enc2_b": u(ks[3], (16,), 8 * 9),
        # decoder: ConvTranspose2d(16->8, k3 s2 p1 op1), ConvTranspose2d(8->3, ...)
        "dec1_w": u(ks[4], (16, 8, 3, 3), 8 * 9),
        "dec1_b": u(ks[5], (8,), 8 * 9),
        "dec2_w": u(ks[6], (8, 3, 3, 3), 3 * 9),
        "dec2_b": u(ks[7], (3,), 3 * 9),
    }


# ----------------------------------------------------------------------------
# pure-XLA reference (PyTorch semantics) for in-script validation
# ----------------------------------------------------------------------------
def _reference_forward(params, x):
    dn = ("NCHW", "OIHW", "NCHW")

    def conv(h, w, b, stride, pad):
        y = jax.lax.conv_general_dilated(
            h, w, window_strides=(stride, stride),
            padding=[(pad, pad), (pad, pad)], dimension_numbers=dn)
        return y + b.reshape(1, -1, 1, 1)

    def deconv(h, w, b, stride, pad, out_pad):
        k = w.shape[2]
        w_conv = jnp.flip(w, axis=(2, 3)).transpose(1, 0, 2, 3)
        lo, hi = k - 1 - pad, k - 1 - pad + out_pad
        y = jax.lax.conv_general_dilated(
            h, w_conv, window_strides=(1, 1),
            padding=[(lo, hi), (lo, hi)], lhs_dilation=(stride, stride),
            dimension_numbers=dn)
        return y + b.reshape(1, -1, 1, 1)

    h = jax.nn.relu(conv(x, params["enc1_w"], params["enc1_b"], 2, 1))
    h = jax.nn.relu(conv(h, params["enc2_w"], params["enc2_b"], 2, 1))
    h = jax.nn.relu(deconv(h, params["dec1_w"], params["dec1_b"], 2, 1, 1))
    h = jax.nn.sigmoid(deconv(h, params["dec2_w"], params["dec2_b"], 2, 1, 1))
    return h


if __name__ == "__main__":
    key = jax.random.PRNGKey(0)
    pkey, xkey = jax.random.split(key)
    params = init_params(pkey)
    x = jax.random.uniform(xkey, (2, 3, 16, 16), jnp.float32)  # NCHW, like PyTorch

    packed = pack_params(params)           # one-time weight re-layout (hoisted)
    fwd = jax.jit(fast_conv_autoencoder)
    y = jax.block_until_ready(fwd(packed, x))

    assert y.shape == (2, 3, 16, 16), y.shape
    assert y.dtype == jnp.float32
    assert bool(jnp.all(jnp.isfinite(y)))
    assert bool(jnp.all((y >= 0.0) & (y <= 1.0)))  # sigmoid output range

    y_ref = _reference_forward(params, x)
    err = float(jnp.max(jnp.abs(y - y_ref)))
    assert err < 5e-3, f"mismatch vs XLA reference: {err}"
    print("KERNEL_OK")
</pallas_src>

<mosaic_0001>
module attributes {stable_mosaic.version = 11 : i64} {
  func.func @_autoencoder_kernel(%arg0: i32, %arg1: memref<1x3x256xf32, #tpu.memory_space<vmem>>, %arg2: memref<9x8x3xf32, #tpu.memory_space<vmem>>, %arg3: memref<8x1xf32, #tpu.memory_space<vmem>>, %arg4: memref<9x16x8xf32, #tpu.memory_space<vmem>>, %arg5: memref<16x1xf32, #tpu.memory_space<vmem>>, %arg6: memref<9x8x16xf32, #tpu.memory_space<vmem>>, %arg7: memref<8x1xf32, #tpu.memory_space<vmem>>, %arg8: memref<9x3x8xf32, #tpu.memory_space<vmem>>, %arg9: memref<3x1xf32, #tpu.memory_space<vmem>>, %arg10: memref<1x3x256xf32, #tpu.memory_space<vmem>>) attributes {dimension_semantics = [#tpu.dimension_semantics<parallel>], iteration_bounds = array<i64: 2>, scalar_prefetch = 0 : i64, scratch_operands = 0 : i64, tpu.core_type = #tpu.core_type<tc>, window_params = [{transform_indices = @transform_0, window_bounds = array<i64: 1, 3, 256>}, {pipeline_mode = #tpu.pipeline_mode<synchronous>, transform_indices = @transform_1, window_bounds = array<i64: 9, 8, 3>}, {pipeline_mode = #tpu.pipeline_mode<synchronous>, transform_indices = @transform_2, window_bounds = array<i64: 8, 1>}, {pipeline_mode = #tpu.pipeline_mode<synchronous>, transform_indices = @transform_3, window_bounds = array<i64: 9, 16, 8>}, {pipeline_mode = #tpu.pipeline_mode<synchronous>, transform_indices = @transform_4, window_bounds = array<i64: 16, 1>}, {pipeline_mode = #tpu.pipeline_mode<synchronous>, transform_indices = @transform_5, window_bounds = array<i64: 9, 8, 16>}, {pipeline_mode = #tpu.pipeline_mode<synchronous>, transform_indices = @transform_6, window_bounds = array<i64: 8, 1>}, {pipeline_mode = #tpu.pipeline_mode<synchronous>, transform_indices = @transform_7, window_bounds = array<i64: 9, 3, 8>}, {pipeline_mode = #tpu.pipeline_mode<synchronous>, transform_indices = @transform_8, window_bounds = array<i64: 3, 1>}, {transform_indices = @transform_9, window_bounds = array<i64: 1, 3, 256>}]} {
    %c0 = arith.constant 0 : index
    %c0_0 = arith.constant 0 : index
    %c0_1 = arith.constant 0 : index
    %0 = vector.load %arg1[%c0, %c0_0, %c0_1] : memref<1x3x256xf32, #tpu.memory_space<vmem>>, vector<1x3x256xf32>
    %1 = vector.shape_cast %0 : vector<1x3x256xf32> to vector<3x256xf32>
    %2 = tpu.iota {dimensions = array<i32: 1>} : vector<1x64xi32>
    %c3_i32 = arith.constant 3 : i32
    %3 = vector.broadcast %c3_i32 : i32 to vector<1x64xi32>
    %4 = arith.shrsi %2, %3 : vector<1x64xi32>
    %c7_i32 = arith.constant 7 : i32
    %5 = vector.broadcast %c7_i32 : i32 to vector<1x64xi32>
    %6 = arith.andi %2, %5 : vector<1x64xi32>
    %7 = tpu.iota {dimensions = array<i32: 0>} : vector<256x64xi32>
    %cst = arith.constant 0.000000e+00 : f32
    %8 = vector.broadcast %cst : f32 to vector<8x64xf32>
    %c2_i32 = arith.constant 2 : i32
    %9 = vector.broadcast %c2_i32 : i32 to vector<1x64xi32>
    %10 = arith.muli %9, %4 : vector<1x64xi32>
    %c-1_i32 = arith.constant -1 : i32
    %11 = vector.broadcast %c-1_i32 : i32 to vector<1x64xi32>
    %12 = arith.addi %10, %11 : vector<1x64xi32>
    %c2_i32_2 = arith.constant 2 : i32
    %13 = vector.broadcast %c2_i32_2 : i32 to vector<1x64xi32>
    %14 = arith.muli %13, %6 : vector<1x64xi32>
    %c-1_i32_3 = arith.constant -1 : i32
    %15 = vector.broadcast %c-1_i32_3 : i32 to vector<1x64xi32>
    %16 = arith.addi %14, %15 : vector<1x64xi32>
    %c0_i32 = arith.constant 0 : i32
    %17 = vector.broadcast %c0_i32 : i32 to vector<1x64xi32>
    %18 = arith.cmpi sge, %12, %17 : vector<1x64xi32>
    %c16_i32 = arith.constant 16 : i32
    %19 = vector.broadcast %c16_i32 : i32 to vector<1x64xi32>
    %20 = arith.cmpi slt, %12, %19 : vector<1x64xi32>
    %21 = arith.andi %18, %20 : vector<1x64xi1>
    %c0_i32_4 = arith.constant 0 : i32
    %22 = vector.broadcast %c0_i32_4 : i32 to vector<1x64xi32>
    %23 = arith.cmpi sge, %16, %22 : vector<1x64xi32>
    %24 = arith.andi %21, %23 : vector<1x64xi1>
    %c16_i32_5 = arith.constant 16 : i32
    %25 = vector.broadcast %c16_i32_5 : i32 to vector<1x64xi32>
    %26 = arith.cmpi slt, %16, %25 : vector<1x64xi32>
    %27 = arith.andi %24, %26 : vector<1x64xi1>
    %c16_i32_6 = arith.constant 16 : i32
    %28 = vector.broadcast %c16_i32_6 : i32 to vector<1x64xi32>
    %29 = arith.muli %12, %28 : vector<1x64xi32>
    %30 = arith.addi %29, %16 : vector<1x64xi32>
    %c-1_i32_7 = arith.constant -1 : i32
    %31 = vector.broadcast %c-1_i32_7 : i32 to vector<1x64xi32>
    %32 = arith.select %27, %30, %31 : vector<1x64xi1>, vector<1x64xi32>
    %33 = vector.broadcast %32 : vector<1x64xi32> to vector<256x64xi32>
    %34 = arith.cmpi eq, %7, %33 : vector<256x64xi32>
    %cst_8 = arith.constant 1.000000e+00 : f32
    %cst_9 = arith.constant 0.000000e+00 : f32
    %35 = vector.broadcast %cst_8 : f32 to vector<256x64xf32>
    %36 = vector.broadcast %cst_9 : f32 to vector<256x64xf32>
    %37 = arith.select %34, %35, %36 : vector<256x64xi1>, vector<256x64xf32>
    %cst_10 = arith.constant dense<0.000000e+00> : vector<3x64xf32>
    %38 = tpu.matmul %1, %37, %cst_10 {dimension_numbers = #tpu.dot_dimension_numbers<[1], [0], [0], [1], [0, 0, 1, 1], [], []>} : vector<3x256xf32>, vector<256x64xf32>, vector<3x64xf32> -> vector<3x64xf32>
    %c0_11 = arith.constant 0 : index
    %c0_12 = arith.constant 0 : index
    %c0_13 = arith.constant 0 : index
    %39 = vector.load %arg2[%c0_11, %c0_12, %c0_13] : memref<9x8x3xf32, #tpu.memory_space<vmem>>, vector<1x8x3xf32>
    %40 = vector.shape_cast %39 : vector<1x8x3xf32> to vector<8x3xf32>
    %cst_14 = arith.constant dense<0.000000e+00> : vector<8x64xf32>
    %41 = tpu.matmul %40, %38, %cst_14 {dimension_numbers = #tpu.dot_dimension_numbers<[1], [0], [0], [1], [0, 0, 1, 1], [], []>} : vector<8x3xf32>, vector<3x64xf32>, vector<8x64xf32> -> vector<8x64xf32>
    %42 = arith.addf %8, %41 : vector<8x64xf32>
    %c2_i32_15 = arith.constant 2 : i32
    %43 = vector.broadcast %c2_i32_15 : i32 to vector<1x64xi32>
    %44 = arith.muli %43, %4 : vector<1x64xi32>
    %c-1_i32_16 = arith.constant -1 : i32
    %45 = vector.broadcast %c-1_i32_16 : i32 to vector<1x64xi32>
    %46 = arith.addi %44, %45 : vector<1x64xi32>
    %c2_i32_17 = arith.constant 2 : i32
    %47 = vector.broadcast %c2_i32_17 : i32 to vector<1x64xi32>
    %48 = arith.muli %47, %6 : vector<1x64xi32>
    %c0_i32_18 = arith.constant 0 : i32
    %49 = vector.broadcast %c0_i32_18 : i32 to vector<1x64xi32>
    %50 = arith.addi %48, %49 : vector<1x64xi32>
    %c0_i32_19 = arith.constant 0 : i32
    %51 = vector.broadcast %c0_i32_19 : i32 to vector<1x64xi32>
    %52 = arith.cmpi sge, %46, %51 : vector<1x64xi32>
    %c16_i32_20 = arith.constant 16 : i32
    %53 = vector.broadcast %c16_i32_20 : i32 to vector<1x64xi32>
    %54 = arith.cmpi slt, %46, %53 : vector<1x64xi32>
    %55 = arith.andi %52, %54 : vector<1x64xi1>
    %c0_i32_21 = arith.constant 0 : i32
    %56 = vector.broadcast %c0_i32_21 : i32 to vector<1x64xi32>
    %57 = arith.cmpi sge, %50, %56 : vector<1x64xi32>
    %58 = arith.andi %55, %57 : vector<1x64xi1>
    %c16_i32_22 = arith.constant 16 : i32
    %59 = vector.broadcast %c16_i32_22 : i32 to vector<1x64xi32>
    %60 = arith.cmpi slt, %50, %59 : vector<1x64xi32>
    %61 = arith.andi %58, %60 : vector<1x64xi1>
    %c16_i32_23 = arith.constant 16 : i32
    %62 = vector.broadcast %c16_i32_23 : i32 to vector<1x64xi32>
    %63 = arith.muli %46, %62 : vector<1x64xi32>
    %64 = arith.addi %63, %50 : vector<1x64xi32>
    %c-1_i32_24 = arith.constant -1 : i32
    %65 = vector.broadcast %c-1_i32_24 : i32 to vector<1x64xi32>
    %66 = arith.select %61, %64, %65 : vector<1x64xi1>, vector<1x64xi32>
    %67 = vector.broadcast %66 : vector<1x64xi32> to vector<256x64xi32>
    %68 = arith.cmpi eq, %7, %67 : vector<256x64xi32>
    %cst_25 = arith.constant 1.000000e+00 : f32
    %cst_26 = arith.constant 0.000000e+00 : f32
    %69 = vector.broadcast %cst_25 : f32 to vector<256x64xf32>
    %70 = vector.broadcast %cst_26 : f32 to vector<256x64xf32>
    %71 = arith.select %68, %69, %70 : vector<256x64xi1>, vector<256x64xf32>
    %cst_27 = arith.constant dense<0.000000e+00> : vector<3x64xf32>
    %72 = tpu.matmul %1, %71, %cst_27 {dimension_numbers = #tpu.dot_dimension_numbers<[1], [0], [0], [1], [0, 0, 1, 1], [], []>} : vector<3x256xf32>, vector<256x64xf32>, vector<3x64xf32> -> vector<3x64xf32>
    %c1 = arith.constant 1 : index
    %c0_28 = arith.constant 0 : index
    %c0_29 = arith.constant 0 : index
    %73 = vector.load %arg2[%c1, %c0_28, %c0_29] : memref<9x8x3xf32, #tpu.memory_space<vmem>>, vector<1x8x3xf32>
    %74 = vector.shape_cast %73 : vector<1x8x3xf32> to vector<8x3xf32>
    %cst_30 = arith.constant dense<0.000000e+00> : vector<8x64xf32>
    %75 = tpu.matmul %74, %72, %cst_30 {dimension_numbers = #tpu.dot_dimension_numbers<[1], [0], [0], [1], [0, 0, 1, 1], [], []>} : vector<8x3xf32>, vector<3x64xf32>, vector<8x64xf32> -> vector<8x64xf32>
    %76 = arith.addf %42, %75 : vector<8x64xf32>
    %c2_i32_31 = arith.constant 2 : i32
    %77 = vector.broadcast %c2_i32_31 : i32 to vector<1x64xi32>
    %78 = arith.muli %77, %4 : vector<1x64xi32>
    %c-1_i32_32 = arith.constant -1 : i32
    %79 = vector.broadcast %c-1_i32_32 : i32 to vector<1x64xi32>
    %80 = arith.addi %78, %79 : vector<1x64xi32>
    %c2_i32_33 = arith.constant 2 : i32
    %81 = vector.broadcast %c2_i32_33 : i32 to vector<1x64xi32>
    %82 = arith.muli %81, %6 : vector<1x64xi32>
    %c1_i32 = arith.constant 1 : i32
    %83 = vector.broadcast %c1_i32 : i32 to vector<1x64xi32>
    %84 = arith.addi %82, %83 : vector<1x64xi32>
    %c0_i32_34 = arith.constant 0 : i32
    %85 = vector.broadcast %c0_i32_34 : i32 to vector<1x64xi32>
    %86 = arith.cmpi sge, %80, %85 : vector<1x64xi32>
    %c16_i32_35 = arith.constant 16 : i32
    %87 = vector.broadcast %c16_i32_35 : i32 to vector<1x64xi32>
    %88 = arith.cmpi slt, %80, %87 : vector<1x64xi32>
    %89 = arith.andi %86, %88 : vector<1x64xi1>
    %c0_i32_36 = arith.constant 0 : i32
    %90 = vector.broadcast %c0_i32_36 : i32 to vector<1x64xi32>
    %91 = arith.cmpi sge, %84, %90 : vector<1x64xi32>
    %92 = arith.andi %89, %91 : vector<1x64xi1>
    %c16_i32_37 = arith.constant 16 : i32
    %93 = vector.broadcast %c16_i32_37 : i32 to vector<1x64xi32>
    %94 = arith.cmpi slt, %84, %93 : vector<1x64xi32>
    %95 = arith.andi %92, %94 : vector<1x64xi1>
    %c16_i32_38 = arith.constant 16 : i32
    %96 = vector.broadcast %c16_i32_38 : i32 to vector<1x64xi32>
    %97 = arith.muli %80, %96 : vector<1x64xi32>
    %98 = arith.addi %97, %84 : vector<1x64xi32>
    %c-1_i32_39 = arith.constant -1 : i32
    %99 = vector.broadcast %c-1_i32_39 : i32 to vector<1x64xi32>
    %100 = arith.select %95, %98, %99 : vector<1x64xi1>, vector<1x64xi32>
    %101 = vector.broadcast %100 : vector<1x64xi32> to vector<256x64xi32>
    %102 = arith.cmpi eq, %7, %101 : vector<256x64xi32>
    %cst_40 = arith.constant 1.000000e+00 : f32
    %cst_41 = arith.constant 0.000000e+00 : f32
    %103 = vector.broadcast %cst_40 : f32 to vector<256x64xf32>
    %104 = vector.broadcast %cst_41 : f32 to vector<256x64xf32>
    %105 = arith.select %102, %103, %104 : vector<256x64xi1>, vector<256x64xf32>
    %cst_42 = arith.constant dense<0.000000e+00> : vector<3x64xf32>
    %106 = tpu.matmul %1, %105, %cst_42 {dimension_numbers = #tpu.dot_dimension_numbers<[1], [0], [0], [1], [0, 0, 1, 1], [], []>} : vector<3x256xf32>, vector<256x64xf32>, vector<3x64xf32> -> vector<3x64xf32>
    %c2 = arith.constant 2 : index
    %c0_43 = arith.constant 0 : index
    %c0_44 = arith.constant 0 : index
    %107 = vector.load %arg2[%c2, %c0_43, %c0_44] : memref<9x8x3xf32, #tpu.memory_space<vmem>>, vector<1x8x3xf32>
    %108 = vector.shape_cast %107 : vector<1x8x3xf32> to vector<8x3xf32>
    %cst_45 = arith.constant dense<0.000000e+00> : vector<8x64xf32>
    %109 = tpu.matmul %108, %106, %cst_45 {dimension_numbers = #tpu.dot_dimension_numbers<[1], [0], [0], [1], [0, 0, 1, 1], [], []>} : vector<8x3xf32>, vector<3x64xf32>, vector<8x64xf32> -> vector<8x64xf32>
    %110 = arith.addf %76, %109 : vector<8x64xf32>
    %c2_i32_46 = arith.constant 2 : i32
    %111 = vector.broadcast %c2_i32_46 : i32 to vector<1x64xi32>
    %112 = arith.muli %111, %4 : vector<1x64xi32>
    %c0_i32_47 = arith.constant 0 : i32
    %113 = vector.broadcast %c0_i32_47 : i32 to vector<1x64xi32>
    %114 = arith.addi %112, %113 : vector<1x64xi32>
    %c2_i32_48 = arith.constant 2 : i32
    %115 = vector.broadcast %c2_i32_48 : i32 to vector<1x64xi32>
    %116 = arith.muli %115, %6 : vector<1x64xi32>
    %c-1_i32_49 = arith.constant -1 : i32
    %117 = vector.broadcast %c-1_i32_49 : i32 to vector<1x64xi32>
    %118 = arith.addi %116, %117 : vector<1x64xi32>
    %c0_i32_50 = arith.constant 0 : i32
    %119 = vector.broadcast %c0_i32_50 : i32 to vector<1x64xi32>
    %120 = arith.cmpi sge, %114, %119 : vector<1x64xi32>
    %c16_i32_51 = arith.constant 16 : i32
    %121 = vector.broadcast %c16_i32_51 : i32 to vector<1x64xi32>
    %122 = arith.cmpi slt, %114, %121 : vector<1x64xi32>
    %123 = arith.andi %120, %122 : vector<1x64xi1>
    %c0_i32_52 = arith.constant 0 : i32
    %124 = vector.broadcast %c0_i32_52 : i32 to vector<1x64xi32>
    %125 = arith.cmpi sge, %118, %124 : vector<1x64xi32>
    %126 = arith.andi %123, %125 : vector<1x64xi1>
    %c16_i32_53 = arith.constant 16 : i32
    %127 = vector.broadcast %c16_i32_53 : i32 to vector<1x64xi32>
    %128 = arith.cmpi slt, %118, %127 : vector<1x64xi32>
    %129 = arith.andi %126, %128 : vector<1x64xi1>
    %c16_i32_54 = arith.constant 16 : i32
    %130 = vector.broadcast %c16_i32_54 : i32 to vector<1x64xi32>
    %131 = arith.muli %114, %130 : vector<1x64xi32>
    %132 = arith.addi %131, %118 : vector<1x64xi32>
    %c-1_i32_55 = arith.constant -1 : i32
    %133 = vector.broadcast %c-1_i32_55 : i32 to vector<1x64xi32>
    %134 = arith.select %129, %132, %133 : vector<1x64xi1>, vector<1x64xi32>
    %135 = vector.broadcast %134 : vector<1x64xi32> to vector<256x64xi32>
    %136 = arith.cmpi eq, %7, %135 : vector<256x64xi32>
    %cst_56 = arith.constant 1.000000e+00 : f32
    %cst_57 = arith.constant 0.000000e+00 : f32
    %137 = vector.broadcast %cst_56 : f32 to vector<256x64xf32>
    %138 = vector.broadcast %cst_57 : f32 to vector<256x64xf32>
    %139 = arith.select %136, %137, %138 : vector<256x64xi1>, vector<256x64xf32>
    %cst_58 = arith.constant dense<0.000000e+00> : vector<3x64xf32>
    %140 = tpu.matmul %1, %139, %cst_58 {dimension_numbers = #tpu.dot_dimension_numbers<[1], [0], [0], [1], [0, 0, 1, 1], [], []>} : vector<3x256xf32>, vector<256x64xf32>, vector<3x64xf32> -> vector<3x64xf32>
    %c3 = arith.constant 3 : index
    %c0_59 = arith.constant 0 : index
    %c0_60 = arith.constant 0 : index
    %141 = vector.load %arg2[%c3, %c0_59, %c0_60] : memref<9x8x3xf32, #tpu.memory_space<vmem>>, vector<1x8x3xf32>
    %142 = vector.shape_cast %141 : vector<1x8x3xf32> to vector<8x3xf32>
    %cst_61 = arith.constant dense<0.000000e+00> : vector<8x64xf32>
    %143 = tpu.matmul %142, %140, %cst_61 {dimension_numbers = #tpu.dot_dimension_numbers<[1], [0], [0], [1], [0, 0, 1, 1], [], []>} : vector<8x3xf32>, vector<3x64xf32>, vector<8x64xf32> -> vector<8x64xf32>
    %144 = arith.addf %110, %143 : vector<8x64xf32>
    %c2_i32_62 = arith.constant 2 : i32
    %145 = vector.broadcast %c2_i32_62 : i32 to vector<1x64xi32>
    %146 = arith.muli %145, %4 : vector<1x64xi32>
    %c0_i32_63 = arith.constant 0 : i32
    %147 = vector.broadcast %c0_i32_63 : i32 to vector<1x64xi32>
    %148 = arith.addi %146, %147 : vector<1x64xi32>
    %c2_i32_64 = arith.constant 2 : i32
    %149 = vector.broadcast %c2_i32_64 : i32 to vector<1x64xi32>
    %150 = arith.muli %149, %6 : vector<1x64xi32>
    %c0_i32_65 = arith.constant 0 : i32
    %151 = vector.broadcast %c0_i32_65 : i32 to vector<1x64xi32>
    %152 = arith.addi %150, %151 : vector<1x64xi32>
    %c0_i32_66 = arith.constant 0 : i32
    %153 = vector.broadcast %c0_i32_66 : i32 to vector<1x64xi32>
    %154 = arith.cmpi sge, %148, %153 : vector<1x64xi32>
    %c16_i32_67 = arith.constant 16 : i32
    %155 = vector.broadcast %c16_i32_67 : i32 to vector<1x64xi32>
    %156 = arith.cmpi slt, %148, %155 : vector<1x64xi32>
    %157 = arith.andi %154, %156 : vector<1x64xi1>
    %c0_i32_68 = arith.constant 0 : i32
    %158 = vector.broadcast %c0_i32_68 : i32 to vector<1x64xi32>
    %159 = arith.cmpi sge, %152, %158 : vector<1x64xi32>
    %160 = arith.andi %157, %159 : vector<1x64xi1>
    %c16_i32_69 = arith.constant 16 : i32
    %161 = vector.broadcast %c16_i32_69 : i32 to vector<1x64xi32>
    %162 = arith.cmpi slt, %152, %161 : vector<1x64xi32>
    %163 = arith.andi %160, %162 : vector<1x64xi1>
    %c16_i32_70 = arith.constant 16 : i32
    %164 = vector.broadcast %c16_i32_70 : i32 to vector<1x64xi32>
    %165 = arith.muli %148, %164 : vector<1x64xi32>
    %166 = arith.addi %165, %152 : vector<1x64xi32>
    %c-1_i32_71 = arith.constant -1 : i32
    %167 = vector.broadcast %c-1_i32_71 : i32 to vector<1x64xi32>
    %168 = arith.select %163, %166, %167 : vector<1x64xi1>, vector<1x64xi32>
    %169 = vector.broadcast %168 : vector<1x64xi32> to vector<256x64xi32>
    %170 = arith.cmpi eq, %7, %169 : vector<256x64xi32>
    %cst_72 = arith.constant 1.000000e+00 : f32
    %cst_73 = arith.constant 0.000000e+00 : f32
    %171 = vector.broadcast %cst_72 : f32 to vector<256x64xf32>
    %172 = vector.broadcast %cst_73 : f32 to vector<256x64xf32>
    %173 = arith.select %170, %171, %172 : vector<256x64xi1>, vector<256x64xf32>
    %cst_74 = arith.constant dense<0.000000e+00> : vector<3x64xf32>
    %174 = tpu.matmul %1, %173, %cst_74 {dimension_numbers = #tpu.dot_dimension_numbers<[1], [0], [0], [1], [0, 0, 1, 1], [], []>} : vector<3x256xf32>, vector<256x64xf32>, vector<3x64xf32> -> vector<3x64xf32>
    %c4 = arith.constant 4 : index
    %c0_75 = arith.constant 0 : index
    %c0_76 = arith.constant 0 : index
    %175 = vector.load %arg2[%c4, %c0_75, %c0_76] : memref<9x8x3xf32, #tpu.memory_space<vmem>>, vector<1x8x3xf32>
    %176 = vector.shape_cast %175 : vector<1x8x3xf32> to vector<8x3xf32>
    %cst_77 = arith.constant dense<0.000000e+00> : vector<8x64xf32>
    %177 = tpu.matmul %176, %174, %cst_77 {dimension_numbers = #tpu.dot_dimension_numbers<[1], [0], [0], [1], [0, 0, 1, 1], [], []>} : vector<8x3xf32>, vector<3x64xf32>, vector<8x64xf32> -> vector<8x64xf32>
    %178 = arith.addf %144, %177 : vector<8x64xf32>
    %c2_i32_78 = arith.constant 2 : i32
    %179 = vector.broadcast %c2_i32_78 : i32 to vector<1x64xi32>
    %180 = arith.muli %179, %4 : vector<1x64xi32>
    %c0_i32_79 = arith.constant 0 : i32
    %181 = vector.broadcast %c0_i32_79 : i32 to vector<1x64xi32>
    %182 = arith.addi %180, %181 : vector<1x64xi32>
    %c2_i32_80 = arith.constant 2 : i32
    %183 = vector.broadcast %c2_i32_80 : i32 to vector<1x64xi32>
    %184 = arith.muli %183, %6 : vector<1x64xi32>
    %c1_i32_81 = arith.constant 1 : i32
    %185 = vector.broadcast %c1_i32_81 : i32 to vector<1x64xi32>
    %186 = arith.addi %184, %185 : vector<1x64xi32>
    %c0_i32_82 = arith.constant 0 : i32
    %187 = vector.broadcast %c0_i32_82 : i32 to vector<1x64xi32>
    %188 = arith.cmpi sge, %182, %187 : vector<1x64xi32>
    %c16_i32_83 = arith.constant 16 : i32
    %189 = vector.broadcast %c16_i32_83 : i32 to vector<1x64xi32>
    %190 = arith.cmpi slt, %182, %189 : vector<1x64xi32>
    %191 = arith.andi %188, %190 : vector<1x64xi1>
    %c0_i32_84 = arith.constant 0 : i32
    %192 = vector.broadcast %c0_i32_84 : i32 to vector<1x64xi32>
    %193 = arith.cmpi sge, %186, %192 : vector<1x64xi32>
    %194 = arith.andi %191, %193 : vector<1x64xi1>
    %c16_i32_85 = arith.constant 16 : i32
    %195 = vector.broadcast %c16_i32_85 : i32 to vector<1x64xi32>
    %196 = arith.cmpi slt, %186, %195 : vector<1x64xi32>
    %197 = arith.andi %194, %196 : vector<1x64xi1>
    %c16_i32_86 = arith.constant 16 : i32
    %198 = vector.broadcast %c16_i32_86 : i32 to vector<1x64xi32>
    %199 = arith.muli %182, %198 : vector<1x64xi32>
    %200 = arith.addi %199, %186 : vector<1x64xi32>
    %c-1_i32_87 = arith.constant -1 : i32
    %201 = vector.broadcast %c-1_i32_87 : i32 to vector<1x64xi32>
    %202 = arith.select %197, %200, %201 : vector<1x64xi1>, vector<1x64xi32>
    %203 = vector.broadcast %202 : vector<1x64xi32> to vector<256x64xi32>
    %204 = arith.cmpi eq, %7, %203 : vector<256x64xi32>
    %cst_88 = arith.constant 1.000000e+00 : f32
    %cst_89 = arith.constant 0.000000e+00 : f32
    %205 = vector.broadcast %cst_88 : f32 to vector<256x64xf32>
    %206 = vector.broadcast %cst_89 : f32 to vector<256x64xf32>
    %207 = arith.select %204, %205, %206 : vector<256x64xi1>, vector<256x64xf32>
    %cst_90 = arith.constant dense<0.000000e+00> : vector<3x64xf32>
    %208 = tpu.matmul %1, %207, %cst_90 {dimension_numbers = #tpu.dot_dimension_numbers<[1], [0], [0], [1], [0, 0, 1, 1], [], []>} : vector<3x256xf32>, vector<256x64xf32>, vector<3x64xf32> -> vector<3x64xf32>
    %c5 = arith.constant 5 : index
    %c0_91 = arith.constant 0 : index
    %c0_92 = arith.constant 0 : index
    %209 = vector.load %arg2[%c5, %c0_91, %c0_92] : memref<9x8x3xf32, #tpu.memory_space<vmem>>, vector<1x8x3xf32>
    %210 = vector.shape_cast %209 : vector<1x8x3xf32> to vector<8x3xf32>
    %cst_93 = arith.constant dense<0.000000e+00> : vector<8x64xf32>
    %211 = tpu.matmul %210, %208, %cst_93 {dimension_numbers = #tpu.dot_dimension_numbers<[1], [0], [0], [1], [0, 0, 1, 1], [], []>} : vector<8x3xf32>, vector<3x64xf32>, vector<8x64xf32> -> vector<8x64xf32>
    %212 = arith.addf %178, %211 : vector<8x64xf32>
    %c2_i32_94 = arith.constant 2 : i32
    %213 = vector.broadcast %c2_i32_94 : i32 to vector<1x64xi32>
    %214 = arith.muli %213, %4 : vector<1x64xi32>
    %c1_i32_95 = arith.constant 1 : i32
    %215 = vector.broadcast %c1_i32_95 : i32 to vector<1x64xi32>
    %216 = arith.addi %214, %215 : vector<1x64xi32>
    %c2_i32_96 = arith.constant 2 : i32
    %217 = vector.broadcast %c2_i32_96 : i32 to vector<1x64xi32>
    %218 = arith.muli %217, %6 : vector<1x64xi32>
    %c-1_i32_97 = arith.constant -1 : i32
    %219 = vector.broadcast %c-1_i32_97 : i32 to vector<1x64xi32>
    %220 = arith.addi %218, %219 : vector<1x64xi32>
    %c0_i32_98 = arith.constant 0 : i32
    %221 = vector.broadcast %c0_i32_98 : i32 to vector<1x64xi32>
    %222 = arith.cmpi sge, %216, %221 : vector<1x64xi32>
    %c16_i32_99 = arith.constant 16 : i32
    %223 = vector.broadcast %c16_i32_99 : i32 to vector<1x64xi32>
    %224 = arith.cmpi slt, %216, %223 : vector<1x64xi32>
    %225 = arith.andi %222, %224 : vector<1x64xi1>
    %c0_i32_100 = arith.constant 0 : i32
    %226 = vector.broadcast %c0_i32_100 : i32 to vector<1x64xi32>
    %227 = arith.cmpi sge, %220, %226 : vector<1x64xi32>
    %228 = arith.andi %225, %227 : vector<1x64xi1>
    %c16_i32_101 = arith.constant 16 : i32
    %229 = vector.broadcast %c16_i32_101 : i32 to vector<1x64xi32>
    %230 = arith.cmpi slt, %220, %229 : vector<1x64xi32>
    %231 = arith.andi %228, %230 : vector<1x64xi1>
    %c16_i32_102 = arith.constant 16 : i32
    %232 = vector.broadcast %c16_i32_102 : i32 to vector<1x64xi32>
    %233 = arith.muli %216, %232 : vector<1x64xi32>
    %234 = arith.addi %233, %220 : vector<1x64xi32>
    %c-1_i32_103 = arith.constant -1 : i32
    %235 = vector.broadcast %c-1_i32_103 : i32 to vector<1x64xi32>
    %236 = arith.select %231, %234, %235 : vector<1x64xi1>, vector<1x64xi32>
    %237 = vector.broadcast %236 : vector<1x64xi32> to vector<256x64xi32>
    %238 = arith.cmpi eq, %7, %237 : vector<256x64xi32>
    %cst_104 = arith.constant 1.000000e+00 : f32
    %cst_105 = arith.constant 0.000000e+00 : f32
    %239 = vector.broadcast %cst_104 : f32 to vector<256x64xf32>
    %240 = vector.broadcast %cst_105 : f32 to vector<256x64xf32>
    %241 = arith.select %238, %239, %240 : vector<256x64xi1>, vector<256x64xf32>
    %cst_106 = arith.constant dense<0.000000e+00> : vector<3x64xf32>
    %242 = tpu.matmul %1, %241, %cst_106 {dimension_numbers = #tpu.dot_dimension_numbers<[1], [0], [0], [1], [0, 0, 1, 1], [], []>} : vector<3x256xf32>, vector<256x64xf32>, vector<3x64xf32> -> vector<3x64xf32>
    %c6 = arith.constant 6 : index
    %c0_107 = arith.constant 0 : index
    %c0_108 = arith.constant 0 : index
    %243 = vector.load %arg2[%c6, %c0_107, %c0_108] : memref<9x8x3xf32, #tpu.memory_space<vmem>>, vector<1x8x3xf32>
    %244 = vector.shape_cast %243 : vector<1x8x3xf32> to vector<8x3xf32>
    %cst_109 = arith.constant dense<0.000000e+00> : vector<8x64xf32>
    %245 = tpu.matmul %244, %242, %cst_109 {dimension_numbers = #tpu.dot_dimension_numbers<[1], [0], [0], [1], [0, 0, 1, 1], [], []>} : vector<8x3xf32>, vector<3x64xf32>, vector<8x64xf32> -> vector<8x64xf32>
    %246 = arith.addf %212, %245 : vector<8x64xf32>
    %c2_i32_110 = arith.constant 2 : i32
    %247 = vector.broadcast %c2_i32_110 : i32 to vector<1x64xi32>
    %248 = arith.muli %247, %4 : vector<1x64xi32>
    %c1_i32_111 = arith.constant 1 : i32
    %249 = vector.broadcast %c1_i32_111 : i32 to vector<1x64xi32>
    %250 = arith.addi %248, %249 : vector<1x64xi32>
    %c2_i32_112 = arith.constant 2 : i32
    %251 = vector.broadcast %c2_i32_112 : i32 to vector<1x64xi32>
    %252 = arith.muli %251, %6 : vector<1x64xi32>
    %c0_i32_113 = arith.constant 0 : i32
    %253 = vector.broadcast %c0_i32_113 : i32 to vector<1x64xi32>
    %254 = arith.addi %252, %253 : vector<1x64xi32>
    %c0_i32_114 = arith.constant 0 : i32
    %255 = vector.broadcast %c0_i32_114 : i32 to vector<1x64xi32>
    %256 = arith.cmpi sge, %250, %255 : vector<1x64xi32>
    %c16_i32_115 = arith.constant 16 : i32
    %257 = vector.broadcast %c16_i32_115 : i32 to vector<1x64xi32>
    %258 = arith.cmpi slt, %250, %257 : vector<1x64xi32>
    %259 = arith.andi %256, %258 : vector<1x64xi1>
    %c0_i32_116 = arith.constant 0 : i32
    %260 = vector.broadcast %c0_i32_116 : i32 to vector<1x64xi32>
    %261 = arith.cmpi sge, %254, %260 : vector<1x64xi32>
    %262 = arith.andi %259, %261 : vector<1x64xi1>
    %c16_i32_117 = arith.constant 16 : i32
    %263 = vector.broadcast %c16_i32_117 : i32 to vector<1x64xi32>
    %264 = arith.cmpi slt, %254, %263 : vector<1x64xi32>
    %265 = arith.andi %262, %264 : vector<1x64xi1>
    %c16_i32_118 = arith.constant 16 : i32
    %266 = vector.broadcast %c16_i32_118 : i32 to vector<1x64xi32>
    %267 = arith.muli %250, %266 : vector<1x64xi32>
    %268 = arith.addi %267, %254 : vector<1x64xi32>
    %c-1_i32_119 = arith.constant -1 : i32
    %269 = vector.broadcast %c-1_i32_119 : i32 to vector<1x64xi32>
    %270 = arith.select %265, %268, %269 : vector<1x64xi1>, vector<1x64xi32>
    %271 = vector.broadcast %270 : vector<1x64xi32> to vector<256x64xi32>
    %272 = arith.cmpi eq, %7, %271 : vector<256x64xi32>
    %cst_120 = arith.constant 1.000000e+00 : f32
    %cst_121 = arith.constant 0.000000e+00 : f32
    %273 = vector.broadcast %cst_120 : f32 to vector<256x64xf32>
    %274 = vector.broadcast %cst_121 : f32 to vector<256x64xf32>
    %275 = arith.select %272, %273, %274 : vector<256x64xi1>, vector<256x64xf32>
    %cst_122 = arith.constant dense<0.000000e+00> : vector<3x64xf32>
    %276 = tpu.matmul %1, %275, %cst_122 {dimension_numbers = #tpu.dot_dimension_numbers<[1], [0], [0], [1], [0, 0, 1, 1], [], []>} : vector<3x256xf32>, vector<256x64xf32>, vector<3x64xf32> -> vector<3x64xf32>
    %c7 = arith.constant 7 : index
    %c0_123 = arith.constant 0 : index
    %c0_124 = arith.constant 0 : index
    %277 = vector.load %arg2[%c7, %c0_123, %c0_124] : memref<9x8x3xf32, #tpu.memory_space<vmem>>, vector<1x8x3xf32>
    %278 = vector.shape_cast %277 : vector<1x8x3xf32> to vector<8x3xf32>
    %cst_125 = arith.constant dense<0.000000e+00> : vector<8x64xf32>
    %279 = tpu.matmul %278, %276, %cst_125 {dimension_numbers = #tpu.dot_dimension_numbers<[1], [0], [0], [1], [0, 0, 1, 1], [], []>} : vector<8x3xf32>, vector<3x64xf32>, vector<8x64xf32> -> vector<8x64xf32>
    %280 = arith.addf %246, %279 : vector<8x64xf32>
    %c2_i32_126 = arith.constant 2 : i32
    %281 = vector.broadcast %c2_i32_126 : i32 to vector<1x64xi32>
    %282 = arith.muli %281, %4 : vector<1x64xi32>
    %c1_i32_127 = arith.constant 1 : i32
    %283 = vector.broadcast %c1_i32_127 : i32 to vector<1x64xi32>
    %284 = arith.addi %282, %283 : vector<1x64xi32>
    %c2_i32_128 = arith.constant 2 : i32
    %285 = vector.broadcast %c2_i32_128 : i32 to vector<1x64xi32>
    %286 = arith.muli %285, %6 : vector<1x64xi32>
    %c1_i32_129 = arith.constant 1 : i32
    %287 = vector.broadcast %c1_i32_129 : i32 to vector<1x64xi32>
    %288 = arith.addi %286, %287 : vector<1x64xi32>
    %c0_i32_130 = arith.constant 0 : i32
    %289 = vector.broadcast %c0_i32_130 : i32 to vector<1x64xi32>
    %290 = arith.cmpi sge, %284, %289 : vector<1x64xi32>
    %c16_i32_131 = arith.constant 16 : i32
    %291 = vector.broadcast %c16_i32_131 : i32 to vector<1x64xi32>
    %292 = arith.cmpi slt, %284, %291 : vector<1x64xi32>
    %293 = arith.andi %290, %292 : vector<1x64xi1>
    %c0_i32_132 = arith.constant 0 : i32
    %294 = vector.broadcast %c0_i32_132 : i32 to vector<1x64xi32>
    %295 = arith.cmpi sge, %288, %294 : vector<1x64xi32>
    %296 = arith.andi %293, %295 : vector<1x64xi1>
    %c16_i32_133 = arith.constant 16 : i32
    %297 = vector.broadcast %c16_i32_133 : i32 to vector<1x64xi32>
    %298 = arith.cmpi slt, %288, %297 : vector<1x64xi32>
    %299 = arith.andi %296, %298 : vector<1x64xi1>
    %c16_i32_134 = arith.constant 16 : i32
    %300 = vector.broadcast %c16_i32_134 : i32 to vector<1x64xi32>
    %301 = arith.muli %284, %300 : vector<1x64xi32>
    %302 = arith.addi %301, %288 : vector<1x64xi32>
    %c-1_i32_135 = arith.constant -1 : i32
    %303 = vector.broadcast %c-1_i32_135 : i32 to vector<1x64xi32>
    %304 = arith.select %299, %302, %303 : vector<1x64xi1>, vector<1x64xi32>
    %305 = vector.broadcast %304 : vector<1x64xi32> to vector<256x64xi32>
    %306 = arith.cmpi eq, %7, %305 : vector<256x64xi32>
    %cst_136 = arith.constant 1.000000e+00 : f32
    %cst_137 = arith.constant 0.000000e+00 : f32
    %307 = vector.broadcast %cst_136 : f32 to vector<256x64xf32>
    %308 = vector.broadcast %cst_137 : f32 to vector<256x64xf32>
    %309 = arith.select %306, %307, %308 : vector<256x64xi1>, vector<256x64xf32>
    %cst_138 = arith.constant dense<0.000000e+00> : vector<3x64xf32>
    %310 = tpu.matmul %1, %309, %cst_138 {dimension_numbers = #tpu.dot_dimension_numbers<[1], [0], [0], [1], [0, 0, 1, 1], [], []>} : vector<3x256xf32>, vector<256x64xf32>, vector<3x64xf32> -> vector<3x64xf32>
    %c8 = arith.constant 8 : index
    %c0_139 = arith.constant 0 : index
    %c0_140 = arith.constant 0 : index
    %311 = vector.load %arg2[%c8, %c0_139, %c0_140] : memref<9x8x3xf32, #tpu.memory_space<vmem>>, vector<1x8x3xf32>
    %312 = vector.shape_cast %311 : vector<1x8x3xf32> to vector<8x3xf32>
    %cst_141 = arith.constant dense<0.000000e+00> : vector<8x64xf32>
    %313 = tpu.matmul %312, %310, %cst_141 {dimension_numbers = #tpu.dot_dimension_numbers<[1], [0], [0], [1], [0, 0, 1, 1], [], []>} : vector<8x3xf32>, vector<3x64xf32>, vector<8x64xf32> -> vector<8x64xf32>
    %314 = arith.addf %280, %313 : vector<8x64xf32>
    %c0_142 = arith.constant 0 : index
    %c0_143 = arith.constant 0 : index
    %315 = vector.load %arg3[%c0_142, %c0_143] : memref<8x1xf32, #tpu.memory_space<vmem>>, vector<8x1xf32>
    %316 = vector.broadcast %315 : vector<8x1xf32> to vector<8x64xf32>
    %317 = arith.addf %314, %316 : vector<8x64xf32>
    %cst_144 = arith.constant 0.000000e+00 : f32
    %318 = vector.broadcast %cst_144 : f32 to vector<8x64xf32>
    %319 = arith.maximumf %317, %318 : vector<8x64xf32>
    %320 = tpu.iota {dimensions = array<i32: 1>} : vector<1x16xi32>
    %c2_i32_145 = arith.constant 2 : i32
    %321 = vector.broadcast %c2_i32_145 : i32 to vector<1x16xi32>
    %322 = arith.shrsi %320, %321 : vector<1x16xi32>
    %c3_i32_146 = arith.constant 3 : i32
    %323 = vector.broadcast %c3_i32_146 : i32 to vector<1x16xi32>
    %324 = arith.andi %320, %323 : vector<1x16xi32>
    %325 = tpu.iota {dimensions = array<i32: 0>} : vector<64x16xi32>
    %cst_147 = arith.constant 0.000000e+00 : f32
    %326 = vector.broadcast %cst_147 : f32 to vector<16x16xf32>
    %c2_i32_148 = arith.constant 2 : i32
    %327 = vector.broadcast %c2_i32_148 : i32 to vector<1x16xi32>
    %328 = arith.muli %327, %322 : vector<1x16xi32>
    %c-1_i32_149 = arith.constant -1 : i32
    %329 = vector.broadcast %c-1_i32_149 : i32 to vector<1x16xi32>
    %330 = arith.addi %328, %329 : vector<1x16xi32>
    %c2_i32_150 = arith.constant 2 : i32
    %331 = vector.broadcast %c2_i32_150 : i32 to vector<1x16xi32>
    %332 = arith.muli %331, %324 : vector<1x16xi32>
    %c-1_i32_151 = arith.constant -1 : i32
    %333 = vector.broadcast %c-1_i32_151 : i32 to vector<1x16xi32>
    %334 = arith.addi %332, %333 : vector<1x16xi32>
    %c0_i32_152 = arith.constant 0 : i32
    %335 = vector.broadcast %c0_i32_152 : i32 to vector<1x16xi32>
    %336 = arith.cmpi sge, %330, %335 : vector<1x16xi32>
    %c8_i32 = arith.constant 8 : i32
    %337 = vector.broadcast %c8_i32 : i32 to vector<1x16xi32>
    %338 = arith.cmpi slt, %330, %337 : vector<1x16xi32>
    %339 = arith.andi %336, %338 : vector<1x16xi1>
    %c0_i32_153 = arith.constant 0 : i32
    %340 = vector.broadcast %c0_i32_153 : i32 to vector<1x16xi32>
    %341 = arith.cmpi sge, %334, %340 : vector<1x16xi32>
    %342 = arith.andi %339, %341 : vector<1x16xi1>
    %c8_i32_154 = arith.constant 8 : i32
    %343 = vector.broadcast %c8_i32_154 : i32 to vector<1x16xi32>
    %344 = arith.cmpi slt, %334, %343 : vector<1x16xi32>
    %345 = arith.andi %342, %344 : vector<1x16xi1>
    %c8_i32_155 = arith.constant 8 : i32
    %346 = vector.broadcast %c8_i32_155 : i32 to vector<1x16xi32>
    %347 = arith.muli %330, %346 : vector<1x16xi32>
    %348 = arith.addi %347, %334 : vector<1x16xi32>
    %c-1_i32_156 = arith.constant -1 : i32
    %349 = vector.broadcast %c-1_i32_156 : i32 to vector<1x16xi32>
    %350 = arith.select %345, %348, %349 : vector<1x16xi1>, vector<1x16xi32>
    %351 = vector.broadcast %350 : vector<1x16xi32> to vector<64x16xi32>
    %352 = arith.cmpi eq, %325, %351 : vector<64x16xi32>
    %cst_157 = arith.constant 1.000000e+00 : f32
    %cst_158 = arith.constant 0.000000e+00 : f32
    %353 = vector.broadcast %cst_157 : f32 to vector<64x16xf32>
    %354 = vector.broadcast %cst_158 : f32 to vector<64x16xf32>
    %355 = arith.select %352, %353, %354 : vector<64x16xi1>, vector<64x16xf32>
    %cst_159 = arith.constant dense<0.000000e+00> : vector<8x16xf32>
    %356 = tpu.matmul %319, %355, %cst_159 {dimension_numbers = #tpu.dot_dimension_numbers<[1], [0], [0], [1], [0, 0, 1, 1], [], []>} : vector<8x64xf32>, vector<64x16xf32>, vector<8x16xf32> -> vector<8x16xf32>
    %c0_160 = arith.constant 0 : index
    %c0_161 = arith.constant 0 : index
    %c0_162 = arith.constant 0 : index
    %357 = vector.load %arg4[%c0_160, %c0_161, %c0_162] : memref<9x16x8xf32, #tpu.memory_space<vmem>>, vector<1x16x8xf32>
    %358 = vector.shape_cast %357 : vector<1x16x8xf32> to vector<16x8xf32>
    %cst_163 = arith.constant dense<0.000000e+00> : vector<16x16xf32>
    %359 = tpu.matmul %358, %356, %cst_163 {dimension_numbers = #tpu.dot_dimension_numbers<[1], [0], [0], [1], [0, 0, 1, 1], [], []>} : vector<16x8xf32>, vector<8x16xf32>, vector<16x16xf32> -> vector<16x16xf32>
    %360 = arith.addf %326, %359 : vector<16x16xf32>
    %c2_i32_164 = arith.constant 2 : i32
    %361 = vector.broadcast %c2_i32_164 : i32 to vector<1x16xi32>
    %362 = arith.muli %361, %322 : vector<1x16xi32>
    %c-1_i32_165 = arith.constant -1 : i32
    %363 = vector.broadcast %c-1_i32_165 : i32 to vector<1x16xi32>
    %364 = arith.addi %362, %363 : vector<1x16xi32>
    %c2_i32_166 = arith.constant 2 : i32
    %365 = vector.broadcast %c2_i32_166 : i32 to vector<1x16xi32>
    %366 = arith.muli %365, %324 : vector<1x16xi32>
    %c0_i32_167 = arith.constant 0 : i32
    %367 = vector.broadcast %c0_i32_167 : i32 to vector<1x16xi32>
    %368 = arith.addi %366, %367 : vector<1x16xi32>
    %c0_i32_168 = arith.constant 0 : i32
    %369 = vector.broadcast %c0_i32_168 : i32 to vector<1x16xi32>
    %370 = arith.cmpi sge, %364, %369 : vector<1x16xi32>
    %c8_i32_169 = arith.constant 8 : i32
    %371 = vector.broadcast %c8_i32_169 : i32 to vector<1x16xi32>
    %372 = arith.cmpi slt, %364, %371 : vector<1x16xi32>
    %373 = arith.andi %370, %372 : vector<1x16xi1>
    %c0_i32_170 = arith.constant 0 : i32
    %374 = vector.broadcast %c0_i32_170 : i32 to vector<1x16xi32>
    %375 = arith.cmpi sge, %368, %374 : vector<1x16xi32>
    %376 = arith.andi %373, %375 : vector<1x16xi1>
    %c8_i32_171 = arith.constant 8 : i32
    %377 = vector.broadcast %c8_i32_171 : i32 to vector<1x16xi32>
    %378 = arith.cmpi slt, %368, %377 : vector<1x16xi32>
    %379 = arith.andi %376, %378 : vector<1x16xi1>
    %c8_i32_172 = arith.constant 8 : i32
    %380 = vector.broadcast %c8_i32_172 : i32 to vector<1x16xi32>
    %381 = arith.muli %364, %380 : vector<1x16xi32>
    %382 = arith.addi %381, %368 : vector<1x16xi32>
    %c-1_i32_173 = arith.constant -1 : i32
    %383 = vector.broadcast %c-1_i32_173 : i32 to vector<1x16xi32>
    %384 = arith.select %379, %382, %383 : vector<1x16xi1>, vector<1x16xi32>
    %385 = vector.broadcast %384 : vector<1x16xi32> to vector<64x16xi32>
    %386 = arith.cmpi eq, %325, %385 : vector<64x16xi32>
    %cst_174 = arith.constant 1.000000e+00 : f32
    %cst_175 = arith.constant 0.000000e+00 : f32
    %387 = vector.broadcast %cst_174 : f32 to vector<64x16xf32>
    %388 = vector.broadcast %cst_175 : f32 to vector<64x16xf32>
    %389 = arith.select %386, %387, %388 : vector<64x16xi1>, vector<64x16xf32>
    %cst_176 = arith.constant dense<0.000000e+00> : vector<8x16xf32>
    %390 = tpu.matmul %319, %389, %cst_176 {dimension_numbers = #tpu.dot_dimension_numbers<[1], [0], [0], [1], [0, 0, 1, 1], [], []>} : vector<8x64xf32>, vector<64x16xf32>, vector<8x16xf32> -> vector<8x16xf32>
    %c1_177 = arith.constant 1 : index
    %c0_178 = arith.constant 0 : index
    %c0_179 = arith.constant 0 : index
    %391 = vector.load %arg4[%c1_177, %c0_178, %c0_179] : memref<9x16x8xf32, #tpu.memory_space<vmem>>, vector<1x16x8xf32>
    %392 = vector.shape_cast %391 : vector<1x16x8xf32> to vector<16x8xf32>
    %cst_180 = arith.constant dense<0.000000e+00> : vector<16x16xf32>
    %393 = tpu.matmul %392, %390, %cst_180 {dimension_numbers = #tpu.dot_dimension_numbers<[1], [0], [0], [1], [0, 0, 1, 1], [], []>} : vector<16x8xf32>, vector<8x16xf32>, vector<16x16xf32> -> vector<16x16xf32>
    %394 = arith.addf %360, %393 : vector<16x16xf32>
    %c2_i32_181 = arith.constant 2 : i32
    %395 = vector.broadcast %c2_i32_181 : i32 to vector<1x16xi32>
    %396 = arith.muli %395, %322 : vector<1x16xi32>
    %c-1_i32_182 = arith.constant -1 : i32
    %397 = vector.broadcast %c-1_i32_182 : i32 to vector<1x16xi32>
    %398 = arith.addi %396, %397 : vector<1x16xi32>
    %c2_i32_183 = arith.constant 2 : i32
    %399 = vector.broadcast %c2_i32_183 : i32 to vector<1x16xi32>
    %400 = arith.muli %399, %324 : vector<1x16xi32>
    %c1_i32_184 = arith.constant 1 : i32
    %401 = vector.broadcast %c1_i32_184 : i32 to vector<1x16xi32>
    %402 = arith.addi %400, %401 : vector<1x16xi32>
    %c0_i32_185 = arith.constant 0 : i32
    %403 = vector.broadcast %c0_i32_185 : i32 to vector<1x16xi32>
    %404 = arith.cmpi sge, %398, %403 : vector<1x16xi32>
    %c8_i32_186 = arith.constant 8 : i32
    %405 = vector.broadcast %c8_i32_186 : i32 to vector<1x16xi32>
    %406 = arith.cmpi slt, %398, %405 : vector<1x16xi32>
    %407 = arith.andi %404, %406 : vector<1x16xi1>
    %c0_i32_187 = arith.constant 0 : i32
    %408 = vector.broadcast %c0_i32_187 : i32 to vector<1x16xi32>
    %409 = arith.cmpi sge, %402, %408 : vector<1x16xi32>
    %410 = arith.andi %407, %409 : vector<1x16xi1>
    %c8_i32_188 = arith.constant 8 : i32
    %411 = vector.broadcast %c8_i32_188 : i32 to vector<1x16xi32>
    %412 = arith.cmpi slt, %402, %411 : vector<1x16xi32>
    %413 = arith.andi %410, %412 : vector<1x16xi1>
    %c8_i32_189 = arith.constant 8 : i32
    %414 = vector.broadcast %c8_i32_189 : i32 to vector<1x16xi32>
    %415 = arith.muli %398, %414 : vector<1x16xi32>
    %416 = arith.addi %415, %402 : vector<1x16xi32>
    %c-1_i32_190 = arith.constant -1 : i32
    %417 = vector.broadcast %c-1_i32_190 : i32 to vector<1x16xi32>
    %418 = arith.select %413, %416, %417 : vector<1x16xi1>, vector<1x16xi32>
    %419 = vector.broadcast %418 : vector<1x16xi32> to vector<64x16xi32>
    %420 = arith.cmpi eq, %325, %419 : vector<64x16xi32>
    %cst_191 = arith.constant 1.000000e+00 : f32
    %cst_192 = arith.constant 0.000000e+00 : f32
    %421 = vector.broadcast %cst_191 : f32 to vector<64x16xf32>
    %422 = vector.broadcast %cst_192 : f32 to vector<64x16xf32>
    %423 = arith.select %420, %421, %422 : vector<64x16xi1>, vector<64x16xf32>
    %cst_193 = arith.constant dense<0.000000e+00> : vector<8x16xf32>
    %424 = tpu.matmul %319, %423, %cst_193 {dimension_numbers = #tpu.dot_dimension_numbers<[1], [0], [0], [1], [0, 0, 1, 1], [], []>} : vector<8x64xf32>, vector<64x16xf32>, vector<8x16xf32> -> vector<8x16xf32>
    %c2_194 = arith.constant 2 : index
    %c0_195 = arith.constant 0 : index
    %c0_196 = arith.constant 0 : index
    %425 = vector.load %arg4[%c2_194, %c0_195, %c0_196] : memref<9x16x8xf32, #tpu.memory_space<vmem>>, vector<1x16x8xf32>
    %426 = vector.shape_cast %425 : vector<1x16x8xf32> to vector<16x8xf32>
    %cst_197 = arith.constant dense<0.000000e+00> : vector<16x16xf32>
    %427 = tpu.matmul %426, %424, %cst_197 {dimension_numbers = #tpu.dot_dimension_numbers<[1], [0], [0], [1], [0, 0, 1, 1], [], []>} : vector<16x8xf32>, vector<8x16xf32>, vector<16x16xf32> -> vector<16x16xf32>
    %428 = arith.addf %394, %427 : vector<16x16xf32>
    %c2_i32_198 = arith.constant 2 : i32
    %429 = vector.broadcast %c2_i32_198 : i32 to vector<1x16xi32>
    %430 = arith.muli %429, %322 : vector<1x16xi32>
    %c0_i32_199 = arith.constant 0 : i32
    %431 = vector.broadcast %c0_i32_199 : i32 to vector<1x16xi32>
    %432 = arith.addi %430, %431 : vector<1x16xi32>
    %c2_i32_200 = arith.constant 2 : i32
    %433 = vector.broadcast %c2_i32_200 : i32 to vector<1x16xi32>
    %434 = arith.muli %433, %324 : vector<1x16xi32>
    %c-1_i32_201 = arith.constant -1 : i32
    %435 = vector.broadcast %c-1_i32_201 : i32 to vector<1x16xi32>
    %436 = arith.addi %434, %435 : vector<1x16xi32>
    %c0_i32_202 = arith.constant 0 : i32
    %437 = vector.broadcast %c0_i32_202 : i32 to vector<1x16xi32>
    %438 = arith.cmpi sge, %432, %437 : vector<1x16xi32>
    %c8_i32_203 = arith.constant 8 : i32
    %439 = vector.broadcast %c8_i32_203 : i32 to vector<1x16xi32>
    %440 = arith.cmpi slt, %432, %439 : vector<1x16xi32>
    %441 = arith.andi %438, %440 : vector<1x16xi1>
    %c0_i32_204 = arith.constant 0 : i32
    %442 = vector.broadcast %c0_i32_204 : i32 to vector<1x16xi32>
    %443 = arith.cmpi sge, %436, %442 : vector<1x16xi32>
    %444 = arith.andi %441, %443 : vector<1x16xi1>
    %c8_i32_205 = arith.constant 8 : i32
    %445 = vector.broadcast %c8_i32_205 : i32 to vector<1x16xi32>
    %446 = arith.cmpi slt, %436, %445 : vector<1x16xi32>
    %447 = arith.andi %444, %446 : vector<1x16xi1>
    %c8_i32_206 = arith.constant 8 : i32
    %448 = vector.broadcast %c8_i32_206 : i32 to vector<1x16xi32>
    %449 = arith.muli %432, %448 : vector<1x16xi32>
    %450 = arith.addi %449, %436 : vector<1x16xi32>
    %c-1_i32_207 = arith.constant -1 : i32
    %451 = vector.broadcast %c-1_i32_207 : i32 to vector<1x16xi32>
    %452 = arith.select %447, %450, %451 : vector<1x16xi1>, vector<1x16xi32>
    %453 = vector.broadcast %452 : vector<1x16xi32> to vector<64x16xi32>
    %454 = arith.cmpi eq, %325, %453 : vector<64x16xi32>
    %cst_208 = arith.constant 1.000000e+00 : f32
    %cst_209 = arith.constant 0.000000e+00 : f32
    %455 = vector.broadcast %cst_208 : f32 to vector<64x16xf32>
    %456 = vector.broadcast %cst_209 : f32 to vector<64x16xf32>
    %457 = arith.select %454, %455, %456 : vector<64x16xi1>, vector<64x16xf32>
    %cst_210 = arith.constant dense<0.000000e+00> : vector<8x16xf32>
    %458 = tpu.matmul %319, %457, %cst_210 {dimension_numbers = #tpu.dot_dimension_numbers<[1], [0], [0], [1], [0, 0, 1, 1], [], []>} : vector<8x64xf32>, vector<64x16xf32>, vector<8x16xf32> -> vector<8x16xf32>
    %c3_211 = arith.constant 3 : index
    %c0_212 = arith.constant 0 : index
    %c0_213 = arith.constant 0 : index
    %459 = vector.load %arg4[%c3_211, %c0_212, %c0_213] : memref<9x16x8xf32, #tpu.memory_space<vmem>>, vector<1x16x8xf32>
    %460 = vector.shape_cast %459 : vector<1x16x8xf32> to vector<16x8xf32>
    %cst_214 = arith.constant dense<0.000000e+00> : vector<16x16xf32>
    %461 = tpu.matmul %460, %458, %cst_214 {dimension_numbers = #tpu.dot_dimension_numbers<[1], [0], [0], [1], [0, 0, 1, 1], [], []>} : vector<16x8xf32>, vector<8x16xf32>, vector<16x16xf32> -> vector<16x16xf32>
    %462 = arith.addf %428, %461 : vector<16x16xf32>
    %c2_i32_215 = arith.constant 2 : i32
    %463 = vector.broadcast %c2_i32_215 : i32 to vector<1x16xi32>
    %464 = arith.muli %463, %322 : vector<1x16xi32>
    %c0_i32_216 = arith.constant 0 : i32
    %465 = vector.broadcast %c0_i32_216 : i32 to vector<1x16xi32>
    %466 = arith.addi %464, %465 : vector<1x16xi32>
    %c2_i32_217 = arith.constant 2 : i32
    %467 = vector.broadcast %c2_i32_217 : i32 to vector<1x16xi32>
    %468 = arith.muli %467, %324 : vector<1x16xi32>
    %c0_i32_218 = arith.constant 0 : i32
    %469 = vector.broadcast %c0_i32_218 : i32 to vector<1x16xi32>
    %470 = arith.addi %468, %469 : vector<1x16xi32>
    %c0_i32_219 = arith.constant 0 : i32
    %471 = vector.broadcast %c0_i32_219 : i32 to vector<1x16xi32>
    %472 = arith.cmpi sge, %466, %471 : vector<1x16xi32>
    %c8_i32_220 = arith.constant 8 : i32
    %473 = vector.broadcast %c8_i32_220 : i32 to vector<1x16xi32>
    %474 = arith.cmpi slt, %466, %473 : vector<1x16xi32>
    %475 = arith.andi %472, %474 : vector<1x16xi1>
    %c0_i32_221 = arith.constant 0 : i32
    %476 = vector.broadcast %c0_i32_221 : i32 to vector<1x16xi32>
    %477 = arith.cmpi sge, %470, %476 : vector<1x16xi32>
    %478 = arith.andi %475, %477 : vector<1x16xi1>
    %c8_i32_222 = arith.constant 8 : i32
    %479 = vector.broadcast %c8_i32_222 : i32 to vector<1x16xi32>
    %480 = arith.cmpi slt, %470, %479 : vector<1x16xi32>
    %481 = arith.andi %478, %480 : vector<1x16xi1>
    %c8_i32_223 = arith.constant 8 : i32
    %482 = vector.broadcast %c8_i32_223 : i32 to vector<1x16xi32>
    %483 = arith.muli %466, %482 : vector<1x16xi32>
    %484 = arith.addi %483, %470 : vector<1x16xi32>
    %c-1_i32_224 = arith.constant -1 : i32
    %485 = vector.broadcast %c-1_i32_224 : i32 to vector<1x16xi32>
    %486 = arith.select %481, %484, %485 : vector<1x16xi1>, vector<1x16xi32>
    %487 = vector.broadcast %486 : vector<1x16xi32> to vector<64x16xi32>
    %488 = arith.cmpi eq, %325, %487 : vector<64x16xi32>
    %cst_225 = arith.constant 1.000000e+00 : f32
    %cst_226 = arith.constant 0.000000e+00 : f32
    %489 = vector.broadcast %cst_225 : f32 to vector<64x16xf32>
    %490 = vector.broadcast %cst_226 : f32 to vector<64x16xf32>
    %491 = arith.select %488, %489, %490 : vector<64x16xi1>, vector<64x16xf32>
    %cst_227 = arith.constant dense<0.000000e+00> : vector<8x16xf32>
    %492 = tpu.matmul %319, %491, %cst_227 {dimension_numbers = #tpu.dot_dimension_numbers<[1], [0], [0], [1], [0, 0, 1, 1], [], []>} : vector<8x64xf32>, vector<64x16xf32>, vector<8x16xf32> -> vector<8x16xf32>
    %c4_228 = arith.constant 4 : index
    %c0_229 = arith.constant 0 : index
    %c0_230 = arith.constant 0 : index
    %493 = vector.load %arg4[%c4_228, %c0_229, %c0_230] : memref<9x16x8xf32, #tpu.memory_space<vmem>>, vector<1x16x8xf32>
    %494 = vector.shape_cast %493 : vector<1x16x8xf32> to vector<16x8xf32>
    %cst_231 = arith.constant dense<0.000000e+00> : vector<16x16xf32>
    %495 = tpu.matmul %494, %492, %cst_231 {dimension_numbers = #tpu.dot_dimension_numbers<[1], [0], [0], [1], [0, 0, 1, 1], [], []>} : vector<16x8xf32>, vector<8x16xf32>, vector<16x16xf32> -> vector<16x16xf32>
    %496 = arith.addf %462, %495 : vector<16x16xf32>
    %c2_i32_232 = arith.constant 2 : i32
    %497 = vector.broadcast %c2_i32_232 : i32 to vector<1x16xi32>
    %498 = arith.muli %497, %322 : vector<1x16xi32>
    %c0_i32_233 = arith.constant 0 : i32
    %499 = vector.broadcast %c0_i32_233 : i32 to vector<1x16xi32>
    %500 = arith.addi %498, %499 : vector<1x16xi32>
    %c2_i32_234 = arith.constant 2 : i32
    %501 = vector.broadcast %c2_i32_234 : i32 to vector<1x16xi32>
    %502 = arith.muli %501, %324 : vector<1x16xi32>
    %c1_i32_235 = arith.constant 1 : i32
    %503 = vector.broadcast %c1_i32_235 : i32 to vector<1x16xi32>
    %504 = arith.addi %502, %503 : vector<1x16xi32>
    %c0_i32_236 = arith.constant 0 : i32
    %505 = vector.broadcast %c0_i32_236 : i32 to vector<1x16xi32>
    %506 = arith.cmpi sge, %500, %505 : vector<1x16xi32>
    %c8_i32_237 = arith.constant 8 : i32
    %507 = vector.broadcast %c8_i32_237 : i32 to vector<1x16xi32>
    %508 = arith.cmpi slt, %500, %507 : vector<1x16xi32>
    %509 = arith.andi %506, %508 : vector<1x16xi1>
    %c0_i32_238 = arith.constant 0 : i32
    %510 = vector.broadcast %c0_i32_238 : i32 to vector<1x16xi32>
    %511 = arith.cmpi sge, %504, %510 : vector<1x16xi32>
    %512 = arith.andi %509, %511 : vector<1x16xi1>
    %c8_i32_239 = arith.constant 8 : i32
    %513 = vector.broadcast %c8_i32_239 : i32 to vector<1x16xi32>
    %514 = arith.cmpi slt, %504, %513 : vector<1x16xi32>
    %515 = arith.andi %512, %514 : vector<1x16xi1>
    %c8_i32_240 = arith.constant 8 : i32
    %516 = vector.broadcast %c8_i32_240 : i32 to vector<1x16xi32>
    %517 = arith.muli %500, %516 : vector<1x16xi32>
    %518 = arith.addi %517, %504 : vector<1x16xi32>
    %c-1_i32_241 = arith.constant -1 : i32
    %519 = vector.broadcast %c-1_i32_241 : i32 to vector<1x16xi32>
    %520 = arith.select %515, %518, %519 : vector<1x16xi1>, vector<1x16xi32>
    %521 = vector.broadcast %520 : vector<1x16xi32> to vector<64x16xi32>
    %522 = arith.cmpi eq, %325, %521 : vector<64x16xi32>
    %cst_242 = arith.constant 1.000000e+00 : f32
    %cst_243 = arith.constant 0.000000e+00 : f32
    %523 = vector.broadcast %cst_242 : f32 to vector<64x16xf32>
    %524 = vector.broadcast %cst_243 : f32 to vector<64x16xf32>
    %525 = arith.select %522, %523, %524 : vector<64x16xi1>, vector<64x16xf32>
    %cst_244 = arith.constant dense<0.000000e+00> : vector<8x16xf32>
    %526 = tpu.matmul %319, %525, %cst_244 {dimension_numbers = #tpu.dot_dimension_numbers<[1], [0], [0], [1], [0, 0, 1, 1], [], []>} : vector<8x64xf32>, vector<64x16xf32>, vector<8x16xf32> -> vector<8x16xf32>
    %c5_245 = arith.constant 5 : index
    %c0_246 = arith.constant 0 : index
    %c0_247 = arith.constant 0 : index
    %527 = vector.load %arg4[%c5_245, %c0_246, %c0_247] : memref<9x16x8xf32, #tpu.memory_space<vmem>>, vector<1x16x8xf32>
    %528 = vector.shape_cast %527 : vector<1x16x8xf32> to vector<16x8xf32>
    %cst_248 = arith.constant dense<0.000000e+00> : vector<16x16xf32>
    %529 = tpu.matmul %528, %526, %cst_248 {dimension_numbers = #tpu.dot_dimension_numbers<[1], [0], [0], [1], [0, 0, 1, 1], [], []>} : vector<16x8xf32>, vector<8x16xf32>, vector<16x16xf32> -> vector<16x16xf32>
    %530 = arith.addf %496, %529 : vector<16x16xf32>
    %c2_i32_249 = arith.constant 2 : i32
    %531 = vector.broadcast %c2_i32_249 : i32 to vector<1x16xi32>
    %532 = arith.muli %531, %322 : vector<1x16xi32>
    %c1_i32_250 = arith.constant 1 : i32
    %533 = vector.broadcast %c1_i32_250 : i32 to vector<1x16xi32>
    %534 = arith.addi %532, %533 : vector<1x16xi32>
    %c2_i32_251 = arith.constant 2 : i32
    %535 = vector.broadcast %c2_i32_251 : i32 to vector<1x16xi32>
    %536 = arith.muli %535, %324 : vector<1x16xi32>
    %c-1_i32_252 = arith.constant -1 : i32
    %537 = vector.broadcast %c-1_i32_252 : i32 to vector<1x16xi32>
    %538 = arith.addi %536, %537 : vector<1x16xi32>
    %c0_i32_253 = arith.constant 0 : i32
    %539 = vector.broadcast %c0_i32_253 : i32 to vector<1x16xi32>
    %540 = arith.cmpi sge, %534, %539 : vector<1x16xi32>
    %c8_i32_254 = arith.constant 8 : i32
    %541 = vector.broadcast %c8_i32_254 : i32 to vector<1x16xi32>
    %542 = arith.cmpi slt, %534, %541 : vector<1x16xi32>
    %543 = arith.andi %540, %542 : vector<1x16xi1>
    %c0_i32_255 = arith.constant 0 : i32
    %544 = vector.broadcast %c0_i32_255 : i32 to vector<1x16xi32>
    %545 = arith.cmpi sge, %538, %544 : vector<1x16xi32>
    %546 = arith.andi %543, %545 : vector<1x16xi1>
    %c8_i32_256 = arith.constant 8 : i32
    %547 = vector.broadcast %c8_i32_256 : i32 to vector<1x16xi32>
    %548 = arith.cmpi slt, %538, %547 : vector<1x16xi32>
    %549 = arith.andi %546, %548 : vector<1x16xi1>
    %c8_i32_257 = arith.constant 8 : i32
    %550 = vector.broadcast %c8_i32_257 : i32 to vector<1x16xi32>
    %551 = arith.muli %534, %550 : vector<1x16xi32>
    %552 = arith.addi %551, %538 : vector<1x16xi32>
    %c-1_i32_258 = arith.constant -1 : i32
    %553 = vector.broadcast %c-1_i32_258 : i32 to vector<1x16xi32>
    %554 = arith.select %549, %552, %553 : vector<1x16xi1>, vector<1x16xi32>
    %555 = vector.broadcast %554 : vector<1x16xi32> to vector<64x16xi32>
    %556 = arith.cmpi eq, %325, %555 : vector<64x16xi32>
    %cst_259 = arith.constant 1.000000e+00 : f32
    %cst_260 = arith.constant 0.000000e+00 : f32
    %557 = vector.broadcast %cst_259 : f32 to vector<64x16xf32>
    %558 = vector.broadcast %cst_260 : f32 to vector<64x16xf32>
    %559 = arith.select %556, %557, %558 : vector<64x16xi1>, vector<64x16xf32>
    %cst_261 = arith.constant dense<0.000000e+00> : vector<8x16xf32>
    %560 = tpu.matmul %319, %559, %cst_261 {dimension_numbers = #tpu.dot_dimension_numbers<[1], [0], [0], [1], [0, 0, 1, 1], [], []>} : vector<8x64xf32>, vector<64x16xf32>, vector<8x16xf32> -> vector<8x16xf32>
    %c6_262 = arith.constant 6 : index
    %c0_263 = arith.constant 0 : index
    %c0_264 = arith.constant 0 : index
    %561 = vector.load %arg4[%c6_262, %c0_263, %c0_264] : memref<9x16x8xf32, #tpu.memory_space<vmem>>, vector<1x16x8xf32>
    %562 = vector.shape_cast %561 : vector<1x16x8xf32> to vector<16x8xf32>
    %cst_265 = arith.constant dense<0.000000e+00> : vector<16x16xf32>
    %563 = tpu.matmul %562, %560, %cst_265 {dimension_numbers = #tpu.dot_dimension_numbers<[1], [0], [0], [1], [0, 0, 1, 1], [], []>} : vector<16x8xf32>, vector<8x16xf32>, vector<16x16xf32> -> vector<16x16xf32>
    %564 = arith.addf %530, %563 : vector<16x16xf32>
    %c2_i32_266 = arith.constant 2 : i32
    %565 = vector.broadcast %c2_i32_266 : i32 to vector<1x16xi32>
    %566 = arith.muli %565, %322 : vector<1x16xi32>
    %c1_i32_267 = arith.constant 1 : i32
    %567 = vector.broadcast %c1_i32_267 : i32 to vector<1x16xi32>
    %568 = arith.addi %566, %567 : vector<1x16xi32>
    %c2_i32_268 = arith.constant 2 : i32
    %569 = vector.broadcast %c2_i32_268 : i32 to vector<1x16xi32>
    %570 = arith.muli %569, %324 : vector<1x16xi32>
    %c0_i32_269 = arith.constant 0 : i32
    %571 = vector.broadcast %c0_i32_269 : i32 to vector<1x16xi32>
    %572 = arith.addi %570, %571 : vector<1x16xi32>
    %c0_i32_270 = arith.constant 0 : i32
    %573 = vector.broadcast %c0_i32_270 : i32 to vector<1x16xi32>
    %574 = arith.cmpi sge, %568, %573 : vector<1x16xi32>
    %c8_i32_271 = arith.constant 8 : i32
    %575 = vector.broadcast %c8_i32_271 : i32 to vector<1x16xi32>
    %576 = arith.cmpi slt, %568, %575 : vector<1x16xi32>
    %577 = arith.andi %574, %576 : vector<1x16xi1>
    %c0_i32_272 = arith.constant 0 : i32
    %578 = vector.broadcast %c0_i32_272 : i32 to vector<1x16xi32>
    %579 = arith.cmpi sge, %572, %578 : vector<1x16xi32>
    %580 = arith.andi %577, %579 : vector<1x16xi1>
    %c8_i32_273 = arith.constant 8 : i32
    %581 = vector.broadcast %c8_i32_273 : i32 to vector<1x16xi32>
    %582 = arith.cmpi slt, %572, %581 : vector<1x16xi32>
    %583 = arith.andi %580, %582 : vector<1x16xi1>
    %c8_i32_274 = arith.constant 8 : i32
    %584 = vector.broadcast %c8_i32_274 : i32 to vector<1x16xi32>
    %585 = arith.muli %568, %584 : vector<1x16xi32>
    %586 = arith.addi %585, %572 : vector<1x16xi32>
    %c-1_i32_275 = arith.constant -1 : i32
    %587 = vector.broadcast %c-1_i32_275 : i32 to vector<1x16xi32>
    %588 = arith.select %583, %586, %587 : vector<1x16xi1>, vector<1x16xi32>
    %589 = vector.broadcast %588 : vector<1x16xi32> to vector<64x16xi32>
    %590 = arith.cmpi eq, %325, %589 : vector<64x16xi32>
    %cst_276 = arith.constant 1.000000e+00 : f32
    %cst_277 = arith.constant 0.000000e+00 : f32
    %591 = vector.broadcast %cst_276 : f32 to vector<64x16xf32>
    %592 = vector.broadcast %cst_277 : f32 to vector<64x16xf32>
    %593 = arith.select %590, %591, %592 : vector<64x16xi1>, vector<64x16xf32>
    %cst_278 = arith.constant dense<0.000000e+00> : vector<8x16xf32>
    %594 = tpu.matmul %319, %593, %cst_278 {dimension_numbers = #tpu.dot_dimension_numbers<[1], [0], [0], [1], [0, 0, 1, 1], [], []>} : vector<8x64xf32>, vector<64x16xf32>, vector<8x16xf32> -> vector<8x16xf32>
    %c7_279 = arith.constant 7 : index
    %c0_280 = arith.constant 0 : index
    %c0_281 = arith.constant 0 : index
    %595 = vector.load %arg4[%c7_279, %c0_280, %c0_281] : memref<9x16x8xf32, #tpu.memory_space<vmem>>, vector<1x16x8xf32>
    %596 = vector.shape_cast %595 : vector<1x16x8xf32> to vector<16x8xf32>
    %cst_282 = arith.constant dense<0.000000e+00> : vector<16x16xf32>
    %597 = tpu.matmul %596, %594, %cst_282 {dimension_numbers = #tpu.dot_dimension_numbers<[1], [0], [0], [1], [0, 0, 1, 1], [], []>} : vector<16x8xf32>, vector<8x16xf32>, vector<16x16xf32> -> vector<16x16xf32>
    %598 = arith.addf %564, %597 : vector<16x16xf32>
    %c2_i32_283 = arith.constant 2 : i32
    %599 = vector.broadcast %c2_i32_283 : i32 to vector<1x16xi32>
    %600 = arith.muli %599, %322 : vector<1x16xi32>
    %c1_i32_284 = arith.constant 1 : i32
    %601 = vector.broadcast %c1_i32_284 : i32 to vector<1x16xi32>
    %602 = arith.addi %600, %601 : vector<1x16xi32>
    %c2_i32_285 = arith.constant 2 : i32
    %603 = vector.broadcast %c2_i32_285 : i32 to vector<1x16xi32>
    %604 = arith.muli %603, %324 : vector<1x16xi32>
    %c1_i32_286 = arith.constant 1 : i32
    %605 = vector.broadcast %c1_i32_286 : i32 to vector<1x16xi32>
    %606 = arith.addi %604, %605 : vector<1x16xi32>
    %c0_i32_287 = arith.constant 0 : i32
    %607 = vector.broadcast %c0_i32_287 : i32 to vector<1x16xi32>
    %608 = arith.cmpi sge, %602, %607 : vector<1x16xi32>
    %c8_i32_288 = arith.constant 8 : i32
    %609 = vector.broadcast %c8_i32_288 : i32 to vector<1x16xi32>
    %610 = arith.cmpi slt, %602, %609 : vector<1x16xi32>
    %611 = arith.andi %608, %610 : vector<1x16xi1>
    %c0_i32_289 = arith.constant 0 : i32
    %612 = vector.broadcast %c0_i32_289 : i32 to vector<1x16xi32>
    %613 = arith.cmpi sge, %606, %612 : vector<1x16xi32>
    %614 = arith.andi %611, %613 : vector<1x16xi1>
    %c8_i32_290 = arith.constant 8 : i32
    %615 = vector.broadcast %c8_i32_290 : i32 to vector<1x16xi32>
    %616 = arith.cmpi slt, %606, %615 : vector<1x16xi32>
    %617 = arith.andi %614, %616 : vector<1x16xi1>
    %c8_i32_291 = arith.constant 8 : i32
    %618 = vector.broadcast %c8_i32_291 : i32 to vector<1x16xi32>
    %619 = arith.muli %602, %618 : vector<1x16xi32>
    %620 = arith.addi %619, %606 : vector<1x16xi32>
    %c-1_i32_292 = arith.constant -1 : i32
    %621 = vector.broadcast %c-1_i32_292 : i32 to vector<1x16xi32>
    %622 = arith.select %617, %620, %621 : vector<1x16xi1>, vector<1x16xi32>
    %623 = vector.broadcast %622 : vector<1x16xi32> to vector<64x16xi32>
    %624 = arith.cmpi eq, %325, %623 : vector<64x16xi32>
    %cst_293 = arith.constant 1.000000e+00 : f32
    %cst_294 = arith.constant 0.000000e+00 : f32
    %625 = vector.broadcast %cst_293 : f32 to vector<64x16xf32>
    %626 = vector.broadcast %cst_294 : f32 to vector<64x16xf32>
    %627 = arith.select %624, %625, %626 : vector<64x16xi1>, vector<64x16xf32>
    %cst_295 = arith.constant dense<0.000000e+00> : vector<8x16xf32>
    %628 = tpu.matmul %319, %627, %cst_295 {dimension_numbers = #tpu.dot_dimension_numbers<[1], [0], [0], [1], [0, 0, 1, 1], [], []>} : vector<8x64xf32>, vector<64x16xf32>, vector<8x16xf32> -> vector<8x16xf32>
    %c8_296 = arith.constant 8 : index
    %c0_297 = arith.constant 0 : index
    %c0_298 = arith.constant 0 : index
    %629 = vector.load %arg4[%c8_296, %c0_297, %c0_298] : memref<9x16x8xf32, #tpu.memory_space<vmem>>, vector<1x16x8xf32>
    %630 = vector.shape_cast %629 : vector<1x16x8xf32> to vector<16x8xf32>
    %cst_299 = arith.constant dense<0.000000e+00> : vector<16x16xf32>
    %631 = tpu.matmul %630, %628, %cst_299 {dimension_numbers = #tpu.dot_dimension_numbers<[1], [0], [0], [1], [0, 0, 1, 1], [], []>} : vector<16x8xf32>, vector<8x16xf32>, vector<16x16xf32> -> vector<16x16xf32>
    %632 = arith.addf %598, %631 : vector<16x16xf32>
    %c0_300 = arith.constant 0 : index
    %c0_301 = arith.constant 0 : index
    %633 = vector.load %arg5[%c0_300, %c0_301] : memref<16x1xf32, #tpu.memory_space<vmem>>, vector<16x1xf32>
    %634 = vector.broadcast %633 : vector<16x1xf32> to vector<16x16xf32>
    %635 = arith.addf %632, %634 : vector<16x16xf32>
    %cst_302 = arith.constant 0.000000e+00 : f32
    %636 = vector.broadcast %cst_302 : f32 to vector<16x16xf32>
    %637 = arith.maximumf %635, %636 : vector<16x16xf32>
    %638 = tpu.iota {dimensions = array<i32: 1>} : vector<1x64xi32>
    %c3_i32_303 = arith.constant 3 : i32
    %639 = vector.broadcast %c3_i32_303 : i32 to vector<1x64xi32>
    %640 = arith.shrsi %638, %639 : vector<1x64xi32>
    %c7_i32_304 = arith.constant 7 : i32
    %641 = vector.broadcast %c7_i32_304 : i32 to vector<1x64xi32>
    %642 = arith.andi %638, %641 : vector<1x64xi32>
    %643 = tpu.iota {dimensions = array<i32: 0>} : vector<16x64xi32>
    %cst_305 = arith.constant 0.000000e+00 : f32
    %644 = vector.broadcast %cst_305 : f32 to vector<8x64xf32>
    %c1_i32_306 = arith.constant 1 : i32
    %645 = vector.broadcast %c1_i32_306 : i32 to vector<1x64xi32>
    %646 = arith.addi %640, %645 : vector<1x64xi32>
    %c2_i32_307 = arith.constant 2 : i32
    %647 = vector.broadcast %c2_i32_307 : i32 to vector<1x64xi32>
    %648 = arith.addi %646, %647 : vector<1x64xi32>
    %c1_i32_308 = arith.constant 1 : i32
    %649 = vector.broadcast %c1_i32_308 : i32 to vector<1x64xi32>
    %650 = arith.addi %642, %649 : vector<1x64xi32>
    %c2_i32_309 = arith.constant 2 : i32
    %651 = vector.broadcast %c2_i32_309 : i32 to vector<1x64xi32>
    %652 = arith.addi %650, %651 : vector<1x64xi32>
    %c1_i32_310 = arith.constant 1 : i32
    %653 = vector.broadcast %c1_i32_310 : i32 to vector<1x64xi32>
    %654 = arith.shrsi %648, %653 : vector<1x64xi32>
    %c1_i32_311 = arith.constant 1 : i32
    %655 = vector.broadcast %c1_i32_311 : i32 to vector<1x64xi32>
    %656 = arith.subi %654, %655 : vector<1x64xi32>
    %c1_i32_312 = arith.constant 1 : i32
    %657 = vector.broadcast %c1_i32_312 : i32 to vector<1x64xi32>
    %658 = arith.shrsi %652, %657 : vector<1x64xi32>
    %c1_i32_313 = arith.constant 1 : i32
    %659 = vector.broadcast %c1_i32_313 : i32 to vector<1x64xi32>
    %660 = arith.subi %658, %659 : vector<1x64xi32>
    %c1_i32_314 = arith.constant 1 : i32
    %661 = vector.broadcast %c1_i32_314 : i32 to vector<1x64xi32>
    %662 = arith.andi %648, %661 : vector<1x64xi32>
    %c0_i32_315 = arith.constant 0 : i32
    %663 = vector.broadcast %c0_i32_315 : i32 to vector<1x64xi32>
    %664 = arith.cmpi eq, %662, %663 : vector<1x64xi32>
    %c0_i32_316 = arith.constant 0 : i32
    %665 = vector.broadcast %c0_i32_316 : i32 to vector<1x64xi32>
    %666 = arith.cmpi sge, %656, %665 : vector<1x64xi32>
    %667 = arith.andi %664, %666 : vector<1x64xi1>
    %c4_i32 = arith.constant 4 : i32
    %668 = vector.broadcast %c4_i32 : i32 to vector<1x64xi32>
    %669 = arith.cmpi slt, %656, %668 : vector<1x64xi32>
    %670 = arith.andi %667, %669 : vector<1x64xi1>
    %c1_i32_317 = arith.constant 1 : i32
    %671 = vector.broadcast %c1_i32_317 : i32 to vector<1x64xi32>
    %672 = arith.andi %652, %671 : vector<1x64xi32>
    %c0_i32_318 = arith.constant 0 : i32
    %673 = vector.broadcast %c0_i32_318 : i32 to vector<1x64xi32>
    %674 = arith.cmpi eq, %672, %673 : vector<1x64xi32>
    %675 = arith.andi %670, %674 : vector<1x64xi1>
    %c0_i32_319 = arith.constant 0 : i32
    %676 = vector.broadcast %c0_i32_319 : i32 to vector<1x64xi32>
    %677 = arith.cmpi sge, %660, %676 : vector<1x64xi32>
    %678 = arith.andi %675, %677 : vector<1x64xi1>
    %c4_i32_320 = arith.constant 4 : i32
    %679 = vector.broadcast %c4_i32_320 : i32 to vector<1x64xi32>
    %680 = arith.cmpi slt, %660, %679 : vector<1x64xi32>
    %681 = arith.andi %678, %680 : vector<1x64xi1>
    %c4_i32_321 = arith.constant 4 : i32
    %682 = vector.broadcast %c4_i32_321 : i32 to vector<1x64xi32>
    %683 = arith.muli %656, %682 : vector<1x64xi32>
    %684 = arith.addi %683, %660 : vector<1x64xi32>
    %c-1_i32_322 = arith.constant -1 : i32
    %685 = vector.broadcast %c-1_i32_322 : i32 to vector<1x64xi32>
    %686 = arith.select %681, %684, %685 : vector<1x64xi1>, vector<1x64xi32>
    %687 = vector.broadcast %686 : vector<1x64xi32> to vector<16x64xi32>
    %688 = arith.cmpi eq, %643, %687 : vector<16x64xi32>
    %cst_323 = arith.constant 1.000000e+00 : f32
    %cst_324 = arith.constant 0.000000e+00 : f32
    %689 = vector.broadcast %cst_323 : f32 to vector<16x64xf32>
    %690 = vector.broadcast %cst_324 : f32 to vector<16x64xf32>
    %691 = arith.select %688, %689, %690 : vector<16x64xi1>, vector<16x64xf32>
    %cst_325 = arith.constant dense<0.000000e+00> : vector<16x64xf32>
    %692 = tpu.matmul %637, %691, %cst_325 {dimension_numbers = #tpu.dot_dimension_numbers<[1], [0], [0], [1], [0, 0, 1, 1], [], []>} : vector<16x16xf32>, vector<16x64xf32>, vector<16x64xf32> -> vector<16x64xf32>
    %c0_326 = arith.constant 0 : index
    %c0_327 = arith.constant 0 : index
    %c0_328 = arith.constant 0 : index
    %693 = vector.load %arg6[%c0_326, %c0_327, %c0_328] : memref<9x8x16xf32, #tpu.memory_space<vmem>>, vector<1x8x16xf32>
    %694 = vector.shape_cast %693 : vector<1x8x16xf32> to vector<8x16xf32>
    %cst_329 = arith.constant dense<0.000000e+00> : vector<8x64xf32>
    %695 = tpu.matmul %694, %692, %cst_329 {dimension_numbers = #tpu.dot_dimension_numbers<[1], [0], [0], [1], [0, 0, 1, 1], [], []>} : vector<8x16xf32>, vector<16x64xf32>, vector<8x64xf32> -> vector<8x64xf32>
    %696 = arith.addf %644, %695 : vector<8x64xf32>
    %c1_i32_330 = arith.constant 1 : i32
    %697 = vector.broadcast %c1_i32_330 : i32 to vector<1x64xi32>
    %698 = arith.addi %640, %697 : vector<1x64xi32>
    %c2_i32_331 = arith.constant 2 : i32
    %699 = vector.broadcast %c2_i32_331 : i32 to vector<1x64xi32>
    %700 = arith.addi %698, %699 : vector<1x64xi32>
    %c0_i32_332 = arith.constant 0 : i32
    %701 = vector.broadcast %c0_i32_332 : i32 to vector<1x64xi32>
    %702 = arith.addi %642, %701 : vector<1x64xi32>
    %c2_i32_333 = arith.constant 2 : i32
    %703 = vector.broadcast %c2_i32_333 : i32 to vector<1x64xi32>
    %704 = arith.addi %702, %703 : vector<1x64xi32>
    %c1_i32_334 = arith.constant 1 : i32
    %705 = vector.broadcast %c1_i32_334 : i32 to vector<1x64xi32>
    %706 = arith.shrsi %700, %705 : vector<1x64xi32>
    %c1_i32_335 = arith.constant 1 : i32
    %707 = vector.broadcast %c1_i32_335 : i32 to vector<1x64xi32>
    %708 = arith.subi %706, %707 : vector<1x64xi32>
    %c1_i32_336 = arith.constant 1 : i32
    %709 = vector.broadcast %c1_i32_336 : i32 to vector<1x64xi32>
    %710 = arith.shrsi %704, %709 : vector<1x64xi32>
    %c1_i32_337 = arith.constant 1 : i32
    %711 = vector.broadcast %c1_i32_337 : i32 to vector<1x64xi32>
    %712 = arith.subi %710, %711 : vector<1x64xi32>
    %c1_i32_338 = arith.constant 1 : i32
    %713 = vector.broadcast %c1_i32_338 : i32 to vector<1x64xi32>
    %714 = arith.andi %700, %713 : vector<1x64xi32>
    %c0_i32_339 = arith.constant 0 : i32
    %715 = vector.broadcast %c0_i32_339 : i32 to vector<1x64xi32>
    %716 = arith.cmpi eq, %714, %715 : vector<1x64xi32>
    %c0_i32_340 = arith.constant 0 : i32
    %717 = vector.broadcast %c0_i32_340 : i32 to vector<1x64xi32>
    %718 = arith.cmpi sge, %708, %717 : vector<1x64xi32>
    %719 = arith.andi %716, %718 : vector<1x64xi1>
    %c4_i32_341 = arith.constant 4 : i32
    %720 = vector.broadcast %c4_i32_341 : i32 to vector<1x64xi32>
    %721 = arith.cmpi slt, %708, %720 : vector<1x64xi32>
    %722 = arith.andi %719, %721 : vector<1x64xi1>
    %c1_i32_342 = arith.constant 1 : i32
    %723 = vector.broadcast %c1_i32_342 : i32 to vector<1x64xi32>
    %724 = arith.andi %704, %723 : vector<1x64xi32>
    %c0_i32_343 = arith.constant 0 : i32
    %725 = vector.broadcast %c0_i32_343 : i32 to vector<1x64xi32>
    %726 = arith.cmpi eq, %724, %725 : vector<1x64xi32>
    %727 = arith.andi %722, %726 : vector<1x64xi1>
    %c0_i32_344 = arith.constant 0 : i32
    %728 = vector.broadcast %c0_i32_344 : i32 to vector<1x64xi32>
    %729 = arith.cmpi sge, %712, %728 : vector<1x64xi32>
    %730 = arith.andi %727, %729 : vector<1x64xi1>
    %c4_i32_345 = arith.constant 4 : i32
    %731 = vector.broadcast %c4_i32_345 : i32 to vector<1x64xi32>
    %732 = arith.cmpi slt, %712, %731 : vector<1x64xi32>
    %733 = arith.andi %730, %732 : vector<1x64xi1>
    %c4_i32_346 = arith.constant 4 : i32
    %734 = vector.broadcast %c4_i32_346 : i32 to vector<1x64xi32>
    %735 = arith.muli %708, %734 : vector<1x64xi32>
    %736 = arith.addi %735, %712 : vector<1x64xi32>
    %c-1_i32_347 = arith.constant -1 : i32
    %737 = vector.broadcast %c-1_i32_347 : i32 to vector<1x64xi32>
    %738 = arith.select %733, %736, %737 : vector<1x64xi1>, vector<1x64xi32>
    %739 = vector.broadcast %738 : vector<1x64xi32> to vector<16x64xi32>
    %740 = arith.cmpi eq, %643, %739 : vector<16x64xi32>
    %cst_348 = arith.constant 1.000000e+00 : f32
    %cst_349 = arith.constant 0.000000e+00 : f32
    %741 = vector.broadcast %cst_348 : f32 to vector<16x64xf32>
    %742 = vector.broadcast %cst_349 : f32 to vector<16x64xf32>
    %743 = arith.select %740, %741, %742 : vector<16x64xi1>, vector<16x64xf32>
    %cst_350 = arith.constant dense<0.000000e+00> : vector<16x64xf32>
    %744 = tpu.matmul %637, %743, %cst_350 {dimension_numbers = #tpu.dot_dimension_numbers<[1], [0], [0], [1], [0, 0, 1, 1], [], []>} : vector<16x16xf32>, vector<16x64xf32>, vector<16x64xf32> -> vector<16x64xf32>
    %c1_351 = arith.constant 1 : index
    %c0_352 = arith.constant 0 : index
    %c0_353 = arith.constant 0 : index
    %745 = vector.load %arg6[%c1_351, %c0_352, %c0_353] : memref<9x8x16xf32, #tpu.memory_space<vmem>>, vector<1x8x16xf32>
    %746 = vector.shape_cast %745 : vector<1x8x16xf32> to vector<8x16xf32>
    %cst_354 = arith.constant dense<0.000000e+00> : vector<8x64xf32>
    %747 = tpu.matmul %746, %744, %cst_354 {dimension_numbers = #tpu.dot_dimension_numbers<[1], [0], [0], [1], [0, 0, 1, 1], [], []>} : vector<8x16xf32>, vector<16x64xf32>, vector<8x64xf32> -> vector<8x64xf32>
    %748 = arith.addf %696, %747 : vector<8x64xf32>
    %c1_i32_355 = arith.constant 1 : i32
    %749 = vector.broadcast %c1_i32_355 : i32 to vector<1x64xi32>
    %750 = arith.addi %640, %749 : vector<1x64xi32>
    %c2_i32_356 = arith.constant 2 : i32
    %751 = vector.broadcast %c2_i32_356 : i32 to vector<1x64xi32>
    %752 = arith.addi %750, %751 : vector<1x64xi32>
    %c-1_i32_357 = arith.constant -1 : i32
    %753 = vector.broadcast %c-1_i32_357 : i32 to vector<1x64xi32>
    %754 = arith.addi %642, %753 : vector<1x64xi32>
    %c2_i32_358 = arith.constant 2 : i32
    %755 = vector.broadcast %c2_i32_358 : i32 to vector<1x64xi32>
    %756 = arith.addi %754, %755 : vector<1x64xi32>
    %c1_i32_359 = arith.constant 1 : i32
    %757 = vector.broadcast %c1_i32_359 : i32 to vector<1x64xi32>
    %758 = arith.shrsi %752, %757 : vector<1x64xi32>
    %c1_i32_360 = arith.constant 1 : i32
    %759 = vector.broadcast %c1_i32_360 : i32 to vector<1x64xi32>
    %760 = arith.subi %758, %759 : vector<1x64xi32>
    %c1_i32_361 = arith.constant 1 : i32
    %761 = vector.broadcast %c1_i32_361 : i32 to vector<1x64xi32>
    %762 = arith.shrsi %756, %761 : vector<1x64xi32>
    %c1_i32_362 = arith.constant 1 : i32
    %763 = vector.broadcast %c1_i32_362 : i32 to vector<1x64xi32>
    %764 = arith.subi %762, %763 : vector<1x64xi32>
    %c1_i32_363 = arith.constant 1 : i32
    %765 = vector.broadcast %c1_i32_363 : i32 to vector<1x64xi32>
    %766 = arith.andi %752, %765 : vector<1x64xi32>
    %c0_i32_364 = arith.constant 0 : i32
    %767 = vector.broadcast %c0_i32_364 : i32 to vector<1x64xi32>
    %768 = arith.cmpi eq, %766, %767 : vector<1x64xi32>
    %c0_i32_365 = arith.constant 0 : i32
    %769 = vector.broadcast %c0_i32_365 : i32 to vector<1x64xi32>
    %770 = arith.cmpi sge, %760, %769 : vector<1x64xi32>
    %771 = arith.andi %768, %770 : vector<1x64xi1>
    %c4_i32_366 = arith.constant 4 : i32
    %772 = vector.broadcast %c4_i32_366 : i32 to vector<1x64xi32>
    %773 = arith.cmpi slt, %760, %772 : vector<1x64xi32>
    %774 = arith.andi %771, %773 : vector<1x64xi1>
    %c1_i32_367 = arith.constant 1 : i32
    %775 = vector.broadcast %c1_i32_367 : i32 to vector<1x64xi32>
    %776 = arith.andi %756, %775 : vector<1x64xi32>
    %c0_i32_368 = arith.constant 0 : i32
    %777 = vector.broadcast %c0_i32_368 : i32 to vector<1x64xi32>
    %778 = arith.cmpi eq, %776, %777 : vector<1x64xi32>
    %779 = arith.andi %774, %778 : vector<1x64xi1>
    %c0_i32_369 = arith.constant 0 : i32
    %780 = vector.broadcast %c0_i32_369 : i32 to vector<1x64xi32>
    %781 = arith.cmpi sge, %764, %780 : vector<1x64xi32>
    %782 = arith.andi %779, %781 : vector<1x64xi1>
    %c4_i32_370 = arith.constant 4 : i32
    %783 = vector.broadcast %c4_i32_370 : i32 to vector<1x64xi32>
    %784 = arith.cmpi slt, %764, %783 : vector<1x64xi32>
    %785 = arith.andi %782, %784 : vector<1x64xi1>
    %c4_i32_371 = arith.constant 4 : i32
    %786 = vector.broadcast %c4_i32_371 : i32 to vector<1x64xi32>
    %787 = arith.muli %760, %786 : vector<1x64xi32>
    %788 = arith.addi %787, %764 : vector<1x64xi32>
    %c-1_i32_372 = arith.constant -1 : i32
    %789 = vector.broadcast %c-1_i32_372 : i32 to vector<1x64xi32>
    %790 = arith.select %785, %788, %789 : vector<1x64xi1>, vector<1x64xi32>
    %791 = vector.broadcast %790 : vector<1x64xi32> to vector<16x64xi32>
    %792 = arith.cmpi eq, %643, %791 : vector<16x64xi32>
    %cst_373 = arith.constant 1.000000e+00 : f32
    %cst_374 = arith.constant 0.000000e+00 : f32
    %793 = vector.broadcast %cst_373 : f32 to vector<16x64xf32>
    %794 = vector.broadcast %cst_374 : f32 to vector<16x64xf32>
    %795 = arith.select %792, %793, %794 : vector<16x64xi1>, vector<16x64xf32>
    %cst_375 = arith.constant dense<0.000000e+00> : vector<16x64xf32>
    %796 = tpu.matmul %637, %795, %cst_375 {dimension_numbers = #tpu.dot_dimension_numbers<[1], [0], [0], [1], [0, 0, 1, 1], [], []>} : vector<16x16xf32>, vector<16x64xf32>, vector<16x64xf32> -> vector<16x64xf32>
    %c2_376 = arith.constant 2 : index
    %c0_377 = arith.constant 0 : index
    %c0_378 = arith.constant 0 : index
    %797 = vector.load %arg6[%c2_376, %c0_377, %c0_378] : memref<9x8x16xf32, #tpu.memory_space<vmem>>, vector<1x8x16xf32>
    %798 = vector.shape_cast %797 : vector<1x8x16xf32> to vector<8x16xf32>
    %cst_379 = arith.constant dense<0.000000e+00> : vector<8x64xf32>
    %799 = tpu.matmul %798, %796, %cst_379 {dimension_numbers = #tpu.dot_dimension_numbers<[1], [0], [0], [1], [0, 0, 1, 1], [], []>} : vector<8x16xf32>, vector<16x64xf32>, vector<8x64xf32> -> vector<8x64xf32>
    %800 = arith.addf %748, %799 : vector<8x64xf32>
    %c0_i32_380 = arith.constant 0 : i32
    %801 = vector.broadcast %c0_i32_380 : i32 to vector<1x64xi32>
    %802 = arith.addi %640, %801 : vector<1x64xi32>
    %c2_i32_381 = arith.constant 2 : i32
    %803 = vector.broadcast %c2_i32_381 : i32 to vector<1x64xi32>
    %804 = arith.addi %802, %803 : vector<1x64xi32>
    %c1_i32_382 = arith.constant 1 : i32
    %805 = vector.broadcast %c1_i32_382 : i32 to vector<1x64xi32>
    %806 = arith.addi %642, %805 : vector<1x64xi32>
    %c2_i32_383 = arith.constant 2 : i32
    %807 = vector.broadcast %c2_i32_383 : i32 to vector<1x64xi32>
    %808 = arith.addi %806, %807 : vector<1x64xi32>
    %c1_i32_384 = arith.constant 1 : i32
    %809 = vector.broadcast %c1_i32_384 : i32 to vector<1x64xi32>
    %810 = arith.shrsi %804, %809 : vector<1x64xi32>
    %c1_i32_385 = arith.constant 1 : i32
    %811 = vector.broadcast %c1_i32_385 : i32 to vector<1x64xi32>
    %812 = arith.subi %810, %811 : vector<1x64xi32>
    %c1_i32_386 = arith.constant 1 : i32
    %813 = vector.broadcast %c1_i32_386 : i32 to vector<1x64xi32>
    %814 = arith.shrsi %808, %813 : vector<1x64xi32>
    %c1_i32_387 = arith.constant 1 : i32
    %815 = vector.broadcast %c1_i32_387 : i32 to vector<1x64xi32>
    %816 = arith.subi %814, %815 : vector<1x64xi32>
    %c1_i32_388 = arith.constant 1 : i32
    %817 = vector.broadcast %c1_i32_388 : i32 to vector<1x64xi32>
    %818 = arith.andi %804, %817 : vector<1x64xi32>
    %c0_i32_389 = arith.constant 0 : i32
    %819 = vector.broadcast %c0_i32_389 : i32 to vector<1x64xi32>
    %820 = arith.cmpi eq, %818, %819 : vector<1x64xi32>
    %c0_i32_390 = arith.constant 0 : i32
    %821 = vector.broadcast %c0_i32_390 : i32 to vector<1x64xi32>
    %822 = arith.cmpi sge, %812, %821 : vector<1x64xi32>
    %823 = arith.andi %820, %822 : vector<1x64xi1>
    %c4_i32_391 = arith.constant 4 : i32
    %824 = vector.broadcast %c4_i32_391 : i32 to vector<1x64xi32>
    %825 = arith.cmpi slt, %812, %824 : vector<1x64xi32>
    %826 = arith.andi %823, %825 : vector<1x64xi1>
    %c1_i32_392 = arith.constant 1 : i32
    %827 = vector.broadcast %c1_i32_392 : i32 to vector<1x64xi32>
    %828 = arith.andi %808, %827 : vector<1x64xi32>
    %c0_i32_393 = arith.constant 0 : i32
    %829 = vector.broadcast %c0_i32_393 : i32 to vector<1x64xi32>
    %830 = arith.cmpi eq, %828, %829 : vector<1x64xi32>
    %831 = arith.andi %826, %830 : vector<1x64xi1>
    %c0_i32_394 = arith.constant 0 : i32
    %832 = vector.broadcast %c0_i32_394 : i32 to vector<1x64xi32>
    %833 = arith.cmpi sge, %816, %832 : vector<1x64xi32>
    %834 = arith.andi %831, %833 : vector<1x64xi1>
    %c4_i32_395 = arith.constant 4 : i32
    %835 = vector.broadcast %c4_i32_395 : i32 to vector<1x64xi32>
    %836 = arith.cmpi slt, %816, %835 : vector<1x64xi32>
    %837 = arith.andi %834, %836 : vector<1x64xi1>
    %c4_i32_396 = arith.constant 4 : i32
    %838 = vector.broadcast %c4_i32_396 : i32 to vector<1x64xi32>
    %839 = arith.muli %812, %838 : vector<1x64xi32>
    %840 = arith.addi %839, %816 : vector<1x64xi32>
    %c-1_i32_397 = arith.constant -1 : i32
    %841 = vector.broadcast %c-1_i32_397 : i32 to vector<1x64xi32>
    %842 = arith.select %837, %840, %841 : vector<1x64xi1>, vector<1x64xi32>
    %843 = vector.broadcast %842 : vector<1x64xi32> to vector<16x64xi32>
    %844 = arith.cmpi eq, %643, %843 : vector<16x64xi32>
    %cst_398 = arith.constant 1.000000e+00 : f32
    %cst_399 = arith.constant 0.000000e+00 : f32
    %845 = vector.broadcast %cst_398 : f32 to vector<16x64xf32>
    %846 = vector.broadcast %cst_399 : f32 to vector<16x64xf32>
    %847 = arith.select %844, %845, %846 : vector<16x64xi1>, vector<16x64xf32>
    %cst_400 = arith.constant dense<0.000000e+00> : vector<16x64xf32>
    %848 = tpu.matmul %637, %847, %cst_400 {dimension_numbers = #tpu.dot_dimension_numbers<[1], [0], [0], [1], [0, 0, 1, 1], [], []>} : vector<16x16xf32>, vector<16x64xf32>, vector<16x64xf32> -> vector<16x64xf32>
    %c3_401 = arith.constant 3 : index
    %c0_402 = arith.constant 0 : index
    %c0_403 = arith.constant 0 : index
    %849 = vector.load %arg6[%c3_401, %c0_402, %c0_403] : memref<9x8x16xf32, #tpu.memory_space<vmem>>, vector<1x8x16xf32>
    %850 = vector.shape_cast %849 : vector<1x8x16xf32> to vector<8x16xf32>
    %cst_404 = arith.constant dense<0.000000e+00> : vector<8x64xf32>
    %851 = tpu.matmul %850, %848, %cst_404 {dimension_numbers = #tpu.dot_dimension_numbers<[1], [0], [0], [1], [0, 0, 1, 1], [], []>} : vector<8x16xf32>, vector<16x64xf32>, vector<8x64xf32> -> vector<8x64xf32>
    %852 = arith.addf %800, %851 : vector<8x64xf32>
    %c0_i32_405 = arith.constant 0 : i32
    %853 = vector.broadcast %c0_i32_405 : i32 to vector<1x64xi32>
    %854 = arith.addi %640, %853 : vector<1x64xi32>
    %c2_i32_406 = arith.constant 2 : i32
    %855 = vector.broadcast %c2_i32_406 : i32 to vector<1x64xi32>
    %856 = arith.addi %854, %855 : vector<1x64xi32>
    %c0_i32_407 = arith.constant 0 : i32
    %857 = vector.broadcast %c0_i32_407 : i32 to vector<1x64xi32>
    %858 = arith.addi %642, %857 : vector<1x64xi32>
    %c2_i32_408 = arith.constant 2 : i32
    %859 = vector.broadcast %c2_i32_408 : i32 to vector<1x64xi32>
    %860 = arith.addi %858, %859 : vector<1x64xi32>
    %c1_i32_409 = arith.constant 1 : i32
    %861 = vector.broadcast %c1_i32_409 : i32 to vector<1x64xi32>
    %862 = arith.shrsi %856, %861 : vector<1x64xi32>
    %c1_i32_410 = arith.constant 1 : i32
    %863 = vector.broadcast %c1_i32_410 : i32 to vector<1x64xi32>
    %864 = arith.subi %862, %863 : vector<1x64xi32>
    %c1_i32_411 = arith.constant 1 : i32
    %865 = vector.broadcast %c1_i32_411 : i32 to vector<1x64xi32>
    %866 = arith.shrsi %860, %865 : vector<1x64xi32>
    %c1_i32_412 = arith.constant 1 : i32
    %867 = vector.broadcast %c1_i32_412 : i32 to vector<1x64xi32>
    %868 = arith.subi %866, %867 : vector<1x64xi32>
    %c1_i32_413 = arith.constant 1 : i32
    %869 = vector.broadcast %c1_i32_413 : i32 to vector<1x64xi32>
    %870 = arith.andi %856, %869 : vector<1x64xi32>
    %c0_i32_414 = arith.constant 0 : i32
    %871 = vector.broadcast %c0_i32_414 : i32 to vector<1x64xi32>
    %872 = arith.cmpi eq, %870, %871 : vector<1x64xi32>
    %c0_i32_415 = arith.constant 0 : i32
    %873 = vector.broadcast %c0_i32_415 : i32 to vector<1x64xi32>
    %874 = arith.cmpi sge, %864, %873 : vector<1x64xi32>
    %875 = arith.andi %872, %874 : vector<1x64xi1>
    %c4_i32_416 = arith.constant 4 : i32
    %876 = vector.broadcast %c4_i32_416 : i32 to vector<1x64xi32>
    %877 = arith.cmpi slt, %864, %876 : vector<1x64xi32>
    %878 = arith.andi %875, %877 : vector<1x64xi1>
    %c1_i32_417 = arith.constant 1 : i32
    %879 = vector.broadcast %c1_i32_417 : i32 to vector<1x64xi32>
    %880 = arith.andi %860, %879 : vector<1x64xi32>
    %c0_i32_418 = arith.constant 0 : i32
    %881 = vector.broadcast %c0_i32_418 : i32 to vector<1x64xi32>
    %882 = arith.cmpi eq, %880, %881 : vector<1x64xi32>
    %883 = arith.andi %878, %882 : vector<1x64xi1>
    %c0_i32_419 = arith.constant 0 : i32
    %884 = vector.broadcast %c0_i32_419 : i32 to vector<1x64xi32>
    %885 = arith.cmpi sge, %868, %884 : vector<1x64xi32>
    %886 = arith.andi %883, %885 : vector<1x64xi1>
    %c4_i32_420 = arith.constant 4 : i32
    %887 = vector.broadcast %c4_i32_420 : i32 to vector<1x64xi32>
    %888 = arith.cmpi slt, %868, %887 : vector<1x64xi32>
    %889 = arith.andi %886, %888 : vector<1x64xi1>
    %c4_i32_421 = arith.constant 4 : i32
    %890 = vector.broadcast %c4_i32_421 : i32 to vector<1x64xi32>
    %891 = arith.muli %864, %890 : vector<1x64xi32>
    %892 = arith.addi %891, %868 : vector<1x64xi32>
    %c-1_i32_422 = arith.constant -1 : i32
    %893 = vector.broadcast %c-1_i32_422 : i32 to vector<1x64xi32>
    %894 = arith.select %889, %892, %893 : vector<1x64xi1>, vector<1x64xi32>
    %895 = vector.broadcast %894 : vector<1x64xi32> to vector<16x64xi32>
    %896 = arith.cmpi eq, %643, %895 : vector<16x64xi32>
    %cst_423 = arith.constant 1.000000e+00 : f32
    %cst_424 = arith.constant 0.000000e+00 : f32
    %897 = vector.broadcast %cst_423 : f32 to vector<16x64xf32>
    %898 = vector.broadcast %cst_424 : f32 to vector<16x64xf32>
    %899 = arith.select %896, %897, %898 : vector<16x64xi1>, vector<16x64xf32>
    %cst_425 = arith.constant dense<0.000000e+00> : vector<16x64xf32>
    %900 = tpu.matmul %637, %899, %cst_425 {dimension_numbers = #tpu.dot_dimension_numbers<[1], [0], [0], [1], [0, 0, 1, 1], [], []>} : vector<16x16xf32>, vector<16x64xf32>, vector<16x64xf32> -> vector<16x64xf32>
    %c4_426 = arith.constant 4 : index
    %c0_427 = arith.constant 0 : index
    %c0_428 = arith.constant 0 : index
    %901 = vector.load %arg6[%c4_426, %c0_427, %c0_428] : memref<9x8x16xf32, #tpu.memory_space<vmem>>, vector<1x8x16xf32>
    %902 = vector.shape_cast %901 : vector<1x8x16xf32> to vector<8x16xf32>
    %cst_429 = arith.constant dense<0.000000e+00> : vector<8x64xf32>
    %903 = tpu.matmul %902, %900, %cst_429 {dimension_numbers = #tpu.dot_dimension_numbers<[1], [0], [0], [1], [0, 0, 1, 1], [], []>} : vector<8x16xf32>, vector<16x64xf32>, vector<8x64xf32> -> vector<8x64xf32>
    %904 = arith.addf %852, %903 : vector<8x64xf32>
    %c0_i32_430 = arith.constant 0 : i32
    %905 = vector.broadcast %c0_i32_430 : i32 to vector<1x64xi32>
    %906 = arith.addi %640, %905 : vector<1x64xi32>
    %c2_i32_431 = arith.constant 2 : i32
    %907 = vector.broadcast %c2_i32_431 : i32 to vector<1x64xi32>
    %908 = arith.addi %906, %907 : vector<1x64xi32>
    %c-1_i32_432 = arith.constant -1 : i32
    %909 = vector.broadcast %c-1_i32_432 : i32 to vector<1x64xi32>
    %910 = arith.addi %642, %909 : vector<1x64xi32>
    %c2_i32_433 = arith.constant 2 : i32
    %911 = vector.broadcast %c2_i32_433 : i32 to vector<1x64xi32>
    %912 = arith.addi %910, %911 : vector<1x64xi32>
    %c1_i32_434 = arith.constant 1 : i32
    %913 = vector.broadcast %c1_i32_434 : i32 to vector<1x64xi32>
    %914 = arith.shrsi %908, %913 : vector<1x64xi32>
    %c1_i32_435 = arith.constant 1 : i32
    %915 = vector.broadcast %c1_i32_435 : i32 to vector<1x64xi32>
    %916 = arith.subi %914, %915 : vector<1x64xi32>
    %c1_i32_436 = arith.constant 1 : i32
    %917 = vector.broadcast %c1_i32_436 : i32 to vector<1x64xi32>
    %918 = arith.shrsi %912, %917 : vector<1x64xi32>
    %c1_i32_437 = arith.constant 1 : i32
    %919 = vector.broadcast %c1_i32_437 : i32 to vector<1x64xi32>
    %920 = arith.subi %918, %919 : vector<1x64xi32>
    %c1_i32_438 = arith.constant 1 : i32
    %921 = vector.broadcast %c1_i32_438 : i32 to vector<1x64xi32>
    %922 = arith.andi %908, %921 : vector<1x64xi32>
    %c0_i32_439 = arith.constant 0 : i32
    %923 = vector.broadcast %c0_i32_439 : i32 to vector<1x64xi32>
    %924 = arith.cmpi eq, %922, %923 : vector<1x64xi32>
    %c0_i32_440 = arith.constant 0 : i32
    %925 = vector.broadcast %c0_i32_440 : i32 to vector<1x64xi32>
    %926 = arith.cmpi sge, %916, %925 : vector<1x64xi32>
    %927 = arith.andi %924, %926 : vector<1x64xi1>
    %c4_i32_441 = arith.constant 4 : i32
    %928 = vector.broadcast %c4_i32_441 : i32 to vector<1x64xi32>
    %929 = arith.cmpi slt, %916, %928 : vector<1x64xi32>
    %930 = arith.andi %927, %929 : vector<1x64xi1>
    %c1_i32_442 = arith.constant 1 : i32
    %931 = vector.broadcast %c1_i32_442 : i32 to vector<1x64xi32>
    %932 = arith.andi %912, %931 : vector<1x64xi32>
    %c0_i32_443 = arith.constant 0 : i32
    %933 = vector.broadcast %c0_i32_443 : i32 to vector<1x64xi32>
    %934 = arith.cmpi eq, %932, %933 : vector<1x64xi32>
    %935 = arith.andi %930, %934 : vector<1x64xi1>
    %c0_i32_444 = arith.constant 0 : i32
    %936 = vector.broadcast %c0_i32_444 : i32 to vector<1x64xi32>
    %937 = arith.cmpi sge, %920, %936 : vector<1x64xi32>
    %938 = arith.andi %935, %937 : vector<1x64xi1>
    %c4_i32_445 = arith.constant 4 : i32
    %939 = vector.broadcast %c4_i32_445 : i32 to vector<1x64xi32>
    %940 = arith.cmpi slt, %920, %939 : vector<1x64xi32>
    %941 = arith.andi %938, %940 : vector<1x64xi1>
    %c4_i32_446 = arith.constant 4 : i32
    %942 = vector.broadcast %c4_i32_446 : i32 to vector<1x64xi32>
    %943 = arith.muli %916, %942 : vector<1x64xi32>
    %944 = arith.addi %943, %920 : vector<1x64xi32>
    %c-1_i32_447 = arith.constant -1 : i32
    %945 = vector.broadcast %c-1_i32_447 : i32 to vector<1x64xi32>
    %946 = arith.select %941, %944, %945 : vector<1x64xi1>, vector<1x64xi32>
    %947 = vector.broadcast %946 : vector<1x64xi32> to vector<16x64xi32>
    %948 = arith.cmpi eq, %643, %947 : vector<16x64xi32>
    %cst_448 = arith.constant 1.000000e+00 : f32
    %cst_449 = arith.constant 0.000000e+00 : f32
    %949 = vector.broadcast %cst_448 : f32 to vector<16x64xf32>
    %950 = vector.broadcast %cst_449 : f32 to vector<16x64xf32>
    %951 = arith.select %948, %949, %950 : vector<16x64xi1>, vector<16x64xf32>
    %cst_450 = arith.constant dense<0.000000e+00> : vector<16x64xf32>
    %952 = tpu.matmul %637, %951, %cst_450 {dimension_numbers = #tpu.dot_dimension_numbers<[1], [0], [0], [1], [0, 0, 1, 1], [], []>} : vector<16x16xf32>, vector<16x64xf32>, vector<16x64xf32> -> vector<16x64xf32>
    %c5_451 = arith.constant 5 : index
    %c0_452 = arith.constant 0 : index
    %c0_453 = arith.constant 0 : index
    %953 = vector.load %arg6[%c5_451, %c0_452, %c0_453] : memref<9x8x16xf32, #tpu.memory_space<vmem>>, vector<1x8x16xf32>
    %954 = vector.shape_cast %953 : vector<1x8x16xf32> to vector<8x16xf32>
    %cst_454 = arith.constant dense<0.000000e+00> : vector<8x64xf32>
    %955 = tpu.matmul %954, %952, %cst_454 {dimension_numbers = #tpu.dot_dimension_numbers<[1], [0], [0], [1], [0, 0, 1, 1], [], []>} : vector<8x16xf32>, vector<16x64xf32>, vector<8x64xf32> -> vector<8x64xf32>
    %956 = arith.addf %904, %955 : vector<8x64xf32>
    %c-1_i32_455 = arith.constant -1 : i32
    %957 = vector.broadcast %c-1_i32_455 : i32 to vector<1x64xi32>
    %958 = arith.addi %640, %957 : vector<1x64xi32>
    %c2_i32_456 = arith.constant 2 : i32
    %959 = vector.broadcast %c2_i32_456 : i32 to vector<1x64xi32>
    %960 = arith.addi %958, %959 : vector<1x64xi32>
    %c1_i32_457 = arith.constant 1 : i32
    %961 = vector.broadcast %c1_i32_457 : i32 to vector<1x64xi32>
    %962 = arith.addi %642, %961 : vector<1x64xi32>
    %c2_i32_458 = arith.constant 2 : i32
    %963 = vector.broadcast %c2_i32_458 : i32 to vector<1x64xi32>
    %964 = arith.addi %962, %963 : vector<1x64xi32>
    %c1_i32_459 = arith.constant 1 : i32
    %965 = vector.broadcast %c1_i32_459 : i32 to vector<1x64xi32>
    %966 = arith.shrsi %960, %965 : vector<1x64xi32>
    %c1_i32_460 = arith.constant 1 : i32
    %967 = vector.broadcast %c1_i32_460 : i32 to vector<1x64xi32>
    %968 = arith.subi %966, %967 : vector<1x64xi32>
    %c1_i32_461 = arith.constant 1 : i32
    %969 = vector.broadcast %c1_i32_461 : i32 to vector<1x64xi32>
    %970 = arith.shrsi %964, %969 : vector<1x64xi32>
    %c1_i32_462 = arith.constant 1 : i32
    %971 = vector.broadcast %c1_i32_462 : i32 to vector<1x64xi32>
    %972 = arith.subi %970, %971 : vector<1x64xi32>
    %c1_i32_463 = arith.constant 1 : i32
    %973 = vector.broadcast %c1_i32_463 : i32 to vector<1x64xi32>
    %974 = arith.andi %960, %973 : vector<1x64xi32>
    %c0_i32_464 = arith.constant 0 : i32
    %975 = vector.broadcast %c0_i32_464 : i32 to vector<1x64xi32>
    %976 = arith.cmpi eq, %974, %975 : vector<1x64xi32>
    %c0_i32_465 = arith.constant 0 : i32
    %977 = vector.broadcast %c0_i32_465 : i32 to vector<1x64xi32>
    %978 = arith.cmpi sge, %968, %977 : vector<1x64xi32>
    %979 = arith.andi %976, %978 : vector<1x64xi1>
    %c4_i32_466 = arith.constant 4 : i32
    %980 = vector.broadcast %c4_i32_466 : i32 to vector<1x64xi32>
    %981 = arith.cmpi slt, %968, %980 : vector<1x64xi32>
    %982 = arith.andi %979, %981 : vector<1x64xi1>
    %c1_i32_467 = arith.constant 1 : i32
    %983 = vector.broadcast %c1_i32_467 : i32 to vector<1x64xi32>
    %984 = arith.andi %964, %983 : vector<1x64xi32>
    %c0_i32_468 = arith.constant 0 : i32
    %985 = vector.broadcast %c0_i32_468 : i32 to vector<1x64xi32>
    %986 = arith.cmpi eq, %984, %985 : vector<1x64xi32>
    %987 = arith.andi %982, %986 : vector<1x64xi1>
    %c0_i32_469 = arith.constant 0 : i32
    %988 = vector.broadcast %c0_i32_469 : i32 to vector<1x64xi32>
    %989 = arith.cmpi sge, %972, %988 : vector<1x64xi32>
    %990 = arith.andi %987, %989 : vector<1x64xi1>
    %c4_i32_470 = arith.constant 4 : i32
    %991 = vector.broadcast %c4_i32_470 : i32 to vector<1x64xi32>
    %992 = arith.cmpi slt, %972, %991 : vector<1x64xi32>
    %993 = arith.andi %990, %992 : vector<1x64xi1>
    %c4_i32_471 = arith.constant 4 : i32
    %994 = vector.broadcast %c4_i32_471 : i32 to vector<1x64xi32>
    %995 = arith.muli %968, %994 : vector<1x64xi32>
    %996 = arith.addi %995, %972 : vector<1x64xi32>
    %c-1_i32_472 = arith.constant -1 : i32
    %997 = vector.broadcast %c-1_i32_472 : i32 to vector<1x64xi32>
    %998 = arith.select %993, %996, %997 : vector<1x64xi1>, vector<1x64xi32>
    %999 = vector.broadcast %998 : vector<1x64xi32> to vector<16x64xi32>
    %1000 = arith.cmpi eq, %643, %999 : vector<16x64xi32>
    %cst_473 = arith.constant 1.000000e+00 : f32
    %cst_474 = arith.constant 0.000000e+00 : f32
    %1001 = vector.broadcast %cst_473 : f32 to vector<16x64xf32>
    %1002 = vector.broadcast %cst_474 : f32 to vector<16x64xf32>
    %1003 = arith.select %1000, %1001, %1002 : vector<16x64xi1>, vector<16x64xf32>
    %cst_475 = arith.constant dense<0.000000e+00> : vector<16x64xf32>
    %1004 = tpu.matmul %637, %1003, %cst_475 {dimension_numbers = #tpu.dot_dimension_numbers<[1], [0], [0], [1], [0, 0, 1, 1], [], []>} : vector<16x16xf32>, vector<16x64xf32>, vector<16x64xf32> -> vector<16x64xf32>
    %c6_476 = arith.constant 6 : index
    %c0_477 = arith.constant 0 : index
    %c0_478 = arith.constant 0 : index
    %1005 = vector.load %arg6[%c6_476, %c0_477, %c0_478] : memref<9x8x16xf32, #tpu.memory_space<vmem>>, vector<1x8x16xf32>
    %1006 = vector.shape_cast %1005 : vector<1x8x16xf32> to vector<8x16xf32>
    %cst_479 = arith.constant dense<0.000000e+00> : vector<8x64xf32>
    %1007 = tpu.matmul %1006, %1004, %cst_479 {dimension_numbers = #tpu.dot_dimension_numbers<[1], [0], [0], [1], [0, 0, 1, 1], [], []>} : vector<8x16xf32>, vector<16x64xf32>, vector<8x64xf32> -> vector<8x64xf32>
    %1008 = arith.addf %956, %1007 : vector<8x64xf32>
    %c-1_i32_480 = arith.constant -1 : i32
    %1009 = vector.broadcast %c-1_i32_480 : i32 to vector<1x64xi32>
    %1010 = arith.addi %640, %1009 : vector<1x64xi32>
    %c2_i32_481 = arith.constant 2 : i32
    %1011 = vector.broadcast %c2_i32_481 : i32 to vector<1x64xi32>
    %1012 = arith.addi %1010, %1011 : vector<1x64xi32>
    %c0_i32_482 = arith.constant 0 : i32
    %1013 = vector.broadcast %c0_i32_482 : i32 to vector<1x64xi32>
    %1014 = arith.addi %642, %1013 : vector<1x64xi32>
    %c2_i32_483 = arith.constant 2 : i32
    %1015 = vector.broadcast %c2_i32_483 : i32 to vector<1x64xi32>
    %1016 = arith.addi %1014, %1015 : vector<1x64xi32>
    %c1_i32_484 = arith.constant 1 : i32
    %1017 = vector.broadcast %c1_i32_484 : i32 to vector<1x64xi32>
    %1018 = arith.shrsi %1012, %1017 : vector<1x64xi32>
    %c1_i32_485 = arith.constant 1 : i32
    %1019 = vector.broadcast %c1_i32_485 : i32 to vector<1x64xi32>
    %1020 = arith.subi %1018, %1019 : vector<1x64xi32>
    %c1_i32_486 = arith.constant 1 : i32
    %1021 = vector.broadcast %c1_i32_486 : i32 to vector<1x64xi32>
    %1022 = arith.shrsi %1016, %1021 : vector<1x64xi32>
    %c1_i32_487 = arith.constant 1 : i32
    %1023 = vector.broadcast %c1_i32_487 : i32 to vector<1x64xi32>
    %1024 = arith.subi %1022, %1023 : vector<1x64xi32>
    %c1_i32_488 = arith.constant 1 : i32
    %1025 = vector.broadcast %c1_i32_488 : i32 to vector<1x64xi32>
    %1026 = arith.andi %1012, %1025 : vector<1x64xi32>
    %c0_i32_489 = arith.constant 0 : i32
    %1027 = vector.broadcast %c0_i32_489 : i32 to vector<1x64xi32>
    %1028 = arith.cmpi eq, %1026, %1027 : vector<1x64xi32>
    %c0_i32_490 = arith.constant 0 : i32
    %1029 = vector.broadcast %c0_i32_490 : i32 to vector<1x64xi32>
    %1030 = arith.cmpi sge, %1020, %1029 : vector<1x64xi32>
    %1031 = arith.andi %1028, %1030 : vector<1x64xi1>
    %c4_i32_491 = arith.constant 4 : i32
    %1032 = vector.broadcast %c4_i32_491 : i32 to vector<1x64xi32>
    %1033 = arith.cmpi slt, %1020, %1032 : vector<1x64xi32>
    %1034 = arith.andi %1031, %1033 : vector<1x64xi1>
    %c1_i32_492 = arith.constant 1 : i32
    %1035 = vector.broadcast %c1_i32_492 : i32 to vector<1x64xi32>
    %1036 = arith.andi %1016, %1035 : vector<1x64xi32>
    %c0_i32_493 = arith.constant 0 : i32
    %1037 = vector.broadcast %c0_i32_493 : i32 to vector<1x64xi32>
    %1038 = arith.cmpi eq, %1036, %1037 : vector<1x64xi32>
    %1039 = arith.andi %1034, %1038 : vector<1x64xi1>
    %c0_i32_494 = arith.constant 0 : i32
    %1040 = vector.broadcast %c0_i32_494 : i32 to vector<1x64xi32>
    %1041 = arith.cmpi sge, %1024, %1040 : vector<1x64xi32>
    %1042 = arith.andi %1039, %1041 : vector<1x64xi1>
    %c4_i32_495 = arith.constant 4 : i32
    %1043 = vector.broadcast %c4_i32_495 : i32 to vector<1x64xi32>
    %1044 = arith.cmpi slt, %1024, %1043 : vector<1x64xi32>
    %1045 = arith.andi %1042, %1044 : vector<1x64xi1>
    %c4_i32_496 = arith.constant 4 : i32
    %1046 = vector.broadcast %c4_i32_496 : i32 to vector<1x64xi32>
    %1047 = arith.muli %1020, %1046 : vector<1x64xi32>
    %1048 = arith.addi %1047, %1024 : vector<1x64xi32>
    %c-1_i32_497 = arith.constant -1 : i32
    %1049 = vector.broadcast %c-1_i32_497 : i32 to vector<1x64xi32>
    %1050 = arith.select %1045, %1048, %1049 : vector<1x64xi1>, vector<1x64xi32>
    %1051 = vector.broadcast %1050 : vector<1x64xi32> to vector<16x64xi32>
    %1052 = arith.cmpi eq, %643, %1051 : vector<16x64xi32>
    %cst_498 = arith.constant 1.000000e+00 : f32
    %cst_499 = arith.constant 0.000000e+00 : f32
    %1053 = vector.broadcast %cst_498 : f32 to vector<16x64xf32>
    %1054 = vector.broadcast %cst_499 : f32 to vector<16x64xf32>
    %1055 = arith.select %1052, %1053, %1054 : vector<16x64xi1>, vector<16x64xf32>
    %cst_500 = arith.constant dense<0.000000e+00> : vector<16x64xf32>
    %1056 = tpu.matmul %637, %1055, %cst_500 {dimension_numbers = #tpu.dot_dimension_numbers<[1], [0], [0], [1], [0, 0, 1, 1], [], []>} : vector<16x16xf32>, vector<16x64xf32>, vector<16x64xf32> -> vector<16x64xf32>
    %c7_501 = arith.constant 7 : index
    %c0_502 = arith.constant 0 : index
    %c0_503 = arith.constant 0 : index
    %1057 = vector.load %arg6[%c7_501, %c0_502, %c0_503] : memref<9x8x16xf32, #tpu.memory_space<vmem>>, vector<1x8x16xf32>
    %1058 = vector.shape_cast %1057 : vector<1x8x16xf32> to vector<8x16xf32>
    %cst_504 = arith.constant dense<0.000000e+00> : vector<8x64xf32>
    %1059 = tpu.matmul %1058, %1056, %cst_504 {dimension_numbers = #tpu.dot_dimension_numbers<[1], [0], [0], [1], [0, 0, 1, 1], [], []>} : vector<8x16xf32>, vector<16x64xf32>, vector<8x64xf32> -> vector<8x64xf32>
    %1060 = arith.addf %1008, %1059 : vector<8x64xf32>
    %c-1_i32_505 = arith.constant -1 : i32
    %1061 = vector.broadcast %c-1_i32_505 : i32 to vector<1x64xi32>
    %1062 = arith.addi %640, %1061 : vector<1x64xi32>
    %c2_i32_506 = arith.constant 2 : i32
    %1063 = vector.broadcast %c2_i32_506 : i32 to vector<1x64xi32>
    %1064 = arith.addi %1062, %1063 : vector<1x64xi32>
    %c-1_i32_507 = arith.constant -1 : i32
    %1065 = vector.broadcast %c-1_i32_507 : i32 to vector<1x64xi32>
    %1066 = arith.addi %642, %1065 : vector<1x64xi32>
    %c2_i32_508 = arith.constant 2 : i32
    %1067 = vector.broadcast %c2_i32_508 : i32 to vector<1x64xi32>
    %1068 = arith.addi %1066, %1067 : vector<1x64xi32>
    %c1_i32_509 = arith.constant 1 : i32
    %1069 = vector.broadcast %c1_i32_509 : i32 to vector<1x64xi32>
    %1070 = arith.shrsi %1064, %1069 : vector<1x64xi32>
    %c1_i32_510 = arith.constant 1 : i32
    %1071 = vector.broadcast %c1_i32_510 : i32 to vector<1x64xi32>
    %1072 = arith.subi %1070, %1071 : vector<1x64xi32>
    %c1_i32_511 = arith.constant 1 : i32
    %1073 = vector.broadcast %c1_i32_511 : i32 to vector<1x64xi32>
    %1074 = arith.shrsi %1068, %1073 : vector<1x64xi32>
    %c1_i32_512 = arith.constant 1 : i32
    %1075 = vector.broadcast %c1_i32_512 : i32 to vector<1x64xi32>
    %1076 = arith.subi %1074, %1075 : vector<1x64xi32>
    %c1_i32_513 = arith.constant 1 : i32
    %1077 = vector.broadcast %c1_i32_513 : i32 to vector<1x64xi32>
    %1078 = arith.andi %1064, %1077 : vector<1x64xi32>
    %c0_i32_514 = arith.constant 0 : i32
    %1079 = vector.broadcast %c0_i32_514 : i32 to vector<1x64xi32>
    %1080 = arith.cmpi eq, %1078, %1079 : vector<1x64xi32>
    %c0_i32_515 = arith.constant 0 : i32
    %1081 = vector.broadcast %c0_i32_515 : i32 to vector<1x64xi32>
    %1082 = arith.cmpi sge, %1072, %1081 : vector<1x64xi32>
    %1083 = arith.andi %1080, %1082 : vector<1x64xi1>
    %c4_i32_516 = arith.constant 4 : i32
    %1084 = vector.broadcast %c4_i32_516 : i32 to vector<1x64xi32>
    %1085 = arith.cmpi slt, %1072, %1084 : vector<1x64xi32>
    %1086 = arith.andi %1083, %1085 : vector<1x64xi1>
    %c1_i32_517 = arith.constant 1 : i32
    %1087 = vector.broadcast %c1_i32_517 : i32 to vector<1x64xi32>
    %1088 = arith.andi %1068, %1087 : vector<1x64xi32>
    %c0_i32_518 = arith.constant 0 : i32
    %1089 = vector.broadcast %c0_i32_518 : i32 to vector<1x64xi32>
    %1090 = arith.cmpi eq, %1088, %1089 : vector<1x64xi32>
    %1091 = arith.andi %1086, %1090 : vector<1x64xi1>
    %c0_i32_519 = arith.constant 0 : i32
    %1092 = vector.broadcast %c0_i32_519 : i32 to vector<1x64xi32>
    %1093 = arith.cmpi sge, %1076, %1092 : vector<1x64xi32>
    %1094 = arith.andi %1091, %1093 : vector<1x64xi1>
    %c4_i32_520 = arith.constant 4 : i32
    %1095 = vector.broadcast %c4_i32_520 : i32 to vector<1x64xi32>
    %1096 = arith.cmpi slt, %1076, %1095 : vector<1x64xi32>
    %1097 = arith.andi %1094, %1096 : vector<1x64xi1>
    %c4_i32_521 = arith.constant 4 : i32
    %1098 = vector.broadcast %c4_i32_521 : i32 to vector<1x64xi32>
    %1099 = arith.muli %1072, %1098 : vector<1x64xi32>
    %1100 = arith.addi %1099, %1076 : vector<1x64xi32>
    %c-1_i32_522 = arith.constant -1 : i32
    %1101 = vector.broadcast %c-1_i32_522 : i32 to vector<1x64xi32>
    %1102 = arith.select %1097, %1100, %1101 : vector<1x64xi1>, vector<1x64xi32>
    %1103 = vector.broadcast %1102 : vector<1x64xi32> to vector<16x64xi32>
    %1104 = arith.cmpi eq, %643, %1103 : vector<16x64xi32>
    %cst_523 = arith.constant 1.000000e+00 : f32
    %cst_524 = arith.constant 0.000000e+00 : f32
    %1105 = vector.broadcast %cst_523 : f32 to vector<16x64xf32>
    %1106 = vector.broadcast %cst_524 : f32 to vector<16x64xf32>
    %1107 = arith.select %1104, %1105, %1106 : vector<16x64xi1>, vector<16x64xf32>
    %cst_525 = arith.constant dense<0.000000e+00> : vector<16x64xf32>
    %1108 = tpu.matmul %637, %1107, %cst_525 {dimension_numbers = #tpu.dot_dimension_numbers<[1], [0], [0], [1], [0, 0, 1, 1], [], []>} : vector<16x16xf32>, vector<16x64xf32>, vector<16x64xf32> -> vector<16x64xf32>
    %c8_526 = arith.constant 8 : index
    %c0_527 = arith.constant 0 : index
    %c0_528 = arith.constant 0 : index
    %1109 = vector.load %arg6[%c8_526, %c0_527, %c0_528] : memref<9x8x16xf32, #tpu.memory_space<vmem>>, vector<1x8x16xf32>
    %1110 = vector.shape_cast %1109 : vector<1x8x16xf32> to vector<8x16xf32>
    %cst_529 = arith.constant dense<0.000000e+00> : vector<8x64xf32>
    %1111 = tpu.matmul %1110, %1108, %cst_529 {dimension_numbers = #tpu.dot_dimension_numbers<[1], [0], [0], [1], [0, 0, 1, 1], [], []>} : vector<8x16xf32>, vector<16x64xf32>, vector<8x64xf32> -> vector<8x64xf32>
    %1112 = arith.addf %1060, %1111 : vector<8x64xf32>
    %c0_530 = arith.constant 0 : index
    %c0_531 = arith.constant 0 : index
    %1113 = vector.load %arg7[%c0_530, %c0_531] : memref<8x1xf32, #tpu.memory_space<vmem>>, vector<8x1xf32>
    %1114 = vector.broadcast %1113 : vector<8x1xf32> to vector<8x64xf32>
    %1115 = arith.addf %1112, %1114 : vector<8x64xf32>
    %cst_532 = arith.constant 0.000000e+00 : f32
    %1116 = vector.broadcast %cst_532 : f32 to vector<8x64xf32>
    %1117 = arith.maximumf %1115, %1116 : vector<8x64xf32>
    %1118 = tpu.iota {dimensions = array<i32: 1>} : vector<1x256xi32>
    %c4_i32_533 = arith.constant 4 : i32
    %1119 = vector.broadcast %c4_i32_533 : i32 to vector<1x256xi32>
    %1120 = arith.shrsi %1118, %1119 : vector<1x256xi32>
    %c15_i32 = arith.constant 15 : i32
    %1121 = vector.broadcast %c15_i32 : i32 to vector<1x256xi32>
    %1122 = arith.andi %1118, %1121 : vector<1x256xi32>
    %1123 = tpu.iota {dimensions = array<i32: 0>} : vector<64x256xi32>
    %cst_534 = arith.constant 0.000000e+00 : f32
    %1124 = vector.broadcast %cst_534 : f32 to vector<3x256xf32>
    %c1_i32_535 = arith.constant 1 : i32
    %1125 = vector.broadcast %c1_i32_535 : i32 to vector<1x256xi32>
    %1126 = arith.addi %1120, %1125 : vector<1x256xi32>
    %c2_i32_536 = arith.constant 2 : i32
    %1127 = vector.broadcast %c2_i32_536 : i32 to vector<1x256xi32>
    %1128 = arith.addi %1126, %1127 : vector<1x256xi32>
    %c1_i32_537 = arith.constant 1 : i32
    %1129 = vector.broadcast %c1_i32_537 : i32 to vector<1x256xi32>
    %1130 = arith.addi %1122, %1129 : vector<1x256xi32>
    %c2_i32_538 = arith.constant 2 : i32
    %1131 = vector.broadcast %c2_i32_538 : i32 to vector<1x256xi32>
    %1132 = arith.addi %1130, %1131 : vector<1x256xi32>
    %c1_i32_539 = arith.constant 1 : i32
    %1133 = vector.broadcast %c1_i32_539 : i32 to vector<1x256xi32>
    %1134 = arith.shrsi %1128, %1133 : vector<1x256xi32>
    %c1_i32_540 = arith.constant 1 : i32
    %1135 = vector.broadcast %c1_i32_540 : i32 to vector<1x256xi32>
    %1136 = arith.subi %1134, %1135 : vector<1x256xi32>
    %c1_i32_541 = arith.constant 1 : i32
    %1137 = vector.broadcast %c1_i32_541 : i32 to vector<1x256xi32>
    %1138 = arith.shrsi %1132, %1137 : vector<1x256xi32>
    %c1_i32_542 = arith.constant 1 : i32
    %1139 = vector.broadcast %c1_i32_542 : i32 to vector<1x256xi32>
    %1140 = arith.subi %1138, %1139 : vector<1x256xi32>
    %c1_i32_543 = arith.constant 1 : i32
    %1141 = vector.broadcast %c1_i32_543 : i32 to vector<1x256xi32>
    %1142 = arith.andi %1128, %1141 : vector<1x256xi32>
    %c0_i32_544 = arith.constant 0 : i32
    %1143 = vector.broadcast %c0_i32_544 : i32 to vector<1x256xi32>
    %1144 = arith.cmpi eq, %1142, %1143 : vector<1x256xi32>
    %c0_i32_545 = arith.constant 0 : i32
    %1145 = vector.broadcast %c0_i32_545 : i32 to vector<1x256xi32>
    %1146 = arith.cmpi sge, %1136, %1145 : vector<1x256xi32>
    %1147 = arith.andi %1144, %1146 : vector<1x256xi1>
    %c8_i32_546 = arith.constant 8 : i32
    %1148 = vector.broadcast %c8_i32_546 : i32 to vector<1x256xi32>
    %1149 = arith.cmpi slt, %1136, %1148 : vector<1x256xi32>
    %1150 = arith.andi %1147, %1149 : vector<1x256xi1>
    %c1_i32_547 = arith.constant 1 : i32
    %1151 = vector.broadcast %c1_i32_547 : i32 to vector<1x256xi32>
    %1152 = arith.andi %1132, %1151 : vector<1x256xi32>
    %c0_i32_548 = arith.constant 0 : i32
    %1153 = vector.broadcast %c0_i32_548 : i32 to vector<1x256xi32>
    %1154 = arith.cmpi eq, %1152, %1153 : vector<1x256xi32>
    %1155 = arith.andi %1150, %1154 : vector<1x256xi1>
    %c0_i32_549 = arith.constant 0 : i32
    %1156 = vector.broadcast %c0_i32_549 : i32 to vector<1x256xi32>
    %1157 = arith.cmpi sge, %1140, %1156 : vector<1x256xi32>
    %1158 = arith.andi %1155, %1157 : vector<1x256xi1>
    %c8_i32_550 = arith.constant 8 : i32
    %1159 = vector.broadcast %c8_i32_550 : i32 to vector<1x256xi32>
    %1160 = arith.cmpi slt, %1140, %1159 : vector<1x256xi32>
    %1161 = arith.andi %1158, %1160 : vector<1x256xi1>
    %c8_i32_551 = arith.constant 8 : i32
    %1162 = vector.broadcast %c8_i32_551 : i32 to vector<1x256xi32>
    %1163 = arith.muli %1136, %1162 : vector<1x256xi32>
    %1164 = arith.addi %1163, %1140 : vector<1x256xi32>
    %c-1_i32_552 = arith.constant -1 : i32
    %1165 = vector.broadcast %c-1_i32_552 : i32 to vector<1x256xi32>
    %1166 = arith.select %1161, %1164, %1165 : vector<1x256xi1>, vector<1x256xi32>
    %1167 = vector.broadcast %1166 : vector<1x256xi32> to vector<64x256xi32>
    %1168 = arith.cmpi eq, %1123, %1167 : vector<64x256xi32>
    %cst_553 = arith.constant 1.000000e+00 : f32
    %cst_554 = arith.constant 0.000000e+00 : f32
    %1169 = vector.broadcast %cst_553 : f32 to vector<64x256xf32>
    %1170 = vector.broadcast %cst_554 : f32 to vector<64x256xf32>
    %1171 = arith.select %1168, %1169, %1170 : vector<64x256xi1>, vector<64x256xf32>
    %cst_555 = arith.constant dense<0.000000e+00> : vector<8x256xf32>
    %1172 = tpu.matmul %1117, %1171, %cst_555 {dimension_numbers = #tpu.dot_dimension_numbers<[1], [0], [0], [1], [0, 0, 1, 1], [], []>} : vector<8x64xf32>, vector<64x256xf32>, vector<8x256xf32> -> vector<8x256xf32>
    %c0_556 = arith.constant 0 : index
    %c0_557 = arith.constant 0 : index
    %c0_558 = arith.constant 0 : index
    %1173 = vector.load %arg8[%c0_556, %c0_557, %c0_558] : memref<9x3x8xf32, #tpu.memory_space<vmem>>, vector<1x3x8xf32>
    %1174 = vector.shape_cast %1173 : vector<1x3x8xf32> to vector<3x8xf32>
    %cst_559 = arith.constant dense<0.000000e+00> : vector<3x256xf32>
    %1175 = tpu.matmul %1174, %1172, %cst_559 {dimension_numbers = #tpu.dot_dimension_numbers<[1], [0], [0], [1], [0, 0, 1, 1], [], []>} : vector<3x8xf32>, vector<8x256xf32>, vector<3x256xf32> -> vector<3x256xf32>
    %1176 = arith.addf %1124, %1175 : vector<3x256xf32>
    %c1_i32_560 = arith.constant 1 : i32
    %1177 = vector.broadcast %c1_i32_560 : i32 to vector<1x256xi32>
    %1178 = arith.addi %1120, %1177 : vector<1x256xi32>
    %c2_i32_561 = arith.constant 2 : i32
    %1179 = vector.broadcast %c2_i32_561 : i32 to vector<1x256xi32>
    %1180 = arith.addi %1178, %1179 : vector<1x256xi32>
    %c0_i32_562 = arith.constant 0 : i32
    %1181 = vector.broadcast %c0_i32_562 : i32 to vector<1x256xi32>
    %1182 = arith.addi %1122, %1181 : vector<1x256xi32>
    %c2_i32_563 = arith.constant 2 : i32
    %1183 = vector.broadcast %c2_i32_563 : i32 to vector<1x256xi32>
    %1184 = arith.addi %1182, %1183 : vector<1x256xi32>
    %c1_i32_564 = arith.constant 1 : i32
    %1185 = vector.broadcast %c1_i32_564 : i32 to vector<1x256xi32>
    %1186 = arith.shrsi %1180, %1185 : vector<1x256xi32>
    %c1_i32_565 = arith.constant 1 : i32
    %1187 = vector.broadcast %c1_i32_565 : i32 to vector<1x256xi32>
    %1188 = arith.subi %1186, %1187 : vector<1x256xi32>
    %c1_i32_566 = arith.constant 1 : i32
    %1189 = vector.broadcast %c1_i32_566 : i32 to vector<1x256xi32>
    %1190 = arith.shrsi %1184, %1189 : vector<1x256xi32>
    %c1_i32_567 = arith.constant 1 : i32
    %1191 = vector.broadcast %c1_i32_567 : i32 to vector<1x256xi32>
    %1192 = arith.subi %1190, %1191 : vector<1x256xi32>
    %c1_i32_568 = arith.constant 1 : i32
    %1193 = vector.broadcast %c1_i32_568 : i32 to vector<1x256xi32>
    %1194 = arith.andi %1180, %1193 : vector<1x256xi32>
    %c0_i32_569 = arith.constant 0 : i32
    %1195 = vector.broadcast %c0_i32_569 : i32 to vector<1x256xi32>
    %1196 = arith.cmpi eq, %1194, %1195 : vector<1x256xi32>
    %c0_i32_570 = arith.constant 0 : i32
    %1197 = vector.broadcast %c0_i32_570 : i32 to vector<1x256xi32>
    %1198 = arith.cmpi sge, %1188, %1197 : vector<1x256xi32>
    %1199 = arith.andi %1196, %1198 : vector<1x256xi1>
    %c8_i32_571 = arith.constant 8 : i32
    %1200 = vector.broadcast %c8_i32_571 : i32 to vector<1x256xi32>
    %1201 = arith.cmpi slt, %1188, %1200 : vector<1x256xi32>
    %1202 = arith.andi %1199, %1201 : vector<1x256xi1>
    %c1_i32_572 = arith.constant 1 : i32
    %1203 = vector.broadcast %c1_i32_572 : i32 to vector<1x256xi32>
    %1204 = arith.andi %1184, %1203 : vector<1x256xi32>
    %c0_i32_573 = arith.constant 0 : i32
    %1205 = vector.broadcast %c0_i32_573 : i32 to vector<1x256xi32>
    %1206 = arith.cmpi eq, %1204, %1205 : vector<1x256xi32>
    %1207 = arith.andi %1202, %1206 : vector<1x256xi1>
    %c0_i32_574 = arith.constant 0 : i32
    %1208 = vector.broadcast %c0_i32_574 : i32 to vector<1x256xi32>
    %1209 = arith.cmpi sge, %1192, %1208 : vector<1x256xi32>
    %1210 = arith.andi %1207, %1209 : vector<1x256xi1>
    %c8_i32_575 = arith.constant 8 : i32
    %1211 = vector.broadcast %c8_i32_575 : i32 to vector<1x256xi32>
    %1212 = arith.cmpi slt, %1192, %1211 : vector<1x256xi32>
    %1213 = arith.andi %1210, %1212 : vector<1x256xi1>
    %c8_i32_576 = arith.constant 8 : i32
    %1214 = vector.broadcast %c8_i32_576 : i32 to vector<1x256xi32>
    %1215 = arith.muli %1188, %1214 : vector<1x256xi32>
    %1216 = arith.addi %1215, %1192 : vector<1x256xi32>
    %c-1_i32_577 = arith.constant -1 : i32
    %1217 = vector.broadcast %c-1_i32_577 : i32 to vector<1x256xi32>
    %1218 = arith.select %1213, %1216, %1217 : vector<1x256xi1>, vector<1x256xi32>
    %1219 = vector.broadcast %1218 : vector<1x256xi32> to vector<64x256xi32>
    %1220 = arith.cmpi eq, %1123, %1219 : vector<64x256xi32>
    %cst_578 = arith.constant 1.000000e+00 : f32
    %cst_579 = arith.constant 0.000000e+00 : f32
    %1221 = vector.broadcast %cst_578 : f32 to vector<64x256xf32>
    %1222 = vector.broadcast %cst_579 : f32 to vector<64x256xf32>
    %1223 = arith.select %1220, %1221, %1222 : vector<64x256xi1>, vector<64x256xf32>
    %cst_580 = arith.constant dense<0.000000e+00> : vector<8x256xf32>
    %1224 = tpu.matmul %1117, %1223, %cst_580 {dimension_numbers = #tpu.dot_dimension_numbers<[1], [0], [0], [1], [0, 0, 1, 1], [], []>} : vector<8x64xf32>, vector<64x256xf32>, vector<8x256xf32> -> vector<8x256xf32>
    %c1_581 = arith.constant 1 : index
    %c0_582 = arith.constant 0 : index
    %c0_583 = arith.constant 0 : index
    %1225 = vector.load %arg8[%c1_581, %c0_582, %c0_583] : memref<9x3x8xf32, #tpu.memory_space<vmem>>, vector<1x3x8xf32>
    %1226 = vector.shape_cast %1225 : vector<1x3x8xf32> to vector<3x8xf32>
    %cst_584 = arith.constant dense<0.000000e+00> : vector<3x256xf32>
    %1227 = tpu.matmul %1226, %1224, %cst_584 {dimension_numbers = #tpu.dot_dimension_numbers<[1], [0], [0], [1], [0, 0, 1, 1], [], []>} : vector<3x8xf32>, vector<8x256xf32>, vector<3x256xf32> -> vector<3x256xf32>
    %1228 = arith.addf %1176, %1227 : vector<3x256xf32>
    %c1_i32_585 = arith.constant 1 : i32
    %1229 = vector.broadcast %c1_i32_585 : i32 to vector<1x256xi32>
    %1230 = arith.addi %1120, %1229 : vector<1x256xi32>
    %c2_i32_586 = arith.constant 2 : i32
    %1231 = vector.broadcast %c2_i32_586 : i32 to vector<1x256xi32>
    %1232 = arith.addi %1230, %1231 : vector<1x256xi32>
    %c-1_i32_587 = arith.constant -1 : i32
    %1233 = vector.broadcast %c-1_i32_587 : i32 to vector<1x256xi32>
    %1234 = arith.addi %1122, %1233 : vector<1x256xi32>
    %c2_i32_588 = arith.constant 2 : i32
    %1235 = vector.broadcast %c2_i32_588 : i32 to vector<1x256xi32>
    %1236 = arith.addi %1234, %1235 : vector<1x256xi32>
    %c1_i32_589 = arith.constant 1 : i32
    %1237 = vector.broadcast %c1_i32_589 : i32 to vector<1x256xi32>
    %1238 = arith.shrsi %1232, %1237 : vector<1x256xi32>
    %c1_i32_590 = arith.constant 1 : i32
    %1239 = vector.broadcast %c1_i32_590 : i32 to vector<1x256xi32>
    %1240 = arith.subi %1238, %1239 : vector<1x256xi32>
    %c1_i32_591 = arith.constant 1 : i32
    %1241 = vector.broadcast %c1_i32_591 : i32 to vector<1x256xi32>
    %1242 = arith.shrsi %1236, %1241 : vector<1x256xi32>
    %c1_i32_592 = arith.constant 1 : i32
    %1243 = vector.broadcast %c1_i32_592 : i32 to vector<1x256xi32>
    %1244 = arith.subi %1242, %1243 : vector<1x256xi32>
    %c1_i32_593 = arith.constant 1 : i32
    %1245 = vector.broadcast %c1_i32_593 : i32 to vector<1x256xi32>
    %1246 = arith.andi %1232, %1245 : vector<1x256xi32>
    %c0_i32_594 = arith.constant 0 : i32
    %1247 = vector.broadcast %c0_i32_594 : i32 to vector<1x256xi32>
    %1248 = arith.cmpi eq, %1246, %1247 : vector<1x256xi32>
    %c0_i32_595 = arith.constant 0 : i32
    %1249 = vector.broadcast %c0_i32_595 : i32 to vector<1x256xi32>
    %1250 = arith.cmpi sge, %1240, %1249 : vector<1x256xi32>
    %1251 = arith.andi %1248, %1250 : vector<1x256xi1>
    %c8_i32_596 = arith.constant 8 : i32
    %1252 = vector.broadcast %c8_i32_596 : i32 to vector<1x256xi32>
    %1253 = arith.cmpi slt, %1240, %1252 : vector<1x256xi32>
    %1254 = arith.andi %1251, %1253 : vector<1x256xi1>
    %c1_i32_597 = arith.constant 1 : i32
    %1255 = vector.broadcast %c1_i32_597 : i32 to vector<1x256xi32>
    %1256 = arith.andi %1236, %1255 : vector<1x256xi32>
    %c0_i32_598 = arith.constant 0 : i32
    %1257 = vector.broadcast %c0_i32_598 : i32 to vector<1x256xi32>
    %1258 = arith.cmpi eq, %1256, %1257 : vector<1x256xi32>
    %1259 = arith.andi %1254, %1258 : vector<1x256xi1>
    %c0_i32_599 = arith.constant 0 : i32
    %1260 = vector.broadcast %c0_i32_599 : i32 to vector<1x256xi32>
    %1261 = arith.cmpi sge, %1244, %1260 : vector<1x256xi32>
    %1262 = arith.andi %1259, %1261 : vector<1x256xi1>
    %c8_i32_600 = arith.constant 8 : i32
    %1263 = vector.broadcast %c8_i32_600 : i32 to vector<1x256xi32>
    %1264 = arith.cmpi slt, %1244, %1263 : vector<1x256xi32>
    %1265 = arith.andi %1262, %1264 : vector<1x256xi1>
    %c8_i32_601 = arith.constant 8 : i32
    %1266 = vector.broadcast %c8_i32_601 : i32 to vector<1x256xi32>
    %1267 = arith.muli %1240, %1266 : vector<1x256xi32>
    %1268 = arith.addi %1267, %1244 : vector<1x256xi32>
    %c-1_i32_602 = arith.constant -1 : i32
    %1269 = vector.broadcast %c-1_i32_602 : i32 to vector<1x256xi32>
    %1270 = arith.select %1265, %1268, %1269 : vector<1x256xi1>, vector<1x256xi32>
    %1271 = vector.broadcast %1270 : vector<1x256xi32> to vector<64x256xi32>
    %1272 = arith.cmpi eq, %1123, %1271 : vector<64x256xi32>
    %cst_603 = arith.constant 1.000000e+00 : f32
    %cst_604 = arith.constant 0.000000e+00 : f32
    %1273 = vector.broadcast %cst_603 : f32 to vector<64x256xf32>
    %1274 = vector.broadcast %cst_604 : f32 to vector<64x256xf32>
    %1275 = arith.select %1272, %1273, %1274 : vector<64x256xi1>, vector<64x256xf32>
    %cst_605 = arith.constant dense<0.000000e+00> : vector<8x256xf32>
    %1276 = tpu.matmul %1117, %1275, %cst_605 {dimension_numbers = #tpu.dot_dimension_numbers<[1], [0], [0], [1], [0, 0, 1, 1], [], []>} : vector<8x64xf32>, vector<64x256xf32>, vector<8x256xf32> -> vector<8x256xf32>
    %c2_606 = arith.constant 2 : index
    %c0_607 = arith.constant 0 : index
    %c0_608 = arith.constant 0 : index
    %1277 = vector.load %arg8[%c2_606, %c0_607, %c0_608] : memref<9x3x8xf32, #tpu.memory_space<vmem>>, vector<1x3x8xf32>
    %1278 = vector.shape_cast %1277 : vector<1x3x8xf32> to vector<3x8xf32>
    %cst_609 = arith.constant dense<0.000000e+00> : vector<3x256xf32>
    %1279 = tpu.matmul %1278, %1276, %cst_609 {dimension_numbers = #tpu.dot_dimension_numbers<[1], [0], [0], [1], [0, 0, 1, 1], [], []>} : vector<3x8xf32>, vector<8x256xf32>, vector<3x256xf32> -> vector<3x256xf32>
    %1280 = arith.addf %1228, %1279 : vector<3x256xf32>
    %c0_i32_610 = arith.constant 0 : i32
    %1281 = vector.broadcast %c0_i32_610 : i32 to vector<1x256xi32>
    %1282 = arith.addi %1120, %1281 : vector<1x256xi32>
    %c2_i32_611 = arith.constant 2 : i32
    %1283 = vector.broadcast %c2_i32_611 : i32 to vector<1x256xi32>
    %1284 = arith.addi %1282, %1283 : vector<1x256xi32>
    %c1_i32_612 = arith.constant 1 : i32
    %1285 = vector.broadcast %c1_i32_612 : i32 to vector<1x256xi32>
    %1286 = arith.addi %1122, %1285 : vector<1x256xi32>
    %c2_i32_613 = arith.constant 2 : i32
    %1287 = vector.broadcast %c2_i32_613 : i32 to vector<1x256xi32>
    %1288 = arith.addi %1286, %1287 : vector<1x256xi32>
    %c1_i32_614 = arith.constant 1 : i32
    %1289 = vector.broadcast %c1_i32_614 : i32 to vector<1x256xi32>
    %1290 = arith.shrsi %1284, %1289 : vector<1x256xi32>
    %c1_i32_615 = arith.constant 1 : i32
    %1291 = vector.broadcast %c1_i32_615 : i32 to vector<1x256xi32>
    %1292 = arith.subi %1290, %1291 : vector<1x256xi32>
    %c1_i32_616 = arith.constant 1 : i32
    %1293 = vector.broadcast %c1_i32_616 : i32 to vector<1x256xi32>
    %1294 = arith.shrsi %1288, %1293 : vector<1x256xi32>
    %c1_i32_617 = arith.constant 1 : i32
    %1295 = vector.broadcast %c1_i32_617 : i32 to vector<1x256xi32>
    %1296 = arith.subi %1294, %1295 : vector<1x256xi32>
    %c1_i32_618 = arith.constant 1 : i32
    %1297 = vector.broadcast %c1_i32_618 : i32 to vector<1x256xi32>
    %1298 = arith.andi %1284, %1297 : vector<1x256xi32>
    %c0_i32_619 = arith.constant 0 : i32
    %1299 = vector.broadcast %c0_i32_619 : i32 to vector<1x256xi32>
    %1300 = arith.cmpi eq, %1298, %1299 : vector<1x256xi32>
    %c0_i32_620 = arith.constant 0 : i32
    %1301 = vector.broadcast %c0_i32_620 : i32 to vector<1x256xi32>
    %1302 = arith.cmpi sge, %1292, %1301 : vector<1x256xi32>
    %1303 = arith.andi %1300, %1302 : vector<1x256xi1>
    %c8_i32_621 = arith.constant 8 : i32
    %1304 = vector.broadcast %c8_i32_621 : i32 to vector<1x256xi32>
    %1305 = arith.cmpi slt, %1292, %1304 : vector<1x256xi32>
    %1306 = arith.andi %1303, %1305 : vector<1x256xi1>
    %c1_i32_622 = arith.constant 1 : i32
    %1307 = vector.broadcast %c1_i32_622 : i32 to vector<1x256xi32>
    %1308 = arith.andi %1288, %1307 : vector<1x256xi32>
    %c0_i32_623 = arith.constant 0 : i32
    %1309 = vector.broadcast %c0_i32_623 : i32 to vector<1x256xi32>
    %1310 = arith.cmpi eq, %1308, %1309 : vector<1x256xi32>
    %1311 = arith.andi %1306, %1310 : vector<1x256xi1>
    %c0_i32_624 = arith.constant 0 : i32
    %1312 = vector.broadcast %c0_i32_624 : i32 to vector<1x256xi32>
    %1313 = arith.cmpi sge, %1296, %1312 : vector<1x256xi32>
    %1314 = arith.andi %1311, %1313 : vector<1x256xi1>
    %c8_i32_625 = arith.constant 8 : i32
    %1315 = vector.broadcast %c8_i32_625 : i32 to vector<1x256xi32>
    %1316 = arith.cmpi slt, %1296, %1315 : vector<1x256xi32>
    %1317 = arith.andi %1314, %1316 : vector<1x256xi1>
    %c8_i32_626 = arith.constant 8 : i32
    %1318 = vector.broadcast %c8_i32_626 : i32 to vector<1x256xi32>
    %1319 = arith.muli %1292, %1318 : vector<1x256xi32>
    %1320 = arith.addi %1319, %1296 : vector<1x256xi32>
    %c-1_i32_627 = arith.constant -1 : i32
    %1321 = vector.broadcast %c-1_i32_627 : i32 to vector<1x256xi32>
    %1322 = arith.select %1317, %1320, %1321 : vector<1x256xi1>, vector<1x256xi32>
    %1323 = vector.broadcast %1322 : vector<1x256xi32> to vector<64x256xi32>
    %1324 = arith.cmpi eq, %1123, %1323 : vector<64x256xi32>
    %cst_628 = arith.constant 1.000000e+00 : f32
    %cst_629 = arith.constant 0.000000e+00 : f32
    %1325 = vector.broadcast %cst_628 : f32 to vector<64x256xf32>
    %1326 = vector.broadcast %cst_629 : f32 to vector<64x256xf32>
    %1327 = arith.select %1324, %1325, %1326 : vector<64x256xi1>, vector<64x256xf32>
    %cst_630 = arith.constant dense<0.000000e+00> : vector<8x256xf32>
    %1328 = tpu.matmul %1117, %1327, %cst_630 {dimension_numbers = #tpu.dot_dimension_numbers<[1], [0], [0], [1], [0, 0, 1, 1], [], []>} : vector<8x64xf32>, vector<64x256xf32>, vector<8x256xf32> -> vector<8x256xf32>
    %c3_631 = arith.constant 3 : index
    %c0_632 = arith.constant 0 : index
    %c0_633 = arith.constant 0 : index
    %1329 = vector.load %arg8[%c3_631, %c0_632, %c0_633] : memref<9x3x8xf32, #tpu.memory_space<vmem>>, vector<1x3x8xf32>
    %1330 = vector.shape_cast %1329 : vector<1x3x8xf32> to vector<3x8xf32>
    %cst_634 = arith.constant dense<0.000000e+00> : vector<3x256xf32>
    %1331 = tpu.matmul %1330, %1328, %cst_634 {dimension_numbers = #tpu.dot_dimension_numbers<[1], [0], [0], [1], [0, 0, 1, 1], [], []>} : vector<3x8xf32>, vector<8x256xf32>, vector<3x256xf32> -> vector<3x256xf32>
    %1332 = arith.addf %1280, %1331 : vector<3x256xf32>
    %c0_i32_635 = arith.constant 0 : i32
    %1333 = vector.broadcast %c0_i32_635 : i32 to vector<1x256xi32>
    %1334 = arith.addi %1120, %1333 : vector<1x256xi32>
    %c2_i32_636 = arith.constant 2 : i32
    %1335 = vector.broadcast %c2_i32_636 : i32 to vector<1x256xi32>
    %1336 = arith.addi %1334, %1335 : vector<1x256xi32>
    %c0_i32_637 = arith.constant 0 : i32
    %1337 = vector.broadcast %c0_i32_637 : i32 to vector<1x256xi32>
    %1338 = arith.addi %1122, %1337 : vector<1x256xi32>
    %c2_i32_638 = arith.constant 2 : i32
    %1339 = vector.broadcast %c2_i32_638 : i32 to vector<1x256xi32>
    %1340 = arith.addi %1338, %1339 : vector<1x256xi32>
    %c1_i32_639 = arith.constant 1 : i32
    %1341 = vector.broadcast %c1_i32_639 : i32 to vector<1x256xi32>
    %1342 = arith.shrsi %1336, %1341 : vector<1x256xi32>
    %c1_i32_640 = arith.constant 1 : i32
    %1343 = vector.broadcast %c1_i32_640 : i32 to vector<1x256xi32>
    %1344 = arith.subi %1342, %1343 : vector<1x256xi32>
    %c1_i32_641 = arith.constant 1 : i32
    %1345 = vector.broadcast %c1_i32_641 : i32 to vector<1x256xi32>
    %1346 = arith.shrsi %1340, %1345 : vector<1x256xi32>
    %c1_i32_642 = arith.constant 1 : i32
    %1347 = vector.broadcast %c1_i32_642 : i32 to vector<1x256xi32>
    %1348 = arith.subi %1346, %1347 : vector<1x256xi32>
    %c1_i32_643 = arith.constant 1 : i32
    %1349 = vector.broadcast %c1_i32_643 : i32 to vector<1x256xi32>
    %1350 = arith.andi %1336, %1349 : vector<1x256xi32>
    %c0_i32_644 = arith.constant 0 : i32
    %1351 = vector.broadcast %c0_i32_644 : i32 to vector<1x256xi32>
    %1352 = arith.cmpi eq, %1350, %1351 : vector<1x256xi32>
    %c0_i32_645 = arith.constant 0 : i32
    %1353 = vector.broadcast %c0_i32_645 : i32 to vector<1x256xi32>
    %1354 = arith.cmpi sge, %1344, %1353 : vector<1x256xi32>
    %1355 = arith.andi %1352, %1354 : vector<1x256xi1>
    %c8_i32_646 = arith.constant 8 : i32
    %1356 = vector.broadcast %c8_i32_646 : i32 to vector<1x256xi32>
    %1357 = arith.cmpi slt, %1344, %1356 : vector<1x256xi32>
    %1358 = arith.andi %1355, %1357 : vector<1x256xi1>
    %c1_i32_647 = arith.constant 1 : i32
    %1359 = vector.broadcast %c1_i32_647 : i32 to vector<1x256xi32>
    %1360 = arith.andi %1340, %1359 : vector<1x256xi32>
    %c0_i32_648 = arith.constant 0 : i32
    %1361 = vector.broadcast %c0_i32_648 : i32 to vector<1x256xi32>
    %1362 = arith.cmpi eq, %1360, %1361 : vector<1x256xi32>
    %1363 = arith.andi %1358, %1362 : vector<1x256xi1>
    %c0_i32_649 = arith.constant 0 : i32
    %1364 = vector.broadcast %c0_i32_649 : i32 to vector<1x256xi32>
    %1365 = arith.cmpi sge, %1348, %1364 : vector<1x256xi32>
    %1366 = arith.andi %1363, %1365 : vector<1x256xi1>
    %c8_i32_650 = arith.constant 8 : i32
    %1367 = vector.broadcast %c8_i32_650 : i32 to vector<1x256xi32>
    %1368 = arith.cmpi slt, %1348, %1367 : vector<1x256xi32>
    %1369 = arith.andi %1366, %1368 : vector<1x256xi1>
    %c8_i32_651 = arith.constant 8 : i32
    %1370 = vector.broadcast %c8_i32_651 : i32 to vector<1x256xi32>
    %1371 = arith.muli %1344, %1370 : vector<1x256xi32>
    %1372 = arith.addi %1371, %1348 : vector<1x256xi32>
    %c-1_i32_652 = arith.constant -1 : i32
    %1373 = vector.broadcast %c-1_i32_652 : i32 to vector<1x256xi32>
    %1374 = arith.select %1369, %1372, %1373 : vector<1x256xi1>, vector<1x256xi32>
    %1375 = vector.broadcast %1374 : vector<1x256xi32> to vector<64x256xi32>
    %1376 = arith.cmpi eq, %1123, %1375 : vector<64x256xi32>
    %cst_653 = arith.constant 1.000000e+00 : f32
    %cst_654 = arith.constant 0.000000e+00 : f32
    %1377 = vector.broadcast %cst_653 : f32 to vector<64x256xf32>
    %1378 = vector.broadcast %cst_654 : f32 to vector<64x256xf32>
    %1379 = arith.select %1376, %1377, %1378 : vector<64x256xi1>, vector<64x256xf32>
    %cst_655 = arith.constant dense<0.000000e+00> : vector<8x256xf32>
    %1380 = tpu.matmul %1117, %1379, %cst_655 {dimension_numbers = #tpu.dot_dimension_numbers<[1], [0], [0], [1], [0, 0, 1, 1], [], []>} : vector<8x64xf32>, vector<64x256xf32>, vector<8x256xf32> -> vector<8x256xf32>
    %c4_656 = arith.constant 4 : index
    %c0_657 = arith.constant 0 : index
    %c0_658 = arith.constant 0 : index
    %1381 = vector.load %arg8[%c4_656, %c0_657, %c0_658] : memref<9x3x8xf32, #tpu.memory_space<vmem>>, vector<1x3x8xf32>
    %1382 = vector.shape_cast %1381 : vector<1x3x8xf32> to vector<3x8xf32>
    %cst_659 = arith.constant dense<0.000000e+00> : vector<3x256xf32>
    %1383 = tpu.matmul %1382, %1380, %cst_659 {dimension_numbers = #tpu.dot_dimension_numbers<[1], [0], [0], [1], [0, 0, 1, 1], [], []>} : vector<3x8xf32>, vector<8x256xf32>, vector<3x256xf32> -> vector<3x256xf32>
    %1384 = arith.addf %1332, %1383 : vector<3x256xf32>
    %c0_i32_660 = arith.constant 0 : i32
    %1385 = vector.broadcast %c0_i32_660 : i32 to vector<1x256xi32>
    %1386 = arith.addi %1120, %1385 : vector<1x256xi32>
    %c2_i32_661 = arith.constant 2 : i32
    %1387 = vector.broadcast %c2_i32_661 : i32 to vector<1x256xi32>
    %1388 = arith.addi %1386, %1387 : vector<1x256xi32>
    %c-1_i32_662 = arith.constant -1 : i32
    %1389 = vector.broadcast %c-1_i32_662 : i32 to vector<1x256xi32>
    %1390 = arith.addi %1122, %1389 : vector<1x256xi32>
    %c2_i32_663 = arith.constant 2 : i32
    %1391 = vector.broadcast %c2_i32_663 : i32 to vector<1x256xi32>
    %1392 = arith.addi %1390, %1391 : vector<1x256xi32>
    %c1_i32_664 = arith.constant 1 : i32
    %1393 = vector.broadcast %c1_i32_664 : i32 to vector<1x256xi32>
    %1394 = arith.shrsi %1388, %1393 : vector<1x256xi32>
    %c1_i32_665 = arith.constant 1 : i32
    %1395 = vector.broadcast %c1_i32_665 : i32 to vector<1x256xi32>
    %1396 = arith.subi %1394, %1395 : vector<1x256xi32>
    %c1_i32_666 = arith.constant 1 : i32
    %1397 = vector.broadcast %c1_i32_666 : i32 to vector<1x256xi32>
    %1398 = arith.shrsi %1392, %1397 : vector<1x256xi32>
    %c1_i32_667 = arith.constant 1 : i32
    %1399 = vector.broadcast %c1_i32_667 : i32 to vector<1x256xi32>
    %1400 = arith.subi %1398, %1399 : vector<1x256xi32>
    %c1_i32_668 = arith.constant 1 : i32
    %1401 = vector.broadcast %c1_i32_668 : i32 to vector<1x256xi32>
    %1402 = arith.andi %1388, %1401 : vector<1x256xi32>
    %c0_i32_669 = arith.constant 0 : i32
    %1403 = vector.broadcast %c0_i32_669 : i32 to vector<1x256xi32>
    %1404 = arith.cmpi eq, %1402, %1403 : vector<1x256xi32>
    %c0_i32_670 = arith.constant 0 : i32
    %1405 = vector.broadcast %c0_i32_670 : i32 to vector<1x256xi32>
    %1406 = arith.cmpi sge, %1396, %1405 : vector<1x256xi32>
    %1407 = arith.andi %1404, %1406 : vector<1x256xi1>
    %c8_i32_671 = arith.constant 8 : i32
    %1408 = vector.broadcast %c8_i32_671 : i32 to vector<1x256xi32>
    %1409 = arith.cmpi slt, %1396, %1408 : vector<1x256xi32>
    %1410 = arith.andi %1407, %1409 : vector<1x256xi1>
    %c1_i32_672 = arith.constant 1 : i32
    %1411 = vector.broadcast %c1_i32_672 : i32 to vector<1x256xi32>
    %1412 = arith.andi %1392, %1411 : vector<1x256xi32>
    %c0_i32_673 = arith.constant 0 : i32
    %1413 = vector.broadcast %c0_i32_673 : i32 to vector<1x256xi32>
    %1414 = arith.cmpi eq, %1412, %1413 : vector<1x256xi32>
    %1415 = arith.andi %1410, %1414 : vector<1x256xi1>
    %c0_i32_674 = arith.constant 0 : i32
    %1416 = vector.broadcast %c0_i32_674 : i32 to vector<1x256xi32>
    %1417 = arith.cmpi sge, %1400, %1416 : vector<1x256xi32>
    %1418 = arith.andi %1415, %1417 : vector<1x256xi1>
    %c8_i32_675 = arith.constant 8 : i32
    %1419 = vector.broadcast %c8_i32_675 : i32 to vector<1x256xi32>
    %1420 = arith.cmpi slt, %1400, %1419 : vector<1x256xi32>
    %1421 = arith.andi %1418, %1420 : vector<1x256xi1>
    %c8_i32_676 = arith.constant 8 : i32
    %1422 = vector.broadcast %c8_i32_676 : i32 to vector<1x256xi32>
    %1423 = arith.muli %1396, %1422 : vector<1x256xi32>
    %1424 = arith.addi %1423, %1400 : vector<1x256xi32>
    %c-1_i32_677 = arith.constant -1 : i32
    %1425 = vector.broadcast %c-1_i32_677 : i32 to vector<1x256xi32>
    %1426 = arith.select %1421, %1424, %1425 : vector<1x256xi1>, vector<1x256xi32>
    %1427 = vector.broadcast %1426 : vector<1x256xi32> to vector<64x256xi32>
    %1428 = arith.cmpi eq, %1123, %1427 : vector<64x256xi32>
    %cst_678 = arith.constant 1.000000e+00 : f32
    %cst_679 = arith.constant 0.000000e+00 : f32
    %1429 = vector.broadcast %cst_678 : f32 to vector<64x256xf32>
    %1430 = vector.broadcast %cst_679 : f32 to vector<64x256xf32>
    %1431 = arith.select %1428, %1429, %1430 : vector<64x256xi1>, vector<64x256xf32>
    %cst_680 = arith.constant dense<0.000000e+00> : vector<8x256xf32>
    %1432 = tpu.matmul %1117, %1431, %cst_680 {dimension_numbers = #tpu.dot_dimension_numbers<[1], [0], [0], [1], [0, 0, 1, 1], [], []>} : vector<8x64xf32>, vector<64x256xf32>, vector<8x256xf32> -> vector<8x256xf32>
    %c5_681 = arith.constant 5 : index
    %c0_682 = arith.constant 0 : index
    %c0_683 = arith.constant 0 : index
    %1433 = vector.load %arg8[%c5_681, %c0_682, %c0_683] : memref<9x3x8xf32, #tpu.memory_space<vmem>>, vector<1x3x8xf32>
    %1434 = vector.shape_cast %1433 : vector<1x3x8xf32> to vector<3x8xf32>
    %cst_684 = arith.constant dense<0.000000e+00> : vector<3x256xf32>
    %1435 = tpu.matmul %1434, %1432, %cst_684 {dimension_numbers = #tpu.dot_dimension_numbers<[1], [0], [0], [1], [0, 0, 1, 1], [], []>} : vector<3x8xf32>, vector<8x256xf32>, vector<3x256xf32> -> vector<3x256xf32>
    %1436 = arith.addf %1384, %1435 : vector<3x256xf32>
    %c-1_i32_685 = arith.constant -1 : i32
    %1437 = vector.broadcast %c-1_i32_685 : i32 to vector<1x256xi32>
    %1438 = arith.addi %1120, %1437 : vector<1x256xi32>
    %c2_i32_686 = arith.constant 2 : i32
    %1439 = vector.broadcast %c2_i32_686 : i32 to vector<1x256xi32>
    %1440 = arith.addi %1438, %1439 : vector<1x256xi32>
    %c1_i32_687 = arith.constant 1 : i32
    %1441 = vector.broadcast %c1_i32_687 : i32 to vector<1x256xi32>
    %1442 = arith.addi %1122, %1441 : vector<1x256xi32>
    %c2_i32_688 = arith.constant 2 : i32
    %1443 = vector.broadcast %c2_i32_688 : i32 to vector<1x256xi32>
    %1444 = arith.addi %1442, %1443 : vector<1x256xi32>
    %c1_i32_689 = arith.constant 1 : i32
    %1445 = vector.broadcast %c1_i32_689 : i32 to vector<1x256xi32>
    %1446 = arith.shrsi %1440, %1445 : vector<1x256xi32>
    %c1_i32_690 = arith.constant 1 : i32
    %1447 = vector.broadcast %c1_i32_690 : i32 to vector<1x256xi32>
    %1448 = arith.subi %1446, %1447 : vector<1x256xi32>
    %c1_i32_691 = arith.constant 1 : i32
    %1449 = vector.broadcast %c1_i32_691 : i32 to vector<1x256xi32>
    %1450 = arith.shrsi %1444, %1449 : vector<1x256xi32>
    %c1_i32_692 = arith.constant 1 : i32
    %1451 = vector.broadcast %c1_i32_692 : i32 to vector<1x256xi32>
    %1452 = arith.subi %1450, %1451 : vector<1x256xi32>
    %c1_i32_693 = arith.constant 1 : i32
    %1453 = vector.broadcast %c1_i32_693 : i32 to vector<1x256xi32>
    %1454 = arith.andi %1440, %1453 : vector<1x256xi32>
    %c0_i32_694 = arith.constant 0 : i32
    %1455 = vector.broadcast %c0_i32_694 : i32 to vector<1x256xi32>
    %1456 = arith.cmpi eq, %1454, %1455 : vector<1x256xi32>
    %c0_i32_695 = arith.constant 0 : i32
    %1457 = vector.broadcast %c0_i32_695 : i32 to vector<1x256xi32>
    %1458 = arith.cmpi sge, %1448, %1457 : vector<1x256xi32>
    %1459 = arith.andi %1456, %1458 : vector<1x256xi1>
    %c8_i32_696 = arith.constant 8 : i32
    %1460 = vector.broadcast %c8_i32_696 : i32 to vector<1x256xi32>
    %1461 = arith.cmpi slt, %1448, %1460 : vector<1x256xi32>
    %1462 = arith.andi %1459, %1461 : vector<1x256xi1>
    %c1_i32_697 = arith.constant 1 : i32
    %1463 = vector.broadcast %c1_i32_697 : i32 to vector<1x256xi32>
    %1464 = arith.andi %1444, %1463 : vector<1x256xi32>
    %c0_i32_698 = arith.constant 0 : i32
    %1465 = vector.broadcast %c0_i32_698 : i32 to vector<1x256xi32>
    %1466 = arith.cmpi eq, %1464, %1465 : vector<1x256xi32>
    %1467 = arith.andi %1462, %1466 : vector<1x256xi1>
    %c0_i32_699 = arith.constant 0 : i32
    %1468 = vector.broadcast %c0_i32_699 : i32 to vector<1x256xi32>
    %1469 = arith.cmpi sge, %1452, %1468 : vector<1x256xi32>
    %1470 = arith.andi %1467, %1469 : vector<1x256xi1>
    %c8_i32_700 = arith.constant 8 : i32
    %1471 = vector.broadcast %c8_i32_700 : i32 to vector<1x256xi32>
    %1472 = arith.cmpi slt, %1452, %1471 : vector<1x256xi32>
    %1473 = arith.andi %1470, %1472 : vector<1x256xi1>
    %c8_i32_701 = arith.constant 8 : i32
    %1474 = vector.broadcast %c8_i32_701 : i32 to vector<1x256xi32>
    %1475 = arith.muli %1448, %1474 : vector<1x256xi32>
    %1476 = arith.addi %1475, %1452 : vector<1x256xi32>
    %c-1_i32_702 = arith.constant -1 : i32
    %1477 = vector.broadcast %c-1_i32_702 : i32 to vector<1x256xi32>
    %1478 = arith.select %1473, %1476, %1477 : vector<1x256xi1>, vector<1x256xi32>
    %1479 = vector.broadcast %1478 : vector<1x256xi32> to vector<64x256xi32>
    %1480 = arith.cmpi eq, %1123, %1479 : vector<64x256xi32>
    %cst_703 = arith.constant 1.000000e+00 : f32
    %cst_704 = arith.constant 0.000000e+00 : f32
    %1481 = vector.broadcast %cst_703 : f32 to vector<64x256xf32>
    %1482 = vector.broadcast %cst_704 : f32 to vector<64x256xf32>
    %1483 = arith.select %1480, %1481, %1482 : vector<64x256xi1>, vector<64x256xf32>
    %cst_705 = arith.constant dense<0.000000e+00> : vector<8x256xf32>
    %1484 = tpu.matmul %1117, %1483, %cst_705 {dimension_numbers = #tpu.dot_dimension_numbers<[1], [0], [0], [1], [0, 0, 1, 1], [], []>} : vector<8x64xf32>, vector<64x256xf32>, vector<8x256xf32> -> vector<8x256xf32>
    %c6_706 = arith.constant 6 : index
    %c0_707 = arith.constant 0 : index
    %c0_708 = arith.constant 0 : index
    %1485 = vector.load %arg8[%c6_706, %c0_707, %c0_708] : memref<9x3x8xf32, #tpu.memory_space<vmem>>, vector<1x3x8xf32>
    %1486 = vector.shape_cast %1485 : vector<1x3x8xf32> to vector<3x8xf32>
    %cst_709 = arith.constant dense<0.000000e+00> : vector<3x256xf32>
    %1487 = tpu.matmul %1486, %1484, %cst_709 {dimension_numbers = #tpu.dot_dimension_numbers<[1], [0], [0], [1], [0, 0, 1, 1], [], []>} : vector<3x8xf32>, vector<8x256xf32>, vector<3x256xf32> -> vector<3x256xf32>
    %1488 = arith.addf %1436, %1487 : vector<3x256xf32>
    %c-1_i32_710 = arith.constant -1 : i32
    %1489 = vector.broadcast %c-1_i32_710 : i32 to vector<1x256xi32>
    %1490 = arith.addi %1120, %1489 : vector<1x256xi32>
    %c2_i32_711 = arith.constant 2 : i32
    %1491 = vector.broadcast %c2_i32_711 : i32 to vector<1x256xi32>
    %1492 = arith.addi %1490, %1491 : vector<1x256xi32>
    %c0_i32_712 = arith.constant 0 : i32
    %1493 = vector.broadcast %c0_i32_712 : i32 to vector<1x256xi32>
    %1494 = arith.addi %1122, %1493 : vector<1x256xi32>
    %c2_i32_713 = arith.constant 2 : i32
    %1495 = vector.broadcast %c2_i32_713 : i32 to vector<1x256xi32>
    %1496 = arith.addi %1494, %1495 : vector<1x256xi32>
    %c1_i32_714 = arith.constant 1 : i32
    %1497 = vector.broadcast %c1_i32_714 : i32 to vector<1x256xi32>
    %1498 = arith.shrsi %1492, %1497 : vector<1x256xi32>
    %c1_i32_715 = arith.constant 1 : i32
    %1499 = vector.broadcast %c1_i32_715 : i32 to vector<1x256xi32>
    %1500 = arith.subi %1498, %1499 : vector<1x256xi32>
    %c1_i32_716 = arith.constant 1 : i32
    %1501 = vector.broadcast %c1_i32_716 : i32 to vector<1x256xi32>
    %1502 = arith.shrsi %1496, %1501 : vector<1x256xi32>
    %c1_i32_717 = arith.constant 1 : i32
    %1503 = vector.broadcast %c1_i32_717 : i32 to vector<1x256xi32>
    %1504 = arith.subi %1502, %1503 : vector<1x256xi32>
    %c1_i32_718 = arith.constant 1 : i32
    %1505 = vector.broadcast %c1_i32_718 : i32 to vector<1x256xi32>
    %1506 = arith.andi %1492, %1505 : vector<1x256xi32>
    %c0_i32_719 = arith.constant 0 : i32
    %1507 = vector.broadcast %c0_i32_719 : i32 to vector<1x256xi32>
    %1508 = arith.cmpi eq, %1506, %1507 : vector<1x256xi32>
    %c0_i32_720 = arith.constant 0 : i32
    %1509 = vector.broadcast %c0_i32_720 : i32 to vector<1x256xi32>
    %1510 = arith.cmpi sge, %1500, %1509 : vector<1x256xi32>
    %1511 = arith.andi %1508, %1510 : vector<1x256xi1>
    %c8_i32_721 = arith.constant 8 : i32
    %1512 = vector.broadcast %c8_i32_721 : i32 to vector<1x256xi32>
    %1513 = arith.cmpi slt, %1500, %1512 : vector<1x256xi32>
    %1514 = arith.andi %1511, %1513 : vector<1x256xi1>
    %c1_i32_722 = arith.constant 1 : i32
    %1515 = vector.broadcast %c1_i32_722 : i32 to vector<1x256xi32>
    %1516 = arith.andi %1496, %1515 : vector<1x256xi32>
    %c0_i32_723 = arith.constant 0 : i32
    %1517 = vector.broadcast %c0_i32_723 : i32 to vector<1x256xi32>
    %1518 = arith.cmpi eq, %1516, %1517 : vector<1x256xi32>
    %1519 = arith.andi %1514, %1518 : vector<1x256xi1>
    %c0_i32_724 = arith.constant 0 : i32
    %1520 = vector.broadcast %c0_i32_724 : i32 to vector<1x256xi32>
    %1521 = arith.cmpi sge, %1504, %1520 : vector<1x256xi32>
    %1522 = arith.andi %1519, %1521 : vector<1x256xi1>
    %c8_i32_725 = arith.constant 8 : i32
    %1523 = vector.broadcast %c8_i32_725 : i32 to vector<1x256xi32>
    %1524 = arith.cmpi slt, %1504, %1523 : vector<1x256xi32>
    %1525 = arith.andi %1522, %1524 : vector<1x256xi1>
    %c8_i32_726 = arith.constant 8 : i32
    %1526 = vector.broadcast %c8_i32_726 : i32 to vector<1x256xi32>
    %1527 = arith.muli %1500, %1526 : vector<1x256xi32>
    %1528 = arith.addi %1527, %1504 : vector<1x256xi32>
    %c-1_i32_727 = arith.constant -1 : i32
    %1529 = vector.broadcast %c-1_i32_727 : i32 to vector<1x256xi32>
    %1530 = arith.select %1525, %1528, %1529 : vector<1x256xi1>, vector<1x256xi32>
    %1531 = vector.broadcast %1530 : vector<1x256xi32> to vector<64x256xi32>
    %1532 = arith.cmpi eq, %1123, %1531 : vector<64x256xi32>
    %cst_728 = arith.constant 1.000000e+00 : f32
    %cst_729 = arith.constant 0.000000e+00 : f32
    %1533 = vector.broadcast %cst_728 : f32 to vector<64x256xf32>
    %1534 = vector.broadcast %cst_729 : f32 to vector<64x256xf32>
    %1535 = arith.select %1532, %1533, %1534 : vector<64x256xi1>, vector<64x256xf32>
    %cst_730 = arith.constant dense<0.000000e+00> : vector<8x256xf32>
    %1536 = tpu.matmul %1117, %1535, %cst_730 {dimension_numbers = #tpu.dot_dimension_numbers<[1], [0], [0], [1], [0, 0, 1, 1], [], []>} : vector<8x64xf32>, vector<64x256xf32>, vector<8x256xf32> -> vector<8x256xf32>
    %c7_731 = arith.constant 7 : index
    %c0_732 = arith.constant 0 : index
    %c0_733 = arith.constant 0 : index
    %1537 = vector.load %arg8[%c7_731, %c0_732, %c0_733] : memref<9x3x8xf32, #tpu.memory_space<vmem>>, vector<1x3x8xf32>
    %1538 = vector.shape_cast %1537 : vector<1x3x8xf32> to vector<3x8xf32>
    %cst_734 = arith.constant dense<0.000000e+00> : vector<3x256xf32>
    %1539 = tpu.matmul %1538, %1536, %cst_734 {dimension_numbers = #tpu.dot_dimension_numbers<[1], [0], [0], [1], [0, 0, 1, 1], [], []>} : vector<3x8xf32>, vector<8x256xf32>, vector<3x256xf32> -> vector<3x256xf32>
    %1540 = arith.addf %1488, %1539 : vector<3x256xf32>
    %c-1_i32_735 = arith.constant -1 : i32
    %1541 = vector.broadcast %c-1_i32_735 : i32 to vector<1x256xi32>
    %1542 = arith.addi %1120, %1541 : vector<1x256xi32>
    %c2_i32_736 = arith.constant 2 : i32
    %1543 = vector.broadcast %c2_i32_736 : i32 to vector<1x256xi32>
    %1544 = arith.addi %1542, %1543 : vector<1x256xi32>
    %c-1_i32_737 = arith.constant -1 : i32
    %1545 = vector.broadcast %c-1_i32_737 : i32 to vector<1x256xi32>
    %1546 = arith.addi %1122, %1545 : vector<1x256xi32>
    %c2_i32_738 = arith.constant 2 : i32
    %1547 = vector.broadcast %c2_i32_738 : i32 to vector<1x256xi32>
    %1548 = arith.addi %1546, %1547 : vector<1x256xi32>
    %c1_i32_739 = arith.constant 1 : i32
    %1549 = vector.broadcast %c1_i32_739 : i32 to vector<1x256xi32>
    %1550 = arith.shrsi %1544, %1549 : vector<1x256xi32>
    %c1_i32_740 = arith.constant 1 : i32
    %1551 = vector.broadcast %c1_i32_740 : i32 to vector<1x256xi32>
    %1552 = arith.subi %1550, %1551 : vector<1x256xi32>
    %c1_i32_741 = arith.constant 1 : i32
    %1553 = vector.broadcast %c1_i32_741 : i32 to vector<1x256xi32>
    %1554 = arith.shrsi %1548, %1553 : vector<1x256xi32>
    %c1_i32_742 = arith.constant 1 : i32
    %1555 = vector.broadcast %c1_i32_742 : i32 to vector<1x256xi32>
    %1556 = arith.subi %1554, %1555 : vector<1x256xi32>
    %c1_i32_743 = arith.constant 1 : i32
    %1557 = vector.broadcast %c1_i32_743 : i32 to vector<1x256xi32>
    %1558 = arith.andi %1544, %1557 : vector<1x256xi32>
    %c0_i32_744 = arith.constant 0 : i32
    %1559 = vector.broadcast %c0_i32_744 : i32 to vector<1x256xi32>
    %1560 = arith.cmpi eq, %1558, %1559 : vector<1x256xi32>
    %c0_i32_745 = arith.constant 0 : i32
    %1561 = vector.broadcast %c0_i32_745 : i32 to vector<1x256xi32>
    %1562 = arith.cmpi sge, %1552, %1561 : vector<1x256xi32>
    %1563 = arith.andi %1560, %1562 : vector<1x256xi1>
    %c8_i32_746 = arith.constant 8 : i32
    %1564 = vector.broadcast %c8_i32_746 : i32 to vector<1x256xi32>
    %1565 = arith.cmpi slt, %1552, %1564 : vector<1x256xi32>
    %1566 = arith.andi %1563, %1565 : vector<1x256xi1>
    %c1_i32_747 = arith.constant 1 : i32
    %1567 = vector.broadcast %c1_i32_747 : i32 to vector<1x256xi32>
    %1568 = arith.andi %1548, %1567 : vector<1x256xi32>
    %c0_i32_748 = arith.constant 0 : i32
    %1569 = vector.broadcast %c0_i32_748 : i32 to vector<1x256xi32>
    %1570 = arith.cmpi eq, %1568, %1569 : vector<1x256xi32>
    %1571 = arith.andi %1566, %1570 : vector<1x256xi1>
    %c0_i32_749 = arith.constant 0 : i32
    %1572 = vector.broadcast %c0_i32_749 : i32 to vector<1x256xi32>
    %1573 = arith.cmpi sge, %1556, %1572 : vector<1x256xi32>
    %1574 = arith.andi %1571, %1573 : vector<1x256xi1>
    %c8_i32_750 = arith.constant 8 : i32
    %1575 = vector.broadcast %c8_i32_750 : i32 to vector<1x256xi32>
    %1576 = arith.cmpi slt, %1556, %1575 : vector<1x256xi32>
    %1577 = arith.andi %1574, %1576 : vector<1x256xi1>
    %c8_i32_751 = arith.constant 8 : i32
    %1578 = vector.broadcast %c8_i32_751 : i32 to vector<1x256xi32>
    %1579 = arith.muli %1552, %1578 : vector<1x256xi32>
    %1580 = arith.addi %1579, %1556 : vector<1x256xi32>
    %c-1_i32_752 = arith.constant -1 : i32
    %1581 = vector.broadcast %c-1_i32_752 : i32 to vector<1x256xi32>
    %1582 = arith.select %1577, %1580, %1581 : vector<1x256xi1>, vector<1x256xi32>
    %1583 = vector.broadcast %1582 : vector<1x256xi32> to vector<64x256xi32>
    %1584 = arith.cmpi eq, %1123, %1583 : vector<64x256xi32>
    %cst_753 = arith.constant 1.000000e+00 : f32
    %cst_754 = arith.constant 0.000000e+00 : f32
    %1585 = vector.broadcast %cst_753 : f32 to vector<64x256xf32>
    %1586 = vector.broadcast %cst_754 : f32 to vector<64x256xf32>
    %1587 = arith.select %1584, %1585, %1586 : vector<64x256xi1>, vector<64x256xf32>
    %cst_755 = arith.constant dense<0.000000e+00> : vector<8x256xf32>
    %1588 = tpu.matmul %1117, %1587, %cst_755 {dimension_numbers = #tpu.dot_dimension_numbers<[1], [0], [0], [1], [0, 0, 1, 1], [], []>} : vector<8x64xf32>, vector<64x256xf32>, vector<8x256xf32> -> vector<8x256xf32>
    %c8_756 = arith.constant 8 : index
    %c0_757 = arith.constant 0 : index
    %c0_758 = arith.constant 0 : index
    %1589 = vector.load %arg8[%c8_756, %c0_757, %c0_758] : memref<9x3x8xf32, #tpu.memory_space<vmem>>, vector<1x3x8xf32>
    %1590 = vector.shape_cast %1589 : vector<1x3x8xf32> to vector<3x8xf32>
    %cst_759 = arith.constant dense<0.000000e+00> : vector<3x256xf32>
    %1591 = tpu.matmul %1590, %1588, %cst_759 {dimension_numbers = #tpu.dot_dimension_numbers<[1], [0], [0], [1], [0, 0, 1, 1], [], []>} : vector<3x8xf32>, vector<8x256xf32>, vector<3x256xf32> -> vector<3x256xf32>
    %1592 = arith.addf %1540, %1591 : vector<3x256xf32>
    %c0_760 = arith.constant 0 : index
    %c0_761 = arith.constant 0 : index
    %1593 = vector.load %arg9[%c0_760, %c0_761] : memref<3x1xf32, #tpu.memory_space<vmem>>, vector<3x1xf32>
    %1594 = vector.broadcast %1593 : vector<3x1xf32> to vector<3x256xf32>
    %1595 = arith.addf %1592, %1594 : vector<3x256xf32>
    %1596 = math.absf %1595 : vector<3x256xf32>
    %cst_762 = arith.constant 0.000000e+00 : f32
    %1597 = vector.broadcast %cst_762 : f32 to vector<3x256xf32>
    %1598 = arith.subf %1597, %1596 : vector<3x256xf32>
    %1599 = math.exp %1598 : vector<3x256xf32>
    %cst_763 = arith.constant 1.000000e+00 : f32
    %1600 = vector.broadcast %cst_763 : f32 to vector<3x256xf32>
    %1601 = arith.addf %1600, %1599 : vector<3x256xf32>
    %1602 = tpu.reciprocal %1601 {approx = true} : vector<3x256xf32> -> vector<3x256xf32>
    %cst_764 = arith.constant 0.000000e+00 : f32
    %1603 = vector.broadcast %cst_764 : f32 to vector<3x256xf32>
    %1604 = arith.cmpf oge, %1595, %1603 : vector<3x256xf32>
    %1605 = arith.mulf %1599, %1602 : vector<3x256xf32>
    %1606 = arith.select %1604, %1602, %1605 : vector<3x256xi1>, vector<3x256xf32>
    %cst_765 = arith.constant 0.000000e+00 : f32
    %cst_766 = arith.constant 1.000000e+00 : f32
    %1607 = vector.broadcast %cst_765 : f32 to vector<3x256xf32>
    %1608 = arith.maximumf %1607, %1606 : vector<3x256xf32>
    %1609 = vector.broadcast %cst_766 : f32 to vector<3x256xf32>
    %1610 = arith.minimumf %1609, %1608 : vector<3x256xf32>
    %c0_767 = arith.constant 0 : index
    %c0_768 = arith.constant 0 : index
    %c0_769 = arith.constant 0 : index
    %1611 = vector.load %arg10[%c0_767, %c0_768, %c0_769] : memref<1x3x256xf32, #tpu.memory_space<vmem>>, vector<1x3x256xf32>
    %1612 = vector.shape_cast %1611 : vector<1x3x256xf32> to vector<3x256xf32>
    %1613 = vector.shape_cast %1610 : vector<3x256xf32> to vector<1x3x256xf32>
    tpu.vector_store %arg10[%c0_767, %c0_768, %c0_769], %1613 {strides = array<i32>} : memref<1x3x256xf32, #tpu.memory_space<vmem>>, vector<1x3x256xf32>,
    return
  }
  func.func @transform_0(%arg0: i32) -> (i32, i32, i32) {
    %c0_i32 = arith.constant 0 : i32
    %c0_i32_0 = arith.constant 0 : i32
    %c0_i32_1 = arith.constant 0 : i32
    return %arg0, %c0_i32, %c0_i32_0 : i32, i32, i32
  }
  func.func @transform_1(%arg0: i32) -> (i32, i32, i32) {
    %c0_i32 = arith.constant 0 : i32
    %c0_i32_0 = arith.constant 0 : i32
    %c0_i32_1 = arith.constant 0 : i32
    %c0_i32_2 = arith.constant 0 : i32
    return %c0_i32, %c0_i32_0, %c0_i32_1 : i32, i32, i32
  }
  func.func @transform_2(%arg0: i32) -> (i32, i32) {
    %c0_i32 = arith.constant 0 : i32
    %c0_i32_0 = arith.constant 0 : i32
    %c0_i32_1 = arith.constant 0 : i32
    return %c0_i32, %c0_i32_0 : i32, i32
  }
  func.func @transform_3(%arg0: i32) -> (i32, i32, i32) {
    %c0_i32 = arith.constant 0 : i32
    %c0_i32_0 = arith.constant 0 : i32
    %c0_i32_1 = arith.constant 0 : i32
    %c0_i32_2 = arith.constant 0 : i32
    return %c0_i32, %c0_i32_0, %c0_i32_1 : i32, i32, i32
  }
  func.func @transform_4(%arg0: i32) -> (i32, i32) {
    %c0_i32 = arith.constant 0 : i32
    %c0_i32_0 = arith.constant 0 : i32
    %c0_i32_1 = arith.constant 0 : i32
    return %c0_i32, %c0_i32_0 : i32, i32
  }
  func.func @transform_5(%arg0: i32) -> (i32, i32, i32) {
    %c0_i32 = arith.constant 0 : i32
    %c0_i32_0 = arith.constant 0 : i32
    %c0_i32_1 = arith.constant 0 : i32
    %c0_i32_2 = arith.constant 0 : i32
    return %c0_i32, %c0_i32_0, %c0_i32_1 : i32, i32, i32
  }
  func.func @transform_6(%arg0: i32) -> (i32, i32) {
    %c0_i32 = arith.constant 0 : i32
    %c0_i32_0 = arith.constant 0 : i32
    %c0_i32_1 = arith.constant 0 : i32
    return %c0_i32, %c0_i32_0 : i32, i32
  }
  func.func @transform_7(%arg0: i32) -> (i32, i32, i32) {
    %c0_i32 = arith.constant 0 : i32
    %c0_i32_0 = arith.constant 0 : i32
    %c0_i32_1 = arith.constant 0 : i32
    %c0_i32_2 = arith.constant 0 : i32
    return %c0_i32, %c0_i32_0, %c0_i32_1 : i32, i32, i32
  }
  func.func @transform_8(%arg0: i32) -> (i32, i32) {
    %c0_i32 = arith.constant 0 : i32
    %c0_i32_0 = arith.constant 0 : i32
    %c0_i32_1 = arith.constant 0 : i32
    return %c0_i32, %c0_i32_0 : i32, i32
  }
  func.func @transform_9(%arg0: i32) -> (i32, i32, i32) {
    %c0_i32 = arith.constant 0 : i32
    %c0_i32_0 = arith.constant 0 : i32
    %c0_i32_1 = arith.constant 0 : i32
    return %arg0, %c0_i32, %c0_i32_0 : i32, i32, i32
  }
}

</mosaic_0001>

<llo_original>
// kernel: fast_conv_autoencoder.1
$region0: #{fast_conv_autoencoder.1}
  #allocation0 [shape = 'u32[]', space=smem, size = 0x4, offset = 0x4, fixed_abs, tag = 'smem constant byte address 0x4 - core index']
  #allocation1 [shape = 'u32[144,128]{1,0:T(1,128)}', space=vmem, size = 0x12000, scoped, tag = 'internal scratch']
  %s0 = inlined_call_operand.vmem [shape: f32[2,3,256], index: 0, kind: input, shape index: {}]
  %s1 = inlined_call_operand.vmem [shape: f32[9,8,3], index: 1, kind: input, shape index: {}]
  %s2 = inlined_call_operand.vmem [shape: f32[8,1], index: 2, kind: input, shape index: {}]
  %s3 = inlined_call_operand.vmem [shape: f32[9,16,8], index: 3, kind: input, shape index: {}]
  %s4 = inlined_call_operand.vmem [shape: f32[16,1], index: 4, kind: input, shape index: {}]
  %s5 = inlined_call_operand.vmem [shape: f32[9,8,16], index: 5, kind: input, shape index: {}]
  %s6 = inlined_call_operand.vmem [shape: f32[8,1], index: 6, kind: input, shape index: {}]
  %s7 = inlined_call_operand.vmem [shape: f32[9,3,8], index: 7, kind: input, shape index: {}]
  %s8 = inlined_call_operand.vmem [shape: f32[3,1], index: 8, kind: input, shape index: {}]
  %s9 = inlined_call_operand.vmem [shape: f32[2,3,256], index: 9, kind: output, shape index: {}]
  %s10 = sld [smem:[#allocation0]]
  $region69: #{fast_conv_autoencoder.1} parent=0
    _
  %s12 = ssub.s32 1, %s10
  %s13 = scalar_select 0, %s12, %s10
  loop: start=0, step=1, limit=4
  $region2: #{fast_conv_autoencoder.1} parent=0 // loop_pre_header
    _
  $region3: #{fast_conv_autoencoder.1} parent=0 // loop_header
    %s15 = sphi 0, %s19
    %p16 = scmp.ge.s32.totalorder %s15, 4
    %s25 = sphi 0, %s27
    %s28 = sphi 0, %s25
    %s29 = sphi 0, %s28
    %s45 = sphi 0, %s29
    %s49 = sphi 0, %s49
    %s51 = sphi 0, %s49
    %s52 = sphi 0, %s51
    %s66 = sphi 0, %s52
    %s70 = sphi 0, %s70
    %s72 = sphi 0, %s70
    %s73 = sphi 0, %s72
    %s87 = sphi 0, %s73
    %s91 = sphi 0, %s91
    %s93 = sphi 0, %s91
    %s94 = sphi 0, %s93
    %s108 = sphi 0, %s94
    %s112 = sphi 0, %s112
    %s114 = sphi 0, %s112
    %s115 = sphi 0, %s114
    %s129 = sphi 0, %s115
    %s133 = sphi 0, %s133
    %s135 = sphi 0, %s133
    %s136 = sphi 0, %s135
    %s150 = sphi 0, %s136
    %s154 = sphi 0, %s154
    %s156 = sphi 0, %s154
    %s157 = sphi 0, %s156
    %s171 = sphi 0, %s157
    %s175 = sphi 0, %s175
    %s177 = sphi 0, %s175
    %s178 = sphi 0, %s177
    %s192 = sphi 0, %s178
    %s196 = sphi 0, %s196
    %s198 = sphi 0, %s196
    %s199 = sphi 0, %s198
    %s213 = sphi 0, %s199
    %s219 = sphi 0, %s221
    %s222 = sphi 0, %s219
    %s223 = sphi 0, %s222
    %s239 = sphi 0, %s223
  $region4: #{fast_conv_autoencoder.1} parent=0 // loop_header_branch
    %18 = sbr.rel (%p16) target = $region8
  $region5: #{fast_conv_autoencoder.1} parent=0 // loop_body
    %s20 = ssub.s32 %s15, 1
    %s21 = ssub.s32 %s15, 2
    %s22 = sadd.s32 %s15, 1
    %s23 = ssub.s32 %s15, %s22
    %p24 = scmp.eq.s32.totalorder %s23, 0
    %s26 = sadd.s32 %s25, 1
    %s27 = scalar_select %p24, %s25, %s26
    %p30 = pneg %p24
    %p31 = scmp.eq.s32.totalorder %s15, 1
    %p32 = por %p30, %p31
    %p33 = scmp.ne.s32.totalorder %s25, %s28
    %p34 = scmp.eq.s32.totalorder %s15, 0
    %p35 = por %p33, %p34
    %p36 = scmp.ne.s32.totalorder %s25, %s28
    %p37 = scmp.eq.s32.totalorder %s20, 1
    %p38 = por %p36, %p37
    %p39 = scmp.ne.s32.totalorder %s28, %s29
    %p40 = scmp.eq.s32.totalorder %s20, 0
    %p41 = por %p39, %p40
    %p42 = scmp.ne.s32.totalorder %s28, %s29
    %p43 = scmp.eq.s32.totalorder %s21, 1
    %p44 = por %p42, %p43
    %p46 = scmp.ne.s32.totalorder %s29, %s45
    %p47 = scmp.eq.s32.totalorder %s21, 0
    %p48 = por %p46, %p47
    %s50 = sadd.s32 %s49, 1
    %p53 = scmp.eq.s32.totalorder %s15, 1
    %p54 = scmp.ne.s32.totalorder %s49, %s51
    %p55 = scmp.eq.s32.totalorder %s15, 0
    %p56 = por %p54, %p55
    %p57 = scmp.ne.s32.totalorder %s49, %s51
    %p58 = scmp.eq.s32.totalorder %s20, 1
    %p59 = por %p57, %p58
    %p60 = scmp.ne.s32.totalorder %s51, %s52
    %p61 = scmp.eq.s32.totalorder %s20, 0
    %p62 = por %p60, %p61
    %p63 = scmp.ne.s32.totalorder %s51, %s52
    %p64 = scmp.eq.s32.totalorder %s21, 1
    %p65 = por %p63, %p64
    %p67 = scmp.ne.s32.totalorder %s52, %s66
    %p68 = scmp.eq.s32.totalorder %s21, 0
    %p69 = por %p67, %p68
    %s71 = sadd.s32 %s70, 1
    %p74 = scmp.eq.s32.totalorder %s15, 1
    %p75 = scmp.ne.s32.totalorder %s70, %s72
    %p76 = scmp.eq.s32.totalorder %s15, 0
    %p77 = por %p75, %p76
    %p78 = scmp.ne.s32.totalorder %s70, %s72
    %p79 = scmp.eq.s32.totalorder %s20, 1
    %p80 = por %p78, %p79
    %p81 = scmp.ne.s32.totalorder %s72, %s73
    %p82 = scmp.eq.s32.totalorder %s20, 0
    %p83 = por %p81, %p82
    %p84 = scmp.ne.s32.totalorder %s72, %s73
    %p85 = scmp.eq.s32.totalorder %s21, 1
    %p86 = por %p84, %p85
    %p88 = scmp.ne.s32.totalorder %s73, %s87
    %p89 = scmp.eq.s32.totalorder %s21, 0
    %p90 = por %p88, %p89
    %s92 = sadd.s32 %s91, 1
    %p95 = scmp.eq.s32.totalorder %s15, 1
    %p96 = scmp.ne.s32.totalorder %s91, %s93
    %p97 = scmp.eq.s32.totalorder %s15, 0
    %p98 = por %p96, %p97
    %p99 = scmp.ne.s32.totalorder %s91, %s93
    %p100 = scmp.eq.s32.totalorder %s20, 1
    %p101 = por %p99, %p100
    %p102 = scmp.ne.s32.totalorder %s93, %s94
    %p103 = scmp.eq.s32.totalorder %s20, 0
    %p104 = por %p102, %p103
    %p105 = scmp.ne.s32.totalorder %s93, %s94
    %p106 = scmp.eq.s32.totalorder %s21, 1
    %p107 = por %p105, %p106
    %p109 = scmp.ne.s32.totalorder %s94, %s108
    %p110 = scmp.eq.s32.totalorder %s21, 0
    %p111 = por %p109, %p110
    %s113 = sadd.s32 %s112, 1
    %p116 = scmp.eq.s32.totalorder %s15, 1
    %p117 = scmp.ne.s32.totalorder %s112, %s114
    %p118 = scmp.eq.s32.totalorder %s15, 0
    %p119 = por %p117, %p118
    %p120 = scmp.ne.s32.totalorder %s112, %s114
    %p121 = scmp.eq.s32.totalorder %s20, 1
    %p122 = por %p120, %p121
    %p123 = scmp.ne.s32.totalorder %s114, %s115
    %p124 = scmp.eq.s32.totalorder %s20, 0
    %p125 = por %p123, %p124
    %p126 = scmp.ne.s32.totalorder %s114, %s115
    %p127 = scmp.eq.s32.totalorder %s21, 1
    %p128 = por %p126, %p127
    %p130 = scmp.ne.s32.totalorder %s115, %s129
    %p131 = scmp.eq.s32.totalorder %s21, 0
    %p132 = por %p130, %p131
    %s134 = sadd.s32 %s133, 1
    %p137 = scmp.eq.s32.totalorder %s15, 1
    %p138 = scmp.ne.s32.totalorder %s133, %s135
    %p139 = scmp.eq.s32.totalorder %s15, 0
    %p140 = por %p138, %p139
    %p141 = scmp.ne.s32.totalorder %s133, %s135
    %p142 = scmp.eq.s32.totalorder %s20, 1
    %p143 = por %p141, %p142
    %p144 = scmp.ne.s32.totalorder %s135, %s136
    %p145 = scmp.eq.s32.totalorder %s20, 0
    %p146 = por %p144, %p145
    %p147 = scmp.ne.s32.totalorder %s135, %s136
    %p148 = scmp.eq.s32.totalorder %s21, 1
    %p149 = por %p147, %p148
    %p151 = scmp.ne.s32.totalorder %s136, %s150
    %p152 = scmp.eq.s32.totalorder %s21, 0
    %p153 = por %p151, %p152
    %s155 = sadd.s32 %s154, 1
    %p158 = scmp.eq.s32.totalorder %s15, 1
    %p159 = scmp.ne.s32.totalorder %s154, %s156
    %p160 = scmp.eq.s32.totalorder %s15, 0
    %p161 = por %p159, %p160
    %p162 = scmp.ne.s32.totalorder %s154, %s156
    %p163 = scmp.eq.s32.totalorder %s20, 1
    %p164 = por %p162, %p163
    %p165 = scmp.ne.s32.totalorder %s156, %s157
    %p166 = scmp.eq.s32.totalorder %s20, 0
    %p167 = por %p165, %p166
    %p168 = scmp.ne.s32.totalorder %s156, %s157
    %p169 = scmp.eq.s32.totalorder %s21, 1
    %p170 = por %p168, %p169
    %p172 = scmp.ne.s32.totalorder %s157, %s171
    %p173 = scmp.eq.s32.totalorder %s21, 0
    %p174 = por %p172, %p173
    %s176 = sadd.s32 %s175, 1
    %p179 = scmp.eq.s32.totalorder %s15, 1
    %p180 = scmp.ne.s32.totalorder %s175, %s177
    %p181 = scmp.eq.s32.totalorder %s15, 0
    %p182 = por %p180, %p181
    %p183 = scmp.ne.s32.totalorder %s175, %s177
    %p184 = scmp.eq.s32.totalorder %s20, 1
    %p185 = por %p183, %p184
    %p186 = scmp.ne.s32.totalorder %s177, %s178
    %p187 = scmp.eq.s32.totalorder %s20, 0
    %p188 = por %p186, %p187
    %p189 = scmp.ne.s32.totalorder %s177, %s178
    %p190 = scmp.eq.s32.totalorder %s21, 1
    %p191 = por %p189, %p190
    %p193 = scmp.ne.s32.totalorder %s178, %s192
    %p194 = scmp.eq.s32.totalorder %s21, 0
    %p195 = por %p193, %p194
    %s197 = sadd.s32 %s196, 1
    %p200 = scmp.eq.s32.totalorder %s15, 1
    %p201 = scmp.ne.s32.totalorder %s196, %s198
    %p202 = scmp.eq.s32.totalorder %s15, 0
    %p203 = por %p201, %p202
    %p204 = scmp.ne.s32.totalorder %s196, %s198
    %p205 = scmp.eq.s32.totalorder %s20, 1
    %p206 = por %p204, %p205
    %p207 = scmp.ne.s32.totalorder %s198, %s199
    %p208 = scmp.eq.s32.totalorder %s20, 0
    %p209 = por %p207, %p208
    %p210 = scmp.ne.s32.totalorder %s198, %s199
    %p211 = scmp.eq.s32.totalorder %s21, 1
    %p212 = por %p210, %p211
    %p214 = scmp.ne.s32.totalorder %s199, %s213
    %p215 = scmp.eq.s32.totalorder %s21, 0
    %p216 = por %p214, %p215
    %s217 = ssub.s32 %s15, %s22
    %p218 = scmp.eq.s32.totalorder %s217, 0
    %s220 = sadd.s32 %s219, 1
    %s221 = scalar_select %p218, %s219, %s220
    %p224 = pneg %p218
    %p225 = scmp.eq.s32.totalorder %s15, 1
    %p226 = por %p224, %p225
    %p227 = scmp.ne.s32.totalorder %s219, %s222
    %p228 = scmp.eq.s32.totalorder %s15, 0
    %p229 = por %p227, %p228
    %p230 = scmp.ne.s32.totalorder %s219, %s222
    %p231 = scmp.eq.s32.totalorder %s20, 1
    %p232 = por %p230, %p231
    %p233 = scmp.ne.s32.totalorder %s222, %s223
    %p234 = scmp.eq.s32.totalorder %s20, 0
    %p235 = por %p233, %p234
    %p236 = scmp.ne.s32.totalorder %s222, %s223
    %p237 = scmp.eq.s32.totalorder %s21, 1
    %p238 = por %p236, %p237
    %p240 = scmp.ne.s32.totalorder %s223, %s239
    %p241 = scmp.eq.s32.totalorder %s21, 0
    %p242 = por %p240, %p241
    %p243 = scmp.le.s32.totalorder 1, %s15
    %p244 = scmp.lt.s32.totalorder %s15, 3
    %p245 = pnand %p243, %p244
    %p246 = pneg %p245
    // Predicated region
    $region9: #{fast_conv_autoencoder.1} parent=5 // pred_check
      _
    $region10: #{fast_conv_autoencoder.1} parent=5 // pred_check_branch
      %248 = sbr.rel (%p245) target = $region12
    $region11: #{fast_conv_autoencoder.1} parent=5 // pred_region
      %s249 = ssub.s32 %s15, 1
      // Predicated region
      $region13: #{fast_conv_autoencoder.1} parent=11 // pred_check
        %p250 = pneg %p62
      $region14: #{fast_conv_autoencoder.1} parent=11 // pred_check_branch
        %252 = sbr.rel (%p250) target = $region16
      $region15: #{fast_conv_autoencoder.1} parent=11 // pred_region
        _
      $region16: #{fast_conv_autoencoder.1} parent=11 // pred_fallthru
        _
      // Predicated region
      $region17: #{fast_conv_autoencoder.1} parent=11 // pred_check
        %p253 = pneg %p83
      $region18: #{fast_conv_autoencoder.1} parent=11 // pred_check_branch
        %255 = sbr.rel (%p253) target = $region20
      $region19: #{fast_conv_autoencoder.1} parent=11 // pred_region
        _
      $region20: #{fast_conv_autoencoder.1} parent=11 // pred_fallthru
        _
      // Predicated region
      $region21: #{fast_conv_autoencoder.1} parent=11 // pred_check
        %p256 = pneg %p104
      $region22: #{fast_conv_autoencoder.1} parent=11 // pred_check_branch
        %258 = sbr.rel (%p256) target = $region24
      $region23: #{fast_conv_autoencoder.1} parent=11 // pred_region
        _
      $region24: #{fast_conv_autoencoder.1} parent=11 // pred_fallthru
        _
      // Predicated region
      $region25: #{fast_conv_autoencoder.1} parent=11 // pred_check
        %p259 = pneg %p125
      $region26: #{fast_conv_autoencoder.1} parent=11 // pred_check_branch
        %261 = sbr.rel (%p259) target = $region28
      $region27: #{fast_conv_autoencoder.1} parent=11 // pred_region
        _
      $region28: #{fast_conv_autoencoder.1} parent=11 // pred_fallthru
        _
      // Predicated region
      $region29: #{fast_conv_autoencoder.1} parent=11 // pred_check
        %p262 = pneg %p146
      $region30: #{fast_conv_autoencoder.1} parent=11 // pred_check_branch
        %264 = sbr.rel (%p262) target = $region32
      $region31: #{fast_conv_autoencoder.1} parent=11 // pred_region
        _
      $region32: #{fast_conv_autoencoder.1} parent=11 // pred_fallthru
        _
      // Predicated region
      $region33: #{fast_conv_autoencoder.1} parent=11 // pred_check
        %p265 = pneg %p167
      $region34: #{fast_conv_autoencoder.1} parent=11 // pred_check_branch
        %267 = sbr.rel (%p265) target = $region36
      $region35: #{fast_conv_autoencoder.1} parent=11 // pred_region
        _
      $region36: #{fast_conv_autoencoder.1} parent=11 // pred_fallthru
        _
      // Predicated region
      $region37: #{fast_conv_autoencoder.1} parent=11 // pred_check
        %p268 = pneg %p188
      $region38: #{fast_conv_autoencoder.1} parent=11 // pred_check_branch
        %270 = sbr.rel (%p268) target = $region40
      $region39: #{fast_conv_autoencoder.1} parent=11 // pred_region
        _
      $region40: #{fast_conv_autoencoder.1} parent=11 // pred_fallthru
        _
      // Predicated region
      $region41: #{fast_conv_autoencoder.1} parent=11 // pred_check
        %p271 = pneg %p209
      $region42: #{fast_conv_autoencoder.1} parent=11 // pred_check_branch
        %273 = sbr.rel (%p271) target = $region44
      $region43: #{fast_conv_autoencoder.1} parent=11 // pred_region
        _
      $region44: #{fast_conv_autoencoder.1} parent=11 // pred_fallthru
        _
    $region12: #{fast_conv_autoencoder.1} parent=5 // pred_fallthru
      _
    %p274 = scmp.lt.s32.totalorder %s15, 2
    // Predicated region
    $region45: #{fast_conv_autoencoder.1} parent=5 // pred_check
      %p275 = pneg %p274
    $region46: #{fast_conv_autoencoder.1} parent=5 // pred_check_branch
      %277 = sbr.rel (%p275) target = $region48
    $region47: #{fast_conv_autoencoder.1} parent=5 // pred_region
      // Predicated region
      $region49: #{fast_conv_autoencoder.1} parent=47 // pred_check
        %p278 = pneg %p35
      $region50: #{fast_conv_autoencoder.1} parent=47 // pred_check_branch
        %280 = sbr.rel (%p278) target = $region52
      $region51: #{fast_conv_autoencoder.1} parent=47 // pred_region
        %p281 = scmp.lt.s32.totalorder %s15, 1
        %s282 = scalar_select %p281, %s15, 1
        %s283 = smul.addr %s282, 2
        %s284 = smul.addr %s283, 4
        %s285 = scalar_lea.vmem %s0, %s284
      $region52: #{fast_conv_autoencoder.1} parent=47 // pred_fallthru
        _
    $region48: #{fast_conv_autoencoder.1} parent=5 // pred_fallthru
      _
    %p286 = scmp.le.s32.totalorder 1, %s15
    %p287 = scmp.lt.s32.totalorder %s15, 3
    %p288 = pnand %p286, %p287
    %p289 = pneg %p288
    // Predicated region
    $region53: #{fast_conv_autoencoder.1} parent=5 // pred_check
      _
    $region54: #{fast_conv_autoencoder.1} parent=5 // pred_check_branch
      %291 = sbr.rel (%p288) target = $region56
    $region55: #{fast_conv_autoencoder.1} parent=5 // pred_region
      %s292 = ssub.s32 %s15, 1
      %p293 = scmp.lt.s32.totalorder %s20, 1
      %s294 = scalar_select %p293, %s20, 1
      %s295 = smul.addr %s294, 2
      %s296 = smul.addr %s295, 4
      %s297 = scalar_lea.vmem %s0, %s296
      %p298 = pneg %p41
      %p299 = pneg %p38
      %p300 = pneg %p62
      %p301 = pneg %p59
      %p302 = pneg %p83
      %p303 = pneg %p80
      %p304 = pneg %p104
      %p305 = pneg %p101
      %p306 = pneg %p125
      %p307 = pneg %p122
      %p308 = pneg %p146
      %p309 = pneg %p143
      %p310 = pneg %p167
      %p311 = pneg %p164
      %p312 = pneg %p188
      %p313 = pneg %p185
      %p314 = pneg %p209
      %p315 = pneg %p206
      %p316 = pneg %p235
      %p317 = pneg %p232
      %p318 = scmp.lt.s32.totalorder %s20, 1
      %s319 = scalar_select %p318, %s20, 1
      %s320 = smul.addr %s319, 2
      %s321 = smul.addr %s320, 4
      %s322 = scalar_lea.vmem %s9, %s321
      %p323 = scmp.lt.s32.totalorder %s20, 1
      %s324 = scalar_select %p323, %s20, 1
      %s325 = smul.addr %s324, 2
      %s326 = smul.addr %s325, 4
      %s327 = scalar_lea.vmem %s0, %s326
      %p328 = scmp.lt.s32.totalorder %s20, 1
      %s329 = scalar_select %p328, %s20, 1
      %s330 = smul.addr %s329, 2
      %s331 = smul.addr %s330, 4
      %s332 = scalar_lea.vmem %s9, %s331
      %v333 = vld [vmem:[%s327] sm:$0x77]
      %v334 = vlaneseq
      %v335 = vand.u32 %v334, 127
      %v336 = vshra.s32 %v335, 3
      %v337 = vand.u32 %v335, 7
      %v338 = vlaneseq
      %v339 = vshrl.u32 %v338, 7
      %v340 = vadd.s32 %v339, 8
      %v341 = vadd.s32 %v339, 16
      %v342 = vadd.s32 %v339, 24
      %v343 = vadd.s32 %v339, 32
      %v344 = vadd.s32 %v339, 40
      %v345 = vadd.s32 %v339, 48
      %v346 = vadd.s32 %v339, 56
      %v347 = vadd.s32 %v339, 64
      %v348 = vadd.s32 %v339, 72
      %v349 = vadd.s32 %v339, 80
      %v350 = vadd.s32 %v339, 88
      %v351 = vadd.s32 %v339, 96
      %v352 = vadd.s32 %v339, 104
      %v353 = vadd.s32 %v339, 112
      %v354 = vadd.s32 %v339, 120
      %v355 = vadd.s32 %v339, 128
      %v356 = vadd.s32 %v339, 136
      %v357 = vadd.s32 %v339, 144
      %v358 = vadd.s32 %v339, 152
      %v359 = vadd.s32 %v339, 160
      %v360 = vadd.s32 %v339, 168
      %v361 = vadd.s32 %v339, 176
      %v362 = vadd.s32 %v339, 184
      %v363 = vadd.s32 %v339, 192
      %v364 = vadd.s32 %v339, 200
      %v365 = vadd.s32 %v339, 208
      %v366 = vadd.s32 %v339, 216
      %v367 = vadd.s32 %v339, 224
      %v368 = vadd.s32 %v339, 232
      %v369 = vadd.s32 %v339, 240
      %v370 = vadd.s32 %v339, 248
      %v371 = vmul.u32 %v336, 2
      %v372 = vadd.s32 %v371, 4294967295
      %v373 = vmul.u32 %v337, 2
      %v374 = vadd.s32 %v373, 4294967295
      %vm375 = vcmp.ge.s32.totalorder %v372, 0
      %vm376 = vcmp.lt.s32.totalorder %v372, 16
      %vm377 = vmand %vm375, %vm376
      %vm378 = vcmp.ge.s32.totalorder %v374, 0
      %vm379 = vmand %vm377, %vm378
      %vm380 = vcmp.lt.s32.totalorder %v374, 16
      %vm381 = vmand %vm379, %vm380
      %v382 = vmul.u32 %v372, 16
      %v383 = vadd.s32 %v382, %v374
      %v384 = vsel %vm381, %v383, 4294967295
      %vm385 = vcmp.eq.s32.totalorder %v339, %v384
      %vm386 = vcmp.eq.s32.totalorder %v340, %v384
      %vm387 = vcmp.eq.s32.totalorder %v341, %v384
      %vm388 = vcmp.eq.s32.totalorder %v342, %v384
      %vm389 = vcmp.eq.s32.totalorder %v343, %v384
      %vm390 = vcmp.eq.s32.totalorder %v344, %v384
      %vm391 = vcmp.eq.s32.totalorder %v345, %v384
      %vm392 = vcmp.eq.s32.totalorder %v346, %v384
      %vm393 = vcmp.eq.s32.totalorder %v347, %v384
      %vm394 = vcmp.eq.s32.totalorder %v348, %v384
      %vm395 = vcmp.eq.s32.totalorder %v349, %v384
      %vm396 = vcmp.eq.s32.totalorder %v350, %v384
      %vm397 = vcmp.eq.s32.totalorder %v351, %v384
      %vm398 = vcmp.eq.s32.totalorder %v352, %v384
      %vm399 = vcmp.eq.s32.totalorder %v353, %v384
      %vm400 = vcmp.eq.s32.totalorder %v354, %v384
      %vm401 = vcmp.eq.s32.totalorder %v355, %v384
      %vm402 = vcmp.eq.s32.totalorder %v356, %v384
      %vm403 = vcmp.eq.s32.totalorder %v357, %v384
      %vm404 = vcmp.eq.s32.totalorder %v358, %v384
      %vm405 = vcmp.eq.s32.totalorder %v359, %v384
      %vm406 = vcmp.eq.s32.totalorder %v360, %v384
      %vm407 = vcmp.eq.s32.totalorder %v361, %v384
      %vm408 = vcmp.eq.s32.totalorder %v362, %v384
      %vm409 = vcmp.eq.s32.totalorder %v363, %v384
      %vm410 = vcmp.eq.s32.totalorder %v364, %v384
      %vm411 = vcmp.eq.s32.totalorder %v365, %v384
      %vm412 = vcmp.eq.s32.totalorder %v366, %v384
      %vm413 = vcmp.eq.s32.totalorder %v367, %v384
      %vm414 = vcmp.eq.s32.totalorder %v368, %v384
      %vm415 = vcmp.eq.s32.totalorder %v369, %v384
      %vm416 = vcmp.eq.s32.totalorder %v370, %v384
      %v417 = vsel %vm385, 1.0, 0.0
      %v418 = vsel %vm386, 1.0, 0.0
      %v419 = vsel %vm387, 1.0, 0.0
      %v420 = vsel %vm388, 1.0, 0.0
      %v421 = vsel %vm389, 1.0, 0.0
      %v422 = vsel %vm390, 1.0, 0.0
      %v423 = vsel %vm391, 1.0, 0.0
      %v424 = vsel %vm392, 1.0, 0.0
      %v425 = vsel %vm393, 1.0, 0.0
      %v426 = vsel %vm394, 1.0, 0.0
      %v427 = vsel %vm395, 1.0, 0.0
      %v428 = vsel %vm396, 1.0, 0.0
      %v429 = vsel %vm397, 1.0, 0.0
      %v430 = vsel %vm398, 1.0, 0.0
      %v431 = vsel %vm399, 1.0, 0.0
      %v432 = vsel %vm400, 1.0, 0.0
      %v433 = vsel %vm401, 1.0, 0.0
      %v434 = vsel %vm402, 1.0, 0.0
      %v435 = vsel %vm403, 1.0, 0.0
      %v436 = vsel %vm404, 1.0, 0.0
      %v437 = vsel %vm405, 1.0, 0.0
      %v438 = vsel %vm406, 1.0, 0.0
      %v439 = vsel %vm407, 1.0, 0.0
      %v440 = vsel %vm408, 1.0, 0.0
      %v441 = vsel %vm409, 1.0, 0.0
      %v442 = vsel %vm410, 1.0, 0.0
      %v443 = vsel %vm411, 1.0, 0.0
      %v444 = vsel %vm412, 1.0, 0.0
      %v445 = vsel %vm413, 1.0, 0.0
      %v446 = vsel %vm414, 1.0, 0.0
      %v447 = vsel %vm415, 1.0, 0.0
      %v448 = vsel %vm416, 1.0, 0.0
      %v450 = vcombine.high %v333, %v333
      %452 = vmatprep.subr.mxu0 0.0
      %453 = vmatpush1.msra.mxu0 %v417
      %454 = vmatprep.subr.mxu0 0.0
      %455 = vmatpush1.msra.mxu0 %v418
      %456 = vmatprep.subr.mxu0 0.0
      %457 = vmatpush1.msra.mxu0 %v419
      %458 = vmatprep.subr.mxu0 0.0
      %459 = vmatpush1.msra.mxu0 %v420
      %460 = vmatprep.subr.mxu0 0.0
      %461 = vmatpush1.msra.mxu0 %v421
      %462 = vmatprep.subr.mxu0 0.0
      %463 = vmatpush1.msra.mxu0 %v422
      %464 = vmatprep.subr.mxu0 0.0
      %465 = vmatpush1.msra.mxu0 %v423
      %466 = vmatprep.subr.mxu0 0.0
      %467 = vmatpush1.msra.mxu0 %v424
      %468 = vmatprep.subr.mxu0 0.0
      %469 = vmatpush1.msra.mxu0 %v425
      %470 = vmatprep.subr.mxu0 0.0
      %471 = vmatpush1.msra.mxu0 %v426
      %472 = vmatprep.subr.mxu0 0.0
      %473 = vmatpush1.msra.mxu0 %v427
      %474 = vmatprep.subr.mxu0 0.0
      %475 = vmatpush1.msra.mxu0 %v428
      %476 = vmatprep.subr.mxu0 0.0
      %477 = vmatpush1.msra.mxu0 %v429
      %478 = vmatprep.subr.mxu0 0.0
      %479 = vmatpush1.msra.mxu0 %v430
      %480 = vmatprep.subr.mxu0 0.0
      %481 = vmatpush1.msra.mxu0 %v431
      %482 = vmatprep.subr.mxu0 0.0
      %483 = vmatpush1.msra.mxu0 %v432
      %484 = vmatprep.subr.mxu0 0.0
      %485 = vmatpush1.msra.mxu0 %v433
      %486 = vmatprep.subr.mxu0 0.0
      %487 = vmatpush1.msra.mxu0 %v434
      %488 = vmatprep.subr.mxu0 0.0
      %489 = vmatpush1.msra.mxu0 %v435
      %490 = vmatprep.subr.mxu0 0.0
      %491 = vmatpush1.msra.mxu0 %v436
      %492 = vmatprep.subr.mxu0 0.0
      %493 = vmatpush1.msra.mxu0 %v437
      %494 = vmatprep.subr.mxu0 0.0
      %495 = vmatpush1.msra.mxu0 %v438
      %496 = vmatprep.subr.mxu0 0.0
      %497 = vmatpush1.msra.mxu0 %v439
      %498 = vmatprep.subr.mxu0 0.0
      %499 = vmatpush1.msra.mxu0 %v440
      %500 = vmatprep.subr.mxu0 0.0
      %501 = vmatpush1.msra.mxu0 %v441
      %502 = vmatprep.subr.mxu0 0.0
      %503 = vmatpush1.msra.mxu0 %v442
      %504 = vmatprep.subr.mxu0 0.0
      %505 = vmatpush1.msra.mxu0 %v443
      %506 = vmatprep.subr.mxu0 0.0
      %507 = vmatpush1.msra.mxu0 %v444
      %508 = vmatprep.subr.mxu0 0.0
      %509 = vmatpush1.msra.mxu0 %v445
      %510 = vmatprep.subr.mxu0 0.0
      %511 = vmatpush1.msra.mxu0 %v446
      %512 = vmatprep.subr.mxu0 0.0
      %513 = vmatpush1.msra.mxu0 %v447
      %514 = vmatprep.subr.mxu0 0.0
      %515 = vmatpush1.msra.mxu0 %v448
      %516 = vmatprep.mubr.f32.mxu0 %v450
      %517 = vmatmul.mubr.f32.gmra.mrb[0].mxu0 %v333
      %v518 = vpop.f32.mrb[0].mxu0
      %v519 = vadd.f32 0.0, %v518
      %v520 = vpop.f32.mrb[0].mxu0
      %521 = vdwg.mxu0
      %v522 = vld [vmem:[%s1] sm:$0xff]
      %vm523 = vcmp.ge.s32.totalorder %v373, 0
      %vm524 = vmand %vm377, %vm523
      %vm525 = vcmp.lt.s32.totalorder %v373, 16
      %vm526 = vmand %vm524, %vm525
      %v527 = vadd.s32 %v382, %v373
      %v528 = vsel %vm526, %v527, 4294967295
      %vm529 = vcmp.eq.s32.totalorder %v339, %v528
      %vm530 = vcmp.eq.s32.totalorder %v340, %v528
      %vm531 = vcmp.eq.s32.totalorder %v341, %v528
      %vm532 = vcmp.eq.s32.totalorder %v342, %v528
      %vm533 = vcmp.eq.s32.totalorder %v343, %v528
      %vm534 = vcmp.eq.s32.totalorder %v344, %v528
      %vm535 = vcmp.eq.s32.totalorder %v345, %v528
      %vm536 = vcmp.eq.s32.totalorder %v346, %v528
      %vm537 = vcmp.eq.s32.totalorder %v347, %v528
      %vm538 = vcmp.eq.s32.totalorder %v348, %v528
      %vm539 = vcmp.eq.s32.totalorder %v349, %v528
      %vm540 = vcmp.eq.s32.totalorder %v350, %v528
      %vm541 = vcmp.eq.s32.totalorder %v351, %v528
      %vm542 = vcmp.eq.s32.totalorder %v352, %v528
      %vm543 = vcmp.eq.s32.totalorder %v353, %v528
      %vm544 = vcmp.eq.s32.totalorder %v354, %v528
      %vm545 = vcmp.eq.s32.totalorder %v355, %v528
      %vm546 = vcmp.eq.s32.totalorder %v356, %v528
      %vm547 = vcmp.eq.s32.totalorder %v357, %v528
      %vm548 = vcmp.eq.s32.totalorder %v358, %v528
      %vm549 = vcmp.eq.s32.totalorder %v359, %v528
      %vm550 = vcmp.eq.s32.totalorder %v360, %v528
      %vm551 = vcmp.eq.s32.totalorder %v361, %v528
      %vm552 = vcmp.eq.s32.totalorder %v362, %v528
      %vm553 = vcmp.eq.s32.totalorder %v363, %v528
      %vm554 = vcmp.eq.s32.totalorder %v364, %v528
      %vm555 = vcmp.eq.s32.totalorder %v365, %v528
      %vm556 = vcmp.eq.s32.totalorder %v366, %v528
      %vm557 = vcmp.eq.s32.totalorder %v367, %v528
      %vm558 = vcmp.eq.s32.totalorder %v368, %v528
      %vm559 = vcmp.eq.s32.totalorder %v369, %v528
      %vm560 = vcmp.eq.s32.totalorder %v370, %v528
      %v561 = vsel %vm529, 1.0, 0.0
      %v562 = vsel %vm530, 1.0, 0.0
      %v563 = vsel %vm531, 1.0, 0.0
      %v564 = vsel %vm532, 1.0, 0.0
      %v565 = vsel %vm533, 1.0, 0.0
      %v566 = vsel %vm534, 1.0, 0.0
      %v567 = vsel %vm535, 1.0, 0.0
      %v568 = vsel %vm536, 1.0, 0.0
      %v569 = vsel %vm537, 1.0, 0.0
      %v570 = vsel %vm538, 1.0, 0.0
      %v571 = vsel %vm539, 1.0, 0.0
      %v572 = vsel %vm540, 1.0, 0.0
      %v573 = vsel %vm541, 1.0, 0.0
      %v574 = vsel %vm542, 1.0, 0.0
      %v575 = vsel %vm543, 1.0, 0.0
      %v576 = vsel %vm544, 1.0, 0.0
      %v577 = vsel %vm545, 1.0, 0.0
      %v578 = vsel %vm546, 1.0, 0.0
      %v579 = vsel %vm547, 1.0, 0.0
      %v580 = vsel %vm548, 1.0, 0.0
      %v581 = vsel %vm549, 1.0, 0.0
      %v582 = vsel %vm550, 1.0, 0.0
      %v583 = vsel %vm551, 1.0, 0.0
      %v584 = vsel %vm552, 1.0, 0.0
      %v585 = vsel %vm553, 1.0, 0.0
      %v586 = vsel %vm554, 1.0, 0.0
      %v587 = vsel %vm555, 1.0, 0.0
      %v588 = vsel %vm556, 1.0, 0.0
      %v589 = vsel %vm557, 1.0, 0.0
      %v590 = vsel %vm558, 1.0, 0.0
      %v591 = vsel %vm559, 1.0, 0.0
      %v592 = vsel %vm560, 1.0, 0.0
      %593 = vmatprep.subr.mxu0 0.0
      %594 = vmatpush1.msra.mxu0 %v561
      %595 = vmatprep.subr.mxu0 0.0
      %596 = vmatpush1.msra.mxu0 %v562
      %597 = vmatprep.subr.mxu0 0.0
      %598 = vmatpush1.msra.mxu0 %v563
      %599 = vmatprep.subr.mxu0 0.0
      %600 = vmatpush1.msra.mxu0 %v564
      %601 = vmatprep.subr.mxu0 0.0
      %602 = vmatpush1.msra.mxu0 %v565
      %603 = vmatprep.subr.mxu0 0.0
      %604 = vmatpush1.msra.mxu0 %v566
      %605 = vmatprep.subr.mxu0 0.0
      %606 = vmatpush1.msra.mxu0 %v567
      %607 = vmatprep.subr.mxu0 0.0
      %608 = vmatpush1.msra.mxu0 %v568
      %609 = vmatprep.subr.mxu0 0.0
      %610 = vmatpush1.msra.mxu0 %v569
      %611 = vmatprep.subr.mxu0 0.0
      %612 = vmatpush1.msra.mxu0 %v570
      %613 = vmatprep.subr.mxu0 0.0
      %614 = vmatpush1.msra.mxu0 %v571
      %615 = vmatprep.subr.mxu0 0.0
      %616 = vmatpush1.msra.mxu0 %v572
      %617 = vmatprep.subr.mxu0 0.0
      %618 = vmatpush1.msra.mxu0 %v573
      %619 = vmatprep.subr.mxu0 0.0
      %620 = vmatpush1.msra.mxu0 %v574
      %621 = vmatprep.subr.mxu0 0.0
      %622 = vmatpush1.msra.mxu0 %v575
      %623 = vmatprep.subr.mxu0 0.0
      %624 = vmatpush1.msra.mxu0 %v576
      %625 = vmatprep.subr.mxu0 0.0
      %626 = vmatpush1.msra.mxu0 %v577
      %627 = vmatprep.subr.mxu0 0.0
      %628 = vmatpush1.msra.mxu0 %v578
      %629 = vmatprep.subr.mxu0 0.0
      %630 = vmatpush1.msra.mxu0 %v579
      %631 = vmatprep.subr.mxu0 0.0
      %632 = vmatpush1.msra.mxu0 %v580
      %633 = vmatprep.subr.mxu0 0.0
      %634 = vmatpush1.msra.mxu0 %v581
      %635 = vmatprep.subr.mxu0 0.0
      %636 = vmatpush1.msra.mxu0 %v582
      %637 = vmatprep.subr.mxu0 0.0
      %638 = vmatpush1.msra.mxu0 %v583
      %639 = vmatprep.subr.mxu0 0.0
      %640 = vmatpush1.msra.mxu0 %v584
      %641 = vmatprep.subr.mxu0 0.0
      %642 = vmatpush1.msra.mxu0 %v585
      %643 = vmatprep.subr.mxu0 0.0
      %644 = vmatpush1.msra.mxu0 %v586
      %645 = vmatprep.subr.mxu0 0.0
      %646 = vmatpush1.msra.mxu0 %v587
      %647 = vmatprep.subr.mxu0 0.0
      %648 = vmatpush1.msra.mxu0 %v588
      %649 = vmatprep.subr.mxu0 0.0
      %650 = vmatpush1.msra.mxu0 %v589
      %651 = vmatprep.subr.mxu0 0.0
      %652 = vmatpush1.msra.mxu0 %v590
      %653 = vmatprep.subr.mxu0 0.0
      %654 = vmatpush1.msra.mxu0 %v591
      %655 = vmatprep.subr.mxu0 0.0
      %656 = vmatpush1.msra.mxu0 %v592
      %657 = vmatprep.mubr.f32.mxu0 %v450
      %658 = vmatmul.mubr.f32.gmra.mrb[0].mxu0 %v333
      %v659 = vpop.f32.mrb[0].mxu0
      %v660 = vadd.f32 0.0, %v659
      %v661 = vpop.f32.mrb[0].mxu0
      %662 = vdwg.mxu0
      %s663 = scalar_lea.vmem %s1, 8
      %v664 = vld [vmem:[%s663] sm:$0xff]
      %vm665 = vcmask 23552
      %v667 = vsel %vm665, %v664, 0
      %vm669 = vcmask 1042432
      %v671 = vsel %vm669, %v660, 0
      %673 = vmatprep.subr.mxu0 0.0
      %674 = vmatpush1.msra.mxu0 %v671
      %675 = vmatprep.subr.mxu0 0.0
      %676 = vmatpush1.msra.mxu0 0.0
      %677 = vmatprep.subr.mxu0 0.0
      %678 = vmatpush1.msra.mxu0 0.0
      %679 = vmatprep.subr.mxu0 0.0
      %680 = vmatpush1.msra.mxu0 0.0
      %681 = vmatprep.subr.mxu0 0.0
      %682 = vmatpush1.msra.mxu0 0.0
      %683 = vmatprep.subr.mxu0 0.0
      %684 = vmatpush1.msra.mxu0 0.0
      %685 = vmatprep.subr.mxu0 0.0
      %686 = vmatpush1.msra.mxu0 0.0
      %687 = vmatprep.subr.mxu0 0.0
      %688 = vmatpush1.msra.mxu0 0.0
      %689 = vmatprep.subr.mxu0 0.0
      %690 = vmatpush1.msra.mxu0 0.0
      %691 = vmatprep.subr.mxu0 0.0
      %692 = vmatpush1.msra.mxu0 0.0
      %693 = vmatprep.subr.mxu0 0.0
      %694 = vmatpush1.msra.mxu0 0.0
      %695 = vmatprep.subr.mxu0 0.0
      %696 = vmatpush1.msra.mxu0 0.0
      %697 = vmatprep.subr.mxu0 0.0
      %698 = vmatpush1.msra.mxu0 0.0
      %699 = vmatprep.subr.mxu0 0.0
      %700 = vmatpush1.msra.mxu0 0.0
      %701 = vmatprep.subr.mxu0 0.0
      %702 = vmatpush1.msra.mxu0 0.0
      %703 = vmatprep.subr.mxu0 0.0
      %704 = vmatpush1.msra.mxu0 0.0
      %705 = vmatprep.subr.mxu0 0.0
      %706 = vmatpush1.msra.mxu0 0.0
      %707 = vmatprep.subr.mxu0 0.0
      %708 = vmatpush1.msra.mxu0 0.0
      %709 = vmatprep.subr.mxu0 0.0
      %710 = vmatpush1.msra.mxu0 0.0
      %711 = vmatprep.subr.mxu0 0.0
      %712 = vmatpush1.msra.mxu0 0.0
      %713 = vmatprep.subr.mxu0 0.0
      %714 = vmatpush1.msra.mxu0 0.0
      %715 = vmatprep.subr.mxu0 0.0
      %716 = vmatpush1.msra.mxu0 0.0
      %717 = vmatprep.subr.mxu0 0.0
      %718 = vmatpush1.msra.mxu0 0.0
      %719 = vmatprep.subr.mxu0 0.0
      %720 = vmatpush1.msra.mxu0 0.0
      %721 = vmatprep.subr.mxu0 0.0
      %722 = vmatpush1.msra.mxu0 0.0
      %723 = vmatprep.subr.mxu0 0.0
      %724 = vmatpush1.msra.mxu0 0.0
      %725 = vmatprep.subr.mxu0 0.0
      %726 = vmatpush1.msra.mxu0 0.0
      %727 = vmatprep.subr.mxu0 0.0
      %728 = vmatpush1.msra.mxu0 0.0
      %729 = vmatprep.subr.mxu0 0.0
      %730 = vmatpush1.msra.mxu0 0.0
      %731 = vmatprep.subr.mxu0 0.0
      %732 = vmatpush1.msra.mxu0 0.0
      %733 = vmatprep.subr.mxu0 0.0
      %734 = vmatpush1.msra.mxu0 0.0
      %735 = vmatprep.subr.mxu0 0.0
      %736 = vmatpush1.msra.mxu0 0.0
      %737 = vmatprep.mubr.f32.mxu0 0.0
      %738 = vmatmul.mubr.f32.gmra.mrb[0].mxu0 %v667
      %v739 = vpop.f32.mrb[0].mxu0
      %v740 = vadd.f32 0.0, %v739
      %v741 = vpop.f32.mrb[0].mxu0
      %742 = vdwg.mxu0
      %v744 = vsel %vm665, %v522, 0
      %v747 = vsel %vm669, %v519, 0
      %749 = vmatprep.subr.mxu0 0.0
      %750 = vmatpush1.msra.mxu0 %v747
      %751 = vmatprep.subr.mxu0 0.0
      %752 = vmatpush1.msra.mxu0 0.0
      %753 = vmatprep.subr.mxu0 0.0
      %754 = vmatpush1.msra.mxu0 0.0
      %755 = vmatprep.subr.mxu0 0.0
      %756 = vmatpush1.msra.mxu0 0.0
      %757 = vmatprep.subr.mxu0 0.0
      %758 = vmatpush1.msra.mxu0 0.0
      %759 = vmatprep.subr.mxu0 0.0
      %760 = vmatpush1.msra.mxu0 0.0
      %761 = vmatprep.subr.mxu0 0.0
      %762 = vmatpush1.msra.mxu0 0.0
      %763 = vmatprep.subr.mxu0 0.0
      %764 = vmatpush1.msra.mxu0 0.0
      %765 = vmatprep.subr.mxu0 0.0
      %766 = vmatpush1.msra.mxu0 0.0
      %767 = vmatprep.subr.mxu0 0.0
      %768 = vmatpush1.msra.mxu0 0.0
      %769 = vmatprep.subr.mxu0 0.0
      %770 = vmatpush1.msra.mxu0 0.0
      %771 = vmatprep.subr.mxu0 0.0
      %772 = vmatpush1.msra.mxu0 0.0
      %773 = vmatprep.subr.mxu0 0.0
      %774 = vmatpush1.msra.mxu0 0.0
      %775 = vmatprep.subr.mxu0 0.0
      %776 = vmatpush1.msra.mxu0 0.0
      %777 = vmatprep.subr.mxu0 0.0
      %778 = vmatpush1.msra.mxu0 0.0
      %779 = vmatprep.subr.mxu0 0.0
      %780 = vmatpush1.msra.mxu0 0.0
      %781 = vmatprep.subr.mxu0 0.0
      %782 = vmatpush1.msra.mxu0 0.0
      %783 = vmatprep.subr.mxu0 0.0
      %784 = vmatpush1.msra.mxu0 0.0
      %785 = vmatprep.subr.mxu0 0.0
      %786 = vmatpush1.msra.mxu0 0.0
      %787 = vmatprep.subr.mxu0 0.0
      %788 = vmatpush1.msra.mxu0 0.0
      %789 = vmatprep.subr.mxu0 0.0
      %790 = vmatpush1.msra.mxu0 0.0
      %791 = vmatprep.subr.mxu0 0.0
      %792 = vmatpush1.msra.mxu0 0.0
      %793 = vmatprep.subr.mxu0 0.0
      %794 = vmatpush1.msra.mxu0 0.0
      %795 = vmatprep.subr.mxu0 0.0
      %796 = vmatpush1.msra.mxu0 0.0
      %797 = vmatprep.subr.mxu0 0.0
      %798 = vmatpush1.msra.mxu0 0.0
      %799 = vmatprep.subr.mxu0 0.0
      %800 = vmatpush1.msra.mxu0 0.0
      %801 = vmatprep.subr.mxu0 0.0
      %802 = vmatpush1.msra.mxu0 0.0
      %803 = vmatprep.subr.mxu0 0.0
      %804 = vmatpush1.msra.mxu0 0.0
      %805 = vmatprep.subr.mxu0 0.0
      %806 = vmatpush1.msra.mxu0 0.0
      %807 = vmatprep.subr.mxu0 0.0
      %808 = vmatpush1.msra.mxu0 0.0
      %809 = vmatprep.subr.mxu0 0.0
      %810 = vmatpush1.msra.mxu0 0.0
      %811 = vmatprep.subr.mxu0 0.0
      %812 = vmatpush1.msra.mxu0 0.0
      %813 = vmatprep.mubr.f32.mxu0 0.0
      %814 = vmatmul.mubr.f32.gmra.mrb[0].mxu0 %v744
      %v815 = vpop.f32.mrb[0].mxu0
      %v816 = vadd.f32 %v740, %v815
      %v817 = vpop.f32.mrb[0].mxu0
      %818 = vdwg.mxu0
      %v819 = vadd.s32 %v373, 1
      %vm820 = vcmp.ge.s32.totalorder %v819, 0
      %vm821 = vmand %vm377, %vm820
      %vm822 = vcmp.lt.s32.totalorder %v819, 16
      %vm823 = vmand %vm821, %vm822
      %v824 = vadd.s32 %v382, %v819
      %v825 = vsel %vm823, %v824, 4294967295
      %vm826 = vcmp.eq.s32.totalorder %v339, %v825
      %vm827 = vcmp.eq.s32.totalorder %v340, %v825
      %vm828 = vcmp.eq.s32.totalorder %v341, %v825
      %vm829 = vcmp.eq.s32.totalorder %v342, %v825
      %vm830 = vcmp.eq.s32.totalorder %v343, %v825
      %vm831 = vcmp.eq.s32.totalorder %v344, %v825
      %vm832 = vcmp.eq.s32.totalorder %v345, %v825
      %vm833 = vcmp.eq.s32.totalorder %v346, %v825
      %vm834 = vcmp.eq.s32.totalorder %v347, %v825
      %vm835 = vcmp.eq.s32.totalorder %v348, %v825
      %vm836 = vcmp.eq.s32.totalorder %v349, %v825
      %vm837 = vcmp.eq.s32.totalorder %v350, %v825
      %vm838 = vcmp.eq.s32.totalorder %v351, %v825
      %vm839 = vcmp.eq.s32.totalorder %v352, %v825
      %vm840 = vcmp.eq.s32.totalorder %v353, %v825
      %vm841 = vcmp.eq.s32.totalorder %v354, %v825
      %vm842 = vcmp.eq.s32.totalorder %v355, %v825
      %vm843 = vcmp.eq.s32.totalorder %v356, %v825
      %vm844 = vcmp.eq.s32.totalorder %v357, %v825
      %vm845 = vcmp.eq.s32.totalorder %v358, %v825
      %vm846 = vcmp.eq.s32.totalorder %v359, %v825
      %vm847 = vcmp.eq.s32.totalorder %v360, %v825
      %vm848 = vcmp.eq.s32.totalorder %v361, %v825
      %vm849 = vcmp.eq.s32.totalorder %v362, %v825
      %vm850 = vcmp.eq.s32.totalorder %v363, %v825
      %vm851 = vcmp.eq.s32.totalorder %v364, %v825
      %vm852 = vcmp.eq.s32.totalorder %v365, %v825
      %vm853 = vcmp.eq.s32.totalorder %v366, %v825
      %vm854 = vcmp.eq.s32.totalorder %v367, %v825
      %vm855 = vcmp.eq.s32.totalorder %v368, %v825
      %vm856 = vcmp.eq.s32.totalorder %v369, %v825
      %vm857 = vcmp.eq.s32.totalorder %v370, %v825
      %v858 = vsel %vm826, 1.0, 0.0
      %v859 = vsel %vm827, 1.0, 0.0
      %v860 = vsel %vm828, 1.0, 0.0
      %v861 = vsel %vm829, 1.0, 0.0
      %v862 = vsel %vm830, 1.0, 0.0
      %v863 = vsel %vm831, 1.0, 0.0
      %v864 = vsel %vm832, 1.0, 0.0
      %v865 = vsel %vm833, 1.0, 0.0
      %v866 = vsel %vm834, 1.0, 0.0
      %v867 = vsel %vm835, 1.0, 0.0
      %v868 = vsel %vm836, 1.0, 0.0
      %v869 = vsel %vm837, 1.0, 0.0
      %v870 = vsel %vm838, 1.0, 0.0
      %v871 = vsel %vm839, 1.0, 0.0
      %v872 = vsel %vm840, 1.0, 0.0
      %v873 = vsel %vm841, 1.0, 0.0
      %v874 = vsel %vm842, 1.0, 0.0
      %v875 = vsel %vm843, 1.0, 0.0
      %v876 = vsel %vm844, 1.0, 0.0
      %v877 = vsel %vm845, 1.0, 0.0
      %v878 = vsel %vm846, 1.0, 0.0
      %v879 = vsel %vm847, 1.0, 0.0
      %v880 = vsel %vm848, 1.0, 0.0
      %v881 = vsel %vm849, 1.0, 0.0
      %v882 = vsel %vm850, 1.0, 0.0
      %v883 = vsel %vm851, 1.0, 0.0
      %v884 = vsel %vm852, 1.0, 0.0
      %v885 = vsel %vm853, 1.0, 0.0
      %v886 = vsel %vm854, 1.0, 0.0
      %v887 = vsel %vm855, 1.0, 0.0
      %v888 = vsel %vm856, 1.0, 0.0
      %v889 = vsel %vm857, 1.0, 0.0
      %890 = vmatprep.subr.mxu0 0.0
      %891 = vmatpush1.msra.mxu0 %v858
      %892 = vmatprep.subr.mxu0 0.0
      %893 = vmatpush1.msra.mxu0 %v859
      %894 = vmatprep.subr.mxu0 0.0
      %895 = vmatpush1.msra.mxu0 %v860
      %896 = vmatprep.subr.mxu0 0.0
      %897 = vmatpush1.msra.mxu0 %v861
      %898 = vmatprep.subr.mxu0 0.0
      %899 = vmatpush1.msra.mxu0 %v862
      %900 = vmatprep.subr.mxu0 0.0
      %901 = vmatpush1.msra.mxu0 %v863
      %902 = vmatprep.subr.mxu0 0.0
      %903 = vmatpush1.msra.mxu0 %v864
      %904 = vmatprep.subr.mxu0 0.0
      %905 = vmatpush1.msra.mxu0 %v865
      %906 = vmatprep.subr.mxu0 0.0
      %907 = vmatpush1.msra.mxu0 %v866
      %908 = vmatprep.subr.mxu0 0.0
      %909 = vmatpush1.msra.mxu0 %v867
      %910 = vmatprep.subr.mxu0 0.0
      %911 = vmatpush1.msra.mxu0 %v868
      %912 = vmatprep.subr.mxu0 0.0
      %913 = vmatpush1.msra.mxu0 %v869
      %914 = vmatprep.subr.mxu0 0.0
      %915 = vmatpush1.msra.mxu0 %v870
      %916 = vmatprep.subr.mxu0 0.0
      %917 = vmatpush1.msra.mxu0 %v871
      %918 = vmatprep.subr.mxu0 0.0
      %919 = vmatpush1.msra.mxu0 %v872
      %920 = vmatprep.subr.mxu0 0.0
      %921 = vmatpush1.msra.mxu0 %v873
      %922 = vmatprep.subr.mxu0 0.0
      %923 = vmatpush1.msra.mxu0 %v874
      %924 = vmatprep.subr.mxu0 0.0
      %925 = vmatpush1.msra.mxu0 %v875
      %926 = vmatprep.subr.mxu0 0.0
      %927 = vmatpush1.msra.mxu0 %v876
      %928 = vmatprep.subr.mxu0 0.0
      %929 = vmatpush1.msra.mxu0 %v877
      %930 = vmatprep.subr.mxu0 0.0
      %931 = vmatpush1.msra.mxu0 %v878
      %932 = vmatprep.subr.mxu0 0.0
      %933 = vmatpush1.msra.mxu0 %v879
      %934 = vmatprep.subr.mxu0 0.0
      %935 = vmatpush1.msra.mxu0 %v880
      %936 = vmatprep.subr.mxu0 0.0
      %937 = vmatpush1.msra.mxu0 %v881
      %938 = vmatprep.subr.mxu0 0.0
      %939 = vmatpush1.msra.mxu0 %v882
      %940 = vmatprep.subr.mxu0 0.0
      %941 = vmatpush1.msra.mxu0 %v883
      %942 = vmatprep.subr.mxu0 0.0
      %943 = vmatpush1.msra.mxu0 %v884
      %944 = vmatprep.subr.mxu0 0.0
      %945 = vmatpush1.msra.mxu0 %v885
      %946 = vmatprep.subr.mxu0 0.0
      %947 = vmatpush1.msra.mxu0 %v886
      %948 = vmatprep.subr.mxu0 0.0
      %949 = vmatpush1.msra.mxu0 %v887
      %950 = vmatprep.subr.mxu0 0.0
      %951 = vmatpush1.msra.mxu0 %v888
      %952 = vmatprep.subr.mxu0 0.0
      %953 = vmatpush1.msra.mxu0 %v889
      %954 = vmatprep.mubr.f32.mxu0 %v450
      %955 = vmatmul.mubr.f32.gmra.mrb[0].mxu0 %v333
      %v956 = vpop.f32.mrb[0].mxu0
      %v957 = vadd.f32 0.0, %v956
      %v958 = vpop.f32.mrb[0].mxu0
      %959 = vdwg.mxu0
      %s960 = scalar_lea.vmem %s1, 16
      %v961 = vld [vmem:[%s960] sm:$0xff]
      %v963 = vsel %vm665, %v961, 0
      %v966 = vsel %vm669, %v957, 0
      %968 = vmatprep.subr.mxu0 0.0
      %969 = vmatpush1.msra.mxu0 %v966
      %970 = vmatprep.subr.mxu0 0.0
      %971 = vmatpush1.msra.mxu0 0.0
      %972 = vmatprep.subr.mxu0 0.0
      %973 = vmatpush1.msra.mxu0 0.0
      %974 = vmatprep.subr.mxu0 0.0
      %975 = vmatpush1.msra.mxu0 0.0
      %976 = vmatprep.subr.mxu0 0.0
      %977 = vmatpush1.msra.mxu0 0.0
      %978 = vmatprep.subr.mxu0 0.0
      %979 = vmatpush1.msra.mxu0 0.0
      %980 = vmatprep.subr.mxu0 0.0
      %981 = vmatpush1.msra.mxu0 0.0
      %982 = vmatprep.subr.mxu0 0.0
      %983 = vmatpush1.msra.mxu0 0.0
      %984 = vmatprep.subr.mxu0 0.0
      %985 = vmatpush1.msra.mxu0 0.0
      %986 = vmatprep.subr.mxu0 0.0
      %987 = vmatpush1.msra.mxu0 0.0
      %988 = vmatprep.subr.mxu0 0.0
      %989 = vmatpush1.msra.mxu0 0.0
      %990 = vmatprep.subr.mxu0 0.0
      %991 = vmatpush1.msra.mxu0 0.0
      %992 = vmatprep.subr.mxu0 0.0
      %993 = vmatpush1.msra.mxu0 0.0
      %994 = vmatprep.subr.mxu0 0.0
      %995 = vmatpush1.msra.mxu0 0.0
      %996 = vmatprep.subr.mxu0 0.0
      %997 = vmatpush1.msra.mxu0 0.0
      %998 = vmatprep.subr.mxu0 0.0
      %999 = vmatpush1.msra.mxu0 0.0
      %1000 = vmatprep.subr.mxu0 0.0
      %1001 = vmatpush1.msra.mxu0 0.0
      %1002 = vmatprep.subr.mxu0 0.0
      %1003 = vmatpush1.msra.mxu0 0.0
      %1004 = vmatprep.subr.mxu0 0.0
      %1005 = vmatpush1.msra.mxu0 0.0
      %1006 = vmatprep.subr.mxu0 0.0
      %1007 = vmatpush1.msra.mxu0 0.0
      %1008 = vmatprep.subr.mxu0 0.0
      %1009 = vmatpush1.msra.mxu0 0.0
      %1010 = vmatprep.subr.mxu0 0.0
      %1011 = vmatpush1.msra.mxu0 0.0
      %1012 = vmatprep.subr.mxu0 0.0
      %1013 = vmatpush1.msra.mxu0 0.0
      %1014 = vmatprep.subr.mxu0 0.0
      %1015 = vmatpush1.msra.mxu0 0.0
      %1016 = vmatprep.subr.mxu0 0.0
      %1017 = vmatpush1.msra.mxu0 0.0
      %1018 = vmatprep.subr.mxu0 0.0
      %1019 = vmatpush1.msra.mxu0 0.0
      %1020 = vmatprep.subr.mxu0 0.0
      %1021 = vmatpush1.msra.mxu0 0.0
      %1022 = vmatprep.subr.mxu0 0.0
      %1023 = vmatpush1.msra.mxu0 0.0
      %1024 = vmatprep.subr.mxu0 0.0
      %1025 = vmatpush1.msra.mxu0 0.0
      %1026 = vmatprep.subr.mxu0 0.0
      %1027 = vmatpush1.msra.mxu0 0.0
      %1028 = vmatprep.subr.mxu0 0.0
      %1029 = vmatpush1.msra.mxu0 0.0
      %1030 = vmatprep.subr.mxu0 0.0
      %1031 = vmatpush1.msra.mxu0 0.0
      %1032 = vmatprep.mubr.f32.mxu0 0.0
      %1033 = vmatmul.mubr.f32.gmra.mrb[0].mxu0 %v963
      %v1034 = vpop.f32.mrb[0].mxu0
      %v1035 = vadd.f32 0.0, %v1034
      %v1036 = vpop.f32.mrb[0].mxu0
      %1037 = vdwg.mxu0
      %v1038 = vadd.f32 %v816, %v1035
      %vm1039 = vcmp.ge.s32.totalorder %v371, 0
      %vm1040 = vcmp.lt.s32.totalorder %v371, 16
      %vm1041 = vmand %vm1039, %vm1040
      %vm1042 = vmand %vm1041, %vm378
      %vm1043 = vmand %vm1042, %vm380
      %v1044 = vmul.u32 %v371, 16
      %v1045 = vadd.s32 %v1044, %v374
      %v1046 = vsel %vm1043, %v1045, 4294967295
      %vm1047 = vcmp.eq.s32.totalorder %v339, %v1046
      %vm1048 = vcmp.eq.s32.totalorder %v340, %v1046
      %vm1049 = vcmp.eq.s32.totalorder %v341, %v1046
      %vm1050 = vcmp.eq.s32.totalorder %v342, %v1046
      %vm1051 = vcmp.eq.s32.totalorder %v343, %v1046
      %vm1052 = vcmp.eq.s32.totalorder %v344, %v1046
      %vm1053 = vcmp.eq.s32.totalorder %v345, %v1046
      %vm1054 = vcmp.eq.s32.totalorder %v346, %v1046
      %vm1055 = vcmp.eq.s32.totalorder %v347, %v1046
      %vm1056 = vcmp.eq.s32.totalorder %v348, %v1046
      %vm1057 = vcmp.eq.s32.totalorder %v349, %v1046
      %vm1058 = vcmp.eq.s32.totalorder %v350, %v1046
      %vm1059 = vcmp.eq.s32.totalorder %v351, %v1046
      %vm1060 = vcmp.eq.s32.totalorder %v352, %v1046
      %vm1061 = vcmp.eq.s32.totalorder %v353, %v1046
      %vm1062 = vcmp.eq.s32.totalorder %v354, %v1046
      %vm1063 = vcmp.eq.s32.totalorder %v355, %v1046
      %vm1064 = vcmp.eq.s32.totalorder %v356, %v1046
      %vm1065 = vcmp.eq.s32.totalorder %v357, %v1046
      %vm1066 = vcmp.eq.s32.totalorder %v358, %v1046
      %vm1067 = vcmp.eq.s32.totalorder %v359, %v1046
      %vm1068 = vcmp.eq.s32.totalorder %v360, %v1046
      %vm1069 = vcmp.eq.s32.totalorder %v361, %v1046
      %vm1070 = vcmp.eq.s32.totalorder %v362, %v1046
      %vm1071 = vcmp.eq.s32.totalorder %v363, %v1046
      %vm1072 = vcmp.eq.s32.totalorder %v364, %v1046
      %vm1073 = vcmp.eq.s32.totalorder %v365, %v1046
      %vm1074 = vcmp.eq.s32.totalorder %v366, %v1046
      %vm1075 = vcmp.eq.s32.totalorder %v367, %v1046
      %vm1076 = vcmp.eq.s32.totalorder %v368, %v1046
      %vm1077 = vcmp.eq.s32.totalorder %v369, %v1046
      %vm1078 = vcmp.eq.s32.totalorder %v370, %v1046
      %v1079 = vsel %vm1047, 1.0, 0.0
      %v1080 = vsel %vm1048, 1.0, 0.0
      %v1081 = vsel %vm1049, 1.0, 0.0
      %v1082 = vsel %vm1050, 1.0, 0.0
      %v1083 = vsel %vm1051, 1.0, 0.0
      %v1084 = vsel %vm1052, 1.0, 0.0
      %v1085 = vsel %vm1053, 1.0, 0.0
      %v1086 = vsel %vm1054, 1.0, 0.0
      %v1087 = vsel %vm1055, 1.0, 0.0
      %v1088 = vsel %vm1056, 1.0, 0.0
      %v1089 = vsel %vm1057, 1.0, 0.0
      %v1090 = vsel %vm1058, 1.0, 0.0
      %v1091 = vsel %vm1059, 1.0, 0.0
      %v1092 = vsel %vm1060, 1.0, 0.0
      %v1093 = vsel %vm1061, 1.0, 0.0
      %v1094 = vsel %vm1062, 1.0, 0.0
      %v1095 = vsel %vm1063, 1.0, 0.0
      %v1096 = vsel %vm1064, 1.0, 0.0
      %v1097 = vsel %vm1065, 1.0, 0.0
      %v1098 = vsel %vm1066, 1.0, 0.0
      %v1099 = vsel %vm1067, 1.0, 0.0
      %v1100 = vsel %vm1068, 1.0, 0.0
      %v1101 = vsel %vm1069, 1.0, 0.0
      %v1102 = vsel %vm1070, 1.0, 0.0
      %v1103 = vsel %vm1071, 1.0, 0.0
      %v1104 = vsel %vm1072, 1.0, 0.0
      %v1105 = vsel %vm1073, 1.0, 0.0
      %v1106 = vsel %vm1074, 1.0, 0.0
      %v1107 = vsel %vm1075, 1.0, 0.0
      %v1108 = vsel %vm1076, 1.0, 0.0
      %v1109 = vsel %vm1077, 1.0, 0.0
      %v1110 = vsel %vm1078, 1.0, 0.0
      %1111 = vmatprep.subr.mxu0 0.0
      %1112 = vmatpush1.msra.mxu0 %v1079
      %1113 = vmatprep.subr.mxu0 0.0
      %1114 = vmatpush1.msra.mxu0 %v1080
      %1115 = vmatprep.subr.mxu0 0.0
      %1116 = vmatpush1.msra.mxu0 %v1081
      %1117 = vmatprep.subr.mxu0 0.0
      %1118 = vmatpush1.msra.mxu0 %v1082
      %1119 = vmatprep.subr.mxu0 0.0
      %1120 = vmatpush1.msra.mxu0 %v1083
      %1121 = vmatprep.subr.mxu0 0.0
      %1122 = vmatpush1.msra.mxu0 %v1084
      %1123 = vmatprep.subr.mxu0 0.0
      %1124 = vmatpush1.msra.mxu0 %v1085
      %1125 = vmatprep.subr.mxu0 0.0
      %1126 = vmatpush1.msra.mxu0 %v1086
      %1127 = vmatprep.subr.mxu0 0.0
      %1128 = vmatpush1.msra.mxu0 %v1087
      %1129 = vmatprep.subr.mxu0 0.0
      %1130 = vmatpush1.msra.mxu0 %v1088
      %1131 = vmatprep.subr.mxu0 0.0
      %1132 = vmatpush1.msra.mxu0 %v1089
      %1133 = vmatprep.subr.mxu0 0.0
      %1134 = vmatpush1.msra.mxu0 %v1090
      %1135 = vmatprep.subr.mxu0 0.0
      %1136 = vmatpush1.msra.mxu0 %v1091
      %1137 = vmatprep.subr.mxu0 0.0
      %1138 = vmatpush1.msra.mxu0 %v1092
      %1139 = vmatprep.subr.mxu0 0.0
      %1140 = vmatpush1.msra.mxu0 %v1093
      %1141 = vmatprep.subr.mxu0 0.0
      %1142 = vmatpush1.msra.mxu0 %v1094
      %1143 = vmatprep.subr.mxu0 0.0
      %1144 = vmatpush1.msra.mxu0 %v1095
      %1145 = vmatprep.subr.mxu0 0.0
      %1146 = vmatpush1.msra.mxu0 %v1096
      %1147 = vmatprep.subr.mxu0 0.0
      %1148 = vmatpush1.msra.mxu0 %v1097
      %1149 = vmatprep.subr.mxu0 0.0
      %1150 = vmatpush1.msra.mxu0 %v1098
      %1151 = vmatprep.subr.mxu0 0.0
      %1152 = vmatpush1.msra.mxu0 %v1099
      %1153 = vmatprep.subr.mxu0 0.0
      %1154 = vmatpush1.msra.mxu0 %v1100
      %1155 = vmatprep.subr.mxu0 0.0
      %1156 = vmatpush1.msra.mxu0 %v1101
      %1157 = vmatprep.subr.mxu0 0.0
      %1158 = vmatpush1.msra.mxu0 %v1102
      %1159 = vmatprep.subr.mxu0 0.0
      %1160 = vmatpush1.msra.mxu0 %v1103
      %1161 = vmatprep.subr.mxu0 0.0
      %1162 = vmatpush1.msra.mxu0 %v1104
      %1163 = vmatprep.subr.mxu0 0.0
      %1164 = vmatpush1.msra.mxu0 %v1105
      %1165 = vmatprep.subr.mxu0 0.0
      %1166 = vmatpush1.msra.mxu0 %v1106
      %1167 = vmatprep.subr.mxu0 0.0
      %1168 = vmatpush1.msra.mxu0 %v1107
      %1169 = vmatprep.subr.mxu0 0.0
      %1170 = vmatpush1.msra.mxu0 %v1108
      %1171 = vmatprep.subr.mxu0 0.0
      %1172 = vmatpush1.msra.mxu0 %v1109
      %1173 = vmatprep.subr.mxu0 0.0
      %1174 = vmatpush1.msra.mxu0 %v1110
      %1175 = vmatprep.mubr.f32.mxu0 %v450
      %1176 = vmatmul.mubr.f32.gmra.mrb[0].mxu0 %v333
      %v1177 = vpop.f32.mrb[0].mxu0
      %v1178 = vadd.f32 0.0, %v1177
      %v1179 = vpop.f32.mrb[0].mxu0
      %1180 = vdwg.mxu0
      %s1181 = scalar_lea.vmem %s1, 24
      %v1182 = vld [vmem:[%s1181] sm:$0xff]
      %v1184 = vsel %vm665, %v1182, 0
      %v1187 = vsel %vm669, %v1178, 0
      %1189 = vmatprep.subr.mxu0 0.0
      %1190 = vmatpush1.msra.mxu0 %v1187
      %1191 = vmatprep.subr.mxu0 0.0
      %1192 = vmatpush1.msra.mxu0 0.0
      %1193 = vmatprep.subr.mxu0 0.0
      %1194 = vmatpush1.msra.mxu0 0.0
      %1195 = vmatprep.subr.mxu0 0.0
      %1196 = vmatpush1.msra.mxu0 0.0
      %1197 = vmatprep.subr.mxu0 0.0
      %1198 = vmatpush1.msra.mxu0 0.0
      %1199 = vmatprep.subr.mxu0 0.0
      %1200 = vmatpush1.msra.mxu0 0.0
      %1201 = vmatprep.subr.mxu0 0.0
      %1202 = vmatpush1.msra.mxu0 0.0
      %1203 = vmatprep.subr.mxu0 0.0
      %1204 = vmatpush1.msra.mxu0 0.0
      %1205 = vmatprep.subr.mxu0 0.0
      %1206 = vmatpush1.msra.mxu0 0.0
      %1207 = vmatprep.subr.mxu0 0.0
      %1208 = vmatpush1.msra.mxu0 0.0
      %1209 = vmatprep.subr.mxu0 0.0
      %1210 = vmatpush1.msra.mxu0 0.0
      %1211 = vmatprep.subr.mxu0 0.0
      %1212 = vmatpush1.msra.mxu0 0.0
      %1213 = vmatprep.subr.mxu0 0.0
      %1214 = vmatpush1.msra.mxu0 0.0
      %1215 = vmatprep.subr.mxu0 0.0
      %1216 = vmatpush1.msra.mxu0 0.0
      %1217 = vmatprep.subr.mxu0 0.0
      %1218 = vmatpush1.msra.mxu0 0.0
      %1219 = vmatprep.subr.mxu0 0.0
      %1220 = vmatpush1.msra.mxu0 0.0
      %1221 = vmatprep.subr.mxu0 0.0
      %1222 = vmatpush1.msra.mxu0 0.0
      %1223 = vmatprep.subr.mxu0 0.0
      %1224 = vmatpush1.msra.mxu0 0.0
      %1225 = vmatprep.subr.mxu0 0.0
      %1226 = vmatpush1.msra.mxu0 0.0
      %1227 = vmatprep.subr.mxu0 0.0
      %1228 = vmatpush1.msra.mxu0 0.0
      %1229 = vmatprep.subr.mxu0 0.0
      %1230 = vmatpush1.msra.mxu0 0.0
      %1231 = vmatprep.subr.mxu0 0.0
      %1232 = vmatpush1.msra.mxu0 0.0
      %1233 = vmatprep.subr.mxu0 0.0
      %1234 = vmatpush1.msra.mxu0 0.0
      %1235 = vmatprep.subr.mxu0 0.0
      %1236 = vmatpush1.msra.mxu0 0.0
      %1237 = vmatprep.subr.mxu0 0.0
      %1238 = vmatpush1.msra.mxu0 0.0
      %1239 = vmatprep.subr.mxu0 0.0
      %1240 = vmatpush1.msra.mxu0 0.0
      %1241 = vmatprep.subr.mxu0 0.0
      %1242 = vmatpush1.msra.mxu0 0.0
      %1243 = vmatprep.subr.mxu0 0.0
      %1244 = vmatpush1.msra.mxu0 0.0
      %1245 = vmatprep.subr.mxu0 0.0
      %1246 = vmatpush1.msra.mxu0 0.0
      %1247 = vmatprep.subr.mxu0 0.0
      %1248 = vmatpush1.msra.mxu0 0.0
      %1249 = vmatprep.subr.mxu0 0.0
      %1250 = vmatpush1.msra.mxu0 0.0
      %1251 = vmatprep.subr.mxu0 0.0
      %1252 = vmatpush1.msra.mxu0 0.0
      %1253 = vmatprep.mubr.f32.mxu0 0.0
      %1254 = vmatmul.mubr.f32.gmra.mrb[0].mxu0 %v1184
      %v1255 = vpop.f32.mrb[0].mxu0
      %v1256 = vadd.f32 0.0, %v1255
      %v1257 = vpop.f32.mrb[0].mxu0
      %1258 = vdwg.mxu0
      %v1259 = vadd.f32 %v1038, %v1256
      %vm1260 = vmand %vm1041, %vm523
      %vm1261 = vmand %vm1260, %vm525
      %v1262 = vadd.s32 %v1044, %v373
      %v1263 = vsel %vm1261, %v1262, 4294967295
      %vm1264 = vcmp.eq.s32.totalorder %v339, %v1263
      %vm1265 = vcmp.eq.s32.totalorder %v340, %v1263
      %vm1266 = vcmp.eq.s32.totalorder %v341, %v1263
      %vm1267 = vcmp.eq.s32.totalorder %v342, %v1263
      %vm1268 = vcmp.eq.s32.totalorder %v343, %v1263
      %vm1269 = vcmp.eq.s32.totalorder %v344, %v1263
      %vm1270 = vcmp.eq.s32.totalorder %v345, %v1263
      %vm1271 = vcmp.eq.s32.totalorder %v346, %v1263
      %vm1272 = vcmp.eq.s32.totalorder %v347, %v1263
      %vm1273 = vcmp.eq.s32.totalorder %v348, %v1263
      %vm1274 = vcmp.eq.s32.totalorder %v349, %v1263
      %vm1275 = vcmp.eq.s32.totalorder %v350, %v1263
      %vm1276 = vcmp.eq.s32.totalorder %v351, %v1263
      %vm1277 = vcmp.eq.s32.totalorder %v352, %v1263
      %vm1278 = vcmp.eq.s32.totalorder %v353, %v1263
      %vm1279 = vcmp.eq.s32.totalorder %v354, %v1263
      %vm1280 = vcmp.eq.s32.totalorder %v355, %v1263
      %vm1281 = vcmp.eq.s32.totalorder %v356, %v1263
      %vm1282 = vcmp.eq.s32.totalorder %v357, %v1263
      %vm1283 = vcmp.eq.s32.totalorder %v358, %v1263
      %vm1284 = vcmp.eq.s32.totalorder %v359, %v1263
      %vm1285 = vcmp.eq.s32.totalorder %v360, %v1263
      %vm1286 = vcmp.eq.s32.totalorder %v361, %v1263
      %vm1287 = vcmp.eq.s32.totalorder %v362, %v1263
      %vm1288 = vcmp.eq.s32.totalorder %v363, %v1263
      %vm1289 = vcmp.eq.s32.totalorder %v364, %v1263
      %vm1290 = vcmp.eq.s32.totalorder %v365, %v1263
      %vm1291 = vcmp.eq.s32.totalorder %v366, %v1263
      %vm1292 = vcmp.eq.s32.totalorder %v367, %v1263
      %vm1293 = vcmp.eq.s32.totalorder %v368, %v1263
      %vm1294 = vcmp.eq.s32.totalorder %v369, %v1263
      %vm1295 = vcmp.eq.s32.totalorder %v370, %v1263
      %v1296 = vsel %vm1264, 1.0, 0.0
      %v1297 = vsel %vm1265, 1.0, 0.0
      %v1298 = vsel %vm1266, 1.0, 0.0
      %v1299 = vsel %vm1267, 1.0, 0.0
      %v1300 = vsel %vm1268, 1.0, 0.0
      %v1301 = vsel %vm1269, 1.0, 0.0
      %v1302 = vsel %vm1270, 1.0, 0.0
      %v1303 = vsel %vm1271, 1.0, 0.0
      %v1304 = vsel %vm1272, 1.0, 0.0
      %v1305 = vsel %vm1273, 1.0, 0.0
      %v1306 = vsel %vm1274, 1.0, 0.0
      %v1307 = vsel %vm1275, 1.0, 0.0
      %v1308 = vsel %vm1276, 1.0, 0.0
      %v1309 = vsel %vm1277, 1.0, 0.0
      %v1310 = vsel %vm1278, 1.0, 0.0
      %v1311 = vsel %vm1279, 1.0, 0.0
      %v1312 = vsel %vm1280, 1.0, 0.0
      %v1313 = vsel %vm1281, 1.0, 0.0
      %v1314 = vsel %vm1282, 1.0, 0.0
      %v1315 = vsel %vm1283, 1.0, 0.0
      %v1316 = vsel %vm1284, 1.0, 0.0
      %v1317 = vsel %vm1285, 1.0, 0.0
      %v1318 = vsel %vm1286, 1.0, 0.0
      %v1319 = vsel %vm1287, 1.0, 0.0
      %v1320 = vsel %vm1288, 1.0, 0.0
      %v1321 = vsel %vm1289, 1.0, 0.0
      %v1322 = vsel %vm1290, 1.0, 0.0
      %v1323 = vsel %vm1291, 1.0, 0.0
      %v1324 = vsel %vm1292, 1.0, 0.0
      %v1325 = vsel %vm1293, 1.0, 0.0
      %v1326 = vsel %vm1294, 1.0, 0.0
      %v1327 = vsel %vm1295, 1.0, 0.0
      %1328 = vmatprep.subr.mxu0 0.0
      %1329 = vmatpush1.msra.mxu0 %v1296
      %1330 = vmatprep.subr.mxu0 0.0
      %1331 = vmatpush1.msra.mxu0 %v1297
      %1332 = vmatprep.subr.mxu0 0.0
      %1333 = vmatpush1.msra.mxu0 %v1298
      %1334 = vmatprep.subr.mxu0 0.0
      %1335 = vmatpush1.msra.mxu0 %v1299
      %1336 = vmatprep.subr.mxu0 0.0
      %1337 = vmatpush1.msra.mxu0 %v1300
      %1338 = vmatprep.subr.mxu0 0.0
      %1339 = vmatpush1.msra.mxu0 %v1301
      %1340 = vmatprep.subr.mxu0 0.0
      %1341 = vmatpush1.msra.mxu0 %v1302
      %1342 = vmatprep.subr.mxu0 0.0
      %1343 = vmatpush1.msra.mxu0 %v1303
      %1344 = vmatprep.subr.mxu0 0.0
      %1345 = vmatpush1.msra.mxu0 %v1304
      %1346 = vmatprep.subr.mxu0 0.0
      %1347 = vmatpush1.msra.mxu0 %v1305
      %1348 = vmatprep.subr.mxu0 0.0
      %1349 = vmatpush1.msra.mxu0 %v1306
      %1350 = vmatprep.subr.mxu0 0.0
      %1351 = vmatpush1.msra.mxu0 %v1307
      %1352 = vmatprep.subr.mxu0 0.0
      %1353 = vmatpush1.msra.mxu0 %v1308
      %1354 = vmatprep.subr.mxu0 0.0
      %1355 = vmatpush1.msra.mxu0 %v1309
      %1356 = vmatprep.subr.mxu0 0.0
      %1357 = vmatpush1.msra.mxu0 %v1310
      %1358 = vmatprep.subr.mxu0 0.0
      %1359 = vmatpush1.msra.mxu0 %v1311
      %1360 = vmatprep.subr.mxu0 0.0
      %1361 = vmatpush1.msra.mxu0 %v1312
      %1362 = vmatprep.subr.mxu0 0.0
      %1363 = vmatpush1.msra.mxu0 %v1313
      %1364 = vmatprep.subr.mxu0 0.0
      %1365 = vmatpush1.msra.mxu0 %v1314
      %1366 = vmatprep.subr.mxu0 0.0
      %1367 = vmatpush1.msra.mxu0 %v1315
      %1368 = vmatprep.subr.mxu0 0.0
      %1369 = vmatpush1.msra.mxu0 %v1316
      %1370 = vmatprep.subr.mxu0 0.0
      %1371 = vmatpush1.msra.mxu0 %v1317
      %1372 = vmatprep.subr.mxu0 0.0
      %1373 = vmatpush1.msra.mxu0 %v1318
      %1374 = vmatprep.subr.mxu0 0.0
      %1375 = vmatpush1.msra.mxu0 %v1319
      %1376 = vmatprep.subr.mxu0 0.0
      %1377 = vmatpush1.msra.mxu0 %v1320
      %1378 = vmatprep.subr.mxu0 0.0
      %1379 = vmatpush1.msra.mxu0 %v1321
      %1380 = vmatprep.subr.mxu0 0.0
      %1381 = vmatpush1.msra.mxu0 %v1322
      %1382 = vmatprep.subr.mxu0 0.0
      %1383 = vmatpush1.msra.mxu0 %v1323
      %1384 = vmatprep.subr.mxu0 0.0
      %1385 = vmatpush1.msra.mxu0 %v1324
      %1386 = vmatprep.subr.mxu0 0.0
      %1387 = vmatpush1.msra.mxu0 %v1325
      %1388 = vmatprep.subr.mxu0 0.0
      %1389 = vmatpush1.msra.mxu0 %v1326
      %1390 = vmatprep.subr.mxu0 0.0
      %1391 = vmatpush1.msra.mxu0 %v1327
      %1392 = vmatprep.mubr.f32.mxu0 %v450
      %1393 = vmatmul.mubr.f32.gmra.mrb[0].mxu0 %v333
      %v1394 = vpop.f32.mrb[0].mxu0
      %v1395 = vadd.f32 0.0, %v1394
      %v1396 = vpop.f32.mrb[0].mxu0
      %1397 = vdwg.mxu0
      %s1398 = scalar_lea.vmem %s1, 32
      %v1399 = vld [vmem:[%s1398] sm:$0xff]
      %v1401 = vsel %vm665, %v1399, 0
      %v1404 = vsel %vm669, %v1395, 0
      %1406 = vmatprep.subr.mxu0 0.0
      %1407 = vmatpush1.msra.mxu0 %v1404
      %1408 = vmatprep.subr.mxu0 0.0
      %1409 = vmatpush1.msra.mxu0 0.0
      %1410 = vmatprep.subr.mxu0 0.0
      %1411 = vmatpush1.msra.mxu0 0.0
      %1412 = vmatprep.subr.mxu0 0.0
      %1413 = vmatpush1.msra.mxu0 0.0
      %1414 = vmatprep.subr.mxu0 0.0
      %1415 = vmatpush1.msra.mxu0 0.0
      %1416 = vmatprep.subr.mxu0 0.0
      %1417 = vmatpush1.msra.mxu0 0.0
      %1418 = vmatprep.subr.mxu0 0.0
      %1419 = vmatpush1.msra.mxu0 0.0
      %1420 = vmatprep.subr.mxu0 0.0
      %1421 = vmatpush1.msra.mxu0 0.0
      %1422 = vmatprep.subr.mxu0 0.0
      %1423 = vmatpush1.msra.mxu0 0.0
      %1424 = vmatprep.subr.mxu0 0.0
      %1425 = vmatpush1.msra.mxu0 0.0
      %1426 = vmatprep.subr.mxu0 0.0
      %1427 = vmatpush1.msra.mxu0 0.0
      %1428 = vmatprep.subr.mxu0 0.0
      %1429 = vmatpush1.msra.mxu0 0.0
      %1430 = vmatprep.subr.mxu0 0.0
      %1431 = vmatpush1.msra.mxu0 0.0
      %1432 = vmatprep.subr.mxu0 0.0
      %1433 = vmatpush1.msra.mxu0 0.0
      %1434 = vmatprep.subr.mxu0 0.0
      %1435 = vmatpush1.msra.mxu0 0.0
      %1436 = vmatprep.subr.mxu0 0.0
      %1437 = vmatpush1.msra.mxu0 0.0
      %1438 = vmatprep.subr.mxu0 0.0
      %1439 = vmatpush1.msra.mxu0 0.0
      %1440 = vmatprep.subr.mxu0 0.0
      %1441 = vmatpush1.msra.mxu0 0.0
      %1442 = vmatprep.subr.mxu0 0.0
      %1443 = vmatpush1.msra.mxu0 0.0
      %1444 = vmatprep.subr.mxu0 0.0
      %1445 = vmatpush1.msra.mxu0 0.0
      %1446 = vmatprep.subr.mxu0 0.0
      %1447 = vmatpush1.msra.mxu0 0.0
      %1448 = vmatprep.subr.mxu0 0.0
      %1449 = vmatpush1.msra.mxu0 0.0
      %1450 = vmatprep.subr.mxu0 0.0
      %1451 = vmatpush1.msra.mxu0 0.0
      %1452 = vmatprep.subr.mxu0 0.0
      %1453 = vmatpush1.msra.mxu0 0.0
      %1454 = vmatprep.subr.mxu0 0.0
      %1455 = vmatpush1.msra.mxu0 0.0
      %1456 = vmatprep.subr.mxu0 0.0
      %1457 = vmatpush1.msra.mxu0 0.0
      %1458 = vmatprep.subr.mxu0 0.0
      %1459 = vmatpush1.msra.mxu0 0.0
      %1460 = vmatprep.subr.mxu0 0.0
      %1461 = vmatpush1.msra.mxu0 0.0
      %1462 = vmatprep.subr.mxu0 0.0
      %1463 = vmatpush1.msra.mxu0 0.0
      %1464 = vmatprep.subr.mxu0 0.0
      %1465 = vmatpush1.msra.mxu0 0.0
      %1466 = vmatprep.subr.mxu0 0.0
      %1467 = vmatpush1.msra.mxu0 0.0
      %1468 = vmatprep.subr.mxu0 0.0
      %1469 = vmatpush1.msra.mxu0 0.0
      %1470 = vmatprep.mubr.f32.mxu0 0.0
      %1471 = vmatmul.mubr.f32.gmra.mrb[0].mxu0 %v1401
      %v1472 = vpop.f32.mrb[0].mxu0
      %v1473 = vadd.f32 0.0, %v1472
      %v1474 = vpop.f32.mrb[0].mxu0
      %1475 = vdwg.mxu0
      %v1476 = vadd.f32 %v1259, %v1473
      %vm1477 = vmand %vm1041, %vm820
      %vm1478 = vmand %vm1477, %vm822
      %v1479 = vadd.s32 %v1044, %v819
      %v1480 = vsel %vm1478, %v1479, 4294967295
      %vm1481 = vcmp.eq.s32.totalorder %v339, %v1480
      %vm1482 = vcmp.eq.s32.totalorder %v340, %v1480
      %vm1483 = vcmp.eq.s32.totalorder %v341, %v1480
      %vm1484 = vcmp.eq.s32.totalorder %v342, %v1480
      %vm1485 = vcmp.eq.s32.totalorder %v343, %v1480
      %vm1486 = vcmp.eq.s32.totalorder %v344, %v1480
      %vm1487 = vcmp.eq.s32.totalorder %v345, %v1480
      %vm1488 = vcmp.eq.s32.totalorder %v346, %v1480
      %vm1489 = vcmp.eq.s32.totalorder %v347, %v1480
      %vm1490 = vcmp.eq.s32.totalorder %v348, %v1480
      %vm1491 = vcmp.eq.s32.totalorder %v349, %v1480
      %vm1492 = vcmp.eq.s32.totalorder %v350, %v1480
      %vm1493 = vcmp.eq.s32.totalorder %v351, %v1480
      %vm1494 = vcmp.eq.s32.totalorder %v352, %v1480
      %vm1495 = vcmp.eq.s32.totalorder %v353, %v1480
      %vm1496 = vcmp.eq.s32.totalorder %v354, %v1480
      %vm1497 = vcmp.eq.s32.totalorder %v355, %v1480
      %vm1498 = vcmp.eq.s32.totalorder %v356, %v1480
      %vm1499 = vcmp.eq.s32.totalorder %v357, %v1480
      %vm1500 = vcmp.eq.s32.totalorder %v358, %v1480
      %vm1501 = vcmp.eq.s32.totalorder %v359, %v1480
      %vm1502 = vcmp.eq.s32.totalorder %v360, %v1480
      %vm1503 = vcmp.eq.s32.totalorder %v361, %v1480
      %vm1504 = vcmp.eq.s32.totalorder %v362, %v1480
      %vm1505 = vcmp.eq.s32.totalorder %v363, %v1480
      %vm1506 = vcmp.eq.s32.totalorder %v364, %v1480
      %vm1507 = vcmp.eq.s32.totalorder %v365, %v1480
      %vm1508 = vcmp.eq.s32.totalorder %v366, %v1480
      %vm1509 = vcmp.eq.s32.totalorder %v367, %v1480
      %vm1510 = vcmp.eq.s32.totalorder %v368, %v1480
      %vm1511 = vcmp.eq.s32.totalorder %v369, %v1480
      %vm1512 = vcmp.eq.s32.totalorder %v370, %v1480
      %v1513 = vsel %vm1481, 1.0, 0.0
      %v1514 = vsel %vm1482, 1.0, 0.0
      %v1515 = vsel %vm1483, 1.0, 0.0
      %v1516 = vsel %vm1484, 1.0, 0.0
      %v1517 = vsel %vm1485, 1.0, 0.0
      %v1518 = vsel %vm1486, 1.0, 0.0
      %v1519 = vsel %vm1487, 1.0, 0.0
      %v1520 = vsel %vm1488, 1.0, 0.0
      %v1521 = vsel %vm1489, 1.0, 0.0
      %v1522 = vsel %vm1490, 1.0, 0.0
      %v1523 = vsel %vm1491, 1.0, 0.0
      %v1524 = vsel %vm1492, 1.0, 0.0
      %v1525 = vsel %vm1493, 1.0, 0.0
      %v1526 = vsel %vm1494, 1.0, 0.0
      %v1527 = vsel %vm1495, 1.0, 0.0
      %v1528 = vsel %vm1496, 1.0, 0.0
      %v1529 = vsel %vm1497, 1.0, 0.0
      %v1530 = vsel %vm1498, 1.0, 0.0
      %v1531 = vsel %vm1499, 1.0, 0.0
      %v1532 = vsel %vm1500, 1.0, 0.0
      %v1533 = vsel %vm1501, 1.0, 0.0
      %v1534 = vsel %vm1502, 1.0, 0.0
      %v1535 = vsel %vm1503, 1.0, 0.0
      %v1536 = vsel %vm1504, 1.0, 0.0
      %v1537 = vsel %vm1505, 1.0, 0.0
      %v1538 = vsel %vm1506, 1.0, 0.0
      %v1539 = vsel %vm1507, 1.0, 0.0
      %v1540 = vsel %vm1508, 1.0, 0.0
      %v1541 = vsel %vm1509, 1.0, 0.0
      %v1542 = vsel %vm1510, 1.0, 0.0
      %v1543 = vsel %vm1511, 1.0, 0.0
      %v1544 = vsel %vm1512, 1.0, 0.0
      %1545 = vmatprep.subr.mxu0 0.0
      %1546 = vmatpush1.msra.mxu0 %v1513
      %1547 = vmatprep.subr.mxu0 0.0
      %1548 = vmatpush1.msra.mxu0 %v1514
      %1549 = vmatprep.subr.mxu0 0.0
      %1550 = vmatpush1.msra.mxu0 %v1515
      %1551 = vmatprep.subr.mxu0 0.0
      %1552 = vmatpush1.msra.mxu0 %v1516
      %1553 = vmatprep.subr.mxu0 0.0
      %1554 = vmatpush1.msra.mxu0 %v1517
      %1555 = vmatprep.subr.mxu0 0.0
      %1556 = vmatpush1.msra.mxu0 %v1518
      %1557 = vmatprep.subr.mxu0 0.0
      %1558 = vmatpush1.msra.mxu0 %v1519
      %1559 = vmatprep.subr.mxu0 0.0
      %1560 = vmatpush1.msra.mxu0 %v1520
      %1561 = vmatprep.subr.mxu0 0.0
      %1562 = vmatpush1.msra.mxu0 %v1521
      %1563 = vmatprep.subr.mxu0 0.0
      %1564 = vmatpush1.msra.mxu0 %v1522
      %1565 = vmatprep.subr.mxu0 0.0
      %1566 = vmatpush1.msra.mxu0 %v1523
      %1567 = vmatprep.subr.mxu0 0.0
      %1568 = vmatpush1.msra.mxu0 %v1524
      %1569 = vmatprep.subr.mxu0 0.0
      %1570 = vmatpush1.msra.mxu0 %v1525
      %1571 = vmatprep.subr.mxu0 0.0
      %1572 = vmatpush1.msra.mxu0 %v1526
      %1573 = vmatprep.subr.mxu0 0.0
      %1574 = vmatpush1.msra.mxu0 %v1527
      %1575 = vmatprep.subr.mxu0 0.0
      %1576 = vmatpush1.msra.mxu0 %v1528
      %1577 = vmatprep.subr.mxu0 0.0
      %1578 = vmatpush1.msra.mxu0 %v1529
      %1579 = vmatprep.subr.mxu0 0.0
      %1580 = vmatpush1.msra.mxu0 %v1530
      %1581 = vmatprep.subr.mxu0 0.0
      %1582 = vmatpush1.msra.mxu0 %v1531
      %1583 = vmatprep.subr.mxu0 0.0
      %1584 = vmatpush1.msra.mxu0 %v1532
      %1585 = vmatprep.subr.mxu0 0.0
      %1586 = vmatpush1.msra.mxu0 %v1533
      %1587 = vmatprep.subr.mxu0 0.0
      %1588 = vmatpush1.msra.mxu0 %v1534
      %1589 = vmatprep.subr.mxu0 0.0
      %1590 = vmatpush1.msra.mxu0 %v1535
      %1591 = vmatprep.subr.mxu0 0.0
      %1592 = vmatpush1.msra.mxu0 %v1536
      %1593 = vmatprep.subr.mxu0 0.0
      %1594 = vmatpush1.msra.mxu0 %v1537
      %1595 = vmatprep.subr.mxu0 0.0
      %1596 = vmatpush1.msra.mxu0 %v1538
      %1597 = vmatprep.subr.mxu0 0.0
      %1598 = vmatpush1.msra.mxu0 %v1539
      %1599 = vmatprep.subr.mxu0 0.0
      %1600 = vmatpush1.msra.mxu0 %v1540
      %1601 = vmatprep.subr.mxu0 0.0
      %1602 = vmatpush1.msra.mxu0 %v1541
      %1603 = vmatprep.subr.mxu0 0.0
      %1604 = vmatpush1.msra.mxu0 %v1542
      %1605 = vmatprep.subr.mxu0 0.0
      %1606 = vmatpush1.msra.mxu0 %v1543
      %1607 = vmatprep.subr.mxu0 0.0
      %1608 = vmatpush1.msra.mxu0 %v1544
      %1609 = vmatprep.mubr.f32.mxu0 %v450
      %1610 = vmatmul.mubr.f32.gmra.mrb[0].mxu0 %v333
      %v1611 = vpop.f32.mrb[0].mxu0
      %v1612 = vadd.f32 0.0, %v1611
      %v1613 = vpop.f32.mrb[0].mxu0
      %1614 = vdwg.mxu0
      %s1615 = scalar_lea.vmem %s1, 40
      %v1616 = vld [vmem:[%s1615] sm:$0xff]
      %v1618 = vsel %vm665, %v1616, 0
      %v1621 = vsel %vm669, %v1612, 0
      %1623 = vmatprep.subr.mxu0 0.0
      %1624 = vmatpush1.msra.mxu0 %v1621
      %1625 = vmatprep.subr.mxu0 0.0
      %1626 = vmatpush1.msra.mxu0 0.0
      %1627 = vmatprep.subr.mxu0 0.0
      %1628 = vmatpush1.msra.mxu0 0.0
      %1629 = vmatprep.subr.mxu0 0.0
      %1630 = vmatpush1.msra.mxu0 0.0
      %1631 = vmatprep.subr.mxu0 0.0
      %1632 = vmatpush1.msra.mxu0 0.0
      %1633 = vmatprep.subr.mxu0 0.0
      %1634 = vmatpush1.msra.mxu0 0.0
      %1635 = vmatprep.subr.mxu0 0.0
      %1636 = vmatpush1.msra.mxu0 0.0
      %1637 = vmatprep.subr.mxu0 0.0
      %1638 = vmatpush1.msra.mxu0 0.0
      %1639 = vmatprep.subr.mxu0 0.0
      %1640 = vmatpush1.msra.mxu0 0.0
      %1641 = vmatprep.subr.mxu0 0.0
      %1642 = vmatpush1.msra.mxu0 0.0
      %1643 = vmatprep.subr.mxu0 0.0
      %1644 = vmatpush1.msra.mxu0 0.0
      %1645 = vmatprep.subr.mxu0 0.0
      %1646 = vmatpush1.msra.mxu0 0.0
      %1647 = vmatprep.subr.mxu0 0.0
      %1648 = vmatpush1.msra.mxu0 0.0
      %1649 = vmatprep.subr.mxu0 0.0
      %1650 = vmatpush1.msra.mxu0 0.0
      %1651 = vmatprep.subr.mxu0 0.0
      %1652 = vmatpush1.msra.mxu0 0.0
      %1653 = vmatprep.subr.mxu0 0.0
      %1654 = vmatpush1.msra.mxu0 0.0
      %1655 = vmatprep.subr.mxu0 0.0
      %1656 = vmatpush1.msra.mxu0 0.0
      %1657 = vmatprep.subr.mxu0 0.0
      %1658 = vmatpush1.msra.mxu0 0.0
      %1659 = vmatprep.subr.mxu0 0.0
      %1660 = vmatpush1.msra.mxu0 0.0
      %1661 = vmatprep.subr.mxu0 0.0
      %1662 = vmatpush1.msra.mxu0 0.0
      %1663 = vmatprep.subr.mxu0 0.0
      %1664 = vmatpush1.msra.mxu0 0.0
      %1665 = vmatprep.subr.mxu0 0.0
      %1666 = vmatpush1.msra.mxu0 0.0
      %1667 = vmatprep.subr.mxu0 0.0
      %1668 = vmatpush1.msra.mxu0 0.0
      %1669 = vmatprep.subr.mxu0 0.0
      %1670 = vmatpush1.msra.mxu0 0.0
      %1671 = vmatprep.subr.mxu0 0.0
      %1672 = vmatpush1.msra.mxu0 0.0
      %1673 = vmatprep.subr.mxu0 0.0
      %1674 = vmatpush1.msra.mxu0 0.0
      %1675 = vmatprep.subr.mxu0 0.0
      %1676 = vmatpush1.msra.mxu0 0.0
      %1677 = vmatprep.subr.mxu0 0.0
      %1678 = vmatpush1.msra.mxu0 0.0
      %1679 = vmatprep.subr.mxu0 0.0
      %1680 = vmatpush1.msra.mxu0 0.0
      %1681 = vmatprep.subr.mxu0 0.0
      %1682 = vmatpush1.msra.mxu0 0.0
      %1683 = vmatprep.subr.mxu0 0.0
      %1684 = vmatpush1.msra.mxu0 0.0
      %1685 = vmatprep.subr.mxu0 0.0
      %1686 = vmatpush1.msra.mxu0 0.0
      %1687 = vmatprep.mubr.f32.mxu0 0.0
      %1688 = vmatmul.mubr.f32.gmra.mrb[0].mxu0 %v1618
      %v1689 = vpop.f32.mrb[0].mxu0
      %v1690 = vadd.f32 0.0, %v1689
      %v1691 = vpop.f32.mrb[0].mxu0
      %1692 = vdwg.mxu0
      %v1693 = vadd.f32 %v1476, %v1690
      %v1694 = vadd.s32 %v371, 1
      %vm1695 = vcmp.ge.s32.totalorder %v1694, 0
      %vm1696 = vcmp.lt.s32.totalorder %v1694, 16
      %vm1697 = vmand %vm1695, %vm1696
      %vm1698 = vmand %vm1697, %vm378
      %vm1699 = vmand %vm1698, %vm380
      %v1700 = vmul.u32 %v1694, 16
      %v1701 = vadd.s32 %v1700, %v374
      %v1702 = vsel %vm1699, %v1701, 4294967295
      %vm1703 = vcmp.eq.s32.totalorder %v339, %v1702
      %vm1704 = vcmp.eq.s32.totalorder %v340, %v1702
      %vm1705 = vcmp.eq.s32.totalorder %v341, %v1702
      %vm1706 = vcmp.eq.s32.totalorder %v342, %v1702
      %vm1707 = vcmp.eq.s32.totalorder %v343, %v1702
      %vm1708 = vcmp.eq.s32.totalorder %v344, %v1702
      %vm1709 = vcmp.eq.s32.totalorder %v345, %v1702
      %vm1710 = vcmp.eq.s32.totalorder %v346, %v1702
      %vm1711 = vcmp.eq.s32.totalorder %v347, %v1702
      %vm1712 = vcmp.eq.s32.totalorder %v348, %v1702
      %vm1713 = vcmp.eq.s32.totalorder %v349, %v1702
      %vm1714 = vcmp.eq.s32.totalorder %v350, %v1702
      %vm1715 = vcmp.eq.s32.totalorder %v351, %v1702
      %vm1716 = vcmp.eq.s32.totalorder %v352, %v1702
      %vm1717 = vcmp.eq.s32.totalorder %v353, %v1702
      %vm1718 = vcmp.eq.s32.totalorder %v354, %v1702
      %vm1719 = vcmp.eq.s32.totalorder %v355, %v1702
      %vm1720 = vcmp.eq.s32.totalorder %v356, %v1702
      %vm1721 = vcmp.eq.s32.totalorder %v357, %v1702
      %vm1722 = vcmp.eq.s32.totalorder %v358, %v1702
      %vm1723 = vcmp.eq.s32.totalorder %v359, %v1702
      %vm1724 = vcmp.eq.s32.totalorder %v360, %v1702
      %vm1725 = vcmp.eq.s32.totalorder %v361, %v1702
      %vm1726 = vcmp.eq.s32.totalorder %v362, %v1702
      %vm1727 = vcmp.eq.s32.totalorder %v363, %v1702
      %vm1728 = vcmp.eq.s32.totalorder %v364, %v1702
      %vm1729 = vcmp.eq.s32.totalorder %v365, %v1702
      %vm1730 = vcmp.eq.s32.totalorder %v366, %v1702
      %vm1731 = vcmp.eq.s32.totalorder %v367, %v1702
      %vm1732 = vcmp.eq.s32.totalorder %v368, %v1702
      %vm1733 = vcmp.eq.s32.totalorder %v369, %v1702
      %vm1734 = vcmp.eq.s32.totalorder %v370, %v1702
      %v1735 = vsel %vm1703, 1.0, 0.0
      %v1736 = vsel %vm1704, 1.0, 0.0
      %v1737 = vsel %vm1705, 1.0, 0.0
      %v1738 = vsel %vm1706, 1.0, 0.0
      %v1739 = vsel %vm1707, 1.0, 0.0
      %v1740 = vsel %vm1708, 1.0, 0.0
      %v1741 = vsel %vm1709, 1.0, 0.0
      %v1742 = vsel %vm1710, 1.0, 0.0
      %v1743 = vsel %vm1711, 1.0, 0.0
      %v1744 = vsel %vm1712, 1.0, 0.0
      %v1745 = vsel %vm1713, 1.0, 0.0
      %v1746 = vsel %vm1714, 1.0, 0.0
      %v1747 = vsel %vm1715, 1.0, 0.0
      %v1748 = vsel %vm1716, 1.0, 0.0
      %v1749 = vsel %vm1717, 1.0, 0.0
      %v1750 = vsel %vm1718, 1.0, 0.0
      %v1751 = vsel %vm1719, 1.0, 0.0
      %v1752 = vsel %vm1720, 1.0, 0.0
      %v1753 = vsel %vm1721, 1.0, 0.0
      %v1754 = vsel %vm1722, 1.0, 0.0
      %v1755 = vsel %vm1723, 1.0, 0.0
      %v1756 = vsel %vm1724, 1.0, 0.0
      %v1757 = vsel %vm1725, 1.0, 0.0
      %v1758 = vsel %vm1726, 1.0, 0.0
      %v1759 = vsel %vm1727, 1.0, 0.0
      %v1760 = vsel %vm1728, 1.0, 0.0
      %v1761 = vsel %vm1729, 1.0, 0.0
      %v1762 = vsel %vm1730, 1.0, 0.0
      %v1763 = vsel %vm1731, 1.0, 0.0
      %v1764 = vsel %vm1732, 1.0, 0.0
      %v1765 = vsel %vm1733, 1.0, 0.0
      %v1766 = vsel %vm1734, 1.0, 0.0
      %1767 = vmatprep.subr.mxu0 0.0
      %1768 = vmatpush1.msra.mxu0 %v1735
      %1769 = vmatprep.subr.mxu0 0.0
      %1770 = vmatpush1.msra.mxu0 %v1736
      %1771 = vmatprep.subr.mxu0 0.0
      %1772 = vmatpush1.msra.mxu0 %v1737
      %1773 = vmatprep.subr.mxu0 0.0
      %1774 = vmatpush1.msra.mxu0 %v1738
      %1775 = vmatprep.subr.mxu0 0.0
      %1776 = vmatpush1.msra.mxu0 %v1739
      %1777 = vmatprep.subr.mxu0 0.0
      %1778 = vmatpush1.msra.mxu0 %v1740
      %1779 = vmatprep.subr.mxu0 0.0
      %1780 = vmatpush1.msra.mxu0 %v1741
      %1781 = vmatprep.subr.mxu0 0.0
      %1782 = vmatpush1.msra.mxu0 %v1742
      %1783 = vmatprep.subr.mxu0 0.0
      %1784 = vmatpush1.msra.mxu0 %v1743
      %1785 = vmatprep.subr.mxu0 0.0
      %1786 = vmatpush1.msra.mxu0 %v1744
      %1787 = vmatprep.subr.mxu0 0.0
      %1788 = vmatpush1.msra.mxu0 %v1745
      %1789 = vmatprep.subr.mxu0 0.0
      %1790 = vmatpush1.msra.mxu0 %v1746
      %1791 = vmatprep.subr.mxu0 0.0
      %1792 = vmatpush1.msra.mxu0 %v1747
      %1793 = vmatprep.subr.mxu0 0.0
      %1794 = vmatpush1.msra.mxu0 %v1748
      %1795 = vmatprep.subr.mxu0 0.0
      %1796 = vmatpush1.msra.mxu0 %v1749
      %1797 = vmatprep.subr.mxu0 0.0
      %1798 = vmatpush1.msra.mxu0 %v1750
      %1799 = vmatprep.subr.mxu0 0.0
      %1800 = vmatpush1.msra.mxu0 %v1751
      %1801 = vmatprep.subr.mxu0 0.0
      %1802 = vmatpush1.msra.mxu0 %v1752
      %1803 = vmatprep.subr.mxu0 0.0
      %1804 = vmatpush1.msra.mxu0 %v1753
      %1805 = vmatprep.subr.mxu0 0.0
      %1806 = vmatpush1.msra.mxu0 %v1754
      %1807 = vmatprep.subr.mxu0 0.0
      %1808 = vmatpush1.msra.mxu0 %v1755
      %1809 = vmatprep.subr.mxu0 0.0
      %1810 = vmatpush1.msra.mxu0 %v1756
      %1811 = vmatprep.subr.mxu0 0.0
      %1812 = vmatpush1.msra.mxu0 %v1757
      %1813 = vmatprep.subr.mxu0 0.0
      %1814 = vmatpush1.msra.mxu0 %v1758
      %1815 = vmatprep.subr.mxu0 0.0
      %1816 = vmatpush1.msra.mxu0 %v1759
      %1817 = vmatprep.subr.mxu0 0.0
      %1818 = vmatpush1.msra.mxu0 %v1760
      %1819 = vmatprep.subr.mxu0 0.0
      %1820 = vmatpush1.msra.mxu0 %v1761
      %1821 = vmatprep.subr.mxu0 0.0
      %1822 = vmatpush1.msra.mxu0 %v1762
      %1823 = vmatprep.subr.mxu0 0.0
      %1824 = vmatpush1.msra.mxu0 %v1763
      %1825 = vmatprep.subr.mxu0 0.0
      %1826 = vmatpush1.msra.mxu0 %v1764
      %1827 = vmatprep.subr.mxu0 0.0
      %1828 = vmatpush1.msra.mxu0 %v1765
      %1829 = vmatprep.subr.mxu0 0.0
      %1830 = vmatpush1.msra.mxu0 %v1766
      %1831 = vmatprep.mubr.f32.mxu0 %v450
      %1832 = vmatmul.mubr.f32.gmra.mrb[0].mxu0 %v333
      %v1833 = vpop.f32.mrb[0].mxu0
      %v1834 = vadd.f32 0.0, %v1833
      %v1835 = vpop.f32.mrb[0].mxu0
      %1836 = vdwg.mxu0
      %s1837 = scalar_lea.vmem %s1, 48
      %v1838 = vld [vmem:[%s1837] sm:$0xff]
      %v1840 = vsel %vm665, %v1838, 0
      %v1843 = vsel %vm669, %v1834, 0
      %1845 = vmatprep.subr.mxu0 0.0
      %1846 = vmatpush1.msra.mxu0 %v1843
      %1847 = vmatprep.subr.mxu0 0.0
      %1848 = vmatpush1.msra.mxu0 0.0
      %1849 = vmatprep.subr.mxu0 0.0
      %1850 = vmatpush1.msra.mxu0 0.0
      %1851 = vmatprep.subr.mxu0 0.0
      %1852 = vmatpush1.msra.mxu0 0.0
      %1853 = vmatprep.subr.mxu0 0.0
      %1854 = vmatpush1.msra.mxu0 0.0
      %1855 = vmatprep.subr.mxu0 0.0
      %1856 = vmatpush1.msra.mxu0 0.0
      %1857 = vmatprep.subr.mxu0 0.0
      %1858 = vmatpush1.msra.mxu0 0.0
      %1859 = vmatprep.subr.mxu0 0.0
      %1860 = vmatpush1.msra.mxu0 0.0
      %1861 = vmatprep.subr.mxu0 0.0
      %1862 = vmatpush1.msra.mxu0 0.0
      %1863 = vmatprep.subr.mxu0 0.0
      %1864 = vmatpush1.msra.mxu0 0.0
      %1865 = vmatprep.subr.mxu0 0.0
      %1866 = vmatpush1.msra.mxu0 0.0
      %1867 = vmatprep.subr.mxu0 0.0
      %1868 = vmatpush1.msra.mxu0 0.0
      %1869 = vmatprep.subr.mxu0 0.0
      %1870 = vmatpush1.msra.mxu0 0.0
      %1871 = vmatprep.subr.mxu0 0.0
      %1872 = vmatpush1.msra.mxu0 0.0
      %1873 = vmatprep.subr.mxu0 0.0
      %1874 = vmatpush1.msra.mxu0 0.0
      %1875 = vmatprep.subr.mxu0 0.0
      %1876 = vmatpush1.msra.mxu0 0.0
      %1877 = vmatprep.subr.mxu0 0.0
      %1878 = vmatpush1.msra.mxu0 0.0
      %1879 = vmatprep.subr.mxu0 0.0
      %1880 = vmatpush1.msra.mxu0 0.0
      %1881 = vmatprep.subr.mxu0 0.0
      %1882 = vmatpush1.msra.mxu0 0.0
      %1883 = vmatprep.subr.mxu0 0.0
      %1884 = vmatpush1.msra.mxu0 0.0
      %1885 = vmatprep.subr.mxu0 0.0
      %1886 = vmatpush1.msra.mxu0 0.0
      %1887 = vmatprep.subr.mxu0 0.0
      %1888 = vmatpush1.msra.mxu0 0.0
      %1889 = vmatprep.subr.mxu0 0.0
      %1890 = vmatpush1.msra.mxu0 0.0
      %1891 = vmatprep.subr.mxu0 0.0
      %1892 = vmatpush1.msra.mxu0 0.0
      %1893 = vmatprep.subr.mxu0 0.0
      %1894 = vmatpush1.msra.mxu0 0.0
      %1895 = vmatprep.subr.mxu0 0.0
      %1896 = vmatpush1.msra.mxu0 0.0
      %1897 = vmatprep.subr.mxu0 0.0
      %1898 = vmatpush1.msra.mxu0 0.0
      %1899 = vmatprep.subr.mxu0 0.0
      %1900 = vmatpush1.msra.mxu0 0.0
      %1901 = vmatprep.subr.mxu0 0.0
      %1902 = vmatpush1.msra.mxu0 0.0
      %1903 = vmatprep.subr.mxu0 0.0
      %1904 = vmatpush1.msra.mxu0 0.0
      %1905 = vmatprep.subr.mxu0 0.0
      %1906 = vmatpush1.msra.mxu0 0.0
      %1907 = vmatprep.subr.mxu0 0.0
      %1908 = vmatpush1.msra.mxu0 0.0
      %1909 = vmatprep.mubr.f32.mxu0 0.0
      %1910 = vmatmul.mubr.f32.gmra.mrb[0].mxu0 %v1840
      %v1911 = vpop.f32.mrb[0].mxu0
      %v1912 = vadd.f32 0.0, %v1911
      %v1913 = vpop.f32.mrb[0].mxu0
      %1914 = vdwg.mxu0
      %v1915 = vadd.f32 %v1693, %v1912
      %vm1916 = vmand %vm1697, %vm523
      %vm1917 = vmand %vm1916, %vm525
      %v1918 = vadd.s32 %v1700, %v373
      %v1919 = vsel %vm1917, %v1918, 4294967295
      %vm1920 = vcmp.eq.s32.totalorder %v339, %v1919
      %vm1921 = vcmp.eq.s32.totalorder %v340, %v1919
      %vm1922 = vcmp.eq.s32.totalorder %v341, %v1919
      %vm1923 = vcmp.eq.s32.totalorder %v342, %v1919
      %vm1924 = vcmp.eq.s32.totalorder %v343, %v1919
      %vm1925 = vcmp.eq.s32.totalorder %v344, %v1919
      %vm1926 = vcmp.eq.s32.totalorder %v345, %v1919
      %vm1927 = vcmp.eq.s32.totalorder %v346, %v1919
      %vm1928 = vcmp.eq.s32.totalorder %v347, %v1919
      %vm1929 = vcmp.eq.s32.totalorder %v348, %v1919
      %vm1930 = vcmp.eq.s32.totalorder %v349, %v1919
      %vm1931 = vcmp.eq.s32.totalorder %v350, %v1919
      %vm1932 = vcmp.eq.s32.totalorder %v351, %v1919
      %vm1933 = vcmp.eq.s32.totalorder %v352, %v1919
      %vm1934 = vcmp.eq.s32.totalorder %v353, %v1919
      %vm1935 = vcmp.eq.s32.totalorder %v354, %v1919
      %vm1936 = vcmp.eq.s32.totalorder %v355, %v1919
      %vm1937 = vcmp.eq.s32.totalorder %v356, %v1919
      %vm1938 = vcmp.eq.s32.totalorder %v357, %v1919
      %vm1939 = vcmp.eq.s32.totalorder %v358, %v1919
      %vm1940 = vcmp.eq.s32.totalorder %v359, %v1919
      %vm1941 = vcmp.eq.s32.totalorder %v360, %v1919
      %vm1942 = vcmp.eq.s32.totalorder %v361, %v1919
      %vm1943 = vcmp.eq.s32.totalorder %v362, %v1919
      %vm1944 = vcmp.eq.s32.totalorder %v363, %v1919
      %vm1945 = vcmp.eq.s32.totalorder %v364, %v1919
      %vm1946 = vcmp.eq.s32.totalorder %v365, %v1919
      %vm1947 = vcmp.eq.s32.totalorder %v366, %v1919
      %vm1948 = vcmp.eq.s32.totalorder %v367, %v1919
      %vm1949 = vcmp.eq.s32.totalorder %v368, %v1919
      %vm1950 = vcmp.eq.s32.totalorder %v369, %v1919
      %vm1951 = vcmp.eq.s32.totalorder %v370, %v1919
      %v1952 = vsel %vm1920, 1.0, 0.0
      %v1953 = vsel %vm1921, 1.0, 0.0
      %v1954 = vsel %vm1922, 1.0, 0.0
      %v1955 = vsel %vm1923, 1.0, 0.0
      %v1956 = vsel %vm1924, 1.0, 0.0
      %v1957 = vsel %vm1925, 1.0, 0.0
      %v1958 = vsel %vm1926, 1.0, 0.0
      %v1959 = vsel %vm1927, 1.0, 0.0
      %v1960 = vsel %vm1928, 1.0, 0.0
      %v1961 = vsel %vm1929, 1.0, 0.0
      %v1962 = vsel %vm1930, 1.0, 0.0
      %v1963 = vsel %vm1931, 1.0, 0.0
      %v1964 = vsel %vm1932, 1.0, 0.0
      %v1965 = vsel %vm1933, 1.0, 0.0
      %v1966 = vsel %vm1934, 1.0, 0.0
      %v1967 = vsel %vm1935, 1.0, 0.0
      %v1968 = vsel %vm1936, 1.0, 0.0
      %v1969 = vsel %vm1937, 1.0, 0.0
      %v1970 = vsel %vm1938, 1.0, 0.0
      %v1971 = vsel %vm1939, 1.0, 0.0
      %v1972 = vsel %vm1940, 1.0, 0.0
      %v1973 = vsel %vm1941, 1.0, 0.0
      %v1974 = vsel %vm1942, 1.0, 0.0
      %v1975 = vsel %vm1943, 1.0, 0.0
      %v1976 = vsel %vm1944, 1.0, 0.0
      %v1977 = vsel %vm1945, 1.0, 0.0
      %v1978 = vsel %vm1946, 1.0, 0.0
      %v1979 = vsel %vm1947, 1.0, 0.0
      %v1980 = vsel %vm1948, 1.0, 0.0
      %v1981 = vsel %vm1949, 1.0, 0.0
      %v1982 = vsel %vm1950, 1.0, 0.0
      %v1983 = vsel %vm1951, 1.0, 0.0
      %1984 = vmatprep.subr.mxu0 0.0
      %1985 = vmatpush1.msra.mxu0 %v1952
      %1986 = vmatprep.subr.mxu0 0.0
      %1987 = vmatpush1.msra.mxu0 %v1953
      %1988 = vmatprep.subr.mxu0 0.0
      %1989 = vmatpush1.msra.mxu0 %v1954
      %1990 = vmatprep.subr.mxu0 0.0
      %1991 = vmatpush1.msra.mxu0 %v1955
      %1992 = vmatprep.subr.mxu0 0.0
      %1993 = vmatpush1.msra.mxu0 %v1956
      %1994 = vmatprep.subr.mxu0 0.0
      %1995 = vmatpush1.msra.mxu0 %v1957
      %1996 = vmatprep.subr.mxu0 0.0
      %1997 = vmatpush1.msra.mxu0 %v1958
      %1998 = vmatprep.subr.mxu0 0.0
      %1999 = vmatpush1.msra.mxu0 %v1959
      %2000 = vmatprep.subr.mxu0 0.0
      %2001 = vmatpush1.msra.mxu0 %v1960
      %2002 = vmatprep.subr.mxu0 0.0
      %2003 = vmatpush1.msra.mxu0 %v1961
      %2004 = vmatprep.subr.mxu0 0.0
      %2005 = vmatpush1.msra.mxu0 %v1962
      %2006 = vmatprep.subr.mxu0 0.0
      %2007 = vmatpush1.msra.mxu0 %v1963
      %2008 = vmatprep.subr.mxu0 0.0
      %2009 = vmatpush1.msra.mxu0 %v1964
      %2010 = vmatprep.subr.mxu0 0.0
      %2011 = vmatpush1.msra.mxu0 %v1965
      %2012 = vmatprep.subr.mxu0 0.0
      %2013 = vmatpush1.msra.mxu0 %v1966
      %2014 = vmatprep.subr.mxu0 0.0
      %2015 = vmatpush1.msra.mxu0 %v1967
      %2016 = vmatprep.subr.mxu0 0.0
      %2017 = vmatpush1.msra.mxu0 %v1968
      %2018 = vmatprep.subr.mxu0 0.0
      %2019 = vmatpush1.msra.mxu0 %v1969
      %2020 = vmatprep.subr.mxu0 0.0
      %2021 = vmatpush1.msra.mxu0 %v1970
      %2022 = vmatprep.subr.mxu0 0.0
      %2023 = vmatpush1.msra.mxu0 %v1971
      %2024 = vmatprep.subr.mxu0 0.0
      %2025 = vmatpush1.msra.mxu0 %v1972
      %2026 = vmatprep.subr.mxu0 0.0
      %2027 = vmatpush1.msra.mxu0 %v1973
      %2028 = vmatprep.subr.mxu0 0.0
      %2029 = vmatpush1.msra.mxu0 %v1974
      %2030 = vmatprep.subr.mxu0 0.0
      %2031 = vmatpush1.msra.mxu0 %v1975
      %2032 = vmatprep.subr.mxu0 0.0
      %2033 = vmatpush1.msra.mxu0 %v1976
      %2034 = vmatprep.subr.mxu0 0.0
      %2035 = vmatpush1.msra.mxu0 %v1977
      %2036 = vmatprep.subr.mxu0 0.0
      %2037 = vmatpush1.msra.mxu0 %v1978
      %2038 = vmatprep.subr.mxu0 0.0
      %2039 = vmatpush1.msra.mxu0 %v1979
      %2040 = vmatprep.subr.mxu0 0.0
      %2041 = vmatpush1.msra.mxu0 %v1980
      %2042 = vmatprep.subr.mxu0 0.0
      %2043 = vmatpush1.msra.mxu0 %v1981
      %2044 = vmatprep.subr.mxu0 0.0
      %2045 = vmatpush1.msra.mxu0 %v1982
      %2046 = vmatprep.subr.mxu0 0.0
      %2047 = vmatpush1.msra.mxu0 %v1983
      %2048 = vmatprep.mubr.f32.mxu0 %v450
      %2049 = vmatmul.mubr.f32.gmra.mrb[0].mxu0 %v333
      %v2050 = vpop.f32.mrb[0].mxu0
      %v2051 = vadd.f32 0.0, %v2050
      %v2052 = vpop.f32.mrb[0].mxu0
      %2053 = vdwg.mxu0
      %s2054 = scalar_lea.vmem %s1, 56
      %v2055 = vld [vmem:[%s2054] sm:$0xff]
      %v2057 = vsel %vm665, %v2055, 0
      %v2060 = vsel %vm669, %v2051, 0
      %2062 = vmatprep.subr.mxu0 0.0
      %2063 = vmatpush1.msra.mxu0 %v2060
      %2064 = vmatprep.subr.mxu0 0.0
      %2065 = vmatpush1.msra.mxu0 0.0
      %2066 = vmatprep.subr.mxu0 0.0
      %2067 = vmatpush1.msra.mxu0 0.0
      %2068 = vmatprep.subr.mxu0 0.0
      %2069 = vmatpush1.msra.mxu0 0.0
      %2070 = vmatprep.subr.mxu0 0.0
      %2071 = vmatpush1.msra.mxu0 0.0
      %2072 = vmatprep.subr.mxu0 0.0
      %2073 = vmatpush1.msra.mxu0 0.0
      %2074 = vmatprep.subr.mxu0 0.0
      %2075 = vmatpush1.msra.mxu0 0.0
      %2076 = vmatprep.subr.mxu0 0.0
      %2077 = vmatpush1.msra.mxu0 0.0
      %2078 = vmatprep.subr.mxu0 0.0
      %2079 = vmatpush1.msra.mxu0 0.0
      %2080 = vmatprep.subr.mxu0 0.0
      %2081 = vmatpush1.msra.mxu0 0.0
      %2082 = vmatprep.subr.mxu0 0.0
      %2083 = vmatpush1.msra.mxu0 0.0
      %2084 = vmatprep.subr.mxu0 0.0
      %2085 = vmatpush1.msra.mxu0 0.0
      %2086 = vmatprep.subr.mxu0 0.0
      %2087 = vmatpush1.msra.mxu0 0.0
      %2088 = vmatprep.subr.mxu0 0.0
      %2089 = vmatpush1.msra.mxu0 0.0
      %2090 = vmatprep.subr.mxu0 0.0
      %2091 = vmatpush1.msra.mxu0 0.0
      %2092 = vmatprep.subr.mxu0 0.0
      %2093 = vmatpush1.msra.mxu0 0.0
      %2094 = vmatprep.subr.mxu0 0.0
      %2095 = vmatpush1.msra.mxu0 0.0
      %2096 = vmatprep.subr.mxu0 0.0
      %2097 = vmatpush1.msra.mxu0 0.0
      %2098 = vmatprep.subr.mxu0 0.0
      %2099 = vmatpush1.msra.mxu0 0.0
      %2100 = vmatprep.subr.mxu0 0.0
      %2101 = vmatpush1.msra.mxu0 0.0
      %2102 = vmatprep.subr.mxu0 0.0
      %2103 = vmatpush1.msra.mxu0 0.0
      %2104 = vmatprep.subr.mxu0 0.0
      %2105 = vmatpush1.msra.mxu0 0.0
      %2106 = vmatprep.subr.mxu0 0.0
      %2107 = vmatpush1.msra.mxu0 0.0
      %2108 = vmatprep.subr.mxu0 0.0
      %2109 = vmatpush1.msra.mxu0 0.0
      %2110 = vmatprep.subr.mxu0 0.0
      %2111 = vmatpush1.msra.mxu0 0.0
      %2112 = vmatprep.subr.mxu0 0.0
      %2113 = vmatpush1.msra.mxu0 0.0
      %2114 = vmatprep.subr.mxu0 0.0
      %2115 = vmatpush1.msra.mxu0 0.0
      %2116 = vmatprep.subr.mxu0 0.0
      %2117 = vmatpush1.msra.mxu0 0.0
      %2118 = vmatprep.subr.mxu0 0.0
      %2119 = vmatpush1.msra.mxu0 0.0
      %2120 = vmatprep.subr.mxu0 0.0
      %2121 = vmatpush1.msra.mxu0 0.0
      %2122 = vmatprep.subr.mxu0 0.0
      %2123 = vmatpush1.msra.mxu0 0.0
      %2124 = vmatprep.subr.mxu0 0.0
      %2125 = vmatpush1.msra.mxu0 0.0
      %2126 = vmatprep.mubr.f32.mxu0 0.0
      %2127 = vmatmul.mubr.f32.gmra.mrb[0].mxu0 %v2057
      %v2128 = vpop.f32.mrb[0].mxu0
      %v2129 = vadd.f32 0.0, %v2128
      %v2130 = vpop.f32.mrb[0].mxu0
      %2131 = vdwg.mxu0
      %v2132 = vadd.f32 %v1915, %v2129
      %vm2133 = vmand %vm1697, %vm820
      %vm2134 = vmand %vm2133, %vm822
      %v2135 = vadd.s32 %v1700, %v819
      %v2136 = vsel %vm2134, %v2135, 4294967295
      %vm2137 = vcmp.eq.s32.totalorder %v339, %v2136
      %vm2138 = vcmp.eq.s32.totalorder %v340, %v2136
      %vm2139 = vcmp.eq.s32.totalorder %v341, %v2136
      %vm2140 = vcmp.eq.s32.totalorder %v342, %v2136
      %vm2141 = vcmp.eq.s32.totalorder %v343, %v2136
      %vm2142 = vcmp.eq.s32.totalorder %v344, %v2136
      %vm2143 = vcmp.eq.s32.totalorder %v345, %v2136
      %vm2144 = vcmp.eq.s32.totalorder %v346, %v2136
      %vm2145 = vcmp.eq.s32.totalorder %v347, %v2136
      %vm2146 = vcmp.eq.s32.totalorder %v348, %v2136
      %vm2147 = vcmp.eq.s32.totalorder %v349, %v2136
      %vm2148 = vcmp.eq.s32.totalorder %v350, %v2136
      %vm2149 = vcmp.eq.s32.totalorder %v351, %v2136
      %vm2150 = vcmp.eq.s32.totalorder %v352, %v2136
      %vm2151 = vcmp.eq.s32.totalorder %v353, %v2136
      %vm2152 = vcmp.eq.s32.totalorder %v354, %v2136
      %vm2153 = vcmp.eq.s32.totalorder %v355, %v2136
      %vm2154 = vcmp.eq.s32.totalorder %v356, %v2136
      %vm2155 = vcmp.eq.s32.totalorder %v357, %v2136
      %vm2156 = vcmp.eq.s32.totalorder %v358, %v2136
      %vm2157 = vcmp.eq.s32.totalorder %v359, %v2136
      %vm2158 = vcmp.eq.s32.totalorder %v360, %v2136
      %vm2159 = vcmp.eq.s32.totalorder %v361, %v2136
      %vm2160 = vcmp.eq.s32.totalorder %v362, %v2136
      %vm2161 = vcmp.eq.s32.totalorder %v363, %v2136
      %vm2162 = vcmp.eq.s32.totalorder %v364, %v2136
      %vm2163 = vcmp.eq.s32.totalorder %v365, %v2136
      %vm2164 = vcmp.eq.s32.totalorder %v366, %v2136
      %vm2165 = vcmp.eq.s32.totalorder %v367, %v2136
      %vm2166 = vcmp.eq.s32.totalorder %v368, %v2136
      %vm2167 = vcmp.eq.s32.totalorder %v369, %v2136
      %vm2168 = vcmp.eq.s32.totalorder %v370, %v2136
      %v2169 = vsel %vm2137, 1.0, 0.0
      %v2170 = vsel %vm2138, 1.0, 0.0
      %v2171 = vsel %vm2139, 1.0, 0.0
      %v2172 = vsel %vm2140, 1.0, 0.0
      %v2173 = vsel %vm2141, 1.0, 0.0
      %v2174 = vsel %vm2142, 1.0, 0.0
      %v2175 = vsel %vm2143, 1.0, 0.0
      %v2176 = vsel %vm2144, 1.0, 0.0
      %v2177 = vsel %vm2145, 1.0, 0.0
      %v2178 = vsel %vm2146, 1.0, 0.0
      %v2179 = vsel %vm2147, 1.0, 0.0
      %v2180 = vsel %vm2148, 1.0, 0.0
      %v2181 = vsel %vm2149, 1.0, 0.0
      %v2182 = vsel %vm2150, 1.0, 0.0
      %v2183 = vsel %vm2151, 1.0, 0.0
      %v2184 = vsel %vm2152, 1.0, 0.0
      %v2185 = vsel %vm2153, 1.0, 0.0
      %v2186 = vsel %vm2154, 1.0, 0.0
      %v2187 = vsel %vm2155, 1.0, 0.0
      %v2188 = vsel %vm2156, 1.0, 0.0
      %v2189 = vsel %vm2157, 1.0, 0.0
      %v2190 = vsel %vm2158, 1.0, 0.0
      %v2191 = vsel %vm2159, 1.0, 0.0
      %v2192 = vsel %vm2160, 1.0, 0.0
      %v2193 = vsel %vm2161, 1.0, 0.0
      %v2194 = vsel %vm2162, 1.0, 0.0
      %v2195 = vsel %vm2163, 1.0, 0.0
      %v2196 = vsel %vm2164, 1.0, 0.0
      %v2197 = vsel %vm2165, 1.0, 0.0
      %v2198 = vsel %vm2166, 1.0, 0.0
      %v2199 = vsel %vm2167, 1.0, 0.0
      %v2200 = vsel %vm2168, 1.0, 0.0
      %2201 = vmatprep.subr.mxu0 0.0
      %2202 = vmatpush1.msra.mxu0 %v2169
      %2203 = vmatprep.subr.mxu0 0.0
      %2204 = vmatpush1.msra.mxu0 %v2170
      %2205 = vmatprep.subr.mxu0 0.0
      %2206 = vmatpush1.msra.mxu0 %v2171
      %2207 = vmatprep.subr.mxu0 0.0
      %2208 = vmatpush1.msra.mxu0 %v2172
      %2209 = vmatprep.subr.mxu0 0.0
      %2210 = vmatpush1.msra.mxu0 %v2173
      %2211 = vmatprep.subr.mxu0 0.0
      %2212 = vmatpush1.msra.mxu0 %v2174
      %2213 = vmatprep.subr.mxu0 0.0
      %2214 = vmatpush1.msra.mxu0 %v2175
      %2215 = vmatprep.subr.mxu0 0.0
      %2216 = vmatpush1.msra.mxu0 %v2176
      %2217 = vmatprep.subr.mxu0 0.0
      %2218 = vmatpush1.msra.mxu0 %v2177
      %2219 = vmatprep.subr.mxu0 0.0
      %2220 = vmatpush1.msra.mxu0 %v2178
      %2221 = vmatprep.subr.mxu0 0.0
      %2222 = vmatpush1.msra.mxu0 %v2179
      %2223 = vmatprep.subr.mxu0 0.0
      %2224 = vmatpush1.msra.mxu0 %v2180
      %2225 = vmatprep.subr.mxu0 0.0
      %2226 = vmatpush1.msra.mxu0 %v2181
      %2227 = vmatprep.subr.mxu0 0.0
      %2228 = vmatpush1.msra.mxu0 %v2182
      %2229 = vmatprep.subr.mxu0 0.0
      %2230 = vmatpush1.msra.mxu0 %v2183
      %2231 = vmatprep.subr.mxu0 0.0
      %2232 = vmatpush1.msra.mxu0 %v2184
      %2233 = vmatprep.subr.mxu0 0.0
      %2234 = vmatpush1.msra.mxu0 %v2185
      %2235 = vmatprep.subr.mxu0 0.0
      %2236 = vmatpush1.msra.mxu0 %v2186
      %2237 = vmatprep.subr.mxu0 0.0
      %2238 = vmatpush1.msra.mxu0 %v2187
      %2239 = vmatprep.subr.mxu0 0.0
      %2240 = vmatpush1.msra.mxu0 %v2188
      %2241 = vmatprep.subr.mxu0 0.0
      %2242 = vmatpush1.msra.mxu0 %v2189
      %2243 = vmatprep.subr.mxu0 0.0
      %2244 = vmatpush1.msra.mxu0 %v2190
      %2245 = vmatprep.subr.mxu0 0.0
      %2246 = vmatpush1.msra.mxu0 %v2191
      %2247 = vmatprep.subr.mxu0 0.0
      %2248 = vmatpush1.msra.mxu0 %v2192
      %2249 = vmatprep.subr.mxu0 0.0
      %2250 = vmatpush1.msra.mxu0 %v2193
      %2251 = vmatprep.subr.mxu0 0.0
      %2252 = vmatpush1.msra.mxu0 %v2194
      %2253 = vmatprep.subr.mxu0 0.0
      %2254 = vmatpush1.msra.mxu0 %v2195
      %2255 = vmatprep.subr.mxu0 0.0
      %2256 = vmatpush1.msra.mxu0 %v2196
      %2257 = vmatprep.subr.mxu0 0.0
      %2258 = vmatpush1.msra.mxu0 %v2197
      %2259 = vmatprep.subr.mxu0 0.0
      %2260 = vmatpush1.msra.mxu0 %v2198
      %2261 = vmatprep.subr.mxu0 0.0
      %2262 = vmatpush1.msra.mxu0 %v2199
      %2263 = vmatprep.subr.mxu0 0.0
      %2264 = vmatpush1.msra.mxu0 %v2200
      %2265 = vmatprep.mubr.f32.mxu0 %v450
      %2266 = vmatmul.mubr.f32.gmra.mrb[0].mxu0 %v333
      %v2267 = vpop.f32.mrb[0].mxu0
      %v2268 = vadd.f32 0.0, %v2267
      %v2269 = vpop.f32.mrb[0].mxu0
      %2270 = vdwg.mxu0
      %s2271 = scalar_lea.vmem %s1, 64
      %v2272 = vld [vmem:[%s2271] sm:$0xff]
      %v2274 = vsel %vm665, %v2272, 0
      %v2277 = vsel %vm669, %v2268, 0
      %2279 = vmatprep.subr.mxu0 0.0
      %2280 = vmatpush1.msra.mxu0 %v2277
      %2281 = vmatprep.subr.mxu0 0.0
      %2282 = vmatpush1.msra.mxu0 0.0
      %2283 = vmatprep.subr.mxu0 0.0
      %2284 = vmatpush1.msra.mxu0 0.0
      %2285 = vmatprep.subr.mxu0 0.0
      %2286 = vmatpush1.msra.mxu0 0.0
      %2287 = vmatprep.subr.mxu0 0.0
      %2288 = vmatpush1.msra.mxu0 0.0
      %2289 = vmatprep.subr.mxu0 0.0
      %2290 = vmatpush1.msra.mxu0 0.0
      %2291 = vmatprep.subr.mxu0 0.0
      %2292 = vmatpush1.msra.mxu0 0.0
      %2293 = vmatprep.subr.mxu0 0.0
      %2294 = vmatpush1.msra.mxu0 0.0
      %2295 = vmatprep.subr.mxu0 0.0
      %2296 = vmatpush1.msra.mxu0 0.0
      %2297 = vmatprep.subr.mxu0 0.0
      %2298 = vmatpush1.msra.mxu0 0.0
      %2299 = vmatprep.subr.mxu0 0.0
      %2300 = vmatpush1.msra.mxu0 0.0
      %2301 = vmatprep.subr.mxu0 0.0
      %2302 = vmatpush1.msra.mxu0 0.0
      %2303 = vmatprep.subr.mxu0 0.0
      %2304 = vmatpush1.msra.mxu0 0.0
      %2305 = vmatprep.subr.mxu0 0.0
      %2306 = vmatpush1.msra.mxu0 0.0
      %2307 = vmatprep.subr.mxu0 0.0
      %2308 = vmatpush1.msra.mxu0 0.0
      %2309 = vmatprep.subr.mxu0 0.0
      %2310 = vmatpush1.msra.mxu0 0.0
      %2311 = vmatprep.subr.mxu0 0.0
      %2312 = vmatpush1.msra.mxu0 0.0
      %2313 = vmatprep.subr.mxu0 0.0
      %2314 = vmatpush1.msra.mxu0 0.0
      %2315 = vmatprep.subr.mxu0 0.0
      %2316 = vmatpush1.msra.mxu0 0.0
      %2317 = vmatprep.subr.mxu0 0.0
      %2318 = vmatpush1.msra.mxu0 0.0
      %2319 = vmatprep.subr.mxu0 0.0
      %2320 = vmatpush1.msra.mxu0 0.0
      %2321 = vmatprep.subr.mxu0 0.0
      %2322 = vmatpush1.msra.mxu0 0.0
      %2323 = vmatprep.subr.mxu0 0.0
      %2324 = vmatpush1.msra.mxu0 0.0
      %2325 = vmatprep.subr.mxu0 0.0
      %2326 = vmatpush1.msra.mxu0 0.0
      %2327 = vmatprep.subr.mxu0 0.0
      %2328 = vmatpush1.msra.mxu0 0.0
      %2329 = vmatprep.subr.mxu0 0.0
      %2330 = vmatpush1.msra.mxu0 0.0
      %2331 = vmatprep.subr.mxu0 0.0
      %2332 = vmatpush1.msra.mxu0 0.0
      %2333 = vmatprep.subr.mxu0 0.0
      %2334 = vmatpush1.msra.mxu0 0.0
      %2335 = vmatprep.subr.mxu0 0.0
      %2336 = vmatpush1.msra.mxu0 0.0
      %2337 = vmatprep.subr.mxu0 0.0
      %2338 = vmatpush1.msra.mxu0 0.0
      %2339 = vmatprep.subr.mxu0 0.0
      %2340 = vmatpush1.msra.mxu0 0.0
      %2341 = vmatprep.subr.mxu0 0.0
      %2342 = vmatpush1.msra.mxu0 0.0
      %2343 = vmatprep.mubr.f32.mxu0 0.0
      %2344 = vmatmul.mubr.f32.gmra.mrb[0].mxu0 %v2274
      %v2345 = vpop.f32.mrb[0].mxu0
      %v2346 = vadd.f32 0.0, %v2345
      %v2347 = vpop.f32.mrb[0].mxu0
      %2348 = vdwg.mxu0
      %v2349 = vadd.f32 %v2132, %v2346
      %v2350 = vld [vmem:[%s2] sm:$0xff]
      %2352 = vset.pattern.permute.xlu0 0
      %2353 = vperm.xlu0 %2352, %v2350
      %v2354 = vpop.permute.xlu0 %2353
      %v2356 = vadd.f32 %v2349, %v2354
      %v2357 = vmax.f32 %v2356, 0.0
      %v2358 = vshra.s32 %v335, 2
      %v2359 = vand.u32 %v335, 3
      %v2360 = vmul.u32 %v2358, 2
      %v2361 = vadd.s32 %v2360, 4294967295
      %v2362 = vmul.u32 %v2359, 2
      %v2363 = vadd.s32 %v2362, 4294967295
      %vm2364 = vcmp.ge.s32.totalorder %v2361, 0
      %vm2365 = vcmp.lt.s32.totalorder %v2361, 8
      %vm2366 = vmand %vm2364, %vm2365
      %vm2367 = vcmp.ge.s32.totalorder %v2363, 0
      %vm2368 = vmand %vm2366, %vm2367
      %vm2369 = vcmp.lt.s32.totalorder %v2363, 8
      %vm2370 = vmand %vm2368, %vm2369
      %v2371 = vmul.u32 %v2361, 8
      %v2372 = vadd.s32 %v2371, %v2363
      %v2373 = vsel %vm2370, %v2372, 4294967295
      %vm2374 = vcmp.eq.s32.totalorder %v339, %v2373
      %vm2375 = vcmp.eq.s32.totalorder %v340, %v2373
      %vm2376 = vcmp.eq.s32.totalorder %v341, %v2373
      %vm2377 = vcmp.eq.s32.totalorder %v342, %v2373
      %vm2378 = vcmp.eq.s32.totalorder %v343, %v2373
      %vm2379 = vcmp.eq.s32.totalorder %v344, %v2373
      %vm2380 = vcmp.eq.s32.totalorder %v345, %v2373
      %vm2381 = vcmp.eq.s32.totalorder %v346, %v2373
      %v2382 = vsel %vm2374, 1.0, 0.0
      %v2383 = vsel %vm2375, 1.0, 0.0
      %v2384 = vsel %vm2376, 1.0, 0.0
      %v2385 = vsel %vm2377, 1.0, 0.0
      %v2386 = vsel %vm2378, 1.0, 0.0
      %v2387 = vsel %vm2379, 1.0, 0.0
      %v2388 = vsel %vm2380, 1.0, 0.0
      %v2389 = vsel %vm2381, 1.0, 0.0
      %vm2390 = vcmask 523264
      %v2392 = vsel %vm2390, %v2357, 0
      %2394 = vmatprep.subr.mxu0 0.0
      %2395 = vmatpush1.msra.mxu0 %v2382
      %2396 = vmatprep.subr.mxu0 0.0
      %2397 = vmatpush1.msra.mxu0 %v2383
      %2398 = vmatprep.subr.mxu0 0.0
      %2399 = vmatpush1.msra.mxu0 %v2384
      %2400 = vmatprep.subr.mxu0 0.0
      %2401 = vmatpush1.msra.mxu0 %v2385
      %2402 = vmatprep.subr.mxu0 0.0
      %2403 = vmatpush1.msra.mxu0 %v2386
      %2404 = vmatprep.subr.mxu0 0.0
      %2405 = vmatpush1.msra.mxu0 %v2387
      %2406 = vmatprep.subr.mxu0 0.0
      %2407 = vmatpush1.msra.mxu0 %v2388
      %2408 = vmatprep.subr.mxu0 0.0
      %2409 = vmatpush1.msra.mxu0 %v2389
      %2410 = vmatprep.subr.mxu0 0.0
      %2411 = vmatpush1.msra.mxu0 0.0
      %2412 = vmatprep.subr.mxu0 0.0
      %2413 = vmatpush1.msra.mxu0 0.0
      %2414 = vmatprep.subr.mxu0 0.0
      %2415 = vmatpush1.msra.mxu0 0.0
      %2416 = vmatprep.subr.mxu0 0.0
      %2417 = vmatpush1.msra.mxu0 0.0
      %2418 = vmatprep.subr.mxu0 0.0
      %2419 = vmatpush1.msra.mxu0 0.0
      %2420 = vmatprep.subr.mxu0 0.0
      %2421 = vmatpush1.msra.mxu0 0.0
      %2422 = vmatprep.subr.mxu0 0.0
      %2423 = vmatpush1.msra.mxu0 0.0
      %2424 = vmatprep.subr.mxu0 0.0
      %2425 = vmatpush1.msra.mxu0 0.0
      %2426 = vmatprep.subr.mxu0 0.0
      %2427 = vmatpush1.msra.mxu0 0.0
      %2428 = vmatprep.subr.mxu0 0.0
      %2429 = vmatpush1.msra.mxu0 0.0
      %2430 = vmatprep.subr.mxu0 0.0
      %2431 = vmatpush1.msra.mxu0 0.0
      %2432 = vmatprep.subr.mxu0 0.0
      %2433 = vmatpush1.msra.mxu0 0.0
      %2434 = vmatprep.subr.mxu0 0.0
      %2435 = vmatpush1.msra.mxu0 0.0
      %2436 = vmatprep.subr.mxu0 0.0
      %2437 = vmatpush1.msra.mxu0 0.0
      %2438 = vmatprep.subr.mxu0 0.0
      %2439 = vmatpush1.msra.mxu0 0.0
      %2440 = vmatprep.subr.mxu0 0.0
      %2441 = vmatpush1.msra.mxu0 0.0
      %2442 = vmatprep.subr.mxu0 0.0
      %2443 = vmatpush1.msra.mxu0 0.0
      %2444 = vmatprep.subr.mxu0 0.0
      %2445 = vmatpush1.msra.mxu0 0.0
      %2446 = vmatprep.subr.mxu0 0.0
      %2447 = vmatpush1.msra.mxu0 0.0
      %2448 = vmatprep.subr.mxu0 0.0
      %2449 = vmatpush1.msra.mxu0 0.0
      %2450 = vmatprep.subr.mxu0 0.0
      %2451 = vmatpush1.msra.mxu0 0.0
      %2452 = vmatprep.subr.mxu0 0.0
      %2453 = vmatpush1.msra.mxu0 0.0
      %2454 = vmatprep.subr.mxu0 0.0
      %2455 = vmatpush1.msra.mxu0 0.0
      %2456 = vmatprep.subr.mxu0 0.0
      %2457 = vmatpush1.msra.mxu0 0.0
      %2458 = vmatprep.mubr.f32.mxu0 0.0
      %2459 = vmatmul.mubr.f32.gmra.mrb[0].mxu0 %v2392
      %v2460 = vpop.f32.mrb[0].mxu0
      %v2461 = vadd.f32 0.0, %v2460
      %v2462 = vpop.f32.mrb[0].mxu0
      %2463 = vdwg.mxu0
      %v2464 = vld [vmem:[%s3] sm:$0xff]
      %v2465 = vld [vmem:[%s3 + $0x8] sm:$0xff]
      %vm2466 = vcmp.ge.s32.totalorder %v2362, 0
      %vm2467 = vmand %vm2366, %vm2466
      %vm2468 = vcmp.lt.s32.totalorder %v2362, 8
      %vm2469 = vmand %vm2467, %vm2468
      %v2470 = vadd.s32 %v2371, %v2362
      %v2471 = vsel %vm2469, %v2470, 4294967295
      %vm2472 = vcmp.eq.s32.totalorder %v339, %v2471
      %vm2473 = vcmp.eq.s32.totalorder %v340, %v2471
      %vm2474 = vcmp.eq.s32.totalorder %v341, %v2471
      %vm2475 = vcmp.eq.s32.totalorder %v342, %v2471
      %vm2476 = vcmp.eq.s32.totalorder %v343, %v2471
      %vm2477 = vcmp.eq.s32.totalorder %v344, %v2471
      %vm2478 = vcmp.eq.s32.totalorder %v345, %v2471
      %vm2479 = vcmp.eq.s32.totalorder %v346, %v2471
      %v2480 = vsel %vm2472, 1.0, 0.0
      %v2481 = vsel %vm2473, 1.0, 0.0
      %v2482 = vsel %vm2474, 1.0, 0.0
      %v2483 = vsel %vm2475, 1.0, 0.0
      %v2484 = vsel %vm2476, 1.0, 0.0
      %v2485 = vsel %vm2477, 1.0, 0.0
      %v2486 = vsel %vm2478, 1.0, 0.0
      %v2487 = vsel %vm2479, 1.0, 0.0
      %2488 = vmatprep.subr.mxu0 0.0
      %2489 = vmatpush1.msra.mxu0 %v2480
      %2490 = vmatprep.subr.mxu0 0.0
      %2491 = vmatpush1.msra.mxu0 %v2481
      %2492 = vmatprep.subr.mxu0 0.0
      %2493 = vmatpush1.msra.mxu0 %v2482
      %2494 = vmatprep.subr.mxu0 0.0
      %2495 = vmatpush1.msra.mxu0 %v2483
      %2496 = vmatprep.subr.mxu0 0.0
      %2497 = vmatpush1.msra.mxu0 %v2484
      %2498 = vmatprep.subr.mxu0 0.0
      %2499 = vmatpush1.msra.mxu0 %v2485
      %2500 = vmatprep.subr.mxu0 0.0
      %2501 = vmatpush1.msra.mxu0 %v2486
      %2502 = vmatprep.subr.mxu0 0.0
      %2503 = vmatpush1.msra.mxu0 %v2487
      %2504 = vmatprep.subr.mxu0 0.0
      %2505 = vmatpush1.msra.mxu0 0.0
      %2506 = vmatprep.subr.mxu0 0.0
      %2507 = vmatpush1.msra.mxu0 0.0
      %2508 = vmatprep.subr.mxu0 0.0
      %2509 = vmatpush1.msra.mxu0 0.0
      %2510 = vmatprep.subr.mxu0 0.0
      %2511 = vmatpush1.msra.mxu0 0.0
      %2512 = vmatprep.subr.mxu0 0.0
      %2513 = vmatpush1.msra.mxu0 0.0
      %2514 = vmatprep.subr.mxu0 0.0
      %2515 = vmatpush1.msra.mxu0 0.0
      %2516 = vmatprep.subr.mxu0 0.0
      %2517 = vmatpush1.msra.mxu0 0.0
      %2518 = vmatprep.subr.mxu0 0.0
      %2519 = vmatpush1.msra.mxu0 0.0
      %2520 = vmatprep.subr.mxu0 0.0
      %2521 = vmatpush1.msra.mxu0 0.0
      %2522 = vmatprep.subr.mxu0 0.0
      %2523 = vmatpush1.msra.mxu0 0.0
      %2524 = vmatprep.subr.mxu0 0.0
      %2525 = vmatpush1.msra.mxu0 0.0
      %2526 = vmatprep.subr.mxu0 0.0
      %2527 = vmatpush1.msra.mxu0 0.0
      %2528 = vmatprep.subr.mxu0 0.0
      %2529 = vmatpush1.msra.mxu0 0.0
      %2530 = vmatprep.subr.mxu0 0.0
      %2531 = vmatpush1.msra.mxu0 0.0
      %2532 = vmatprep.subr.mxu0 0.0
      %2533 = vmatpush1.msra.mxu0 0.0
      %2534 = vmatprep.subr.mxu0 0.0
      %2535 = vmatpush1.msra.mxu0 0.0
      %2536 = vmatprep.subr.mxu0 0.0
      %2537 = vmatpush1.msra.mxu0 0.0
      %2538 = vmatprep.subr.mxu0 0.0
      %2539 = vmatpush1.msra.mxu0 0.0
      %2540 = vmatprep.subr.mxu0 0.0
      %2541 = vmatpush1.msra.mxu0 0.0
      %2542 = vmatprep.subr.mxu0 0.0
      %2543 = vmatpush1.msra.mxu0 0.0
      %2544 = vmatprep.subr.mxu0 0.0
      %2545 = vmatpush1.msra.mxu0 0.0
      %2546 = vmatprep.subr.mxu0 0.0
      %2547 = vmatpush1.msra.mxu0 0.0
      %2548 = vmatprep.subr.mxu0 0.0
      %2549 = vmatpush1.msra.mxu0 0.0
      %2550 = vmatprep.subr.mxu0 0.0
      %2551 = vmatpush1.msra.mxu0 0.0
      %2552 = vmatprep.mubr.f32.mxu0 0.0
      %2553 = vmatmul.mubr.f32.gmra.mrb[0].mxu0 %v2392
      %v2554 = vpop.f32.mrb[0].mxu0
      %v2555 = vadd.f32 0.0, %v2554
      %v2556 = vpop.f32.mrb[0].mxu0
      %2557 = vdwg.mxu0
      %s2558 = scalar_lea.vmem %s3, 16
      %v2559 = vld [vmem:[%s2558] sm:$0xff]
      %v2560 = vld [vmem:[%s2558 + $0x8] sm:$0xff]
      %vm2561 = vcmask 64512
      %v2563 = vsel %vm2561, %v2559, 0
      %v2566 = vsel %vm2561, %v2560, 0
      %2568 = vmatprep.subr.mxu0 0.0
      %2569 = vmatpush1.msra.mxu0 %v2555
      %2570 = vmatprep.subr.mxu0 0.0
      %2571 = vmatpush1.msra.mxu0 0.0
      %2572 = vmatprep.subr.mxu0 0.0
      %2573 = vmatpush1.msra.mxu0 0.0
      %2574 = vmatprep.subr.mxu0 0.0
      %2575 = vmatpush1.msra.mxu0 0.0
      %2576 = vmatprep.subr.mxu0 0.0
      %2577 = vmatpush1.msra.mxu0 0.0
      %2578 = vmatprep.subr.mxu0 0.0
      %2579 = vmatpush1.msra.mxu0 0.0
      %2580 = vmatprep.subr.mxu0 0.0
      %2581 = vmatpush1.msra.mxu0 0.0
      %2582 = vmatprep.subr.mxu0 0.0
      %2583 = vmatpush1.msra.mxu0 0.0
      %2584 = vmatprep.subr.mxu0 0.0
      %2585 = vmatpush1.msra.mxu0 0.0
      %2586 = vmatprep.subr.mxu0 0.0
      %2587 = vmatpush1.msra.mxu0 0.0
      %2588 = vmatprep.subr.mxu0 0.0
      %2589 = vmatpush1.msra.mxu0 0.0
      %2590 = vmatprep.subr.mxu0 0.0
      %2591 = vmatpush1.msra.mxu0 0.0
      %2592 = vmatprep.subr.mxu0 0.0
      %2593 = vmatpush1.msra.mxu0 0.0
      %2594 = vmatprep.subr.mxu0 0.0
      %2595 = vmatpush1.msra.mxu0 0.0
      %2596 = vmatprep.subr.mxu0 0.0
      %2597 = vmatpush1.msra.mxu0 0.0
      %2598 = vmatprep.subr.mxu0 0.0
      %2599 = vmatpush1.msra.mxu0 0.0
      %2600 = vmatprep.subr.mxu0 0.0
      %2601 = vmatpush1.msra.mxu0 0.0
      %2602 = vmatprep.subr.mxu0 0.0
      %2603 = vmatpush1.msra.mxu0 0.0
      %2604 = vmatprep.subr.mxu0 0.0
      %2605 = vmatpush1.msra.mxu0 0.0
      %2606 = vmatprep.subr.mxu0 0.0
      %2607 = vmatpush1.msra.mxu0 0.0
      %2608 = vmatprep.subr.mxu0 0.0
      %2609 = vmatpush1.msra.mxu0 0.0
      %2610 = vmatprep.subr.mxu0 0.0
      %2611 = vmatpush1.msra.mxu0 0.0
      %2612 = vmatprep.subr.mxu0 0.0
      %2613 = vmatpush1.msra.mxu0 0.0
      %2614 = vmatprep.subr.mxu0 0.0
      %2615 = vmatpush1.msra.mxu0 0.0
      %2616 = vmatprep.subr.mxu0 0.0
      %2617 = vmatpush1.msra.mxu0 0.0
      %2618 = vmatprep.subr.mxu0 0.0
      %2619 = vmatpush1.msra.mxu0 0.0
      %2620 = vmatprep.subr.mxu0 0.0
      %2621 = vmatpush1.msra.mxu0 0.0
      %2622 = vmatprep.subr.mxu0 0.0
      %2623 = vmatpush1.msra.mxu0 0.0
      %2624 = vmatprep.subr.mxu0 0.0
      %2625 = vmatpush1.msra.mxu0 0.0
      %2626 = vmatprep.subr.mxu0 0.0
      %2627 = vmatpush1.msra.mxu0 0.0
      %2628 = vmatprep.subr.mxu0 0.0
      %2629 = vmatpush1.msra.mxu0 0.0
      %2630 = vmatprep.subr.mxu0 0.0
      %2631 = vmatpush1.msra.mxu0 0.0
      %2632 = vmatprep.mubr.f32.mxu0 0.0
      %2633 = vmatmul.mubr.f32.gmra.mrb[0].mxu0 %v2563
      %v2634 = vpop.f32.mrb[0].mxu0
      %v2635 = vadd.f32 0.0, %v2634
      %v2636 = vpop.f32.mrb[0].mxu0
      %2637 = vmatprep.mubr.f32.mxu0 0.0
      %2638 = vmatmul.mubr.f32.gmra.mrb[0].mxu0 %v2566
      %v2639 = vpop.f32.mrb[0].mxu0
      %v2640 = vadd.f32 0.0, %v2639
      %v2641 = vpop.f32.mrb[0].mxu0
      %2642 = vdwg.mxu0
      %v2644 = vsel %vm2561, %v2464, 0
      %v2647 = vsel %vm2561, %v2465, 0
      %2649 = vmatprep.subr.mxu0 0.0
      %2650 = vmatpush1.msra.mxu0 %v2461
      %2651 = vmatprep.subr.mxu0 0.0
      %2652 = vmatpush1.msra.mxu0 0.0
      %2653 = vmatprep.subr.mxu0 0.0
      %2654 = vmatpush1.msra.mxu0 0.0
      %2655 = vmatprep.subr.mxu0 0.0
      %2656 = vmatpush1.msra.mxu0 0.0
      %2657 = vmatprep.subr.mxu0 0.0
      %2658 = vmatpush1.msra.mxu0 0.0
      %2659 = vmatprep.subr.mxu0 0.0
      %2660 = vmatpush1.msra.mxu0 0.0
      %2661 = vmatprep.subr.mxu0 0.0
      %2662 = vmatpush1.msra.mxu0 0.0
      %2663 = vmatprep.subr.mxu0 0.0
      %2664 = vmatpush1.msra.mxu0 0.0
      %2665 = vmatprep.subr.mxu0 0.0
      %2666 = vmatpush1.msra.mxu0 0.0
      %2667 = vmatprep.subr.mxu0 0.0
      %2668 = vmatpush1.msra.mxu0 0.0
      %2669 = vmatprep.subr.mxu0 0.0
      %2670 = vmatpush1.msra.mxu0 0.0
      %2671 = vmatprep.subr.mxu0 0.0
      %2672 = vmatpush1.msra.mxu0 0.0
      %2673 = vmatprep.subr.mxu0 0.0
      %2674 = vmatpush1.msra.mxu0 0.0
      %2675 = vmatprep.subr.mxu0 0.0
      %2676 = vmatpush1.msra.mxu0 0.0
      %2677 = vmatprep.subr.mxu0 0.0
      %2678 = vmatpush1.msra.mxu0 0.0
      %2679 = vmatprep.subr.mxu0 0.0
      %2680 = vmatpush1.msra.mxu0 0.0
      %2681 = vmatprep.subr.mxu0 0.0
      %2682 = vmatpush1.msra.mxu0 0.0
      %2683 = vmatprep.subr.mxu0 0.0
      %2684 = vmatpush1.msra.mxu0 0.0
      %2685 = vmatprep.subr.mxu0 0.0
      %2686 = vmatpush1.msra.mxu0 0.0
      %2687 = vmatprep.subr.mxu0 0.0
      %2688 = vmatpush1.msra.mxu0 0.0
      %2689 = vmatprep.subr.mxu0 0.0
      %2690 = vmatpush1.msra.mxu0 0.0
      %2691 = vmatprep.subr.mxu0 0.0
      %2692 = vmatpush1.msra.mxu0 0.0
      %2693 = vmatprep.subr.mxu0 0.0
      %2694 = vmatpush1.msra.mxu0 0.0
      %2695 = vmatprep.subr.mxu0 0.0
      %2696 = vmatpush1.msra.mxu0 0.0
      %2697 = vmatprep.subr.mxu0 0.0
      %2698 = vmatpush1.msra.mxu0 0.0
      %2699 = vmatprep.subr.mxu0 0.0
      %2700 = vmatpush1.msra.mxu0 0.0
      %2701 = vmatprep.subr.mxu0 0.0
      %2702 = vmatpush1.msra.mxu0 0.0
      %2703 = vmatprep.subr.mxu0 0.0
      %2704 = vmatpush1.msra.mxu0 0.0
      %2705 = vmatprep.subr.mxu0 0.0
      %2706 = vmatpush1.msra.mxu0 0.0
      %2707 = vmatprep.subr.mxu0 0.0
      %2708 = vmatpush1.msra.mxu0 0.0
      %2709 = vmatprep.subr.mxu0 0.0
      %2710 = vmatpush1.msra.mxu0 0.0
      %2711 = vmatprep.subr.mxu0 0.0
      %2712 = vmatpush1.msra.mxu0 0.0
      %2713 = vmatprep.mubr.f32.mxu0 0.0
      %2714 = vmatmul.mubr.f32.gmra.mrb[0].mxu0 %v2644
      %v2715 = vpop.f32.mrb[0].mxu0
      %v2716 = vadd.f32 %v2635, %v2715
      %v2717 = vpop.f32.mrb[0].mxu0
      %2718 = vmatprep.mubr.f32.mxu0 0.0
      %2719 = vmatmul.mubr.f32.gmra.mrb[0].mxu0 %v2647
      %v2720 = vpop.f32.mrb[0].mxu0
      %v2721 = vadd.f32 %v2640, %v2720
      %v2722 = vpop.f32.mrb[0].mxu0
      %2723 = vdwg.mxu0
      %v2724 = vadd.s32 %v2362, 1
      %vm2725 = vcmp.ge.s32.totalorder %v2724, 0
      %vm2726 = vmand %vm2366, %vm2725
      %vm2727 = vcmp.lt.s32.totalorder %v2724, 8
      %vm2728 = vmand %vm2726, %vm2727
      %v2729 = vadd.s32 %v2371, %v2724
      %v2730 = vsel %vm2728, %v2729, 4294967295
      %vm2731 = vcmp.eq.s32.totalorder %v339, %v2730
      %vm2732 = vcmp.eq.s32.totalorder %v340, %v2730
      %vm2733 = vcmp.eq.s32.totalorder %v341, %v2730
      %vm2734 = vcmp.eq.s32.totalorder %v342, %v2730
      %vm2735 = vcmp.eq.s32.totalorder %v343, %v2730
      %vm2736 = vcmp.eq.s32.totalorder %v344, %v2730
      %vm2737 = vcmp.eq.s32.totalorder %v345, %v2730
      %vm2738 = vcmp.eq.s32.totalorder %v346, %v2730
      %v2739 = vsel %vm2731, 1.0, 0.0
      %v2740 = vsel %vm2732, 1.0, 0.0
      %v2741 = vsel %vm2733, 1.0, 0.0
      %v2742 = vsel %vm2734, 1.0, 0.0
      %v2743 = vsel %vm2735, 1.0, 0.0
      %v2744 = vsel %vm2736, 1.0, 0.0
      %v2745 = vsel %vm2737, 1.0, 0.0
      %v2746 = vsel %vm2738, 1.0, 0.0
      %2747 = vmatprep.subr.mxu0 0.0
      %2748 = vmatpush1.msra.mxu0 %v2739
      %2749 = vmatprep.subr.mxu0 0.0
      %2750 = vmatpush1.msra.mxu0 %v2740
      %2751 = vmatprep.subr.mxu0 0.0
      %2752 = vmatpush1.msra.mxu0 %v2741
      %2753 = vmatprep.subr.mxu0 0.0
      %2754 = vmatpush1.msra.mxu0 %v2742
      %2755 = vmatprep.subr.mxu0 0.0
      %2756 = vmatpush1.msra.mxu0 %v2743
      %2757 = vmatprep.subr.mxu0 0.0
      %2758 = vmatpush1.msra.mxu0 %v2744
      %2759 = vmatprep.subr.mxu0 0.0
      %2760 = vmatpush1.msra.mxu0 %v2745
      %2761 = vmatprep.subr.mxu0 0.0
      %2762 = vmatpush1.msra.mxu0 %v2746
      %2763 = vmatprep.subr.mxu0 0.0
      %2764 = vmatpush1.msra.mxu0 0.0
      %2765 = vmatprep.subr.mxu0 0.0
      %2766 = vmatpush1.msra.mxu0 0.0
      %2767 = vmatprep.subr.mxu0 0.0
      %2768 = vmatpush1.msra.mxu0 0.0
      %2769 = vmatprep.subr.mxu0 0.0
      %2770 = vmatpush1.msra.mxu0 0.0
      %2771 = vmatprep.subr.mxu0 0.0
      %2772 = vmatpush1.msra.mxu0 0.0
      %2773 = vmatprep.subr.mxu0 0.0
      %2774 = vmatpush1.msra.mxu0 0.0
      %2775 = vmatprep.subr.mxu0 0.0
      %2776 = vmatpush1.msra.mxu0 0.0
      %2777 = vmatprep.subr.mxu0 0.0
      %2778 = vmatpush1.msra.mxu0 0.0
      %2779 = vmatprep.subr.mxu0 0.0
      %2780 = vmatpush1.msra.mxu0 0.0
      %2781 = vmatprep.subr.mxu0 0.0
      %2782 = vmatpush1.msra.mxu0 0.0
      %2783 = vmatprep.subr.mxu0 0.0
      %2784 = vmatpush1.msra.mxu0 0.0
      %2785 = vmatprep.subr.mxu0 0.0
      %2786 = vmatpush1.msra.mxu0 0.0
      %2787 = vmatprep.subr.mxu0 0.0
      %2788 = vmatpush1.msra.mxu0 0.0
      %2789 = vmatprep.subr.mxu0 0.0
      %2790 = vmatpush1.msra.mxu0 0.0
      %2791 = vmatprep.subr.mxu0 0.0
      %2792 = vmatpush1.msra.mxu0 0.0
      %2793 = vmatprep.subr.mxu0 0.0
      %2794 = vmatpush1.msra.mxu0 0.0
      %2795 = vmatprep.subr.mxu0 0.0
      %2796 = vmatpush1.msra.mxu0 0.0
      %2797 = vmatprep.subr.mxu0 0.0
      %2798 = vmatpush1.msra.mxu0 0.0
      %2799 = vmatprep.subr.mxu0 0.0
      %2800 = vmatpush1.msra.mxu0 0.0
      %2801 = vmatprep.subr.mxu0 0.0
      %2802 = vmatpush1.msra.mxu0 0.0
      %2803 = vmatprep.subr.mxu0 0.0
      %2804 = vmatpush1.msra.mxu0 0.0
      %2805 = vmatprep.subr.mxu0 0.0
      %2806 = vmatpush1.msra.mxu0 0.0
      %2807 = vmatprep.subr.mxu0 0.0
      %2808 = vmatpush1.msra.mxu0 0.0
      %2809 = vmatprep.subr.mxu0 0.0
      %2810 = vmatpush1.msra.mxu0 0.0
      %2811 = vmatprep.mubr.f32.mxu0 0.0
      %2812 = vmatmul.mubr.f32.gmra.mrb[0].mxu0 %v2392
      %v2813 = vpop.f32.mrb[0].mxu0
      %v2814 = vadd.f32 0.0, %v2813
      %v2815 = vpop.f32.mrb[0].mxu0
      %2816 = vdwg.mxu0
      %s2817 = scalar_lea.vmem %s3, 32
      %v2818 = vld [vmem:[%s2817] sm:$0xff]
      %v2819 = vld [vmem:[%s2817 + $0x8] sm:$0xff]
      %v2821 = vsel %vm2561, %v2818, 0
      %v2824 = vsel %vm2561, %v2819, 0
      %2826 = vmatprep.subr.mxu0 0.0
      %2827 = vmatpush1.msra.mxu0 %v2814
      %2828 = vmatprep.subr.mxu0 0.0
      %2829 = vmatpush1.msra.mxu0 0.0
      %2830 = vmatprep.subr.mxu0 0.0
      %2831 = vmatpush1.msra.mxu0 0.0
      %2832 = vmatprep.subr.mxu0 0.0
      %2833 = vmatpush1.msra.mxu0 0.0
      %2834 = vmatprep.subr.mxu0 0.0
      %2835 = vmatpush1.msra.mxu0 0.0
      %2836 = vmatprep.subr.mxu0 0.0
      %2837 = vmatpush1.msra.mxu0 0.0
      %2838 = vmatprep.subr.mxu0 0.0
      %2839 = vmatpush1.msra.mxu0 0.0
      %2840 = vmatprep.subr.mxu0 0.0
      %2841 = vmatpush1.msra.mxu0 0.0
      %2842 = vmatprep.subr.mxu0 0.0
      %2843 = vmatpush1.msra.mxu0 0.0
      %2844 = vmatprep.subr.mxu0 0.0
      %2845 = vmatpush1.msra.mxu0 0.0
      %2846 = vmatprep.subr.mxu0 0.0
      %2847 = vmatpush1.msra.mxu0 0.0
      %2848 = vmatprep.subr.mxu0 0.0
      %2849 = vmatpush1.msra.mxu0 0.0
      %2850 = vmatprep.subr.mxu0 0.0
      %2851 = vmatpush1.msra.mxu0 0.0
      %2852 = vmatprep.subr.mxu0 0.0
      %2853 = vmatpush1.msra.mxu0 0.0
      %2854 = vmatprep.subr.mxu0 0.0
      %2855 = vmatpush1.msra.mxu0 0.0
      %2856 = vmatprep.subr.mxu0 0.0
      %2857 = vmatpush1.msra.mxu0 0.0
      %2858 = vmatprep.subr.mxu0 0.0
      %2859 = vmatpush1.msra.mxu0 0.0
      %2860 = vmatprep.subr.mxu0 0.0
      %2861 = vmatpush1.msra.mxu0 0.0
      %2862 = vmatprep.subr.mxu0 0.0
      %2863 = vmatpush1.msra.mxu0 0.0
      %2864 = vmatprep.subr.mxu0 0.0
      %2865 = vmatpush1.msra.mxu0 0.0
      %2866 = vmatprep.subr.mxu0 0.0
      %2867 = vmatpush1.msra.mxu0 0.0
      %2868 = vmatprep.subr.mxu0 0.0
      %2869 = vmatpush1.msra.mxu0 0.0
      %2870 = vmatprep.subr.mxu0 0.0
      %2871 = vmatpush1.msra.mxu0 0.0
      %2872 = vmatprep.subr.mxu0 0.0
      %2873 = vmatpush1.msra.mxu0 0.0
      %2874 = vmatprep.subr.mxu0 0.0
      %2875 = vmatpush1.msra.mxu0 0.0
      %2876 = vmatprep.subr.mxu0 0.0
      %2877 = vmatpush1.msra.mxu0 0.0
      %2878 = vmatprep.subr.mxu0 0.0
      %2879 = vmatpush1.msra.mxu0 0.0
      %2880 = vmatprep.subr.mxu0 0.0
      %2881 = vmatpush1.msra.mxu0 0.0
      %2882 = vmatprep.subr.mxu0 0.0
      %2883 = vmatpush1.msra.mxu0 0.0
      %2884 = vmatprep.subr.mxu0 0.0
      %2885 = vmatpush1.msra.mxu0 0.0
      %2886 = vmatprep.subr.mxu0 0.0
      %2887 = vmatpush1.msra.mxu0 0.0
      %2888 = vmatprep.subr.mxu0 0.0
      %2889 = vmatpush1.msra.mxu0 0.0
      %2890 = vmatprep.mubr.f32.mxu0 0.0
      %2891 = vmatmul.mubr.f32.gmra.mrb[0].mxu0 %v2821
      %v2892 = vpop.f32.mrb[0].mxu0
      %v2893 = vadd.f32 0.0, %v2892
      %v2894 = vpop.f32.mrb[0].mxu0
      %2895 = vmatprep.mubr.f32.mxu0 0.0
      %2896 = vmatmul.mubr.f32.gmra.mrb[0].mxu0 %v2824
      %v2897 = vpop.f32.mrb[0].mxu0
      %v2898 = vadd.f32 0.0, %v2897
      %v2899 = vpop.f32.mrb[0].mxu0
      %2900 = vdwg.mxu0
      %v2901 = vadd.f32 %v2716, %v2893
      %v2902 = vadd.f32 %v2721, %v2898
      %vm2903 = vcmp.ge.s32.totalorder %v2360, 0
      %vm2904 = vcmp.lt.s32.totalorder %v2360, 8
      %vm2905 = vmand %vm2903, %vm2904
      %vm2906 = vmand %vm2905, %vm2367
      %vm2907 = vmand %vm2906, %vm2369
      %v2908 = vmul.u32 %v2360, 8
      %v2909 = vadd.s32 %v2908, %v2363
      %v2910 = vsel %vm2907, %v2909, 4294967295
      %vm2911 = vcmp.eq.s32.totalorder %v339, %v2910
      %vm2912 = vcmp.eq.s32.totalorder %v340, %v2910
      %vm2913 = vcmp.eq.s32.totalorder %v341, %v2910
      %vm2914 = vcmp.eq.s32.totalorder %v342, %v2910
      %vm2915 = vcmp.eq.s32.totalorder %v343, %v2910
      %vm2916 = vcmp.eq.s32.totalorder %v344, %v2910
      %vm2917 = vcmp.eq.s32.totalorder %v345, %v2910
      %vm2918 = vcmp.eq.s32.totalorder %v346, %v2910
      %v2919 = vsel %vm2911, 1.0, 0.0
      %v2920 = vsel %vm2912, 1.0, 0.0
      %v2921 = vsel %vm2913, 1.0, 0.0
      %v2922 = vsel %vm2914, 1.0, 0.0
      %v2923 = vsel %vm2915, 1.0, 0.0
      %v2924 = vsel %vm2916, 1.0, 0.0
      %v2925 = vsel %vm2917, 1.0, 0.0
      %v2926 = vsel %vm2918, 1.0, 0.0
      %2927 = vmatprep.subr.mxu0 0.0
      %2928 = vmatpush1.msra.mxu0 %v2919
      %2929 = vmatprep.subr.mxu0 0.0
      %2930 = vmatpush1.msra.mxu0 %v2920
      %2931 = vmatprep.subr.mxu0 0.0
      %2932 = vmatpush1.msra.mxu0 %v2921
      %2933 = vmatprep.subr.mxu0 0.0
      %2934 = vmatpush1.msra.mxu0 %v2922
      %2935 = vmatprep.subr.mxu0 0.0
      %2936 = vmatpush1.msra.mxu0 %v2923
      %2937 = vmatprep.subr.mxu0 0.0
      %2938 = vmatpush1.msra.mxu0 %v2924
      %2939 = vmatprep.subr.mxu0 0.0
      %2940 = vmatpush1.msra.mxu0 %v2925
      %2941 = vmatprep.subr.mxu0 0.0
      %2942 = vmatpush1.msra.mxu0 %v2926
      %2943 = vmatprep.subr.mxu0 0.0
      %2944 = vmatpush1.msra.mxu0 0.0
      %2945 = vmatprep.subr.mxu0 0.0
      %2946 = vmatpush1.msra.mxu0 0.0
      %2947 = vmatprep.subr.mxu0 0.0
      %2948 = vmatpush1.msra.mxu0 0.0
      %2949 = vmatprep.subr.mxu0 0.0
      %2950 = vmatpush1.msra.mxu0 0.0
      %2951 = vmatprep.subr.mxu0 0.0
      %2952 = vmatpush1.msra.mxu0 0.0
      %2953 = vmatprep.subr.mxu0 0.0
      %2954 = vmatpush1.msra.mxu0 0.0
      %2955 = vmatprep.subr.mxu0 0.0
      %2956 = vmatpush1.msra.mxu0 0.0
      %2957 = vmatprep.subr.mxu0 0.0
      %2958 = vmatpush1.msra.mxu0 0.0
      %2959 = vmatprep.subr.mxu0 0.0
      %2960 = vmatpush1.msra.mxu0 0.0
      %2961 = vmatprep.subr.mxu0 0.0
      %2962 = vmatpush1.msra.mxu0 0.0
      %2963 = vmatprep.subr.mxu0 0.0
      %2964 = vmatpush1.msra.mxu0 0.0
      %2965 = vmatprep.subr.mxu0 0.0
      %2966 = vmatpush1.msra.mxu0 0.0
      %2967 = vmatprep.subr.mxu0 0.0
      %2968 = vmatpush1.msra.mxu0 0.0
      %2969 = vmatprep.subr.mxu0 0.0
      %2970 = vmatpush1.msra.mxu0 0.0
      %2971 = vmatprep.subr.mxu0 0.0
      %2972 = vmatpush1.msra.mxu0 0.0
      %2973 = vmatprep.subr.mxu0 0.0
      %2974 = vmatpush1.msra.mxu0 0.0
      %2975 = vmatprep.subr.mxu0 0.0
      %2976 = vmatpush1.msra.mxu0 0.0
      %2977 = vmatprep.subr.mxu0 0.0
      %2978 = vmatpush1.msra.mxu0 0.0
      %2979 = vmatprep.subr.mxu0 0.0
      %2980 = vmatpush1.msra.mxu0 0.0
      %2981 = vmatprep.subr.mxu0 0.0
      %2982 = vmatpush1.msra.mxu0 0.0
      %2983 = vmatprep.subr.mxu0 0.0
      %2984 = vmatpush1.msra.mxu0 0.0
      %2985 = vmatprep.subr.mxu0 0.0
      %2986 = vmatpush1.msra.mxu0 0.0
      %2987 = vmatprep.subr.mxu0 0.0
      %2988 = vmatpush1.msra.mxu0 0.0
      %2989 = vmatprep.subr.mxu0 0.0
      %2990 = vmatpush1.msra.mxu0 0.0
      %2991 = vmatprep.mubr.f32.mxu0 0.0
      %2992 = vmatmul.mubr.f32.gmra.mrb[0].mxu0 %v2392
      %v2993 = vpop.f32.mrb[0].mxu0
      %v2994 = vadd.f32 0.0, %v2993
      %v2995 = vpop.f32.mrb[0].mxu0
      %2996 = vdwg.mxu0
      %s2997 = scalar_lea.vmem %s3, 48
      %v2998 = vld [vmem:[%s2997] sm:$0xff]
      %v2999 = vld [vmem:[%s2997 + $0x8] sm:$0xff]
      %v3001 = vsel %vm2561, %v2998, 0
      %v3004 = vsel %vm2561, %v2999, 0
      %3006 = vmatprep.subr.mxu0 0.0
      %3007 = vmatpush1.msra.mxu0 %v2994
      %3008 = vmatprep.subr.mxu0 0.0
      %3009 = vmatpush1.msra.mxu0 0.0
      %3010 = vmatprep.subr.mxu0 0.0
      %3011 = vmatpush1.msra.mxu0 0.0
      %3012 = vmatprep.subr.mxu0 0.0
      %3013 = vmatpush1.msra.mxu0 0.0
      %3014 = vmatprep.subr.mxu0 0.0
      %3015 = vmatpush1.msra.mxu0 0.0
      %3016 = vmatprep.subr.mxu0 0.0
      %3017 = vmatpush1.msra.mxu0 0.0
      %3018 = vmatprep.subr.mxu0 0.0
      %3019 = vmatpush1.msra.mxu0 0.0
      %3020 = vmatprep.subr.mxu0 0.0
      %3021 = vmatpush1.msra.mxu0 0.0
      %3022 = vmatprep.subr.mxu0 0.0
      %3023 = vmatpush1.msra.mxu0 0.0
      %3024 = vmatprep.subr.mxu0 0.0
      %3025 = vmatpush1.msra.mxu0 0.0
      %3026 = vmatprep.subr.mxu0 0.0
      %3027 = vmatpush1.msra.mxu0 0.0
      %3028 = vmatprep.subr.mxu0 0.0
      %3029 = vmatpush1.msra.mxu0 0.0
      %3030 = vmatprep.subr.mxu0 0.0
      %3031 = vmatpush1.msra.mxu0 0.0
      %3032 = vmatprep.subr.mxu0 0.0
      %3033 = vmatpush1.msra.mxu0 0.0
      %3034 = vmatprep.subr.mxu0 0.0
      %3035 = vmatpush1.msra.mxu0 0.0
      %3036 = vmatprep.subr.mxu0 0.0
      %3037 = vmatpush1.msra.mxu0 0.0
      %3038 = vmatprep.subr.mxu0 0.0
      %3039 = vmatpush1.msra.mxu0 0.0
      %3040 = vmatprep.subr.mxu0 0.0
      %3041 = vmatpush1.msra.mxu0 0.0
      %3042 = vmatprep.subr.mxu0 0.0
      %3043 = vmatpush1.msra.mxu0 0.0
      %3044 = vmatprep.subr.mxu0 0.0
      %3045 = vmatpush1.msra.mxu0 0.0
      %3046 = vmatprep.subr.mxu0 0.0
      %3047 = vmatpush1.msra.mxu0 0.0
      %3048 = vmatprep.subr.mxu0 0.0
      %3049 = vmatpush1.msra.mxu0 0.0
      %3050 = vmatprep.subr.mxu0 0.0
      %3051 = vmatpush1.msra.mxu0 0.0
      %3052 = vmatprep.subr.mxu0 0.0
      %3053 = vmatpush1.msra.mxu0 0.0
      %3054 = vmatprep.subr.mxu0 0.0
      %3055 = vmatpush1.msra.mxu0 0.0
      %3056 = vmatprep.subr.mxu0 0.0
      %3057 = vmatpush1.msra.mxu0 0.0
      %3058 = vmatprep.subr.mxu0 0.0
      %3059 = vmatpush1.msra.mxu0 0.0
      %3060 = vmatprep.subr.mxu0 0.0
      %3061 = vmatpush1.msra.mxu0 0.0
      %3062 = vmatprep.subr.mxu0 0.0
      %3063 = vmatpush1.msra.mxu0 0.0
      %3064 = vmatprep.subr.mxu0 0.0
      %3065 = vmatpush1.msra.mxu0 0.0
      %3066 = vmatprep.subr.mxu0 0.0
      %3067 = vmatpush1.msra.mxu0 0.0
      %3068 = vmatprep.subr.mxu0 0.0
      %3069 = vmatpush1.msra.mxu0 0.0
      %3070 = vmatprep.mubr.f32.mxu0 0.0
      %3071 = vmatmul.mubr.f32.gmra.mrb[0].mxu0 %v3001
      %v3072 = vpop.f32.mrb[0].mxu0
      %v3073 = vadd.f32 0.0, %v3072
      %v3074 = vpop.f32.mrb[0].mxu0
      %3075 = vmatprep.mubr.f32.mxu0 0.0
      %3076 = vmatmul.mubr.f32.gmra.mrb[0].mxu0 %v3004
      %v3077 = vpop.f32.mrb[0].mxu0
      %v3078 = vadd.f32 0.0, %v3077
      %v3079 = vpop.f32.mrb[0].mxu0
      %3080 = vdwg.mxu0
      %v3081 = vadd.f32 %v2901, %v3073
      %v3082 = vadd.f32 %v2902, %v3078
      %vm3083 = vmand %vm2905, %vm2466
      %vm3084 = vmand %vm3083, %vm2468
      %v3085 = vadd.s32 %v2908, %v2362
      %v3086 = vsel %vm3084, %v3085, 4294967295
      %vm3087 = vcmp.eq.s32.totalorder %v339, %v3086
      %vm3088 = vcmp.eq.s32.totalorder %v340, %v3086
      %vm3089 = vcmp.eq.s32.totalorder %v341, %v3086
      %vm3090 = vcmp.eq.s32.totalorder %v342, %v3086
      %vm3091 = vcmp.eq.s32.totalorder %v343, %v3086
      %vm3092 = vcmp.eq.s32.totalorder %v344, %v3086
      %vm3093 = vcmp.eq.s32.totalorder %v345, %v3086
      %vm3094 = vcmp.eq.s32.totalorder %v346, %v3086
      %v3095 = vsel %vm3087, 1.0, 0.0
      %v3096 = vsel %vm3088, 1.0, 0.0
      %v3097 = vsel %vm3089, 1.0, 0.0
      %v3098 = vsel %vm3090, 1.0, 0.0
      %v3099 = vsel %vm3091, 1.0, 0.0
      %v3100 = vsel %vm3092, 1.0, 0.0
      %v3101 = vsel %vm3093, 1.0, 0.0
      %v3102 = vsel %vm3094, 1.0, 0.0
      %3103 = vmatprep.subr.mxu0 0.0
      %3104 = vmatpush1.msra.mxu0 %v3095
      %3105 = vmatprep.subr.mxu0 0.0
      %3106 = vmatpush1.msra.mxu0 %v3096
      %3107 = vmatprep.subr.mxu0 0.0
      %3108 = vmatpush1.msra.mxu0 %v3097
      %3109 = vmatprep.subr.mxu0 0.0
      %3110 = vmatpush1.msra.mxu0 %v3098
      %3111 = vmatprep.subr.mxu0 0.0
      %3112 = vmatpush1.msra.mxu0 %v3099
      %3113 = vmatprep.subr.mxu0 0.0
      %3114 = vmatpush1.msra.mxu0 %v3100
      %3115 = vmatprep.subr.mxu0 0.0
      %3116 = vmatpush1.msra.mxu0 %v3101
      %3117 = vmatprep.subr.mxu0 0.0
      %3118 = vmatpush1.msra.mxu0 %v3102
      %3119 = vmatprep.subr.mxu0 0.0
      %3120 = vmatpush1.msra.mxu0 0.0
      %3121 = vmatprep.subr.mxu0 0.0
      %3122 = vmatpush1.msra.mxu0 0.0
      %3123 = vmatprep.subr.mxu0 0.0
      %3124 = vmatpush1.msra.mxu0 0.0
      %3125 = vmatprep.subr.mxu0 0.0
      %3126 = vmatpush1.msra.mxu0 0.0
      %3127 = vmatprep.subr.mxu0 0.0
      %3128 = vmatpush1.msra.mxu0 0.0
      %3129 = vmatprep.subr.mxu0 0.0
      %3130 = vmatpush1.msra.mxu0 0.0
      %3131 = vmatprep.subr.mxu0 0.0
      %3132 = vmatpush1.msra.mxu0 0.0
      %3133 = vmatprep.subr.mxu0 0.0
      %3134 = vmatpush1.msra.mxu0 0.0
      %3135 = vmatprep.subr.mxu0 0.0
      %3136 = vmatpush1.msra.mxu0 0.0
      %3137 = vmatprep.subr.mxu0 0.0
      %3138 = vmatpush1.msra.mxu0 0.0
      %3139 = vmatprep.subr.mxu0 0.0
      %3140 = vmatpush1.msra.mxu0 0.0
      %3141 = vmatprep.subr.mxu0 0.0
      %3142 = vmatpush1.msra.mxu0 0.0
      %3143 = vmatprep.subr.mxu0 0.0
      %3144 = vmatpush1.msra.mxu0 0.0
      %3145 = vmatprep.subr.mxu0 0.0
      %3146 = vmatpush1.msra.mxu0 0.0
      %3147 = vmatprep.subr.mxu0 0.0
      %3148 = vmatpush1.msra.mxu0 0.0
      %3149 = vmatprep.subr.mxu0 0.0
      %3150 = vmatpush1.msra.mxu0 0.0
      %3151 = vmatprep.subr.mxu0 0.0
      %3152 = vmatpush1.msra.mxu0 0.0
      %3153 = vmatprep.subr.mxu0 0.0
      %3154 = vmatpush1.msra.mxu0 0.0
      %3155 = vmatprep.subr.mxu0 0.0
      %3156 = vmatpush1.msra.mxu0 0.0
      %3157 = vmatprep.subr.mxu0 0.0
      %3158 = vmatpush1.msra.mxu0 0.0
      %3159 = vmatprep.subr.mxu0 0.0
      %3160 = vmatpush1.msra.mxu0 0.0
      %3161 = vmatprep.subr.mxu0 0.0
      %3162 = vmatpush1.msra.mxu0 0.0
      %3163 = vmatprep.subr.mxu0 0.0
      %3164 = vmatpush1.msra.mxu0 0.0
      %3165 = vmatprep.subr.mxu0 0.0
      %3166 = vmatpush1.msra.mxu0 0.0
      %3167 = vmatprep.mubr.f32.mxu0 0.0
      %3168 = vmatmul.mubr.f32.gmra.mrb[0].mxu0 %v2392
      %v3169 = vpop.f32.mrb[0].mxu0
      %v3170 = vadd.f32 0.0, %v3169
      %v3171 = vpop.f32.mrb[0].mxu0
      %3172 = vdwg.mxu0
      %s3173 = scalar_lea.vmem %s3, 64
      %v3174 = vld [vmem:[%s3173] sm:$0xff]
      %v3175 = vld [vmem:[%s3173 + $0x8] sm:$0xff]
      %v3177 = vsel %vm2561, %v3174, 0
      %v3180 = vsel %vm2561, %v3175, 0
      %3182 = vmatprep.subr.mxu0 0.0
      %3183 = vmatpush1.msra.mxu0 %v3170
      %3184 = vmatprep.subr.mxu0 0.0
      %3185 = vmatpush1.msra.mxu0 0.0
      %3186 = vmatprep.subr.mxu0 0.0
      %3187 = vmatpush1.msra.mxu0 0.0
      %3188 = vmatprep.subr.mxu0 0.0
      %3189 = vmatpush1.msra.mxu0 0.0
      %3190 = vmatprep.subr.mxu0 0.0
      %3191 = vmatpush1.msra.mxu0 0.0
      %3192 = vmatprep.subr.mxu0 0.0
      %3193 = vmatpush1.msra.mxu0 0.0
      %3194 = vmatprep.subr.mxu0 0.0
      %3195 = vmatpush1.msra.mxu0 0.0
      %3196 = vmatprep.subr.mxu0 0.0
      %3197 = vmatpush1.msra.mxu0 0.0
      %3198 = vmatprep.subr.mxu0 0.0
      %3199 = vmatpush1.msra.mxu0 0.0
      %3200 = vmatprep.subr.mxu0 0.0
      %3201 = vmatpush1.msra.mxu0 0.0
      %3202 = vmatprep.subr.mxu0 0.0
      %3203 = vmatpush1.msra.mxu0 0.0
      %3204 = vmatprep.subr.mxu0 0.0
      %3205 = vmatpush1.msra.mxu0 0.0
      %3206 = vmatprep.subr.mxu0 0.0
      %3207 = vmatpush1.msra.mxu0 0.0
      %3208 = vmatprep.subr.mxu0 0.0
      %3209 = vmatpush1.msra.mxu0 0.0
      %3210 = vmatprep.subr.mxu0 0.0
      %3211 = vmatpush1.msra.mxu0 0.0
      %3212 = vmatprep.subr.mxu0 0.0
      %3213 = vmatpush1.msra.mxu0 0.0
      %3214 = vmatprep.subr.mxu0 0.0
      %3215 = vmatpush1.msra.mxu0 0.0
      %3216 = vmatprep.subr.mxu0 0.0
      %3217 = vmatpush1.msra.mxu0 0.0
      %3218 = vmatprep.subr.mxu0 0.0
      %3219 = vmatpush1.msra.mxu0 0.0
      %3220 = vmatprep.subr.mxu0 0.0
      %3221 = vmatpush1.msra.mxu0 0.0
      %3222 = vmatprep.subr.mxu0 0.0
      %3223 = vmatpush1.msra.mxu0 0.0
      %3224 = vmatprep.subr.mxu0 0.0
      %3225 = vmatpush1.msra.mxu0 0.0
      %3226 = vmatprep.subr.mxu0 0.0
      %3227 = vmatpush1.msra.mxu0 0.0
      %3228 = vmatprep.subr.mxu0 0.0
      %3229 = vmatpush1.msra.mxu0 0.0
      %3230 = vmatprep.subr.mxu0 0.0
      %3231 = vmatpush1.msra.mxu0 0.0
      %3232 = vmatprep.subr.mxu0 0.0
      %3233 = vmatpush1.msra.mxu0 0.0
      %3234 = vmatprep.subr.mxu0 0.0
      %3235 = vmatpush1.msra.mxu0 0.0
      %3236 = vmatprep.subr.mxu0 0.0
      %3237 = vmatpush1.msra.mxu0 0.0
      %3238 = vmatprep.subr.mxu0 0.0
      %3239 = vmatpush1.msra.mxu0 0.0
      %3240 = vmatprep.subr.mxu0 0.0
      %3241 = vmatpush1.msra.mxu0 0.0
      %3242 = vmatprep.subr.mxu0 0.0
      %3243 = vmatpush1.msra.mxu0 0.0
      %3244 = vmatprep.subr.mxu0 0.0
      %3245 = vmatpush1.msra.mxu0 0.0
      %3246 = vmatprep.mubr.f32.mxu0 0.0
      %3247 = vmatmul.mubr.f32.gmra.mrb[0].mxu0 %v3177
      %v3248 = vpop.f32.mrb[0].mxu0
      %v3249 = vadd.f32 0.0, %v3248
      %v3250 = vpop.f32.mrb[0].mxu0
      %3251 = vmatprep.mubr.f32.mxu0 0.0
      %3252 = vmatmul.mubr.f32.gmra.mrb[0].mxu0 %v3180
      %v3253 = vpop.f32.mrb[0].mxu0
      %v3254 = vadd.f32 0.0, %v3253
      %v3255 = vpop.f32.mrb[0].mxu0
      %3256 = vdwg.mxu0
      %v3257 = vadd.f32 %v3081, %v3249
      %v3258 = vadd.f32 %v3082, %v3254
      %vm3259 = vmand %vm2905, %vm2725
      %vm3260 = vmand %vm3259, %vm2727
      %v3261 = vadd.s32 %v2908, %v2724
      %v3262 = vsel %vm3260, %v3261, 4294967295
      %vm3263 = vcmp.eq.s32.totalorder %v339, %v3262
      %vm3264 = vcmp.eq.s32.totalorder %v340, %v3262
      %vm3265 = vcmp.eq.s32.totalorder %v341, %v3262
      %vm3266 = vcmp.eq.s32.totalorder %v342, %v3262
      %vm3267 = vcmp.eq.s32.totalorder %v343, %v3262
      %vm3268 = vcmp.eq.s32.totalorder %v344, %v3262
      %vm3269 = vcmp.eq.s32.totalorder %v345, %v3262
      %vm3270 = vcmp.eq.s32.totalorder %v346, %v3262
      %v3271 = vsel %vm3263, 1.0, 0.0
      %v3272 = vsel %vm3264, 1.0, 0.0
      %v3273 = vsel %vm3265, 1.0, 0.0
      %v3274 = vsel %vm3266, 1.0, 0.0
      %v3275 = vsel %vm3267, 1.0, 0.0
      %v3276 = vsel %vm3268, 1.0, 0.0
      %v3277 = vsel %vm3269, 1.0, 0.0
      %v3278 = vsel %vm3270, 1.0, 0.0
      %3279 = vmatprep.subr.mxu0 0.0
      %3280 = vmatpush1.msra.mxu0 %v3271
      %3281 = vmatprep.subr.mxu0 0.0
      %3282 = vmatpush1.msra.mxu0 %v3272
      %3283 = vmatprep.subr.mxu0 0.0
      %3284 = vmatpush1.msra.mxu0 %v3273
      %3285 = vmatprep.subr.mxu0 0.0
      %3286 = vmatpush1.msra.mxu0 %v3274
      %3287 = vmatprep.subr.mxu0 0.0
      %3288 = vmatpush1.msra.mxu0 %v3275
      %3289 = vmatprep.subr.mxu0 0.0
      %3290 = vmatpush1.msra.mxu0 %v3276
      %3291 = vmatprep.subr.mxu0 0.0
      %3292 = vmatpush1.msra.mxu0 %v3277
      %3293 = vmatprep.subr.mxu0 0.0
      %3294 = vmatpush1.msra.mxu0 %v3278
      %3295 = vmatprep.subr.mxu0 0.0
      %3296 = vmatpush1.msra.mxu0 0.0
      %3297 = vmatprep.subr.mxu0 0.0
      %3298 = vmatpush1.msra.mxu0 0.0
      %3299 = vmatprep.subr.mxu0 0.0
      %3300 = vmatpush1.msra.mxu0 0.0
      %3301 = vmatprep.subr.mxu0 0.0
      %3302 = vmatpush1.msra.mxu0 0.0
      %3303 = vmatprep.subr.mxu0 0.0
      %3304 = vmatpush1.msra.mxu0 0.0
      %3305 = vmatprep.subr.mxu0 0.0
      %3306 = vmatpush1.msra.mxu0 0.0
      %3307 = vmatprep.subr.mxu0 0.0
      %3308 = vmatpush1.msra.mxu0 0.0
      %3309 = vmatprep.subr.mxu0 0.0
      %3310 = vmatpush1.msra.mxu0 0.0
      %3311 = vmatprep.subr.mxu0 0.0
      %3312 = vmatpush1.msra.mxu0 0.0
      %3313 = vmatprep.subr.mxu0 0.0
      %3314 = vmatpush1.msra.mxu0 0.0
      %3315 = vmatprep.subr.mxu0 0.0
      %3316 = vmatpush1.msra.mxu0 0.0
      %3317 = vmatprep.subr.mxu0 0.0
      %3318 = vmatpush1.msra.mxu0 0.0
      %3319 = vmatprep.subr.mxu0 0.0
      %3320 = vmatpush1.msra.mxu0 0.0
      %3321 = vmatprep.subr.mxu0 0.0
      %3322 = vmatpush1.msra.mxu0 0.0
      %3323 = vmatprep.subr.mxu0 0.0
      %3324 = vmatpush1.msra.mxu0 0.0
      %3325 = vmatprep.subr.mxu0 0.0
      %3326 = vmatpush1.msra.mxu0 0.0
      %3327 = vmatprep.subr.mxu0 0.0
      %3328 = vmatpush1.msra.mxu0 0.0
      %3329 = vmatprep.subr.mxu0 0.0
      %3330 = vmatpush1.msra.mxu0 0.0
      %3331 = vmatprep.subr.mxu0 0.0
      %3332 = vmatpush1.msra.mxu0 0.0
      %3333 = vmatprep.subr.mxu0 0.0
      %3334 = vmatpush1.msra.mxu0 0.0
      %3335 = vmatprep.subr.mxu0 0.0
      %3336 = vmatpush1.msra.mxu0 0.0
      %3337 = vmatprep.subr.mxu0 0.0
      %3338 = vmatpush1.msra.mxu0 0.0
      %3339 = vmatprep.subr.mxu0 0.0
      %3340 = vmatpush1.msra.mxu0 0.0
      %3341 = vmatprep.subr.mxu0 0.0
      %3342 = vmatpush1.msra.mxu0 0.0
      %3343 = vmatprep.mubr.f32.mxu0 0.0
      %3344 = vmatmul.mubr.f32.gmra.mrb[0].mxu0 %v2392
      %v3345 = vpop.f32.mrb[0].mxu0
      %v3346 = vadd.f32 0.0, %v3345
      %v3347 = vpop.f32.mrb[0].mxu0
      %3348 = vdwg.mxu0
      %s3349 = scalar_lea.vmem %s3, 80
      %v3350 = vld [vmem:[%s3349] sm:$0xff]
      %v3351 = vld [vmem:[%s3349 + $0x8] sm:$0xff]
      %v3353 = vsel %vm2561, %v3350, 0
      %v3356 = vsel %vm2561, %v3351, 0
      %3358 = vmatprep.subr.mxu0 0.0
      %3359 = vmatpush1.msra.mxu0 %v3346
      %3360 = vmatprep.subr.mxu0 0.0
      %3361 = vmatpush1.msra.mxu0 0.0
      %3362 = vmatprep.subr.mxu0 0.0
      %3363 = vmatpush1.msra.mxu0 0.0
      %3364 = vmatprep.subr.mxu0 0.0
      %3365 = vmatpush1.msra.mxu0 0.0
      %3366 = vmatprep.subr.mxu0 0.0
      %3367 = vmatpush1.msra.mxu0 0.0
      %3368 = vmatprep.subr.mxu0 0.0
      %3369 = vmatpush1.msra.mxu0 0.0
      %3370 = vmatprep.subr.mxu0 0.0
      %3371 = vmatpush1.msra.mxu0 0.0
      %3372 = vmatprep.subr.mxu0 0.0
      %3373 = vmatpush1.msra.mxu0 0.0
      %3374 = vmatprep.subr.mxu0 0.0
      %3375 = vmatpush1.msra.mxu0 0.0
      %3376 = vmatprep.subr.mxu0 0.0
      %3377 = vmatpush1.msra.mxu0 0.0
      %3378 = vmatprep.subr.mxu0 0.0
      %3379 = vmatpush1.msra.mxu0 0.0
      %3380 = vmatprep.subr.mxu0 0.0
      %3381 = vmatpush1.msra.mxu0 0.0
      %3382 = vmatprep.subr.mxu0 0.0
      %3383 = vmatpush1.msra.mxu0 0.0
      %3384 = vmatprep.subr.mxu0 0.0
      %3385 = vmatpush1.msra.mxu0 0.0
      %3386 = vmatprep.subr.mxu0 0.0
      %3387 = vmatpush1.msra.mxu0 0.0
      %3388 = vmatprep.subr.mxu0 0.0
      %3389 = vmatpush1.msra.mxu0 0.0
      %3390 = vmatprep.subr.mxu0 0.0
      %3391 = vmatpush1.msra.mxu0 0.0
      %3392 = vmatprep.subr.mxu0 0.0
      %3393 = vmatpush1.msra.mxu0 0.0
      %3394 = vmatprep.subr.mxu0 0.0
      %3395 = vmatpush1.msra.mxu0 0.0
      %3396 = vmatprep.subr.mxu0 0.0
      %3397 = vmatpush1.msra.mxu0 0.0
      %3398 = vmatprep.subr.mxu0 0.0
      %3399 = vmatpush1.msra.mxu0 0.0
      %3400 = vmatprep.subr.mxu0 0.0
      %3401 = vmatpush1.msra.mxu0 0.0
      %3402 = vmatprep.subr.mxu0 0.0
      %3403 = vmatpush1.msra.mxu0 0.0
      %3404 = vmatprep.subr.mxu0 0.0
      %3405 = vmatpush1.msra.mxu0 0.0
      %3406 = vmatprep.subr.mxu0 0.0
      %3407 = vmatpush1.msra.mxu0 0.0
      %3408 = vmatprep.subr.mxu0 0.0
      %3409 = vmatpush1.msra.mxu0 0.0
      %3410 = vmatprep.subr.mxu0 0.0
      %3411 = vmatpush1.msra.mxu0 0.0
      %3412 = vmatprep.subr.mxu0 0.0
      %3413 = vmatpush1.msra.mxu0 0.0
      %3414 = vmatprep.subr.mxu0 0.0
      %3415 = vmatpush1.msra.mxu0 0.0
      %3416 = vmatprep.subr.mxu0 0.0
      %3417 = vmatpush1.msra.mxu0 0.0
      %3418 = vmatprep.subr.mxu0 0.0
      %3419 = vmatpush1.msra.mxu0 0.0
      %3420 = vmatprep.subr.mxu0 0.0
      %3421 = vmatpush1.msra.mxu0 0.0
      %3422 = vmatprep.mubr.f32.mxu0 0.0
      %3423 = vmatmul.mubr.f32.gmra.mrb[0].mxu0 %v3353
      %v3424 = vpop.f32.mrb[0].mxu0
      %v3425 = vadd.f32 0.0, %v3424
      %v3426 = vpop.f32.mrb[0].mxu0
      %3427 = vmatprep.mubr.f32.mxu0 0.0
      %3428 = vmatmul.mubr.f32.gmra.mrb[0].mxu0 %v3356
      %v3429 = vpop.f32.mrb[0].mxu0
      %v3430 = vadd.f32 0.0, %v3429
      %v3431 = vpop.f32.mrb[0].mxu0
      %3432 = vdwg.mxu0
      %v3433 = vadd.f32 %v3257, %v3425
      %v3434 = vadd.f32 %v3258, %v3430
      %v3435 = vadd.s32 %v2360, 1
      %vm3436 = vcmp.ge.s32.totalorder %v3435, 0
      %vm3437 = vcmp.lt.s32.totalorder %v3435, 8
      %vm3438 = vmand %vm3436, %vm3437
      %vm3439 = vmand %vm3438, %vm2367
      %vm3440 = vmand %vm3439, %vm2369
      %v3441 = vmul.u32 %v3435, 8
      %v3442 = vadd.s32 %v3441, %v2363
      %v3443 = vsel %vm3440, %v3442, 4294967295
      %vm3444 = vcmp.eq.s32.totalorder %v339, %v3443
      %vm3445 = vcmp.eq.s32.totalorder %v340, %v3443
      %vm3446 = vcmp.eq.s32.totalorder %v341, %v3443
      %vm3447 = vcmp.eq.s32.totalorder %v342, %v3443
      %vm3448 = vcmp.eq.s32.totalorder %v343, %v3443
      %vm3449 = vcmp.eq.s32.totalorder %v344, %v3443
      %vm3450 = vcmp.eq.s32.totalorder %v345, %v3443
      %vm3451 = vcmp.eq.s32.totalorder %v346, %v3443
      %v3452 = vsel %vm3444, 1.0, 0.0
      %v3453 = vsel %vm3445, 1.0, 0.0
      %v3454 = vsel %vm3446, 1.0, 0.0
      %v3455 = vsel %vm3447, 1.0, 0.0
      %v3456 = vsel %vm3448, 1.0, 0.0
      %v3457 = vsel %vm3449, 1.0, 0.0
      %v3458 = vsel %vm3450, 1.0, 0.0
      %v3459 = vsel %vm3451, 1.0, 0.0
      %3460 = vmatprep.subr.mxu0 0.0
      %3461 = vmatpush1.msra.mxu0 %v3452
      %3462 = vmatprep.subr.mxu0 0.0
      %3463 = vmatpush1.msra.mxu0 %v3453
      %3464 = vmatprep.subr.mxu0 0.0
      %3465 = vmatpush1.msra.mxu0 %v3454
      %3466 = vmatprep.subr.mxu0 0.0
      %3467 = vmatpush1.msra.mxu0 %v3455
      %3468 = vmatprep.subr.mxu0 0.0
      %3469 = vmatpush1.msra.mxu0 %v3456
      %3470 = vmatprep.subr.mxu0 0.0
      %3471 = vmatpush1.msra.mxu0 %v3457
      %3472 = vmatprep.subr.mxu0 0.0
      %3473 = vmatpush1.msra.mxu0 %v3458
      %3474 = vmatprep.subr.mxu0 0.0
      %3475 = vmatpush1.msra.mxu0 %v3459
      %3476 = vmatprep.subr.mxu0 0.0
      %3477 = vmatpush1.msra.mxu0 0.0
      %3478 = vmatprep.subr.mxu0 0.0
      %3479 = vmatpush1.msra.mxu0 0.0
      %3480 = vmatprep.subr.mxu0 0.0
      %3481 = vmatpush1.msra.mxu0 0.0
      %3482 = vmatprep.subr.mxu0 0.0
      %3483 = vmatpush1.msra.mxu0 0.0
      %3484 = vmatprep.subr.mxu0 0.0
      %3485 = vmatpush1.msra.mxu0 0.0
      %3486 = vmatprep.subr.mxu0 0.0
      %3487 = vmatpush1.msra.mxu0 0.0
      %3488 = vmatprep.subr.mxu0 0.0
      %3489 = vmatpush1.msra.mxu0 0.0
      %3490 = vmatprep.subr.mxu0 0.0
      %3491 = vmatpush1.msra.mxu0 0.0
      %3492 = vmatprep.subr.mxu0 0.0
      %3493 = vmatpush1.msra.mxu0 0.0
      %3494 = vmatprep.subr.mxu0 0.0
      %3495 = vmatpush1.msra.mxu0 0.0
      %3496 = vmatprep.subr.mxu0 0.0
      %3497 = vmatpush1.msra.mxu0 0.0
      %3498 = vmatprep.subr.mxu0 0.0
      %3499 = vmatpush1.msra.mxu0 0.0
      %3500 = vmatprep.subr.mxu0 0.0
      %3501 = vmatpush1.msra.mxu0 0.0
      %3502 = vmatprep.subr.mxu0 0.0
      %3503 = vmatpush1.msra.mxu0 0.0
      %3504 = vmatprep.subr.mxu0 0.0
      %3505 = vmatpush1.msra.mxu0 0.0
      %3506 = vmatprep.subr.mxu0 0.0
      %3507 = vmatpush1.msra.mxu0 0.0
      %3508 = vmatprep.subr.mxu0 0.0
      %3509 = vmatpush1.msra.mxu0 0.0
      %3510 = vmatprep.subr.mxu0 0.0
      %3511 = vmatpush1.msra.mxu0 0.0
      %3512 = vmatprep.subr.mxu0 0.0
      %3513 = vmatpush1.msra.mxu0 0.0
      %3514 = vmatprep.subr.mxu0 0.0
      %3515 = vmatpush1.msra.mxu0 0.0
      %3516 = vmatprep.subr.mxu0 0.0
      %3517 = vmatpush1.msra.mxu0 0.0
      %3518 = vmatprep.subr.mxu0 0.0
      %3519 = vmatpush1.msra.mxu0 0.0
      %3520 = vmatprep.subr.mxu0 0.0
      %3521 = vmatpush1.msra.mxu0 0.0
      %3522 = vmatprep.subr.mxu0 0.0
      %3523 = vmatpush1.msra.mxu0 0.0
      %3524 = vmatprep.mubr.f32.mxu0 0.0
      %3525 = vmatmul.mubr.f32.gmra.mrb[0].mxu0 %v2392
      %v3526 = vpop.f32.mrb[0].mxu0
      %v3527 = vadd.f32 0.0, %v3526
      %v3528 = vpop.f32.mrb[0].mxu0
      %3529 = vdwg.mxu0
      %s3530 = scalar_lea.vmem %s3, 96
      %v3531 = vld [vmem:[%s3530] sm:$0xff]
      %v3532 = vld [vmem:[%s3530 + $0x8] sm:$0xff]
      %v3534 = vsel %vm2561, %v3531, 0
      %v3537 = vsel %vm2561, %v3532, 0
      %3539 = vmatprep.subr.mxu0 0.0
      %3540 = vmatpush1.msra.mxu0 %v3527
      %3541 = vmatprep.subr.mxu0 0.0
      %3542 = vmatpush1.msra.mxu0 0.0
      %3543 = vmatprep.subr.mxu0 0.0
      %3544 = vmatpush1.msra.mxu0 0.0
      %3545 = vmatprep.subr.mxu0 0.0
      %3546 = vmatpush1.msra.mxu0 0.0
      %3547 = vmatprep.subr.mxu0 0.0
      %3548 = vmatpush1.msra.mxu0 0.0
      %3549 = vmatprep.subr.mxu0 0.0
      %3550 = vmatpush1.msra.mxu0 0.0
      %3551 = vmatprep.subr.mxu0 0.0
      %3552 = vmatpush1.msra.mxu0 0.0
      %3553 = vmatprep.subr.mxu0 0.0
      %3554 = vmatpush1.msra.mxu0 0.0
      %3555 = vmatprep.subr.mxu0 0.0
      %3556 = vmatpush1.msra.mxu0 0.0
      %3557 = vmatprep.subr.mxu0 0.0
      %3558 = vmatpush1.msra.mxu0 0.0
      %3559 = vmatprep.subr.mxu0 0.0
      %3560 = vmatpush1.msra.mxu0 0.0
      %3561 = vmatprep.subr.mxu0 0.0
      %3562 = vmatpush1.msra.mxu0 0.0
      %3563 = vmatprep.subr.mxu0 0.0
      %3564 = vmatpush1.msra.mxu0 0.0
      %3565 = vmatprep.subr.mxu0 0.0
      %3566 = vmatpush1.msra.mxu0 0.0
      %3567 = vmatprep.subr.mxu0 0.0
      %3568 = vmatpush1.msra.mxu0 0.0
      %3569 = vmatprep.subr.mxu0 0.0
      %3570 = vmatpush1.msra.mxu0 0.0
      %3571 = vmatprep.subr.mxu0 0.0
      %3572 = vmatpush1.msra.mxu0 0.0
      %3573 = vmatprep.subr.mxu0 0.0
      %3574 = vmatpush1.msra.mxu0 0.0
      %3575 = vmatprep.subr.mxu0 0.0
      %3576 = vmatpush1.msra.mxu0 0.0
      %3577 = vmatprep.subr.mxu0 0.0
      %3578 = vmatpush1.msra.mxu0 0.0
      %3579 = vmatprep.subr.mxu0 0.0
      %3580 = vmatpush1.msra.mxu0 0.0
      %3581 = vmatprep.subr.mxu0 0.0
      %3582 = vmatpush1.msra.mxu0 0.0
      %3583 = vmatprep.subr.mxu0 0.0
      %3584 = vmatpush1.msra.mxu0 0.0
      %3585 = vmatprep.subr.mxu0 0.0
      %3586 = vmatpush1.msra.mxu0 0.0
      %3587 = vmatprep.subr.mxu0 0.0
      %3588 = vmatpush1.msra.mxu0 0.0
      %3589 = vmatprep.subr.mxu0 0.0
      %3590 = vmatpush1.msra.mxu0 0.0
      %3591 = vmatprep.subr.mxu0 0.0
      %3592 = vmatpush1.msra.mxu0 0.0
      %3593 = vmatprep.subr.mxu0 0.0
      %3594 = vmatpush1.msra.mxu0 0.0
      %3595 = vmatprep.subr.mxu0 0.0
      %3596 = vmatpush1.msra.mxu0 0.0
      %3597 = vmatprep.subr.mxu0 0.0
      %3598 = vmatpush1.msra.mxu0 0.0
      %3599 = vmatprep.subr.mxu0 0.0
      %3600 = vmatpush1.msra.mxu0 0.0
      %3601 = vmatprep.subr.mxu0 0.0
      %3602 = vmatpush1.msra.mxu0 0.0
      %3603 = vmatprep.mubr.f32.mxu0 0.0
      %3604 = vmatmul.mubr.f32.gmra.mrb[0].mxu0 %v3534
      %v3605 = vpop.f32.mrb[0].mxu0
      %v3606 = vadd.f32 0.0, %v3605
      %v3607 = vpop.f32.mrb[0].mxu0
      %3608 = vmatprep.mubr.f32.mxu0 0.0
      %3609 = vmatmul.mubr.f32.gmra.mrb[0].mxu0 %v3537
      %v3610 = vpop.f32.mrb[0].mxu0
      %v3611 = vadd.f32 0.0, %v3610
      %v3612 = vpop.f32.mrb[0].mxu0
      %3613 = vdwg.mxu0
      %v3614 = vadd.f32 %v3433, %v3606
      %v3615 = vadd.f32 %v3434, %v3611
      %vm3616 = vmand %vm3438, %vm2466
      %vm3617 = vmand %vm3616, %vm2468
      %v3618 = vadd.s32 %v3441, %v2362
      %v3619 = vsel %vm3617, %v3618, 4294967295
      %vm3620 = vcmp.eq.s32.totalorder %v339, %v3619
      %vm3621 = vcmp.eq.s32.totalorder %v340, %v3619
      %vm3622 = vcmp.eq.s32.totalorder %v341, %v3619
      %vm3623 = vcmp.eq.s32.totalorder %v342, %v3619
      %vm3624 = vcmp.eq.s32.totalorder %v343, %v3619
      %vm3625 = vcmp.eq.s32.totalorder %v344, %v3619
      %vm3626 = vcmp.eq.s32.totalorder %v345, %v3619
      %vm3627 = vcmp.eq.s32.totalorder %v346, %v3619
      %v3628 = vsel %vm3620, 1.0, 0.0
      %v3629 = vsel %vm3621, 1.0, 0.0
      %v3630 = vsel %vm3622, 1.0, 0.0
      %v3631 = vsel %vm3623, 1.0, 0.0
      %v3632 = vsel %vm3624, 1.0, 0.0
      %v3633 = vsel %vm3625, 1.0, 0.0
      %v3634 = vsel %vm3626, 1.0, 0.0
      %v3635 = vsel %vm3627, 1.0, 0.0
      %3636 = vmatprep.subr.mxu0 0.0
      %3637 = vmatpush1.msra.mxu0 %v3628
      %3638 = vmatprep.subr.mxu0 0.0
      %3639 = vmatpush1.msra.mxu0 %v3629
      %3640 = vmatprep.subr.mxu0 0.0
      %3641 = vmatpush1.msra.mxu0 %v3630
      %3642 = vmatprep.subr.mxu0 0.0
      %3643 = vmatpush1.msra.mxu0 %v3631
      %3644 = vmatprep.subr.mxu0 0.0
      %3645 = vmatpush1.msra.mxu0 %v3632
      %3646 = vmatprep.subr.mxu0 0.0
      %3647 = vmatpush1.msra.mxu0 %v3633
      %3648 = vmatprep.subr.mxu0 0.0
      %3649 = vmatpush1.msra.mxu0 %v3634
      %3650 = vmatprep.subr.mxu0 0.0
      %3651 = vmatpush1.msra.mxu0 %v3635
      %3652 = vmatprep.subr.mxu0 0.0
      %3653 = vmatpush1.msra.mxu0 0.0
      %3654 = vmatprep.subr.mxu0 0.0
      %3655 = vmatpush1.msra.mxu0 0.0
      %3656 = vmatprep.subr.mxu0 0.0
      %3657 = vmatpush1.msra.mxu0 0.0
      %3658 = vmatprep.subr.mxu0 0.0
      %3659 = vmatpush1.msra.mxu0 0.0
      %3660 = vmatprep.subr.mxu0 0.0
      %3661 = vmatpush1.msra.mxu0 0.0
      %3662 = vmatprep.subr.mxu0 0.0
      %3663 = vmatpush1.msra.mxu0 0.0
      %3664 = vmatprep.subr.mxu0 0.0
      %3665 = vmatpush1.msra.mxu0 0.0
      %3666 = vmatprep.subr.mxu0 0.0
      %3667 = vmatpush1.msra.mxu0 0.0
      %3668 = vmatprep.subr.mxu0 0.0
      %3669 = vmatpush1.msra.mxu0 0.0
      %3670 = vmatprep.subr.mxu0 0.0
      %3671 = vmatpush1.msra.mxu0 0.0
      %3672 = vmatprep.subr.mxu0 0.0
      %3673 = vmatpush1.msra.mxu0 0.0
      %3674 = vmatprep.subr.mxu0 0.0
      %3675 = vmatpush1.msra.mxu0 0.0
      %3676 = vmatprep.subr.mxu0 0.0
      %3677 = vmatpush1.msra.mxu0 0.0
      %3678 = vmatprep.subr.mxu0 0.0
      %3679 = vmatpush1.msra.mxu0 0.0
      %3680 = vmatprep.subr.mxu0 0.0
      %3681 = vmatpush1.msra.mxu0 0.0
      %3682 = vmatprep.subr.mxu0 0.0
      %3683 = vmatpush1.msra.mxu0 0.0
      %3684 = vmatprep.subr.mxu0 0.0
      %3685 = vmatpush1.msra.mxu0 0.0
      %3686 = vmatprep.subr.mxu0 0.0
      %3687 = vmatpush1.msra.mxu0 0.0
      %3688 = vmatprep.subr.mxu0 0.0
      %3689 = vmatpush1.msra.mxu0 0.0
      %3690 = vmatprep.subr.mxu0 0.0
      %3691 = vmatpush1.msra.mxu0 0.0
      %3692 = vmatprep.subr.mxu0 0.0
      %3693 = vmatpush1.msra.mxu0 0.0
      %3694 = vmatprep.subr.mxu0 0.0
      %3695 = vmatpush1.msra.mxu0 0.0
      %3696 = vmatprep.subr.mxu0 0.0
      %3697 = vmatpush1.msra.mxu0 0.0
      %3698 = vmatprep.subr.mxu0 0.0
      %3699 = vmatpush1.msra.mxu0 0.0
      %3700 = vmatprep.mubr.f32.mxu0 0.0
      %3701 = vmatmul.mubr.f32.gmra.mrb[0].mxu0 %v2392
      %v3702 = vpop.f32.mrb[0].mxu0
      %v3703 = vadd.f32 0.0, %v3702
      %v3704 = vpop.f32.mrb[0].mxu0
      %3705 = vdwg.mxu0
      %s3706 = scalar_lea.vmem %s3, 112
      %v3707 = vld [vmem:[%s3706] sm:$0xff]
      %v3708 = vld [vmem:[%s3706 + $0x8] sm:$0xff]
      %v3710 = vsel %vm2561, %v3707, 0
      %v3713 = vsel %vm2561, %v3708, 0
      %3715 = vmatprep.subr.mxu0 0.0
      %3716 = vmatpush1.msra.mxu0 %v3703
      %3717 = vmatprep.subr.mxu0 0.0
      %3718 = vmatpush1.msra.mxu0 0.0
      %3719 = vmatprep.subr.mxu0 0.0
      %3720 = vmatpush1.msra.mxu0 0.0
      %3721 = vmatprep.subr.mxu0 0.0
      %3722 = vmatpush1.msra.mxu0 0.0
      %3723 = vmatprep.subr.mxu0 0.0
      %3724 = vmatpush1.msra.mxu0 0.0
      %3725 = vmatprep.subr.mxu0 0.0
      %3726 = vmatpush1.msra.mxu0 0.0
      %3727 = vmatprep.subr.mxu0 0.0
      %3728 = vmatpush1.msra.mxu0 0.0
      %3729 = vmatprep.subr.mxu0 0.0
      %3730 = vmatpush1.msra.mxu0 0.0
      %3731 = vmatprep.subr.mxu0 0.0
      %3732 = vmatpush1.msra.mxu0 0.0
      %3733 = vmatprep.subr.mxu0 0.0
      %3734 = vmatpush1.msra.mxu0 0.0
      %3735 = vmatprep.subr.mxu0 0.0
      %3736 = vmatpush1.msra.mxu0 0.0
      %3737 = vmatprep.subr.mxu0 0.0
      %3738 = vmatpush1.msra.mxu0 0.0
      %3739 = vmatprep.subr.mxu0 0.0
      %3740 = vmatpush1.msra.mxu0 0.0
      %3741 = vmatprep.subr.mxu0 0.0
      %3742 = vmatpush1.msra.mxu0 0.0
      %3743 = vmatprep.subr.mxu0 0.0
      %3744 = vmatpush1.msra.mxu0 0.0
      %3745 = vmatprep.subr.mxu0 0.0
      %3746 = vmatpush1.msra.mxu0 0.0
      %3747 = vmatprep.subr.mxu0 0.0
      %3748 = vmatpush1.msra.mxu0 0.0
      %3749 = vmatprep.subr.mxu0 0.0
      %3750 = vmatpush1.msra.mxu0 0.0
      %3751 = vmatprep.subr.mxu0 0.0
      %3752 = vmatpush1.msra.mxu0 0.0
      %3753 = vmatprep.subr.mxu0 0.0
      %3754 = vmatpush1.msra.mxu0 0.0
      %3755 = vmatprep.subr.mxu0 0.0
      %3756 = vmatpush1.msra.mxu0 0.0
      %3757 = vmatprep.subr.mxu0 0.0
      %3758 = vmatpush1.msra.mxu0 0.0
      %3759 = vmatprep.subr.mxu0 0.0
      %3760 = vmatpush1.msra.mxu0 0.0
      %3761 = vmatprep.subr.mxu0 0.0
      %3762 = vmatpush1.msra.mxu0 0.0
      %3763 = vmatprep.subr.mxu0 0.0
      %3764 = vmatpush1.msra.mxu0 0.0
      %3765 = vmatprep.subr.mxu0 0.0
      %3766 = vmatpush1.msra.mxu0 0.0
      %3767 = vmatprep.subr.mxu0 0.0
      %3768 = vmatpush1.msra.mxu0 0.0
      %3769 = vmatprep.subr.mxu0 0.0
      %3770 = vmatpush1.msra.mxu0 0.0
      %3771 = vmatprep.subr.mxu0 0.0
      %3772 = vmatpush1.msra.mxu0 0.0
      %3773 = vmatprep.subr.mxu0 0.0
      %3774 = vmatpush1.msra.mxu0 0.0
      %3775 = vmatprep.subr.mxu0 0.0
      %3776 = vmatpush1.msra.mxu0 0.0
      %3777 = vmatprep.subr.mxu0 0.0
      %3778 = vmatpush1.msra.mxu0 0.0
      %3779 = vmatprep.mubr.f32.mxu0 0.0
      %3780 = vmatmul.mubr.f32.gmra.mrb[0].mxu0 %v3710
      %v3781 = vpop.f32.mrb[0].mxu0
      %v3782 = vadd.f32 0.0, %v3781
      %v3783 = vpop.f32.mrb[0].mxu0
      %3784 = vmatprep.mubr.f32.mxu0 0.0
      %3785 = vmatmul.mubr.f32.gmra.mrb[0].mxu0 %v3713
      %v3786 = vpop.f32.mrb[0].mxu0
      %v3787 = vadd.f32 0.0, %v3786
      %v3788 = vpop.f32.mrb[0].mxu0
      %3789 = vdwg.mxu0
      %v3790 = vadd.f32 %v3614, %v3782
      %v3791 = vadd.f32 %v3615, %v3787
      %vm3792 = vmand %vm3438, %vm2725
      %vm3793 = vmand %vm3792, %vm2727
      %v3794 = vadd.s32 %v3441, %v2724
      %v3795 = vsel %vm3793, %v3794, 4294967295
      %vm3796 = vcmp.eq.s32.totalorder %v339, %v3795
      %vm3797 = vcmp.eq.s32.totalorder %v340, %v3795
      %vm3798 = vcmp.eq.s32.totalorder %v341, %v3795
      %vm3799 = vcmp.eq.s32.totalorder %v342, %v3795
      %vm3800 = vcmp.eq.s32.totalorder %v343, %v3795
      %vm3801 = vcmp.eq.s32.totalorder %v344, %v3795
      %vm3802 = vcmp.eq.s32.totalorder %v345, %v3795
      %vm3803 = vcmp.eq.s32.totalorder %v346, %v3795
      %v3804 = vsel %vm3796, 1.0, 0.0
      %v3805 = vsel %vm3797, 1.0, 0.0
      %v3806 = vsel %vm3798, 1.0, 0.0
      %v3807 = vsel %vm3799, 1.0, 0.0
      %v3808 = vsel %vm3800, 1.0, 0.0
      %v3809 = vsel %vm3801, 1.0, 0.0
      %v3810 = vsel %vm3802, 1.0, 0.0
      %v3811 = vsel %vm3803, 1.0, 0.0
      %3812 = vmatprep.subr.mxu0 0.0
      %3813 = vmatpush1.msra.mxu0 %v3804
      %3814 = vmatprep.subr.mxu0 0.0
      %3815 = vmatpush1.msra.mxu0 %v3805
      %3816 = vmatprep.subr.mxu0 0.0
      %3817 = vmatpush1.msra.mxu0 %v3806
      %3818 = vmatprep.subr.mxu0 0.0
      %3819 = vmatpush1.msra.mxu0 %v3807
      %3820 = vmatprep.subr.mxu0 0.0
      %3821 = vmatpush1.msra.mxu0 %v3808
      %3822 = vmatprep.subr.mxu0 0.0
      %3823 = vmatpush1.msra.mxu0 %v3809
      %3824 = vmatprep.subr.mxu0 0.0
      %3825 = vmatpush1.msra.mxu0 %v3810
      %3826 = vmatprep.subr.mxu0 0.0
      %3827 = vmatpush1.msra.mxu0 %v3811
      %3828 = vmatprep.subr.mxu0 0.0
      %3829 = vmatpush1.msra.mxu0 0.0
      %3830 = vmatprep.subr.mxu0 0.0
      %3831 = vmatpush1.msra.mxu0 0.0
      %3832 = vmatprep.subr.mxu0 0.0
      %3833 = vmatpush1.msra.mxu0 0.0
      %3834 = vmatprep.subr.mxu0 0.0
      %3835 = vmatpush1.msra.mxu0 0.0
      %3836 = vmatprep.subr.mxu0 0.0
      %3837 = vmatpush1.msra.mxu0 0.0
      %3838 = vmatprep.subr.mxu0 0.0
      %3839 = vmatpush1.msra.mxu0 0.0
      %3840 = vmatprep.subr.mxu0 0.0
      %3841 = vmatpush1.msra.mxu0 0.0
      %3842 = vmatprep.subr.mxu0 0.0
      %3843 = vmatpush1.msra.mxu0 0.0
      %3844 = vmatprep.subr.mxu0 0.0
      %3845 = vmatpush1.msra.mxu0 0.0
      %3846 = vmatprep.subr.mxu0 0.0
      %3847 = vmatpush1.msra.mxu0 0.0
      %3848 = vmatprep.subr.mxu0 0.0
      %3849 = vmatpush1.msra.mxu0 0.0
      %3850 = vmatprep.subr.mxu0 0.0
      %3851 = vmatpush1.msra.mxu0 0.0
      %3852 = vmatprep.subr.mxu0 0.0
      %3853 = vmatpush1.msra.mxu0 0.0
      %3854 = vmatprep.subr.mxu0 0.0
      %3855 = vmatpush1.msra.mxu0 0.0
      %3856 = vmatprep.subr.mxu0 0.0
      %3857 = vmatpush1.msra.mxu0 0.0
      %3858 = vmatprep.subr.mxu0 0.0
      %3859 = vmatpush1.msra.mxu0 0.0
      %3860 = vmatprep.subr.mxu0 0.0
      %3861 = vmatpush1.msra.mxu0 0.0
      %3862 = vmatprep.subr.mxu0 0.0
      %3863 = vmatpush1.msra.mxu0 0.0
      %3864 = vmatprep.subr.mxu0 0.0
      %3865 = vmatpush1.msra.mxu0 0.0
      %3866 = vmatprep.subr.mxu0 0.0
      %3867 = vmatpush1.msra.mxu0 0.0
      %3868 = vmatprep.subr.mxu0 0.0
      %3869 = vmatpush1.msra.mxu0 0.0
      %3870 = vmatprep.subr.mxu0 0.0
      %3871 = vmatpush1.msra.mxu0 0.0
      %3872 = vmatprep.subr.mxu0 0.0
      %3873 = vmatpush1.msra.mxu0 0.0
      %3874 = vmatprep.subr.mxu0 0.0
      %3875 = vmatpush1.msra.mxu0 0.0
      %3876 = vmatprep.mubr.f32.mxu0 0.0
      %3877 = vmatmul.mubr.f32.gmra.mrb[0].mxu0 %v2392
      %v3878 = vpop.f32.mrb[0].mxu0
      %v3879 = vadd.f32 0.0, %v3878
      %v3880 = vpop.f32.mrb[0].mxu0
      %3881 = vdwg.mxu0
      %s3882 = scalar_lea.vmem %s3, 128
      %v3883 = vld [vmem:[%s3882] sm:$0xff]
      %v3884 = vld [vmem:[%s3882 + $0x8] sm:$0xff]
      %v3886 = vsel %vm2561, %v3883, 0
      %v3889 = vsel %vm2561, %v3884, 0
      %3891 = vmatprep.subr.mxu0 0.0
      %3892 = vmatpush1.msra.mxu0 %v3879
      %3893 = vmatprep.subr.mxu0 0.0
      %3894 = vmatpush1.msra.mxu0 0.0
      %3895 = vmatprep.subr.mxu0 0.0
      %3896 = vmatpush1.msra.mxu0 0.0
      %3897 = vmatprep.subr.mxu0 0.0
      %3898 = vmatpush1.msra.mxu0 0.0
      %3899 = vmatprep.subr.mxu0 0.0
      %3900 = vmatpush1.msra.mxu0 0.0
      %3901 = vmatprep.subr.mxu0 0.0
      %3902 = vmatpush1.msra.mxu0 0.0
      %3903 = vmatprep.subr.mxu0 0.0
      %3904 = vmatpush1.msra.mxu0 0.0
      %3905 = vmatprep.subr.mxu0 0.0
      %3906 = vmatpush1.msra.mxu0 0.0
      %3907 = vmatprep.subr.mxu0 0.0
      %3908 = vmatpush1.msra.mxu0 0.0
      %3909 = vmatprep.subr.mxu0 0.0
      %3910 = vmatpush1.msra.mxu0 0.0
      %3911 = vmatprep.subr.mxu0 0.0
      %3912 = vmatpush1.msra.mxu0 0.0
      %3913 = vmatprep.subr.mxu0 0.0
      %3914 = vmatpush1.msra.mxu0 0.0
      %3915 = vmatprep.subr.mxu0 0.0
      %3916 = vmatpush1.msra.mxu0 0.0
      %3917 = vmatprep.subr.mxu0 0.0
      %3918 = vmatpush1.msra.mxu0 0.0
      %3919 = vmatprep.subr.mxu0 0.0
      %3920 = vmatpush1.msra.mxu0 0.0
      %3921 = vmatprep.subr.mxu0 0.0
      %3922 = vmatpush1.msra.mxu0 0.0
      %3923 = vmatprep.subr.mxu0 0.0
      %3924 = vmatpush1.msra.mxu0 0.0
      %3925 = vmatprep.subr.mxu0 0.0
      %3926 = vmatpush1.msra.mxu0 0.0
      %3927 = vmatprep.subr.mxu0 0.0
      %3928 = vmatpush1.msra.mxu0 0.0
      %3929 = vmatprep.subr.mxu0 0.0
      %3930 = vmatpush1.msra.mxu0 0.0
      %3931 = vmatprep.subr.mxu0 0.0
      %3932 = vmatpush1.msra.mxu0 0.0
      %3933 = vmatprep.subr.mxu0 0.0
      %3934 = vmatpush1.msra.mxu0 0.0
      %3935 = vmatprep.subr.mxu0 0.0
      %3936 = vmatpush1.msra.mxu0 0.0
      %3937 = vmatprep.subr.mxu0 0.0
      %3938 = vmatpush1.msra.mxu0 0.0
      %3939 = vmatprep.subr.mxu0 0.0
      %3940 = vmatpush1.msra.mxu0 0.0
      %3941 = vmatprep.subr.mxu0 0.0
      %3942 = vmatpush1.msra.mxu0 0.0
      %3943 = vmatprep.subr.mxu0 0.0
      %3944 = vmatpush1.msra.mxu0 0.0
      %3945 = vmatprep.subr.mxu0 0.0
      %3946 = vmatpush1.msra.mxu0 0.0
      %3947 = vmatprep.subr.mxu0 0.0
      %3948 = vmatpush1.msra.mxu0 0.0
      %3949 = vmatprep.subr.mxu0 0.0
      %3950 = vmatpush1.msra.mxu0 0.0
      %3951 = vmatprep.subr.mxu0 0.0
      %3952 = vmatpush1.msra.mxu0 0.0
      %3953 = vmatprep.subr.mxu0 0.0
      %3954 = vmatpush1.msra.mxu0 0.0
      %3955 = vmatprep.mubr.f32.mxu0 0.0
      %3956 = vmatmul.mubr.f32.gmra.mrb[0].mxu0 %v3886
      %v3957 = vpop.f32.mrb[0].mxu0
      %v3958 = vadd.f32 0.0, %v3957
      %v3959 = vpop.f32.mrb[0].mxu0
      %3960 = vmatprep.mubr.f32.mxu0 0.0
      %3961 = vmatmul.mubr.f32.gmra.mrb[0].mxu0 %v3889
      %v3962 = vpop.f32.mrb[0].mxu0
      %v3963 = vadd.f32 0.0, %v3962
      %v3964 = vpop.f32.mrb[0].mxu0
      %3965 = vdwg.mxu0
      %v3966 = vadd.f32 %v3790, %v3958
      %v3967 = vadd.f32 %v3791, %v3963
      %v3968 = vld [vmem:[%s4] sm:$0xff]
      %v3969 = vld [vmem:[%s4 + $0x8] sm:$0xff]
      %3971 = vset.pattern.permute.xlu0 0
      %3972 = vperm.xlu0 %3971, %v3968
      %v3973 = vpop.permute.xlu0 %3972
      %3976 = vset.pattern.permute.xlu0 0
      %3977 = vperm.xlu0 %3976, %v3969
      %v3978 = vpop.permute.xlu0 %3977
      %v3980 = vadd.f32 %v3966, %v3973
      %v3981 = vadd.f32 %v3967, %v3978
      %v3982 = vmax.f32 %v3980, 0.0
      %v3983 = vmax.f32 %v3981, 0.0
      %v3984 = vadd.s32 %v336, 1
      %v3985 = vadd.s32 %v3984, 2
      %v3986 = vadd.s32 %v337, 1
      %v3987 = vadd.s32 %v3986, 2
      %v3988 = vshra.s32 %v3985, 1
      %v3989 = vsub.s32 %v3988, 1
      %v3990 = vshra.s32 %v3987, 1
      %v3991 = vsub.s32 %v3990, 1
      %v3992 = vand.u32 %v3985, 1
      %vm3993 = vcmp.eq.s32.totalorder %v3992, 0
      %vm3994 = vcmp.ge.s32.totalorder %v3989, 0
      %vm3995 = vmand %vm3993, %vm3994
      %vm3996 = vcmp.lt.s32.totalorder %v3989, 4
      %vm3997 = vmand %vm3995, %vm3996
      %v3998 = vand.u32 %v3987, 1
      %vm3999 = vcmp.eq.s32.totalorder %v3998, 0
      %vm4000 = vmand %vm3997, %vm3999
      %vm4001 = vcmp.ge.s32.totalorder %v3991, 0
      %vm4002 = vmand %vm4000, %vm4001
      %vm4003 = vcmp.lt.s32.totalorder %v3991, 4
      %vm4004 = vmand %vm4002, %vm4003
      %v4005 = vmul.u32 %v3989, 4
      %v4006 = vadd.s32 %v4005, %v3991
      %v4007 = vsel %vm4004, %v4006, 4294967295
      %vm4008 = vcmp.eq.s32.totalorder %v339, %v4007
      %vm4009 = vcmp.eq.s32.totalorder %v340, %v4007
      %v4010 = vsel %vm4008, 1.0, 0.0
      %v4011 = vsel %vm4009, 1.0, 0.0
      %vm4012 = vcmask 130048
      %v4014 = vsel %vm4012, %v3982, 0
      %v4017 = vsel %vm4012, %v3983, 0
      %4019 = vmatprep.subr.mxu0 0.0
      %4020 = vmatpush1.msra.mxu0 %v4010
      %4021 = vmatprep.subr.mxu0 0.0
      %4022 = vmatpush1.msra.mxu0 %v4011
      %4023 = vmatprep.subr.mxu0 0.0
      %4024 = vmatpush1.msra.mxu0 0.0
      %4025 = vmatprep.subr.mxu0 0.0
      %4026 = vmatpush1.msra.mxu0 0.0
      %4027 = vmatprep.subr.mxu0 0.0
      %4028 = vmatpush1.msra.mxu0 0.0
      %4029 = vmatprep.subr.mxu0 0.0
      %4030 = vmatpush1.msra.mxu0 0.0
      %4031 = vmatprep.subr.mxu0 0.0
      %4032 = vmatpush1.msra.mxu0 0.0
      %4033 = vmatprep.subr.mxu0 0.0
      %4034 = vmatpush1.msra.mxu0 0.0
      %4035 = vmatprep.subr.mxu0 0.0
      %4036 = vmatpush1.msra.mxu0 0.0
      %4037 = vmatprep.subr.mxu0 0.0
      %4038 = vmatpush1.msra.mxu0 0.0
      %4039 = vmatprep.subr.mxu0 0.0
      %4040 = vmatpush1.msra.mxu0 0.0
      %4041 = vmatprep.subr.mxu0 0.0
      %4042 = vmatpush1.msra.mxu0 0.0
      %4043 = vmatprep.subr.mxu0 0.0
      %4044 = vmatpush1.msra.mxu0 0.0
      %4045 = vmatprep.subr.mxu0 0.0
      %4046 = vmatpush1.msra.mxu0 0.0
      %4047 = vmatprep.subr.mxu0 0.0
      %4048 = vmatpush1.msra.mxu0 0.0
      %4049 = vmatprep.subr.mxu0 0.0
      %4050 = vmatpush1.msra.mxu0 0.0
      %4051 = vmatprep.subr.mxu0 0.0
      %4052 = vmatpush1.msra.mxu0 0.0
      %4053 = vmatprep.subr.mxu0 0.0
      %4054 = vmatpush1.msra.mxu0 0.0
      %4055 = vmatprep.subr.mxu0 0.0
      %4056 = vmatpush1.msra.mxu0 0.0
      %4057 = vmatprep.subr.mxu0 0.0
      %4058 = vmatpush1.msra.mxu0 0.0
      %4059 = vmatprep.subr.mxu0 0.0
      %4060 = vmatpush1.msra.mxu0 0.0
      %4061 = vmatprep.subr.mxu0 0.0
      %4062 = vmatpush1.msra.mxu0 0.0
      %4063 = vmatprep.subr.mxu0 0.0
      %4064 = vmatpush1.msra.mxu0 0.0
      %4065 = vmatprep.subr.mxu0 0.0
      %4066 = vmatpush1.msra.mxu0 0.0
      %4067 = vmatprep.subr.mxu0 0.0
      %4068 = vmatpush1.msra.mxu0 0.0
      %4069 = vmatprep.subr.mxu0 0.0
      %4070 = vmatpush1.msra.mxu0 0.0
      %4071 = vmatprep.subr.mxu0 0.0
      %4072 = vmatpush1.msra.mxu0 0.0
      %4073 = vmatprep.subr.mxu0 0.0
      %4074 = vmatpush1.msra.mxu0 0.0
      %4075 = vmatprep.subr.mxu0 0.0
      %4076 = vmatpush1.msra.mxu0 0.0
      %4077 = vmatprep.subr.mxu0 0.0
      %4078 = vmatpush1.msra.mxu0 0.0
      %4079 = vmatprep.subr.mxu0 0.0
      %4080 = vmatpush1.msra.mxu0 0.0
      %4081 = vmatprep.subr.mxu0 0.0
      %4082 = vmatpush1.msra.mxu0 0.0
      %4083 = vmatprep.mubr.f32.mxu0 0.0
      %4084 = vmatmul.mubr.f32.gmra.mrb[0].mxu0 %v4014
      %v4085 = vpop.f32.mrb[0].mxu0
      %v4086 = vadd.f32 0.0, %v4085
      %v4087 = vpop.f32.mrb[0].mxu0
      %4088 = vmatprep.mubr.f32.mxu0 0.0
      %4089 = vmatmul.mubr.f32.gmra.mrb[0].mxu0 %v4017
      %v4090 = vpop.f32.mrb[0].mxu0
      %v4091 = vadd.f32 0.0, %v4090
      %v4092 = vpop.f32.mrb[0].mxu0
      %4093 = vdwg.mxu0
      %v4094 = vld [vmem:[%s5] sm:$0xff]
      %v4095 = vadd.s32 %v337, 2
      %v4096 = vshra.s32 %v4095, 1
      %v4097 = vsub.s32 %v4096, 1
      %v4098 = vand.u32 %v4095, 1
      %vm4099 = vcmp.eq.s32.totalorder %v4098, 0
      %vm4100 = vmand %vm3997, %vm4099
      %vm4101 = vcmp.ge.s32.totalorder %v4097, 0
      %vm4102 = vmand %vm4100, %vm4101
      %vm4103 = vcmp.lt.s32.totalorder %v4097, 4
      %vm4104 = vmand %vm4102, %vm4103
      %v4105 = vadd.s32 %v4005, %v4097
      %v4106 = vsel %vm4104, %v4105, 4294967295
      %vm4107 = vcmp.eq.s32.totalorder %v339, %v4106
      %vm4108 = vcmp.eq.s32.totalorder %v340, %v4106
      %v4109 = vsel %vm4107, 1.0, 0.0
      %v4110 = vsel %vm4108, 1.0, 0.0
      %4111 = vmatprep.subr.mxu0 0.0
      %4112 = vmatpush1.msra.mxu0 %v4109
      %4113 = vmatprep.subr.mxu0 0.0
      %4114 = vmatpush1.msra.mxu0 %v4110
      %4115 = vmatprep.subr.mxu0 0.0
      %4116 = vmatpush1.msra.mxu0 0.0
      %4117 = vmatprep.subr.mxu0 0.0
      %4118 = vmatpush1.msra.mxu0 0.0
      %4119 = vmatprep.subr.mxu0 0.0
      %4120 = vmatpush1.msra.mxu0 0.0
      %4121 = vmatprep.subr.mxu0 0.0
      %4122 = vmatpush1.msra.mxu0 0.0
      %4123 = vmatprep.subr.mxu0 0.0
      %4124 = vmatpush1.msra.mxu0 0.0
      %4125 = vmatprep.subr.mxu0 0.0
      %4126 = vmatpush1.msra.mxu0 0.0
      %4127 = vmatprep.subr.mxu0 0.0
      %4128 = vmatpush1.msra.mxu0 0.0
      %4129 = vmatprep.subr.mxu0 0.0
      %4130 = vmatpush1.msra.mxu0 0.0
      %4131 = vmatprep.subr.mxu0 0.0
      %4132 = vmatpush1.msra.mxu0 0.0
      %4133 = vmatprep.subr.mxu0 0.0
      %4134 = vmatpush1.msra.mxu0 0.0
      %4135 = vmatprep.subr.mxu0 0.0
      %4136 = vmatpush1.msra.mxu0 0.0
      %4137 = vmatprep.subr.mxu0 0.0
      %4138 = vmatpush1.msra.mxu0 0.0
      %4139 = vmatprep.subr.mxu0 0.0
      %4140 = vmatpush1.msra.mxu0 0.0
      %4141 = vmatprep.subr.mxu0 0.0
      %4142 = vmatpush1.msra.mxu0 0.0
      %4143 = vmatprep.subr.mxu0 0.0
      %4144 = vmatpush1.msra.mxu0 0.0
      %4145 = vmatprep.subr.mxu0 0.0
      %4146 = vmatpush1.msra.mxu0 0.0
      %4147 = vmatprep.subr.mxu0 0.0
      %4148 = vmatpush1.msra.mxu0 0.0
      %4149 = vmatprep.subr.mxu0 0.0
      %4150 = vmatpush1.msra.mxu0 0.0
      %4151 = vmatprep.subr.mxu0 0.0
      %4152 = vmatpush1.msra.mxu0 0.0
      %4153 = vmatprep.subr.mxu0 0.0
      %4154 = vmatpush1.msra.mxu0 0.0
      %4155 = vmatprep.subr.mxu0 0.0
      %4156 = vmatpush1.msra.mxu0 0.0
      %4157 = vmatprep.subr.mxu0 0.0
      %4158 = vmatpush1.msra.mxu0 0.0
      %4159 = vmatprep.subr.mxu0 0.0
      %4160 = vmatpush1.msra.mxu0 0.0
      %4161 = vmatprep.subr.mxu0 0.0
      %4162 = vmatpush1.msra.mxu0 0.0
      %4163 = vmatprep.subr.mxu0 0.0
      %4164 = vmatpush1.msra.mxu0 0.0
      %4165 = vmatprep.subr.mxu0 0.0
      %4166 = vmatpush1.msra.mxu0 0.0
      %4167 = vmatprep.subr.mxu0 0.0
      %4168 = vmatpush1.msra.mxu0 0.0
      %4169 = vmatprep.subr.mxu0 0.0
      %4170 = vmatpush1.msra.mxu0 0.0
      %4171 = vmatprep.subr.mxu0 0.0
      %4172 = vmatpush1.msra.mxu0 0.0
      %4173 = vmatprep.subr.mxu0 0.0
      %4174 = vmatpush1.msra.mxu0 0.0
      %4175 = vmatprep.mubr.f32.mxu0 0.0
      %4176 = vmatmul.mubr.f32.gmra.mrb[0].mxu0 %v4014
      %v4177 = vpop.f32.mrb[0].mxu0
      %v4178 = vadd.f32 0.0, %v4177
      %v4179 = vpop.f32.mrb[0].mxu0
      %4180 = vmatprep.mubr.f32.mxu0 0.0
      %4181 = vmatmul.mubr.f32.gmra.mrb[0].mxu0 %v4017
      %v4182 = vpop.f32.mrb[0].mxu0
      %v4183 = vadd.f32 0.0, %v4182
      %v4184 = vpop.f32.mrb[0].mxu0
      %4185 = vdwg.mxu0
      %s4186 = scalar_lea.vmem %s5, 8
      %v4187 = vld [vmem:[%s4186] sm:$0xff]
      %v4189 = vsel %vm4012, %v4187, 0
      %4191 = vmatprep.subr.mxu0 0.0
      %4192 = vmatpush1.msra.mxu0 %v4178
      %4193 = vmatprep.subr.mxu0 0.0
      %4194 = vmatpush1.msra.mxu0 %v4183
      %4195 = vmatprep.subr.mxu0 0.0
      %4196 = vmatpush1.msra.mxu0 0.0
      %4197 = vmatprep.subr.mxu0 0.0
      %4198 = vmatpush1.msra.mxu0 0.0
      %4199 = vmatprep.subr.mxu0 0.0
      %4200 = vmatpush1.msra.mxu0 0.0
      %4201 = vmatprep.subr.mxu0 0.0
      %4202 = vmatpush1.msra.mxu0 0.0
      %4203 = vmatprep.subr.mxu0 0.0
      %4204 = vmatpush1.msra.mxu0 0.0
      %4205 = vmatprep.subr.mxu0 0.0
      %4206 = vmatpush1.msra.mxu0 0.0
      %4207 = vmatprep.subr.mxu0 0.0
      %4208 = vmatpush1.msra.mxu0 0.0
      %4209 = vmatprep.subr.mxu0 0.0
      %4210 = vmatpush1.msra.mxu0 0.0
      %4211 = vmatprep.subr.mxu0 0.0
      %4212 = vmatpush1.msra.mxu0 0.0
      %4213 = vmatprep.subr.mxu0 0.0
      %4214 = vmatpush1.msra.mxu0 0.0
      %4215 = vmatprep.subr.mxu0 0.0
      %4216 = vmatpush1.msra.mxu0 0.0
      %4217 = vmatprep.subr.mxu0 0.0
      %4218 = vmatpush1.msra.mxu0 0.0
      %4219 = vmatprep.subr.mxu0 0.0
      %4220 = vmatpush1.msra.mxu0 0.0
      %4221 = vmatprep.subr.mxu0 0.0
      %4222 = vmatpush1.msra.mxu0 0.0
      %4223 = vmatprep.subr.mxu0 0.0
      %4224 = vmatpush1.msra.mxu0 0.0
      %4225 = vmatprep.subr.mxu0 0.0
      %4226 = vmatpush1.msra.mxu0 0.0
      %4227 = vmatprep.subr.mxu0 0.0
      %4228 = vmatpush1.msra.mxu0 0.0
      %4229 = vmatprep.subr.mxu0 0.0
      %4230 = vmatpush1.msra.mxu0 0.0
      %4231 = vmatprep.subr.mxu0 0.0
      %4232 = vmatpush1.msra.mxu0 0.0
      %4233 = vmatprep.subr.mxu0 0.0
      %4234 = vmatpush1.msra.mxu0 0.0
      %4235 = vmatprep.subr.mxu0 0.0
      %4236 = vmatpush1.msra.mxu0 0.0
      %4237 = vmatprep.subr.mxu0 0.0
      %4238 = vmatpush1.msra.mxu0 0.0
      %4239 = vmatprep.subr.mxu0 0.0
      %4240 = vmatpush1.msra.mxu0 0.0
      %4241 = vmatprep.subr.mxu0 0.0
      %4242 = vmatpush1.msra.mxu0 0.0
      %4243 = vmatprep.subr.mxu0 0.0
      %4244 = vmatpush1.msra.mxu0 0.0
      %4245 = vmatprep.subr.mxu0 0.0
      %4246 = vmatpush1.msra.mxu0 0.0
      %4247 = vmatprep.subr.mxu0 0.0
      %4248 = vmatpush1.msra.mxu0 0.0
      %4249 = vmatprep.subr.mxu0 0.0
      %4250 = vmatpush1.msra.mxu0 0.0
      %4251 = vmatprep.subr.mxu0 0.0
      %4252 = vmatpush1.msra.mxu0 0.0
      %4253 = vmatprep.subr.mxu0 0.0
      %4254 = vmatpush1.msra.mxu0 0.0
      %4255 = vmatprep.mubr.f32.mxu0 0.0
      %4256 = vmatmul.mubr.f32.gmra.mrb[0].mxu0 %v4189
      %v4257 = vpop.f32.mrb[0].mxu0
      %v4258 = vadd.f32 0.0, %v4257
      %v4259 = vpop.f32.mrb[0].mxu0
      %4260 = vdwg.mxu0
      %v4262 = vsel %vm4012, %v4094, 0
      %4264 = vmatprep.subr.mxu0 0.0
      %4265 = vmatpush1.msra.mxu0 %v4086
      %4266 = vmatprep.subr.mxu0 0.0
      %4267 = vmatpush1.msra.mxu0 %v4091
      %4268 = vmatprep.subr.mxu0 0.0
      %4269 = vmatpush1.msra.mxu0 0.0
      %4270 = vmatprep.subr.mxu0 0.0
      %4271 = vmatpush1.msra.mxu0 0.0
      %4272 = vmatprep.subr.mxu0 0.0
      %4273 = vmatpush1.msra.mxu0 0.0
      %4274 = vmatprep.subr.mxu0 0.0
      %4275 = vmatpush1.msra.mxu0 0.0
      %4276 = vmatprep.subr.mxu0 0.0
      %4277 = vmatpush1.msra.mxu0 0.0
      %4278 = vmatprep.subr.mxu0 0.0
      %4279 = vmatpush1.msra.mxu0 0.0
      %4280 = vmatprep.subr.mxu0 0.0
      %4281 = vmatpush1.msra.mxu0 0.0
      %4282 = vmatprep.subr.mxu0 0.0
      %4283 = vmatpush1.msra.mxu0 0.0
      %4284 = vmatprep.subr.mxu0 0.0
      %4285 = vmatpush1.msra.mxu0 0.0
      %4286 = vmatprep.subr.mxu0 0.0
      %4287 = vmatpush1.msra.mxu0 0.0
      %4288 = vmatprep.subr.mxu0 0.0
      %4289 = vmatpush1.msra.mxu0 0.0
      %4290 = vmatprep.subr.mxu0 0.0
      %4291 = vmatpush1.msra.mxu0 0.0
      %4292 = vmatprep.subr.mxu0 0.0
      %4293 = vmatpush1.msra.mxu0 0.0
      %4294 = vmatprep.subr.mxu0 0.0
      %4295 = vmatpush1.msra.mxu0 0.0
      %4296 = vmatprep.subr.mxu0 0.0
      %4297 = vmatpush1.msra.mxu0 0.0
      %4298 = vmatprep.subr.mxu0 0.0
      %4299 = vmatpush1.msra.mxu0 0.0
      %4300 = vmatprep.subr.mxu0 0.0
      %4301 = vmatpush1.msra.mxu0 0.0
      %4302 = vmatprep.subr.mxu0 0.0
      %4303 = vmatpush1.msra.mxu0 0.0
      %4304 = vmatprep.subr.mxu0 0.0
      %4305 = vmatpush1.msra.mxu0 0.0
      %4306 = vmatprep.subr.mxu0 0.0
      %4307 = vmatpush1.msra.mxu0 0.0
      %4308 = vmatprep.subr.mxu0 0.0
      %4309 = vmatpush1.msra.mxu0 0.0
      %4310 = vmatprep.subr.mxu0 0.0
      %4311 = vmatpush1.msra.mxu0 0.0
      %4312 = vmatprep.subr.mxu0 0.0
      %4313 = vmatpush1.msra.mxu0 0.0
      %4314 = vmatprep.subr.mxu0 0.0
      %4315 = vmatpush1.msra.mxu0 0.0
      %4316 = vmatprep.subr.mxu0 0.0
      %4317 = vmatpush1.msra.mxu0 0.0
      %4318 = vmatprep.subr.mxu0 0.0
      %4319 = vmatpush1.msra.mxu0 0.0
      %4320 = vmatprep.subr.mxu0 0.0
      %4321 = vmatpush1.msra.mxu0 0.0
      %4322 = vmatprep.subr.mxu0 0.0
      %4323 = vmatpush1.msra.mxu0 0.0
      %4324 = vmatprep.subr.mxu0 0.0
      %4325 = vmatpush1.msra.mxu0 0.0
      %4326 = vmatprep.subr.mxu0 0.0
      %4327 = vmatpush1.msra.mxu0 0.0
      %4328 = vmatprep.mubr.f32.mxu0 0.0
      %4329 = vmatmul.mubr.f32.gmra.mrb[0].mxu0 %v4262
      %v4330 = vpop.f32.mrb[0].mxu0
      %v4331 = vadd.f32 %v4258, %v4330
      %v4332 = vpop.f32.mrb[0].mxu0
      %4333 = vdwg.mxu0
      %v4334 = vadd.s32 %v337, 4294967295
      %v4335 = vadd.s32 %v4334, 2
      %v4336 = vshra.s32 %v4335, 1
      %v4337 = vsub.s32 %v4336, 1
      %v4338 = vand.u32 %v4335, 1
      %vm4339 = vcmp.eq.s32.totalorder %v4338, 0
      %vm4340 = vmand %vm3997, %vm4339
      %vm4341 = vcmp.ge.s32.totalorder %v4337, 0
      %vm4342 = vmand %vm4340, %vm4341
      %vm4343 = vcmp.lt.s32.totalorder %v4337, 4
      %vm4344 = vmand %vm4342, %vm4343
      %v4345 = vadd.s32 %v4005, %v4337
      %v4346 = vsel %vm4344, %v4345, 4294967295
      %vm4347 = vcmp.eq.s32.totalorder %v339, %v4346
      %vm4348 = vcmp.eq.s32.totalorder %v340, %v4346
      %v4349 = vsel %vm4347, 1.0, 0.0
      %v4350 = vsel %vm4348, 1.0, 0.0
      %4351 = vmatprep.subr.mxu0 0.0
      %4352 = vmatpush1.msra.mxu0 %v4349
      %4353 = vmatprep.subr.mxu0 0.0
      %4354 = vmatpush1.msra.mxu0 %v4350
      %4355 = vmatprep.subr.mxu0 0.0
      %4356 = vmatpush1.msra.mxu0 0.0
      %4357 = vmatprep.subr.mxu0 0.0
      %4358 = vmatpush1.msra.mxu0 0.0
      %4359 = vmatprep.subr.mxu0 0.0
      %4360 = vmatpush1.msra.mxu0 0.0
      %4361 = vmatprep.subr.mxu0 0.0
      %4362 = vmatpush1.msra.mxu0 0.0
      %4363 = vmatprep.subr.mxu0 0.0
      %4364 = vmatpush1.msra.mxu0 0.0
      %4365 = vmatprep.subr.mxu0 0.0
      %4366 = vmatpush1.msra.mxu0 0.0
      %4367 = vmatprep.subr.mxu0 0.0
      %4368 = vmatpush1.msra.mxu0 0.0
      %4369 = vmatprep.subr.mxu0 0.0
      %4370 = vmatpush1.msra.mxu0 0.0
      %4371 = vmatprep.subr.mxu0 0.0
      %4372 = vmatpush1.msra.mxu0 0.0
      %4373 = vmatprep.subr.mxu0 0.0
      %4374 = vmatpush1.msra.mxu0 0.0
      %4375 = vmatprep.subr.mxu0 0.0
      %4376 = vmatpush1.msra.mxu0 0.0
      %4377 = vmatprep.subr.mxu0 0.0
      %4378 = vmatpush1.msra.mxu0 0.0
      %4379 = vmatprep.subr.mxu0 0.0
      %4380 = vmatpush1.msra.mxu0 0.0
      %4381 = vmatprep.subr.mxu0 0.0
      %4382 = vmatpush1.msra.mxu0 0.0
      %4383 = vmatprep.subr.mxu0 0.0
      %4384 = vmatpush1.msra.mxu0 0.0
      %4385 = vmatprep.subr.mxu0 0.0
      %4386 = vmatpush1.msra.mxu0 0.0
      %4387 = vmatprep.subr.mxu0 0.0
      %4388 = vmatpush1.msra.mxu0 0.0
      %4389 = vmatprep.subr.mxu0 0.0
      %4390 = vmatpush1.msra.mxu0 0.0
      %4391 = vmatprep.subr.mxu0 0.0
      %4392 = vmatpush1.msra.mxu0 0.0
      %4393 = vmatprep.subr.mxu0 0.0
      %4394 = vmatpush1.msra.mxu0 0.0
      %4395 = vmatprep.subr.mxu0 0.0
      %4396 = vmatpush1.msra.mxu0 0.0
      %4397 = vmatprep.subr.mxu0 0.0
      %4398 = vmatpush1.msra.mxu0 0.0
      %4399 = vmatprep.subr.mxu0 0.0
      %4400 = vmatpush1.msra.mxu0 0.0
      %4401 = vmatprep.subr.mxu0 0.0
      %4402 = vmatpush1.msra.mxu0 0.0
      %4403 = vmatprep.subr.mxu0 0.0
      %4404 = vmatpush1.msra.mxu0 0.0
      %4405 = vmatprep.subr.mxu0 0.0
      %4406 = vmatpush1.msra.mxu0 0.0
      %4407 = vmatprep.subr.mxu0 0.0
      %4408 = vmatpush1.msra.mxu0 0.0
      %4409 = vmatprep.subr.mxu0 0.0
      %4410 = vmatpush1.msra.mxu0 0.0
      %4411 = vmatprep.subr.mxu0 0.0
      %4412 = vmatpush1.msra.mxu0 0.0
      %4413 = vmatprep.subr.mxu0 0.0
      %4414 = vmatpush1.msra.mxu0 0.0
      %4415 = vmatprep.mubr.f32.mxu0 0.0
      %4416 = vmatmul.mubr.f32.gmra.mrb[0].mxu0 %v4014
      %v4417 = vpop.f32.mrb[0].mxu0
      %v4418 = vadd.f32 0.0, %v4417
      %v4419 = vpop.f32.mrb[0].mxu0
      %4420 = vmatprep.mubr.f32.mxu0 0.0
      %4421 = vmatmul.mubr.f32.gmra.mrb[0].mxu0 %v4017
      %v4422 = vpop.f32.mrb[0].mxu0
      %v4423 = vadd.f32 0.0, %v4422
      %v4424 = vpop.f32.mrb[0].mxu0
      %4425 = vdwg.mxu0
      %s4426 = scalar_lea.vmem %s5, 16
      %v4427 = vld [vmem:[%s4426] sm:$0xff]
      %v4429 = vsel %vm4012, %v4427, 0
      %4431 = vmatprep.subr.mxu0 0.0
      %4432 = vmatpush1.msra.mxu0 %v4418
      %4433 = vmatprep.subr.mxu0 0.0
      %4434 = vmatpush1.msra.mxu0 %v4423
      %4435 = vmatprep.subr.mxu0 0.0
      %4436 = vmatpush1.msra.mxu0 0.0
      %4437 = vmatprep.subr.mxu0 0.0
      %4438 = vmatpush1.msra.mxu0 0.0
      %4439 = vmatprep.subr.mxu0 0.0
      %4440 = vmatpush1.msra.mxu0 0.0
      %4441 = vmatprep.subr.mxu0 0.0
      %4442 = vmatpush1.msra.mxu0 0.0
      %4443 = vmatprep.subr.mxu0 0.0
      %4444 = vmatpush1.msra.mxu0 0.0
      %4445 = vmatprep.subr.mxu0 0.0
      %4446 = vmatpush1.msra.mxu0 0.0
      %4447 = vmatprep.subr.mxu0 0.0
      %4448 = vmatpush1.msra.mxu0 0.0
      %4449 = vmatprep.subr.mxu0 0.0
      %4450 = vmatpush1.msra.mxu0 0.0
      %4451 = vmatprep.subr.mxu0 0.0
      %4452 = vmatpush1.msra.mxu0 0.0
      %4453 = vmatprep.subr.mxu0 0.0
      %4454 = vmatpush1.msra.mxu0 0.0
      %4455 = vmatprep.subr.mxu0 0.0
      %4456 = vmatpush1.msra.mxu0 0.0
      %4457 = vmatprep.subr.mxu0 0.0
      %4458 = vmatpush1.msra.mxu0 0.0
      %4459 = vmatprep.subr.mxu0 0.0
      %4460 = vmatpush1.msra.mxu0 0.0
      %4461 = vmatprep.subr.mxu0 0.0
      %4462 = vmatpush1.msra.mxu0 0.0
      %4463 = vmatprep.subr.mxu0 0.0
      %4464 = vmatpush1.msra.mxu0 0.0
      %4465 = vmatprep.subr.mxu0 0.0
      %4466 = vmatpush1.msra.mxu0 0.0
      %4467 = vmatprep.subr.mxu0 0.0
      %4468 = vmatpush1.msra.mxu0 0.0
      %4469 = vmatprep.subr.mxu0 0.0
      %4470 = vmatpush1.msra.mxu0 0.0
      %4471 = vmatprep.subr.mxu0 0.0
      %4472 = vmatpush1.msra.mxu0 0.0
      %4473 = vmatprep.subr.mxu0 0.0
      %4474 = vmatpush1.msra.mxu0 0.0
      %4475 = vmatprep.subr.mxu0 0.0
      %4476 = vmatpush1.msra.mxu0 0.0
      %4477 = vmatprep.subr.mxu0 0.0
      %4478 = vmatpush1.msra.mxu0 0.0
      %4479 = vmatprep.subr.mxu0 0.0
      %4480 = vmatpush1.msra.mxu0 0.0
      %4481 = vmatprep.subr.mxu0 0.0
      %4482 = vmatpush1.msra.mxu0 0.0
      %4483 = vmatprep.subr.mxu0 0.0
      %4484 = vmatpush1.msra.mxu0 0.0
      %4485 = vmatprep.subr.mxu0 0.0
      %4486 = vmatpush1.msra.mxu0 0.0
      %4487 = vmatprep.subr.mxu0 0.0
      %4488 = vmatpush1.msra.mxu0 0.0
      %4489 = vmatprep.subr.mxu0 0.0
      %4490 = vmatpush1.msra.mxu0 0.0
      %4491 = vmatprep.subr.mxu0 0.0
      %4492 = vmatpush1.msra.mxu0 0.0
      %4493 = vmatprep.subr.mxu0 0.0
      %4494 = vmatpush1.msra.mxu0 0.0
      %4495 = vmatprep.mubr.f32.mxu0 0.0
      %4496 = vmatmul.mubr.f32.gmra.mrb[0].mxu0 %v4429
      %v4497 = vpop.f32.mrb[0].mxu0
      %v4498 = vadd.f32 0.0, %v4497
      %v4499 = vpop.f32.mrb[0].mxu0
      %4500 = vdwg.mxu0
      %v4501 = vadd.f32 %v4331, %v4498
      %v4502 = vadd.s32 %v336, 2
      %v4503 = vshra.s32 %v4502, 1
      %v4504 = vsub.s32 %v4503, 1
      %v4505 = vand.u32 %v4502, 1
      %vm4506 = vcmp.eq.s32.totalorder %v4505, 0
      %vm4507 = vcmp.ge.s32.totalorder %v4504, 0
      %vm4508 = vmand %vm4506, %vm4507
      %vm4509 = vcmp.lt.s32.totalorder %v4504, 4
      %vm4510 = vmand %vm4508, %vm4509
      %vm4511 = vmand %vm4510, %vm3999
      %vm4512 = vmand %vm4511, %vm4001
      %vm4513 = vmand %vm4512, %vm4003
      %v4514 = vmul.u32 %v4504, 4
      %v4515 = vadd.s32 %v4514, %v3991
      %v4516 = vsel %vm4513, %v4515, 4294967295
      %vm4517 = vcmp.eq.s32.totalorder %v339, %v4516
      %vm4518 = vcmp.eq.s32.totalorder %v340, %v4516
      %v4519 = vsel %vm4517, 1.0, 0.0
      %v4520 = vsel %vm4518, 1.0, 0.0
      %4521 = vmatprep.subr.mxu0 0.0
      %4522 = vmatpush1.msra.mxu0 %v4519
      %4523 = vmatprep.subr.mxu0 0.0
      %4524 = vmatpush1.msra.mxu0 %v4520
      %4525 = vmatprep.subr.mxu0 0.0
      %4526 = vmatpush1.msra.mxu0 0.0
      %4527 = vmatprep.subr.mxu0 0.0
      %4528 = vmatpush1.msra.mxu0 0.0
      %4529 = vmatprep.subr.mxu0 0.0
      %4530 = vmatpush1.msra.mxu0 0.0
      %4531 = vmatprep.subr.mxu0 0.0
      %4532 = vmatpush1.msra.mxu0 0.0
      %4533 = vmatprep.subr.mxu0 0.0
      %4534 = vmatpush1.msra.mxu0 0.0
      %4535 = vmatprep.subr.mxu0 0.0
      %4536 = vmatpush1.msra.mxu0 0.0
      %4537 = vmatprep.subr.mxu0 0.0
      %4538 = vmatpush1.msra.mxu0 0.0
      %4539 = vmatprep.subr.mxu0 0.0
      %4540 = vmatpush1.msra.mxu0 0.0
      %4541 = vmatprep.subr.mxu0 0.0
      %4542 = vmatpush1.msra.mxu0 0.0
      %4543 = vmatprep.subr.mxu0 0.0
      %4544 = vmatpush1.msra.mxu0 0.0
      %4545 = vmatprep.subr.mxu0 0.0
      %4546 = vmatpush1.msra.mxu0 0.0
      %4547 = vmatprep.subr.mxu0 0.0
      %4548 = vmatpush1.msra.mxu0 0.0
      %4549 = vmatprep.subr.mxu0 0.0
      %4550 = vmatpush1.msra.mxu0 0.0
      %4551 = vmatprep.subr.mxu0 0.0
      %4552 = vmatpush1.msra.mxu0 0.0
      %4553 = vmatprep.subr.mxu0 0.0
      %4554 = vmatpush1.msra.mxu0 0.0
      %4555 = vmatprep.subr.mxu0 0.0
      %4556 = vmatpush1.msra.mxu0 0.0
      %4557 = vmatprep.subr.mxu0 0.0
      %4558 = vmatpush1.msra.mxu0 0.0
      %4559 = vmatprep.subr.mxu0 0.0
      %4560 = vmatpush1.msra.mxu0 0.0
      %4561 = vmatprep.subr.mxu0 0.0
      %4562 = vmatpush1.msra.mxu0 0.0
      %4563 = vmatprep.subr.mxu0 0.0
      %4564 = vmatpush1.msra.mxu0 0.0
      %4565 = vmatprep.subr.mxu0 0.0
      %4566 = vmatpush1.msra.mxu0 0.0
      %4567 = vmatprep.subr.mxu0 0.0
      %4568 = vmatpush1.msra.mxu0 0.0
      %4569 = vmatprep.subr.mxu0 0.0
      %4570 = vmatpush1.msra.mxu0 0.0
      %4571 = vmatprep.subr.mxu0 0.0
      %4572 = vmatpush1.msra.mxu0 0.0
      %4573 = vmatprep.subr.mxu0 0.0
      %4574 = vmatpush1.msra.mxu0 0.0
      %4575 = vmatprep.subr.mxu0 0.0
      %4576 = vmatpush1.msra.mxu0 0.0
      %4577 = vmatprep.subr.mxu0 0.0
      %4578 = vmatpush1.msra.mxu0 0.0
      %4579 = vmatprep.subr.mxu0 0.0
      %4580 = vmatpush1.msra.mxu0 0.0
      %4581 = vmatprep.subr.mxu0 0.0
      %4582 = vmatpush1.msra.mxu0 0.0
      %4583 = vmatprep.subr.mxu0 0.0
      %4584 = vmatpush1.msra.mxu0 0.0
      %4585 = vmatprep.mubr.f32.mxu0 0.0
      %4586 = vmatmul.mubr.f32.gmra.mrb[0].mxu0 %v4014
      %v4587 = vpop.f32.mrb[0].mxu0
      %v4588 = vadd.f32 0.0, %v4587
      %v4589 = vpop.f32.mrb[0].mxu0
      %4590 = vmatprep.mubr.f32.mxu0 0.0
      %4591 = vmatmul.mubr.f32.gmra.mrb[0].mxu0 %v4017
      %v4592 = vpop.f32.mrb[0].mxu0
      %v4593 = vadd.f32 0.0, %v4592
      %v4594 = vpop.f32.mrb[0].mxu0
      %4595 = vdwg.mxu0
      %s4596 = scalar_lea.vmem %s5, 24
      %v4597 = vld [vmem:[%s4596] sm:$0xff]
      %v4599 = vsel %vm4012, %v4597, 0
      %4601 = vmatprep.subr.mxu0 0.0
      %4602 = vmatpush1.msra.mxu0 %v4588
      %4603 = vmatprep.subr.mxu0 0.0
      %4604 = vmatpush1.msra.mxu0 %v4593
      %4605 = vmatprep.subr.mxu0 0.0
      %4606 = vmatpush1.msra.mxu0 0.0
      %4607 = vmatprep.subr.mxu0 0.0
      %4608 = vmatpush1.msra.mxu0 0.0
      %4609 = vmatprep.subr.mxu0 0.0
      %4610 = vmatpush1.msra.mxu0 0.0
      %4611 = vmatprep.subr.mxu0 0.0
      %4612 = vmatpush1.msra.mxu0 0.0
      %4613 = vmatprep.subr.mxu0 0.0
      %4614 = vmatpush1.msra.mxu0 0.0
      %4615 = vmatprep.subr.mxu0 0.0
      %4616 = vmatpush1.msra.mxu0 0.0
      %4617 = vmatprep.subr.mxu0 0.0
      %4618 = vmatpush1.msra.mxu0 0.0
      %4619 = vmatprep.subr.mxu0 0.0
      %4620 = vmatpush1.msra.mxu0 0.0
      %4621 = vmatprep.subr.mxu0 0.0
      %4622 = vmatpush1.msra.mxu0 0.0
      %4623 = vmatprep.subr.mxu0 0.0
      %4624 = vmatpush1.msra.mxu0 0.0
      %4625 = vmatprep.subr.mxu0 0.0
      %4626 = vmatpush1.msra.mxu0 0.0
      %4627 = vmatprep.subr.mxu0 0.0
      %4628 = vmatpush1.msra.mxu0 0.0
      %4629 = vmatprep.subr.mxu0 0.0
      %4630 = vmatpush1.msra.mxu0 0.0
      %4631 = vmatprep.subr.mxu0 0.0
      %4632 = vmatpush1.msra.mxu0 0.0
      %4633 = vmatprep.subr.mxu0 0.0
      %4634 = vmatpush1.msra.mxu0 0.0
      %4635 = vmatprep.subr.mxu0 0.0
      %4636 = vmatpush1.msra.mxu0 0.0
      %4637 = vmatprep.subr.mxu0 0.0
      %4638 = vmatpush1.msra.mxu0 0.0
      %4639 = vmatprep.subr.mxu0 0.0
      %4640 = vmatpush1.msra.mxu0 0.0
      %4641 = vmatprep.subr.mxu0 0.0
      %4642 = vmatpush1.msra.mxu0 0.0
      %4643 = vmatprep.subr.mxu0 0.0
      %4644 = vmatpush1.msra.mxu0 0.0
      %4645 = vmatprep.subr.mxu0 0.0
      %4646 = vmatpush1.msra.mxu0 0.0
      %4647 = vmatprep.subr.mxu0 0.0
      %4648 = vmatpush1.msra.mxu0 0.0
      %4649 = vmatprep.subr.mxu0 0.0
      %4650 = vmatpush1.msra.mxu0 0.0
      %4651 = vmatprep.subr.mxu0 0.0
      %4652 = vmatpush1.msra.mxu0 0.0
      %4653 = vmatprep.subr.mxu0 0.0
      %4654 = vmatpush1.msra.mxu0 0.0
      %4655 = vmatprep.subr.mxu0 0.0
      %4656 = vmatpush1.msra.mxu0 0.0
      %4657 = vmatprep.subr.mxu0 0.0
      %4658 = vmatpush1.msra.mxu0 0.0
      %4659 = vmatprep.subr.mxu0 0.0
      %4660 = vmatpush1.msra.mxu0 0.0
      %4661 = vmatprep.subr.mxu0 0.0
      %4662 = vmatpush1.msra.mxu0 0.0
      %4663 = vmatprep.subr.mxu0 0.0
      %4664 = vmatpush1.msra.mxu0 0.0
      %4665 = vmatprep.mubr.f32.mxu0 0.0
      %4666 = vmatmul.mubr.f32.gmra.mrb[0].mxu0 %v4599
      %v4667 = vpop.f32.mrb[0].mxu0
      %v4668 = vadd.f32 0.0, %v4667
      %v4669 = vpop.f32.mrb[0].mxu0
      %4670 = vdwg.mxu0
      %v4671 = vadd.f32 %v4501, %v4668
      %vm4672 = vmand %vm4510, %vm4099
      %vm4673 = vmand %vm4672, %vm4101
      %vm4674 = vmand %vm4673, %vm4103
      %v4675 = vadd.s32 %v4514, %v4097
      %v4676 = vsel %vm4674, %v4675, 4294967295
      %vm4677 = vcmp.eq.s32.totalorder %v339, %v4676
      %vm4678 = vcmp.eq.s32.totalorder %v340, %v4676
      %v4679 = vsel %vm4677, 1.0, 0.0
      %v4680 = vsel %vm4678, 1.0, 0.0
      %4681 = vmatprep.subr.mxu0 0.0
      %4682 = vmatpush1.msra.mxu0 %v4679
      %4683 = vmatprep.subr.mxu0 0.0
      %4684 = vmatpush1.msra.mxu0 %v4680
      %4685 = vmatprep.subr.mxu0 0.0
      %4686 = vmatpush1.msra.mxu0 0.0
      %4687 = vmatprep.subr.mxu0 0.0
      %4688 = vmatpush1.msra.mxu0 0.0
      %4689 = vmatprep.subr.mxu0 0.0
      %4690 = vmatpush1.msra.mxu0 0.0
      %4691 = vmatprep.subr.mxu0 0.0
      %4692 = vmatpush1.msra.mxu0 0.0
      %4693 = vmatprep.subr.mxu0 0.0
      %4694 = vmatpush1.msra.mxu0 0.0
      %4695 = vmatprep.subr.mxu0 0.0
      %4696 = vmatpush1.msra.mxu0 0.0
      %4697 = vmatprep.subr.mxu0 0.0
      %4698 = vmatpush1.msra.mxu0 0.0
      %4699 = vmatprep.subr.mxu0 0.0
      %4700 = vmatpush1.msra.mxu0 0.0
      %4701 = vmatprep.subr.mxu0 0.0
      %4702 = vmatpush1.msra.mxu0 0.0
      %4703 = vmatprep.subr.mxu0 0.0
      %4704 = vmatpush1.msra.mxu0 0.0
      %4705 = vmatprep.subr.mxu0 0.0
      %4706 = vmatpush1.msra.mxu0 0.0
      %4707 = vmatprep.subr.mxu0 0.0
      %4708 = vmatpush1.msra.mxu0 0.0
      %4709 = vmatprep.subr.mxu0 0.0
      %4710 = vmatpush1.msra.mxu0 0.0
      %4711 = vmatprep.subr.mxu0 0.0
      %4712 = vmatpush1.msra.mxu0 0.0
      %4713 = vmatprep.subr.mxu0 0.0
      %4714 = vmatpush1.msra.mxu0 0.0
      %4715 = vmatprep.subr.mxu0 0.0
      %4716 = vmatpush1.msra.mxu0 0.0
      %4717 = vmatprep.subr.mxu0 0.0
      %4718 = vmatpush1.msra.mxu0 0.0
      %4719 = vmatprep.subr.mxu0 0.0
      %4720 = vmatpush1.msra.mxu0 0.0
      %4721 = vmatprep.subr.mxu0 0.0
      %4722 = vmatpush1.msra.mxu0 0.0
      %4723 = vmatprep.subr.mxu0 0.0
      %4724 = vmatpush1.msra.mxu0 0.0
      %4725 = vmatprep.subr.mxu0 0.0
      %4726 = vmatpush1.msra.mxu0 0.0
      %4727 = vmatprep.subr.mxu0 0.0
      %4728 = vmatpush1.msra.mxu0 0.0
      %4729 = vmatprep.subr.mxu0 0.0
      %4730 = vmatpush1.msra.mxu0 0.0
      %4731 = vmatprep.subr.mxu0 0.0
      %4732 = vmatpush1.msra.mxu0 0.0
      %4733 = vmatprep.subr.mxu0 0.0
      %4734 = vmatpush1.msra.mxu0 0.0
      %4735 = vmatprep.subr.mxu0 0.0
      %4736 = vmatpush1.msra.mxu0 0.0
      %4737 = vmatprep.subr.mxu0 0.0
      %4738 = vmatpush1.msra.mxu0 0.0
      %4739 = vmatprep.subr.mxu0 0.0
      %4740 = vmatpush1.msra.mxu0 0.0
      %4741 = vmatprep.subr.mxu0 0.0
      %4742 = vmatpush1.msra.mxu0 0.0
      %4743 = vmatprep.subr.mxu0 0.0
      %4744 = vmatpush1.msra.mxu0 0.0
      %4745 = vmatprep.mubr.f32.mxu0 0.0
      %4746 = vmatmul.mubr.f32.gmra.mrb[0].mxu0 %v4014
      %v4747 = vpop.f32.mrb[0].mxu0
      %v4748 = vadd.f32 0.0, %v4747
      %v4749 = vpop.f32.mrb[0].mxu0
      %4750 = vmatprep.mubr.f32.mxu0 0.0
      %4751 = vmatmul.mubr.f32.gmra.mrb[0].mxu0 %v4017
      %v4752 = vpop.f32.mrb[0].mxu0
      %v4753 = vadd.f32 0.0, %v4752
      %v4754 = vpop.f32.mrb[0].mxu0
      %4755 = vdwg.mxu0
      %s4756 = scalar_lea.vmem %s5, 32
      %v4757 = vld [vmem:[%s4756] sm:$0xff]
      %v4759 = vsel %vm4012, %v4757, 0
      %4761 = vmatprep.subr.mxu0 0.0
      %4762 = vmatpush1.msra.mxu0 %v4748
      %4763 = vmatprep.subr.mxu0 0.0
      %4764 = vmatpush1.msra.mxu0 %v4753
      %4765 = vmatprep.subr.mxu0 0.0
      %4766 = vmatpush1.msra.mxu0 0.0
      %4767 = vmatprep.subr.mxu0 0.0
      %4768 = vmatpush1.msra.mxu0 0.0
      %4769 = vmatprep.subr.mxu0 0.0
      %4770 = vmatpush1.msra.mxu0 0.0
      %4771 = vmatprep.subr.mxu0 0.0
      %4772 = vmatpush1.msra.mxu0 0.0
      %4773 = vmatprep.subr.mxu0 0.0
      %4774 = vmatpush1.msra.mxu0 0.0
      %4775 = vmatprep.subr.mxu0 0.0
      %4776 = vmatpush1.msra.mxu0 0.0
      %4777 = vmatprep.subr.mxu0 0.0
      %4778 = vmatpush1.msra.mxu0 0.0
      %4779 = vmatprep.subr.mxu0 0.0
      %4780 = vmatpush1.msra.mxu0 0.0
      %4781 = vmatprep.subr.mxu0 0.0
      %4782 = vmatpush1.msra.mxu0 0.0
      %4783 = vmatprep.subr.mxu0 0.0
      %4784 = vmatpush1.msra.mxu0 0.0
      %4785 = vmatprep.subr.mxu0 0.0
      %4786 = vmatpush1.msra.mxu0 0.0
      %4787 = vmatprep.subr.mxu0 0.0
      %4788 = vmatpush1.msra.mxu0 0.0
      %4789 = vmatprep.subr.mxu0 0.0
      %4790 = vmatpush1.msra.mxu0 0.0
      %4791 = vmatprep.subr.mxu0 0.0
      %4792 = vmatpush1.msra.mxu0 0.0
      %4793 = vmatprep.subr.mxu0 0.0
      %4794 = vmatpush1.msra.mxu0 0.0
      %4795 = vmatprep.subr.mxu0 0.0
      %4796 = vmatpush1.msra.mxu0 0.0
      %4797 = vmatprep.subr.mxu0 0.0
      %4798 = vmatpush1.msra.mxu0 0.0
      %4799 = vmatprep.subr.mxu0 0.0
      %4800 = vmatpush1.msra.mxu0 0.0
      %4801 = vmatprep.subr.mxu0 0.0
      %4802 = vmatpush1.msra.mxu0 0.0
      %4803 = vmatprep.subr.mxu0 0.0
      %4804 = vmatpush1.msra.mxu0 0.0
      %4805 = vmatprep.subr.mxu0 0.0
      %4806 = vmatpush1.msra.mxu0 0.0
      %4807 = vmatprep.subr.mxu0 0.0
      %4808 = vmatpush1.msra.mxu0 0.0
      %4809 = vmatprep.subr.mxu0 0.0
      %4810 = vmatpush1.msra.mxu0 0.0
      %4811 = vmatprep.subr.mxu0 0.0
      %4812 = vmatpush1.msra.mxu0 0.0
      %4813 = vmatprep.subr.mxu0 0.0
      %4814 = vmatpush1.msra.mxu0 0.0
      %4815 = vmatprep.subr.mxu0 0.0
      %4816 = vmatpush1.msra.mxu0 0.0
      %4817 = vmatprep.subr.mxu0 0.0
      %4818 = vmatpush1.msra.mxu0 0.0
      %4819 = vmatprep.subr.mxu0 0.0
      %4820 = vmatpush1.msra.mxu0 0.0
      %4821 = vmatprep.subr.mxu0 0.0
      %4822 = vmatpush1.msra.mxu0 0.0
      %4823 = vmatprep.subr.mxu0 0.0
      %4824 = vmatpush1.msra.mxu0 0.0
      %4825 = vmatprep.mubr.f32.mxu0 0.0
      %4826 = vmatmul.mubr.f32.gmra.mrb[0].mxu0 %v4759
      %v4827 = vpop.f32.mrb[0].mxu0
      %v4828 = vadd.f32 0.0, %v4827
      %v4829 = vpop.f32.mrb[0].mxu0
      %4830 = vdwg.mxu0
      %v4831 = vadd.f32 %v4671, %v4828
      %vm4832 = vmand %vm4510, %vm4339
      %vm4833 = vmand %vm4832, %vm4341
      %vm4834 = vmand %vm4833, %vm4343
      %v4835 = vadd.s32 %v4514, %v4337
      %v4836 = vsel %vm4834, %v4835, 4294967295
      %vm4837 = vcmp.eq.s32.totalorder %v339, %v4836
      %vm4838 = vcmp.eq.s32.totalorder %v340, %v4836
      %v4839 = vsel %vm4837, 1.0, 0.0
      %v4840 = vsel %vm4838, 1.0, 0.0
      %4841 = vmatprep.subr.mxu0 0.0
      %4842 = vmatpush1.msra.mxu0 %v4839
      %4843 = vmatprep.subr.mxu0 0.0
      %4844 = vmatpush1.msra.mxu0 %v4840
      %4845 = vmatprep.subr.mxu0 0.0
      %4846 = vmatpush1.msra.mxu0 0.0
      %4847 = vmatprep.subr.mxu0 0.0
      %4848 = vmatpush1.msra.mxu0 0.0
      %4849 = vmatprep.subr.mxu0 0.0
      %4850 = vmatpush1.msra.mxu0 0.0
      %4851 = vmatprep.subr.mxu0 0.0
      %4852 = vmatpush1.msra.mxu0 0.0
      %4853 = vmatprep.subr.mxu0 0.0
      %4854 = vmatpush1.msra.mxu0 0.0
      %4855 = vmatprep.subr.mxu0 0.0
      %4856 = vmatpush1.msra.mxu0 0.0
      %4857 = vmatprep.subr.mxu0 0.0
      %4858 = vmatpush1.msra.mxu0 0.0
      %4859 = vmatprep.subr.mxu0 0.0
      %4860 = vmatpush1.msra.mxu0 0.0
      %4861 = vmatprep.subr.mxu0 0.0
      %4862 = vmatpush1.msra.mxu0 0.0
      %4863 = vmatprep.subr.mxu0 0.0
      %4864 = vmatpush1.msra.mxu0 0.0
      %4865 = vmatprep.subr.mxu0 0.0
      %4866 = vmatpush1.msra.mxu0 0.0
      %4867 = vmatprep.subr.mxu0 0.0
      %4868 = vmatpush1.msra.mxu0 0.0
      %4869 = vmatprep.subr.mxu0 0.0
      %4870 = vmatpush1.msra.mxu0 0.0
      %4871 = vmatprep.subr.mxu0 0.0
      %4872 = vmatpush1.msra.mxu0 0.0
      %4873 = vmatprep.subr.mxu0 0.0
      %4874 = vmatpush1.msra.mxu0 0.0
      %4875 = vmatprep.subr.mxu0 0.0
      %4876 = vmatpush1.msra.mxu0 0.0
      %4877 = vmatprep.subr.mxu0 0.0
      %4878 = vmatpush1.msra.mxu0 0.0
      %4879 = vmatprep.subr.mxu0 0.0
      %4880 = vmatpush1.msra.mxu0 0.0
      %4881 = vmatprep.subr.mxu0 0.0
      %4882 = vmatpush1.msra.mxu0 0.0
      %4883 = vmatprep.subr.mxu0 0.0
      %4884 = vmatpush1.msra.mxu0 0.0
      %4885 = vmatprep.subr.mxu0 0.0
      %4886 = vmatpush1.msra.mxu0 0.0
      %4887 = vmatprep.subr.mxu0 0.0
      %4888 = vmatpush1.msra.mxu0 0.0
      %4889 = vmatprep.subr.mxu0 0.0
      %4890 = vmatpush1.msra.mxu0 0.0
      %4891 = vmatprep.subr.mxu0 0.0
      %4892 = vmatpush1.msra.mxu0 0.0
      %4893 = vmatprep.subr.mxu0 0.0
      %4894 = vmatpush1.msra.mxu0 0.0
      %4895 = vmatprep.subr.mxu0 0.0
      %4896 = vmatpush1.msra.mxu0 0.0
      %4897 = vmatprep.subr.mxu0 0.0
      %4898 = vmatpush1.msra.mxu0 0.0
      %4899 = vmatprep.subr.mxu0 0.0
      %4900 = vmatpush1.msra.mxu0 0.0
      %4901 = vmatprep.subr.mxu0 0.0
      %4902 = vmatpush1.msra.mxu0 0.0
      %4903 = vmatprep.subr.mxu0 0.0
      %4904 = vmatpush1.msra.mxu0 0.0
      %4905 = vmatprep.mubr.f32.mxu0 0.0
      %4906 = vmatmul.mubr.f32.gmra.mrb[0].mxu0 %v4014
      %v4907 = vpop.f32.mrb[0].mxu0
      %v4908 = vadd.f32 0.0, %v4907
      %v4909 = vpop.f32.mrb[0].mxu0
      %4910 = vmatprep.mubr.f32.mxu0 0.0
      %4911 = vmatmul.mubr.f32.gmra.mrb[0].mxu0 %v4017
      %v4912 = vpop.f32.mrb[0].mxu0
      %v4913 = vadd.f32 0.0, %v4912
      %v4914 = vpop.f32.mrb[0].mxu0
      %4915 = vdwg.mxu0
      %s4916 = scalar_lea.vmem %s5, 40
      %v4917 = vld [vmem:[%s4916] sm:$0xff]
      %v4919 = vsel %vm4012, %v4917, 0
      %4921 = vmatprep.subr.mxu0 0.0
      %4922 = vmatpush1.msra.mxu0 %v4908
      %4923 = vmatprep.subr.mxu0 0.0
      %4924 = vmatpush1.msra.mxu0 %v4913
      %4925 = vmatprep.subr.mxu0 0.0
      %4926 = vmatpush1.msra.mxu0 0.0
      %4927 = vmatprep.subr.mxu0 0.0
      %4928 = vmatpush1.msra.mxu0 0.0
      %4929 = vmatprep.subr.mxu0 0.0
      %4930 = vmatpush1.msra.mxu0 0.0
      %4931 = vmatprep.subr.mxu0 0.0
      %4932 = vmatpush1.msra.mxu0 0.0
      %4933 = vmatprep.subr.mxu0 0.0
      %4934 = vmatpush1.msra.mxu0 0.0
      %4935 = vmatprep.subr.mxu0 0.0
      %4936 = vmatpush1.msra.mxu0 0.0
      %4937 = vmatprep.subr.mxu0 0.0
      %4938 = vmatpush1.msra.mxu0 0.0
      %4939 = vmatprep.subr.mxu0 0.0
      %4940 = vmatpush1.msra.mxu0 0.0
      %4941 = vmatprep.subr.mxu0 0.0
      %4942 = vmatpush1.msra.mxu0 0.0
      %4943 = vmatprep.subr.mxu0 0.0
      %4944 = vmatpush1.msra.mxu0 0.0
      %4945 = vmatprep.subr.mxu0 0.0
      %4946 = vmatpush1.msra.mxu0 0.0
      %4947 = vmatprep.subr.mxu0 0.0
      %4948 = vmatpush1.msra.mxu0 0.0
      %4949 = vmatprep.subr.mxu0 0.0
      %4950 = vmatpush1.msra.mxu0 0.0
      %4951 = vmatprep.subr.mxu0 0.0
      %4952 = vmatpush1.msra.mxu0 0.0
      %4953 = vmatprep.subr.mxu0 0.0
      %4954 = vmatpush1.msra.mxu0 0.0
      %4955 = vmatprep.subr.mxu0 0.0
      %4956 = vmatpush1.msra.mxu0 0.0
      %4957 = vmatprep.subr.mxu0 0.0
      %4958 = vmatpush1.msra.mxu0 0.0
      %4959 = vmatprep.subr.mxu0 0.0
      %4960 = vmatpush1.msra.mxu0 0.0
      %4961 = vmatprep.subr.mxu0 0.0
      %4962 = vmatpush1.msra.mxu0 0.0
      %4963 = vmatprep.subr.mxu0 0.0
      %4964 = vmatpush1.msra.mxu0 0.0
      %4965 = vmatprep.subr.mxu0 0.0
      %4966 = vmatpush1.msra.mxu0 0.0
      %4967 = vmatprep.subr.mxu0 0.0
      %4968 = vmatpush1.msra.mxu0 0.0
      %4969 = vmatprep.subr.mxu0 0.0
      %4970 = vmatpush1.msra.mxu0 0.0
      %4971 = vmatprep.subr.mxu0 0.0
      %4972 = vmatpush1.msra.mxu0 0.0
      %4973 = vmatprep.subr.mxu0 0.0
      %4974 = vmatpush1.msra.mxu0 0.0
      %4975 = vmatprep.subr.mxu0 0.0
      %4976 = vmatpush1.msra.mxu0 0.0
      %4977 = vmatprep.subr.mxu0 0.0
      %4978 = vmatpush1.msra.mxu0 0.0
      %4979 = vmatprep.subr.mxu0 0.0
      %4980 = vmatpush1.msra.mxu0 0.0
      %4981 = vmatprep.subr.mxu0 0.0
      %4982 = vmatpush1.msra.mxu0 0.0
      %4983 = vmatprep.subr.mxu0 0.0
      %4984 = vmatpush1.msra.mxu0 0.0
      %4985 = vmatprep.mubr.f32.mxu0 0.0
      %4986 = vmatmul.mubr.f32.gmra.mrb[0].mxu0 %v4919
      %v4987 = vpop.f32.mrb[0].mxu0
      %v4988 = vadd.f32 0.0, %v4987
      %v4989 = vpop.f32.mrb[0].mxu0
      %4990 = vdwg.mxu0
      %v4991 = vadd.f32 %v4831, %v4988
      %v4992 = vadd.s32 %v336, 4294967295
      %v4993 = vadd.s32 %v4992, 2
      %v4994 = vshra.s32 %v4993, 1
      %v4995 = vsub.s32 %v4994, 1
      %v4996 = vand.u32 %v4993, 1
      %vm4997 = vcmp.eq.s32.totalorder %v4996, 0
      %vm4998 = vcmp.ge.s32.totalorder %v4995, 0
      %vm4999 = vmand %vm4997, %vm4998
      %vm5000 = vcmp.lt.s32.totalorder %v4995, 4
      %vm5001 = vmand %vm4999, %vm5000
      %vm5002 = vmand %vm5001, %vm3999
      %vm5003 = vmand %vm5002, %vm4001
      %vm5004 = vmand %vm5003, %vm4003
      %v5005 = vmul.u32 %v4995, 4
      %v5006 = vadd.s32 %v5005, %v3991
      %v5007 = vsel %vm5004, %v5006, 4294967295
      %vm5008 = vcmp.eq.s32.totalorder %v339, %v5007
      %vm5009 = vcmp.eq.s32.totalorder %v340, %v5007
      %v5010 = vsel %vm5008, 1.0, 0.0
      %v5011 = vsel %vm5009, 1.0, 0.0
      %5012 = vmatprep.subr.mxu0 0.0
      %5013 = vmatpush1.msra.mxu0 %v5010
      %5014 = vmatprep.subr.mxu0 0.0
      %5015 = vmatpush1.msra.mxu0 %v5011
      %5016 = vmatprep.subr.mxu0 0.0
      %5017 = vmatpush1.msra.mxu0 0.0
      %5018 = vmatprep.subr.mxu0 0.0
      %5019 = vmatpush1.msra.mxu0 0.0
      %5020 = vmatprep.subr.mxu0 0.0
      %5021 = vmatpush1.msra.mxu0 0.0
      %5022 = vmatprep.subr.mxu0 0.0
      %5023 = vmatpush1.msra.mxu0 0.0
      %5024 = vmatprep.subr.mxu0 0.0
      %5025 = vmatpush1.msra.mxu0 0.0
      %5026 = vmatprep.subr.mxu0 0.0
      %5027 = vmatpush1.msra.mxu0 0.0
      %5028 = vmatprep.subr.mxu0 0.0
      %5029 = vmatpush1.msra.mxu0 0.0
      %5030 = vmatprep.subr.mxu0 0.0
      %5031 = vmatpush1.msra.mxu0 0.0
      %5032 = vmatprep.subr.mxu0 0.0
      %5033 = vmatpush1.msra.mxu0 0.0
      %5034 = vmatprep.subr.mxu0 0.0
      %5035 = vmatpush1.msra.mxu0 0.0
      %5036 = vmatprep.subr.mxu0 0.0
      %5037 = vmatpush1.msra.mxu0 0.0
      %5038 = vmatprep.subr.mxu0 0.0
      %5039 = vmatpush1.msra.mxu0 0.0
      %5040 = vmatprep.subr.mxu0 0.0
      %5041 = vmatpush1.msra.mxu0 0.0
      %5042 = vmatprep.subr.mxu0 0.0
      %5043 = vmatpush1.msra.mxu0 0.0
      %5044 = vmatprep.subr.mxu0 0.0
      %5045 = vmatpush1.msra.mxu0 0.0
      %5046 = vmatprep.subr.mxu0 0.0
      %5047 = vmatpush1.msra.mxu0 0.0
      %5048 = vmatprep.subr.mxu0 0.0
      %5049 = vmatpush1.msra.mxu0 0.0
      %5050 = vmatprep.subr.mxu0 0.0
      %5051 = vmatpush1.msra.mxu0 0.0
      %5052 = vmatprep.subr.mxu0 0.0
      %5053 = vmatpush1.msra.mxu0 0.0
      %5054 = vmatprep.subr.mxu0 0.0
      %5055 = vmatpush1.msra.mxu0 0.0
      %5056 = vmatprep.subr.mxu0 0.0
      %5057 = vmatpush1.msra.mxu0 0.0
      %5058 = vmatprep.subr.mxu0 0.0
      %5059 = vmatpush1.msra.mxu0 0.0
      %5060 = vmatprep.subr.mxu0 0.0
      %5061 = vmatpush1.msra.mxu0 0.0
      %5062 = vmatprep.subr.mxu0 0.0
      %5063 = vmatpush1.msra.mxu0 0.0
      %5064 = vmatprep.subr.mxu0 0.0
      %5065 = vmatpush1.msra.mxu0 0.0
      %5066 = vmatprep.subr.mxu0 0.0
      %5067 = vmatpush1.msra.mxu0 0.0
      %5068 = vmatprep.subr.mxu0 0.0
      %5069 = vmatpush1.msra.mxu0 0.0
      %5070 = vmatprep.subr.mxu0 0.0
      %5071 = vmatpush1.msra.mxu0 0.0
      %5072 = vmatprep.subr.mxu0 0.0
      %5073 = vmatpush1.msra.mxu0 0.0
      %5074 = vmatprep.subr.mxu0 0.0
      %5075 = vmatpush1.msra.mxu0 0.0
      %5076 = vmatprep.mubr.f32.mxu0 0.0
      %5077 = vmatmul.mubr.f32.gmra.mrb[0].mxu0 %v4014
      %v5078 = vpop.f32.mrb[0].mxu0
      %v5079 = vadd.f32 0.0, %v5078
      %v5080 = vpop.f32.mrb[0].mxu0
      %5081 = vmatprep.mubr.f32.mxu0 0.0
      %5082 = vmatmul.mubr.f32.gmra.mrb[0].mxu0 %v4017
      %v5083 = vpop.f32.mrb[0].mxu0
      %v5084 = vadd.f32 0.0, %v5083
      %v5085 = vpop.f32.mrb[0].mxu0
      %5086 = vdwg.mxu0
      %s5087 = scalar_lea.vmem %s5, 48
      %v5088 = vld [vmem:[%s5087] sm:$0xff]
      %v5090 = vsel %vm4012, %v5088, 0
      %5092 = vmatprep.subr.mxu0 0.0
      %5093 = vmatpush1.msra.mxu0 %v5079
      %5094 = vmatprep.subr.mxu0 0.0
      %5095 = vmatpush1.msra.mxu0 %v5084
      %5096 = vmatprep.subr.mxu0 0.0
      %5097 = vmatpush1.msra.mxu0 0.0
      %5098 = vmatprep.subr.mxu0 0.0
      %5099 = vmatpush1.msra.mxu0 0.0
      %5100 = vmatprep.subr.mxu0 0.0
      %5101 = vmatpush1.msra.mxu0 0.0
      %5102 = vmatprep.subr.mxu0 0.0
      %5103 = vmatpush1.msra.mxu0 0.0
      %5104 = vmatprep.subr.mxu0 0.0
      %5105 = vmatpush1.msra.mxu0 0.0
      %5106 = vmatprep.subr.mxu0 0.0
      %5107 = vmatpush1.msra.mxu0 0.0
      %5108 = vmatprep.subr.mxu0 0.0
      %5109 = vmatpush1.msra.mxu0 0.0
      %5110 = vmatprep.subr.mxu0 0.0
      %5111 = vmatpush1.msra.mxu0 0.0
      %5112 = vmatprep.subr.mxu0 0.0
      %5113 = vmatpush1.msra.mxu0 0.0
      %5114 = vmatprep.subr.mxu0 0.0
      %5115 = vmatpush1.msra.mxu0 0.0
      %5116 = vmatprep.subr.mxu0 0.0
      %5117 = vmatpush1.msra.mxu0 0.0
      %5118 = vmatprep.subr.mxu0 0.0
      %5119 = vmatpush1.msra.mxu0 0.0
      %5120 = vmatprep.subr.mxu0 0.0
      %5121 = vmatpush1.msra.mxu0 0.0
      %5122 = vmatprep.subr.mxu0 0.0
      %5123 = vmatpush1.msra.mxu0 0.0
      %5124 = vmatprep.subr.mxu0 0.0
      %5125 = vmatpush1.msra.mxu0 0.0
      %5126 = vmatprep.subr.mxu0 0.0
      %5127 = vmatpush1.msra.mxu0 0.0
      %5128 = vmatprep.subr.mxu0 0.0
      %5129 = vmatpush1.msra.mxu0 0.0
      %5130 = vmatprep.subr.mxu0 0.0
      %5131 = vmatpush1.msra.mxu0 0.0
      %5132 = vmatprep.subr.mxu0 0.0
      %5133 = vmatpush1.msra.mxu0 0.0
      %5134 = vmatprep.subr.mxu0 0.0
      %5135 = vmatpush1.msra.mxu0 0.0
      %5136 = vmatprep.subr.mxu0 0.0
      %5137 = vmatpush1.msra.mxu0 0.0
      %5138 = vmatprep.subr.mxu0 0.0
      %5139 = vmatpush1.msra.mxu0 0.0
      %5140 = vmatprep.subr.mxu0 0.0
      %5141 = vmatpush1.msra.mxu0 0.0
      %5142 = vmatprep.subr.mxu0 0.0
      %5143 = vmatpush1.msra.mxu0 0.0
      %5144 = vmatprep.subr.mxu0 0.0
      %5145 = vmatpush1.msra.mxu0 0.0
      %5146 = vmatprep.subr.mxu0 0.0
      %5147 = vmatpush1.msra.mxu0 0.0
      %5148 = vmatprep.subr.mxu0 0.0
      %5149 = vmatpush1.msra.mxu0 0.0
      %5150 = vmatprep.subr.mxu0 0.0
      %5151 = vmatpush1.msra.mxu0 0.0
      %5152 = vmatprep.subr.mxu0 0.0
      %5153 = vmatpush1.msra.mxu0 0.0
      %5154 = vmatprep.subr.mxu0 0.0
      %5155 = vmatpush1.msra.mxu0 0.0
      %5156 = vmatprep.mubr.f32.mxu0 0.0
      %5157 = vmatmul.mubr.f32.gmra.mrb[0].mxu0 %v5090
      %v5158 = vpop.f32.mrb[0].mxu0
      %v5159 = vadd.f32 0.0, %v5158
      %v5160 = vpop.f32.mrb[0].mxu0
      %5161 = vdwg.mxu0
      %v5162 = vadd.f32 %v4991, %v5159
      %vm5163 = vmand %vm5001, %vm4099
      %vm5164 = vmand %vm5163, %vm4101
      %vm5165 = vmand %vm5164, %vm4103
      %v5166 = vadd.s32 %v5005, %v4097
      %v5167 = vsel %vm5165, %v5166, 4294967295
      %vm5168 = vcmp.eq.s32.totalorder %v339, %v5167
      %vm5169 = vcmp.eq.s32.totalorder %v340, %v5167
      %v5170 = vsel %vm5168, 1.0, 0.0
      %v5171 = vsel %vm5169, 1.0, 0.0
      %5172 = vmatprep.subr.mxu0 0.0
      %5173 = vmatpush1.msra.mxu0 %v5170
      %5174 = vmatprep.subr.mxu0 0.0
      %5175 = vmatpush1.msra.mxu0 %v5171
      %5176 = vmatprep.subr.mxu0 0.0
      %5177 = vmatpush1.msra.mxu0 0.0
      %5178 = vmatprep.subr.mxu0 0.0
      %5179 = vmatpush1.msra.mxu0 0.0
      %5180 = vmatprep.subr.mxu0 0.0
      %5181 = vmatpush1.msra.mxu0 0.0
      %5182 = vmatprep.subr.mxu0 0.0
      %5183 = vmatpush1.msra.mxu0 0.0
      %5184 = vmatprep.subr.mxu0 0.0
      %5185 = vmatpush1.msra.mxu0 0.0
      %5186 = vmatprep.subr.mxu0 0.0
      %5187 = vmatpush1.msra.mxu0 0.0
      %5188 = vmatprep.subr.mxu0 0.0
      %5189 = vmatpush1.msra.mxu0 0.0
      %5190 = vmatprep.subr.mxu0 0.0
      %5191 = vmatpush1.msra.mxu0 0.0
      %5192 = vmatprep.subr.mxu0 0.0
      %5193 = vmatpush1.msra.mxu0 0.0
      %5194 = vmatprep.subr.mxu0 0.0
      %5195 = vmatpush1.msra.mxu0 0.0
      %5196 = vmatprep.subr.mxu0 0.0
      %5197 = vmatpush1.msra.mxu0 0.0
      %5198 = vmatprep.subr.mxu0 0.0
      %5199 = vmatpush1.msra.mxu0 0.0
      %5200 = vmatprep.subr.mxu0 0.0
      %5201 = vmatpush1.msra.mxu0 0.0
      %5202 = vmatprep.subr.mxu0 0.0
      %5203 = vmatpush1.msra.mxu0 0.0
      %5204 = vmatprep.subr.mxu0 0.0
      %5205 = vmatpush1.msra.mxu0 0.0
      %5206 = vmatprep.subr.mxu0 0.0
      %5207 = vmatpush1.msra.mxu0 0.0
      %5208 = vmatprep.subr.mxu0 0.0
      %5209 = vmatpush1.msra.mxu0 0.0
      %5210 = vmatprep.subr.mxu0 0.0
      %5211 = vmatpush1.msra.mxu0 0.0
      %5212 = vmatprep.subr.mxu0 0.0
      %5213 = vmatpush1.msra.mxu0 0.0
      %5214 = vmatprep.subr.mxu0 0.0
      %5215 = vmatpush1.msra.mxu0 0.0
      %5216 = vmatprep.subr.mxu0 0.0
      %5217 = vmatpush1.msra.mxu0 0.0
      %5218 = vmatprep.subr.mxu0 0.0
      %5219 = vmatpush1.msra.mxu0 0.0
      %5220 = vmatprep.subr.mxu0 0.0
      %5221 = vmatpush1.msra.mxu0 0.0
      %5222 = vmatprep.subr.mxu0 0.0
      %5223 = vmatpush1.msra.mxu0 0.0
      %5224 = vmatprep.subr.mxu0 0.0
      %5225 = vmatpush1.msra.mxu0 0.0
      %5226 = vmatprep.subr.mxu0 0.0
      %5227 = vmatpush1.msra.mxu0 0.0
      %5228 = vmatprep.subr.mxu0 0.0
      %5229 = vmatpush1.msra.mxu0 0.0
      %5230 = vmatprep.subr.mxu0 0.0
      %5231 = vmatpush1.msra.mxu0 0.0
      %5232 = vmatprep.subr.mxu0 0.0
      %5233 = vmatpush1.msra.mxu0 0.0
      %5234 = vmatprep.subr.mxu0 0.0
      %5235 = vmatpush1.msra.mxu0 0.0
      %5236 = vmatprep.mubr.f32.mxu0 0.0
      %5237 = vmatmul.mubr.f32.gmra.mrb[0].mxu0 %v4014
      %v5238 = vpop.f32.mrb[0].mxu0
      %v5239 = vadd.f32 0.0, %v5238
      %v5240 = vpop.f32.mrb[0].mxu0
      %5241 = vmatprep.mubr.f32.mxu0 0.0
      %5242 = vmatmul.mubr.f32.gmra.mrb[0].mxu0 %v4017
      %v5243 = vpop.f32.mrb[0].mxu0
      %v5244 = vadd.f32 0.0, %v5243
      %v5245 = vpop.f32.mrb[0].mxu0
      %5246 = vdwg.mxu0
      %s5247 = scalar_lea.vmem %s5, 56
      %v5248 = vld [vmem:[%s5247] sm:$0xff]
      %v5250 = vsel %vm4012, %v5248, 0
      %5252 = vmatprep.subr.mxu0 0.0
      %5253 = vmatpush1.msra.mxu0 %v5239
      %5254 = vmatprep.subr.mxu0 0.0
      %5255 = vmatpush1.msra.mxu0 %v5244
      %5256 = vmatprep.subr.mxu0 0.0
      %5257 = vmatpush1.msra.mxu0 0.0
      %5258 = vmatprep.subr.mxu0 0.0
      %5259 = vmatpush1.msra.mxu0 0.0
      %5260 = vmatprep.subr.mxu0 0.0
      %5261 = vmatpush1.msra.mxu0 0.0
      %5262 = vmatprep.subr.mxu0 0.0
      %5263 = vmatpush1.msra.mxu0 0.0
      %5264 = vmatprep.subr.mxu0 0.0
      %5265 = vmatpush1.msra.mxu0 0.0
      %5266 = vmatprep.subr.mxu0 0.0
      %5267 = vmatpush1.msra.mxu0 0.0
      %5268 = vmatprep.subr.mxu0 0.0
      %5269 = vmatpush1.msra.mxu0 0.0
      %5270 = vmatprep.subr.mxu0 0.0
      %5271 = vmatpush1.msra.mxu0 0.0
      %5272 = vmatprep.subr.mxu0 0.0
      %5273 = vmatpush1.msra.mxu0 0.0
      %5274 = vmatprep.subr.mxu0 0.0
      %5275 = vmatpush1.msra.mxu0 0.0
      %5276 = vmatprep.subr.mxu0 0.0
      %5277 = vmatpush1.msra.mxu0 0.0
      %5278 = vmatprep.subr.mxu0 0.0
      %5279 = vmatpush1.msra.mxu0 0.0
      %5280 = vmatprep.subr.mxu0 0.0
      %5281 = vmatpush1.msra.mxu0 0.0
      %5282 = vmatprep.subr.mxu0 0.0
      %5283 = vmatpush1.msra.mxu0 0.0
      %5284 = vmatprep.subr.mxu0 0.0
      %5285 = vmatpush1.msra.mxu0 0.0
      %5286 = vmatprep.subr.mxu0 0.0
      %5287 = vmatpush1.msra.mxu0 0.0
      %5288 = vmatprep.subr.mxu0 0.0
      %5289 = vmatpush1.msra.mxu0 0.0
      %5290 = vmatprep.subr.mxu0 0.0
      %5291 = vmatpush1.msra.mxu0 0.0
      %5292 = vmatprep.subr.mxu0 0.0
      %5293 = vmatpush1.msra.mxu0 0.0
      %5294 = vmatprep.subr.mxu0 0.0
      %5295 = vmatpush1.msra.mxu0 0.0
      %5296 = vmatprep.subr.mxu0 0.0
      %5297 = vmatpush1.msra.mxu0 0.0
      %5298 = vmatprep.subr.mxu0 0.0
      %5299 = vmatpush1.msra.mxu0 0.0
      %5300 = vmatprep.subr.mxu0 0.0
      %5301 = vmatpush1.msra.mxu0 0.0
      %5302 = vmatprep.subr.mxu0 0.0
      %5303 = vmatpush1.msra.mxu0 0.0
      %5304 = vmatprep.subr.mxu0 0.0
      %5305 = vmatpush1.msra.mxu0 0.0
      %5306 = vmatprep.subr.mxu0 0.0
      %5307 = vmatpush1.msra.mxu0 0.0
      %5308 = vmatprep.subr.mxu0 0.0
      %5309 = vmatpush1.msra.mxu0 0.0
      %5310 = vmatprep.subr.mxu0 0.0
      %5311 = vmatpush1.msra.mxu0 0.0
      %5312 = vmatprep.subr.mxu0 0.0
      %5313 = vmatpush1.msra.mxu0 0.0
      %5314 = vmatprep.subr.mxu0 0.0
      %5315 = vmatpush1.msra.mxu0 0.0
      %5316 = vmatprep.mubr.f32.mxu0 0.0
      %5317 = vmatmul.mubr.f32.gmra.mrb[0].mxu0 %v5250
      %v5318 = vpop.f32.mrb[0].mxu0
      %v5319 = vadd.f32 0.0, %v5318
      %v5320 = vpop.f32.mrb[0].mxu0
      %5321 = vdwg.mxu0
      %v5322 = vadd.f32 %v5162, %v5319
      %vm5323 = vmand %vm5001, %vm4339
      %vm5324 = vmand %vm5323, %vm4341
      %vm5325 = vmand %vm5324, %vm4343
      %v5326 = vadd.s32 %v5005, %v4337
      %v5327 = vsel %vm5325, %v5326, 4294967295
      %vm5328 = vcmp.eq.s32.totalorder %v339, %v5327
      %vm5329 = vcmp.eq.s32.totalorder %v340, %v5327
      %v5330 = vsel %vm5328, 1.0, 0.0
      %v5331 = vsel %vm5329, 1.0, 0.0
      %5332 = vmatprep.subr.mxu0 0.0
      %5333 = vmatpush1.msra.mxu0 %v5330
      %5334 = vmatprep.subr.mxu0 0.0
      %5335 = vmatpush1.msra.mxu0 %v5331
      %5336 = vmatprep.subr.mxu0 0.0
      %5337 = vmatpush1.msra.mxu0 0.0
      %5338 = vmatprep.subr.mxu0 0.0
      %5339 = vmatpush1.msra.mxu0 0.0
      %5340 = vmatprep.subr.mxu0 0.0
      %5341 = vmatpush1.msra.mxu0 0.0
      %5342 = vmatprep.subr.mxu0 0.0
      %5343 = vmatpush1.msra.mxu0 0.0
      %5344 = vmatprep.subr.mxu0 0.0
      %5345 = vmatpush1.msra.mxu0 0.0
      %5346 = vmatprep.subr.mxu0 0.0
      %5347 = vmatpush1.msra.mxu0 0.0
      %5348 = vmatprep.subr.mxu0 0.0
      %5349 = vmatpush1.msra.mxu0 0.0
      %5350 = vmatprep.subr.mxu0 0.0
      %5351 = vmatpush1.msra.mxu0 0.0
      %5352 = vmatprep.subr.mxu0 0.0
      %5353 = vmatpush1.msra.mxu0 0.0
      %5354 = vmatprep.subr.mxu0 0.0
      %5355 = vmatpush1.msra.mxu0 0.0
      %5356 = vmatprep.subr.mxu0 0.0
      %5357 = vmatpush1.msra.mxu0 0.0
      %5358 = vmatprep.subr.mxu0 0.0
      %5359 = vmatpush1.msra.mxu0 0.0
      %5360 = vmatprep.subr.mxu0 0.0
      %5361 = vmatpush1.msra.mxu0 0.0
      %5362 = vmatprep.subr.mxu0 0.0
      %5363 = vmatpush1.msra.mxu0 0.0
      %5364 = vmatprep.subr.mxu0 0.0
      %5365 = vmatpush1.msra.mxu0 0.0
      %5366 = vmatprep.subr.mxu0 0.0
      %5367 = vmatpush1.msra.mxu0 0.0
      %5368 = vmatprep.subr.mxu0 0.0
      %5369 = vmatpush1.msra.mxu0 0.0
      %5370 = vmatprep.subr.mxu0 0.0
      %5371 = vmatpush1.msra.mxu0 0.0
      %5372 = vmatprep.subr.mxu0 0.0
      %5373 = vmatpush1.msra.mxu0 0.0
      %5374 = vmatprep.subr.mxu0 0.0
      %5375 = vmatpush1.msra.mxu0 0.0
      %5376 = vmatprep.subr.mxu0 0.0
      %5377 = vmatpush1.msra.mxu0 0.0
      %5378 = vmatprep.subr.mxu0 0.0
      %5379 = vmatpush1.msra.mxu0 0.0
      %5380 = vmatprep.subr.mxu0 0.0
      %5381 = vmatpush1.msra.mxu0 0.0
      %5382 = vmatprep.subr.mxu0 0.0
      %5383 = vmatpush1.msra.mxu0 0.0
      %5384 = vmatprep.subr.mxu0 0.0
      %5385 = vmatpush1.msra.mxu0 0.0
      %5386 = vmatprep.subr.mxu0 0.0
      %5387 = vmatpush1.msra.mxu0 0.0
      %5388 = vmatprep.subr.mxu0 0.0
      %5389 = vmatpush1.msra.mxu0 0.0
      %5390 = vmatprep.subr.mxu0 0.0
      %5391 = vmatpush1.msra.mxu0 0.0
      %5392 = vmatprep.subr.mxu0 0.0
      %5393 = vmatpush1.msra.mxu0 0.0
      %5394 = vmatprep.subr.mxu0 0.0
      %5395 = vmatpush1.msra.mxu0 0.0
      %5396 = vmatprep.mubr.f32.mxu0 0.0
      %5397 = vmatmul.mubr.f32.gmra.mrb[0].mxu0 %v4014
      %v5398 = vpop.f32.mrb[0].mxu0
      %v5399 = vadd.f32 0.0, %v5398
      %v5400 = vpop.f32.mrb[0].mxu0
      %5401 = vmatprep.mubr.f32.mxu0 0.0
      %5402 = vmatmul.mubr.f32.gmra.mrb[0].mxu0 %v4017
      %v5403 = vpop.f32.mrb[0].mxu0
      %v5404 = vadd.f32 0.0, %v5403
      %v5405 = vpop.f32.mrb[0].mxu0
      %5406 = vdwg.mxu0
      %s5407 = scalar_lea.vmem %s5, 64
      %v5408 = vld [vmem:[%s5407] sm:$0xff]
      %v5410 = vsel %vm4012, %v5408, 0
      %5412 = vmatprep.subr.mxu0 0.0
      %5413 = vmatpush1.msra.mxu0 %v5399
      %5414 = vmatprep.subr.mxu0 0.0
      %5415 = vmatpush1.msra.mxu0 %v5404
      %5416 = vmatprep.subr.mxu0 0.0
      %5417 = vmatpush1.msra.mxu0 0.0
      %5418 = vmatprep.subr.mxu0 0.0
      %5419 = vmatpush1.msra.mxu0 0.0
      %5420 = vmatprep.subr.mxu0 0.0
      %5421 = vmatpush1.msra.mxu0 0.0
      %5422 = vmatprep.subr.mxu0 0.0
      %5423 = vmatpush1.msra.mxu0 0.0
      %5424 = vmatprep.subr.mxu0 0.0
      %5425 = vmatpush1.msra.mxu0 0.0
      %5426 = vmatprep.subr.mxu0 0.0
      %5427 = vmatpush1.msra.mxu0 0.0
      %5428 = vmatprep.subr.mxu0 0.0
      %5429 = vmatpush1.msra.mxu0 0.0
      %5430 = vmatprep.subr.mxu0 0.0
      %5431 = vmatpush1.msra.mxu0 0.0
      %5432 = vmatprep.subr.mxu0 0.0
      %5433 = vmatpush1.msra.mxu0 0.0
      %5434 = vmatprep.subr.mxu0 0.0
      %5435 = vmatpush1.msra.mxu0 0.0
      %5436 = vmatprep.subr.mxu0 0.0
      %5437 = vmatpush1.msra.mxu0 0.0
      %5438 = vmatprep.subr.mxu0 0.0
      %5439 = vmatpush1.msra.mxu0 0.0
      %5440 = vmatprep.subr.mxu0 0.0
      %5441 = vmatpush1.msra.mxu0 0.0
      %5442 = vmatprep.subr.mxu0 0.0
      %5443 = vmatpush1.msra.mxu0 0.0
      %5444 = vmatprep.subr.mxu0 0.0
      %5445 = vmatpush1.msra.mxu0 0.0
      %5446 = vmatprep.subr.mxu0 0.0
      %5447 = vmatpush1.msra.mxu0 0.0
      %5448 = vmatprep.subr.mxu0 0.0
      %5449 = vmatpush1.msra.mxu0 0.0
      %5450 = vmatprep.subr.mxu0 0.0
      %5451 = vmatpush1.msra.mxu0 0.0
      %5452 = vmatprep.subr.mxu0 0.0
      %5453 = vmatpush1.msra.mxu0 0.0
      %5454 = vmatprep.subr.mxu0 0.0
      %5455 = vmatpush1.msra.mxu0 0.0
      %5456 = vmatprep.subr.mxu0 0.0
      %5457 = vmatpush1.msra.mxu0 0.0
      %5458 = vmatprep.subr.mxu0 0.0
      %5459 = vmatpush1.msra.mxu0 0.0
      %5460 = vmatprep.subr.mxu0 0.0
      %5461 = vmatpush1.msra.mxu0 0.0
      %5462 = vmatprep.subr.mxu0 0.0
      %5463 = vmatpush1.msra.mxu0 0.0
      %5464 = vmatprep.subr.mxu0 0.0
      %5465 = vmatpush1.msra.mxu0 0.0
      %5466 = vmatprep.subr.mxu0 0.0
      %5467 = vmatpush1.msra.mxu0 0.0
      %5468 = vmatprep.subr.mxu0 0.0
      %5469 = vmatpush1.msra.mxu0 0.0
      %5470 = vmatprep.subr.mxu0 0.0
      %5471 = vmatpush1.msra.mxu0 0.0
      %5472 = vmatprep.subr.mxu0 0.0
      %5473 = vmatpush1.msra.mxu0 0.0
      %5474 = vmatprep.subr.mxu0 0.0
      %5475 = vmatpush1.msra.mxu0 0.0
      %5476 = vmatprep.mubr.f32.mxu0 0.0
      %5477 = vmatmul.mubr.f32.gmra.mrb[0].mxu0 %v5410
      %v5478 = vpop.f32.mrb[0].mxu0
      %v5479 = vadd.f32 0.0, %v5478
      %v5480 = vpop.f32.mrb[0].mxu0
      %5481 = vdwg.mxu0
      %v5482 = vadd.f32 %v5322, %v5479
      %v5483 = vld [vmem:[%s6] sm:$0xff]
      %5485 = vset.pattern.permute.xlu0 0
      %5486 = vperm.xlu0 %5485, %v5483
      %v5487 = vpop.permute.xlu0 %5486
      %v5489 = vadd.f32 %v5482, %v5487
      %v5490 = vmax.f32 %v5489, 0.0
      %v5491 = vadd.s32 %v335, 128
      %v5492 = vshra.s32 %v335, 4
      %v5493 = vshra.s32 %v5491, 4
      %v5494 = vand.u32 %v335, 15
      %v5495 = vand.u32 %v5491, 15
      %v5496 = vadd.s32 %v5492, 1
      %v5497 = vadd.s32 %v5493, 1
      %v5498 = vadd.s32 %v5496, 2
      %v5499 = vadd.s32 %v5497, 2
      %v5500 = vadd.s32 %v5494, 1
      %v5501 = vadd.s32 %v5495, 1
      %v5502 = vadd.s32 %v5500, 2
      %v5503 = vadd.s32 %v5501, 2
      %v5504 = vshra.s32 %v5498, 1
      %v5505 = vshra.s32 %v5499, 1
      %v5506 = vsub.s32 %v5504, 1
      %v5507 = vsub.s32 %v5505, 1
      %v5508 = vshra.s32 %v5502, 1
      %v5509 = vshra.s32 %v5503, 1
      %v5510 = vsub.s32 %v5508, 1
      %v5511 = vsub.s32 %v5509, 1
      %v5512 = vand.u32 %v5498, 1
      %v5513 = vand.u32 %v5499, 1
      %vm5514 = vcmp.eq.s32.totalorder %v5512, 0
      %vm5515 = vcmp.eq.s32.totalorder %v5513, 0
      %vm5516 = vcmp.ge.s32.totalorder %v5506, 0
      %vm5517 = vcmp.ge.s32.totalorder %v5507, 0
      %vm5518 = vmand %vm5514, %vm5516
      %vm5519 = vmand %vm5515, %vm5517
      %vm5520 = vcmp.lt.s32.totalorder %v5506, 8
      %vm5521 = vcmp.lt.s32.totalorder %v5507, 8
      %vm5522 = vmand %vm5518, %vm5520
      %vm5523 = vmand %vm5519, %vm5521
      %v5524 = vand.u32 %v5502, 1
      %v5525 = vand.u32 %v5503, 1
      %vm5526 = vcmp.eq.s32.totalorder %v5524, 0
      %vm5527 = vcmp.eq.s32.totalorder %v5525, 0
      %vm5528 = vmand %vm5522, %vm5526
      %vm5529 = vmand %vm5523, %vm5527
      %vm5530 = vcmp.ge.s32.totalorder %v5510, 0
      %vm5531 = vcmp.ge.s32.totalorder %v5511, 0
      %vm5532 = vmand %vm5528, %vm5530
      %vm5533 = vmand %vm5529, %vm5531
      %vm5534 = vcmp.lt.s32.totalorder %v5510, 8
      %vm5535 = vcmp.lt.s32.totalorder %v5511, 8
      %vm5536 = vmand %vm5532, %vm5534
      %vm5537 = vmand %vm5533, %vm5535
      %v5538 = vmul.u32 %v5506, 8
      %v5539 = vmul.u32 %v5507, 8
      %v5540 = vadd.s32 %v5538, %v5510
      %v5541 = vadd.s32 %v5539, %v5511
      %v5542 = vsel %vm5536, %v5540, 4294967295
      %v5543 = vsel %vm5537, %v5541, 4294967295
      %vm5544 = vcmp.eq.s32.totalorder %v339, %v5542
      %vm5545 = vcmp.eq.s32.totalorder %v339, %v5543
      %vm5546 = vcmp.eq.s32.totalorder %v340, %v5542
      %vm5547 = vcmp.eq.s32.totalorder %v340, %v5543
      %vm5548 = vcmp.eq.s32.totalorder %v341, %v5542
      %vm5549 = vcmp.eq.s32.totalorder %v341, %v5543
      %vm5550 = vcmp.eq.s32.totalorder %v342, %v5542
      %vm5551 = vcmp.eq.s32.totalorder %v342, %v5543
      %vm5552 = vcmp.eq.s32.totalorder %v343, %v5542
      %vm5553 = vcmp.eq.s32.totalorder %v343, %v5543
      %vm5554 = vcmp.eq.s32.totalorder %v344, %v5542
      %vm5555 = vcmp.eq.s32.totalorder %v344, %v5543
      %vm5556 = vcmp.eq.s32.totalorder %v345, %v5542
      %vm5557 = vcmp.eq.s32.totalorder %v345, %v5543
      %vm5558 = vcmp.eq.s32.totalorder %v346, %v5542
      %vm5559 = vcmp.eq.s32.totalorder %v346, %v5543
      %v5560 = vsel %vm5544, 1.0, 0.0
      %v5561 = vsel %vm5545, 1.0, 0.0
      %v5562 = vsel %vm5546, 1.0, 0.0
      %v5563 = vsel %vm5547, 1.0, 0.0
      %v5564 = vsel %vm5548, 1.0, 0.0
      %v5565 = vsel %vm5549, 1.0, 0.0
      %v5566 = vsel %vm5550, 1.0, 0.0
      %v5567 = vsel %vm5551, 1.0, 0.0
      %v5568 = vsel %vm5552, 1.0, 0.0
      %v5569 = vsel %vm5553, 1.0, 0.0
      %v5570 = vsel %vm5554, 1.0, 0.0
      %v5571 = vsel %vm5555, 1.0, 0.0
      %v5572 = vsel %vm5556, 1.0, 0.0
      %v5573 = vsel %vm5557, 1.0, 0.0
      %v5574 = vsel %vm5558, 1.0, 0.0
      %v5575 = vsel %vm5559, 1.0, 0.0
      %v5577 = vsel %vm2390, %v5490, 0
      %5579 = vmatprep.subr.mxu0 %v5561
      %5580 = vmatpush1.msra.mxu0 %v5560
      %5581 = vmatprep.subr.mxu0 %v5563
      %5582 = vmatpush1.msra.mxu0 %v5562
      %5583 = vmatprep.subr.mxu0 %v5565
      %5584 = vmatpush1.msra.mxu0 %v5564
      %5585 = vmatprep.subr.mxu0 %v5567
      %5586 = vmatpush1.msra.mxu0 %v5566
      %5587 = vmatprep.subr.mxu0 %v5569
      %5588 = vmatpush1.msra.mxu0 %v5568
      %5589 = vmatprep.subr.mxu0 %v5571
      %5590 = vmatpush1.msra.mxu0 %v5570
      %5591 = vmatprep.subr.mxu0 %v5573
      %5592 = vmatpush1.msra.mxu0 %v5572
      %5593 = vmatprep.subr.mxu0 %v5575
      %5594 = vmatpush1.msra.mxu0 %v5574
      %5595 = vmatprep.subr.mxu0 0.0
      %5596 = vmatpush1.msra.mxu0 0.0
      %5597 = vmatprep.subr.mxu0 0.0
      %5598 = vmatpush1.msra.mxu0 0.0
      %5599 = vmatprep.subr.mxu0 0.0
      %5600 = vmatpush1.msra.mxu0 0.0
      %5601 = vmatprep.subr.mxu0 0.0
      %5602 = vmatpush1.msra.mxu0 0.0
      %5603 = vmatprep.subr.mxu0 0.0
      %5604 = vmatpush1.msra.mxu0 0.0
      %5605 = vmatprep.subr.mxu0 0.0
      %5606 = vmatpush1.msra.mxu0 0.0
      %5607 = vmatprep.subr.mxu0 0.0
      %5608 = vmatpush1.msra.mxu0 0.0
      %5609 = vmatprep.subr.mxu0 0.0
      %5610 = vmatpush1.msra.mxu0 0.0
      %5611 = vmatprep.subr.mxu0 0.0
      %5612 = vmatpush1.msra.mxu0 0.0
      %5613 = vmatprep.subr.mxu0 0.0
      %5614 = vmatpush1.msra.mxu0 0.0
      %5615 = vmatprep.subr.mxu0 0.0
      %5616 = vmatpush1.msra.mxu0 0.0
      %5617 = vmatprep.subr.mxu0 0.0
      %5618 = vmatpush1.msra.mxu0 0.0
      %5619 = vmatprep.subr.mxu0 0.0
      %5620 = vmatpush1.msra.mxu0 0.0
      %5621 = vmatprep.subr.mxu0 0.0
      %5622 = vmatpush1.msra.mxu0 0.0
      %5623 = vmatprep.subr.mxu0 0.0
      %5624 = vmatpush1.msra.mxu0 0.0
      %5625 = vmatprep.subr.mxu0 0.0
      %5626 = vmatpush1.msra.mxu0 0.0
      %5627 = vmatprep.subr.mxu0 0.0
      %5628 = vmatpush1.msra.mxu0 0.0
      %5629 = vmatprep.subr.mxu0 0.0
      %5630 = vmatpush1.msra.mxu0 0.0
      %5631 = vmatprep.subr.mxu0 0.0
      %5632 = vmatpush1.msra.mxu0 0.0
      %5633 = vmatprep.subr.mxu0 0.0
      %5634 = vmatpush1.msra.mxu0 0.0
      %5635 = vmatprep.subr.mxu0 0.0
      %5636 = vmatpush1.msra.mxu0 0.0
      %5637 = vmatprep.subr.mxu0 0.0
      %5638 = vmatpush1.msra.mxu0 0.0
      %5639 = vmatprep.subr.mxu0 0.0
      %5640 = vmatpush1.msra.mxu0 0.0
      %5641 = vmatprep.subr.mxu0 0.0
      %5642 = vmatpush1.msra.mxu0 0.0
      %5643 = vmatprep.mubr.f32.mxu0 0.0
      %5644 = vmatmul.mubr.f32.gmra.mrb[0].mxu0 %v5577
      %v5645 = vpop.f32.mrb[0].mxu0
      %v5646 = vadd.f32 0.0, %v5645
      %v5647 = vpop.f32.mrb[0].mxu0
      %v5648 = vadd.f32 0.0, %v5647
      %5649 = vdwg.mxu0
      %v5650 = vld [vmem:[%s7] sm:$0x7]
      %v5651 = vadd.s32 %v5494, 2
      %v5652 = vadd.s32 %v5495, 2
      %v5653 = vshra.s32 %v5651, 1
      %v5654 = vshra.s32 %v5652, 1
      %v5655 = vsub.s32 %v5653, 1
      %v5656 = vsub.s32 %v5654, 1
      %v5657 = vand.u32 %v5651, 1
      %v5658 = vand.u32 %v5652, 1
      %vm5659 = vcmp.eq.s32.totalorder %v5657, 0
      %vm5660 = vcmp.eq.s32.totalorder %v5658, 0
      %vm5661 = vmand %vm5522, %vm5659
      %vm5662 = vmand %vm5523, %vm5660
      %vm5663 = vcmp.ge.s32.totalorder %v5655, 0
      %vm5664 = vcmp.ge.s32.totalorder %v5656, 0
      %vm5665 = vmand %vm5661, %vm5663
      %vm5666 = vmand %vm5662, %vm5664
      %vm5667 = vcmp.lt.s32.totalorder %v5655, 8
      %vm5668 = vcmp.lt.s32.totalorder %v5656, 8
      %vm5669 = vmand %vm5665, %vm5667
      %vm5670 = vmand %vm5666, %vm5668
      %v5671 = vadd.s32 %v5538, %v5655
      %v5672 = vadd.s32 %v5539, %v5656
      %v5673 = vsel %vm5669, %v5671, 4294967295
      %v5674 = vsel %vm5670, %v5672, 4294967295
      %vm5675 = vcmp.eq.s32.totalorder %v339, %v5673
      %vm5676 = vcmp.eq.s32.totalorder %v339, %v5674
      %vm5677 = vcmp.eq.s32.totalorder %v340, %v5673
      %vm5678 = vcmp.eq.s32.totalorder %v340, %v5674
      %vm5679 = vcmp.eq.s32.totalorder %v341, %v5673
      %vm5680 = vcmp.eq.s32.totalorder %v341, %v5674
      %vm5681 = vcmp.eq.s32.totalorder %v342, %v5673
      %vm5682 = vcmp.eq.s32.totalorder %v342, %v5674
      %vm5683 = vcmp.eq.s32.totalorder %v343, %v5673
      %vm5684 = vcmp.eq.s32.totalorder %v343, %v5674
      %vm5685 = vcmp.eq.s32.totalorder %v344, %v5673
      %vm5686 = vcmp.eq.s32.totalorder %v344, %v5674
      %vm5687 = vcmp.eq.s32.totalorder %v345, %v5673
      %vm5688 = vcmp.eq.s32.totalorder %v345, %v5674
      %vm5689 = vcmp.eq.s32.totalorder %v346, %v5673
      %vm5690 = vcmp.eq.s32.totalorder %v346, %v5674
      %v5691 = vsel %vm5675, 1.0, 0.0
      %v5692 = vsel %vm5676, 1.0, 0.0
      %v5693 = vsel %vm5677, 1.0, 0.0
      %v5694 = vsel %vm5678, 1.0, 0.0
      %v5695 = vsel %vm5679, 1.0, 0.0
      %v5696 = vsel %vm5680, 1.0, 0.0
      %v5697 = vsel %vm5681, 1.0, 0.0
      %v5698 = vsel %vm5682, 1.0, 0.0
      %v5699 = vsel %vm5683, 1.0, 0.0
      %v5700 = vsel %vm5684, 1.0, 0.0
      %v5701 = vsel %vm5685, 1.0, 0.0
      %v5702 = vsel %vm5686, 1.0, 0.0
      %v5703 = vsel %vm5687, 1.0, 0.0
      %v5704 = vsel %vm5688, 1.0, 0.0
      %v5705 = vsel %vm5689, 1.0, 0.0
      %v5706 = vsel %vm5690, 1.0, 0.0
      %5707 = vmatprep.subr.mxu0 %v5692
      %5708 = vmatpush1.msra.mxu0 %v5691
      %5709 = vmatprep.subr.mxu0 %v5694
      %5710 = vmatpush1.msra.mxu0 %v5693
      %5711 = vmatprep.subr.mxu0 %v5696
      %5712 = vmatpush1.msra.mxu0 %v5695
      %5713 = vmatprep.subr.mxu0 %v5698
      %5714 = vmatpush1.msra.mxu0 %v5697
      %5715 = vmatprep.subr.mxu0 %v5700
      %5716 = vmatpush1.msra.mxu0 %v5699
      %5717 = vmatprep.subr.mxu0 %v5702
      %5718 = vmatpush1.msra.mxu0 %v5701
      %5719 = vmatprep.subr.mxu0 %v5704
      %5720 = vmatpush1.msra.mxu0 %v5703
      %5721 = vmatprep.subr.mxu0 %v5706
      %5722 = vmatpush1.msra.mxu0 %v5705
      %5723 = vmatprep.subr.mxu0 0.0
      %5724 = vmatpush1.msra.mxu0 0.0
      %5725 = vmatprep.subr.mxu0 0.0
      %5726 = vmatpush1.msra.mxu0 0.0
      %5727 = vmatprep.subr.mxu0 0.0
      %5728 = vmatpush1.msra.mxu0 0.0
      %5729 = vmatprep.subr.mxu0 0.0
      %5730 = vmatpush1.msra.mxu0 0.0
      %5731 = vmatprep.subr.mxu0 0.0
      %5732 = vmatpush1.msra.mxu0 0.0
      %5733 = vmatprep.subr.mxu0 0.0
      %5734 = vmatpush1.msra.mxu0 0.0
      %5735 = vmatprep.subr.mxu0 0.0
      %5736 = vmatpush1.msra.mxu0 0.0
      %5737 = vmatprep.subr.mxu0 0.0
      %5738 = vmatpush1.msra.mxu0 0.0
      %5739 = vmatprep.subr.mxu0 0.0
      %5740 = vmatpush1.msra.mxu0 0.0
      %5741 = vmatprep.subr.mxu0 0.0
      %5742 = vmatpush1.msra.mxu0 0.0
      %5743 = vmatprep.subr.mxu0 0.0
      %5744 = vmatpush1.msra.mxu0 0.0
      %5745 = vmatprep.subr.mxu0 0.0
      %5746 = vmatpush1.msra.mxu0 0.0
      %5747 = vmatprep.subr.mxu0 0.0
      %5748 = vmatpush1.msra.mxu0 0.0
      %5749 = vmatprep.subr.mxu0 0.0
      %5750 = vmatpush1.msra.mxu0 0.0
      %5751 = vmatprep.subr.mxu0 0.0
      %5752 = vmatpush1.msra.mxu0 0.0
      %5753 = vmatprep.subr.mxu0 0.0
      %5754 = vmatpush1.msra.mxu0 0.0
      %5755 = vmatprep.subr.mxu0 0.0
      %5756 = vmatpush1.msra.mxu0 0.0
      %5757 = vmatprep.subr.mxu0 0.0
      %5758 = vmatpush1.msra.mxu0 0.0
      %5759 = vmatprep.subr.mxu0 0.0
      %5760 = vmatpush1.msra.mxu0 0.0
      %5761 = vmatprep.subr.mxu0 0.0
      %5762 = vmatpush1.msra.mxu0 0.0
      %5763 = vmatprep.subr.mxu0 0.0
      %5764 = vmatpush1.msra.mxu0 0.0
      %5765 = vmatprep.subr.mxu0 0.0
      %5766 = vmatpush1.msra.mxu0 0.0
      %5767 = vmatprep.subr.mxu0 0.0
      %5768 = vmatpush1.msra.mxu0 0.0
      %5769 = vmatprep.subr.mxu0 0.0
      %5770 = vmatpush1.msra.mxu0 0.0
      %5771 = vmatprep.mubr.f32.mxu0 0.0
      %5772 = vmatmul.mubr.f32.gmra.mrb[0].mxu0 %v5577
      %v5773 = vpop.f32.mrb[0].mxu0
      %v5774 = vadd.f32 0.0, %v5773
      %v5775 = vpop.f32.mrb[0].mxu0
      %v5776 = vadd.f32 0.0, %v5775
      %5777 = vdwg.mxu0
      %s5778 = scalar_lea.vmem %s7, 4
      %v5779 = vld [vmem:[%s5778] sm:$0x7]
      %v5781 = vsel %vm2561, %v5779, 0
      %5783 = vmatprep.subr.mxu0 %v5776
      %5784 = vmatpush1.msra.mxu0 %v5774
      %5785 = vmatprep.subr.mxu0 0.0
      %5786 = vmatpush1.msra.mxu0 0.0
      %5787 = vmatprep.subr.mxu0 0.0
      %5788 = vmatpush1.msra.mxu0 0.0
      %5789 = vmatprep.subr.mxu0 0.0
      %5790 = vmatpush1.msra.mxu0 0.0
      %5791 = vmatprep.subr.mxu0 0.0
      %5792 = vmatpush1.msra.mxu0 0.0
      %5793 = vmatprep.subr.mxu0 0.0
      %5794 = vmatpush1.msra.mxu0 0.0
      %5795 = vmatprep.subr.mxu0 0.0
      %5796 = vmatpush1.msra.mxu0 0.0
      %5797 = vmatprep.subr.mxu0 0.0
      %5798 = vmatpush1.msra.mxu0 0.0
      %5799 = vmatprep.subr.mxu0 0.0
      %5800 = vmatpush1.msra.mxu0 0.0
      %5801 = vmatprep.subr.mxu0 0.0
      %5802 = vmatpush1.msra.mxu0 0.0
      %5803 = vmatprep.subr.mxu0 0.0
      %5804 = vmatpush1.msra.mxu0 0.0
      %5805 = vmatprep.subr.mxu0 0.0
      %5806 = vmatpush1.msra.mxu0 0.0
      %5807 = vmatprep.subr.mxu0 0.0
      %5808 = vmatpush1.msra.mxu0 0.0
      %5809 = vmatprep.subr.mxu0 0.0
      %5810 = vmatpush1.msra.mxu0 0.0
      %5811 = vmatprep.subr.mxu0 0.0
      %5812 = vmatpush1.msra.mxu0 0.0
      %5813 = vmatprep.subr.mxu0 0.0
      %5814 = vmatpush1.msra.mxu0 0.0
      %5815 = vmatprep.subr.mxu0 0.0
      %5816 = vmatpush1.msra.mxu0 0.0
      %5817 = vmatprep.subr.mxu0 0.0
      %5818 = vmatpush1.msra.mxu0 0.0
      %5819 = vmatprep.subr.mxu0 0.0
      %5820 = vmatpush1.msra.mxu0 0.0
      %5821 = vmatprep.subr.mxu0 0.0
      %5822 = vmatpush1.msra.mxu0 0.0
      %5823 = vmatprep.subr.mxu0 0.0
      %5824 = vmatpush1.msra.mxu0 0.0
      %5825 = vmatprep.subr.mxu0 0.0
      %5826 = vmatpush1.msra.mxu0 0.0
      %5827 = vmatprep.subr.mxu0 0.0
      %5828 = vmatpush1.msra.mxu0 0.0
      %5829 = vmatprep.subr.mxu0 0.0
      %5830 = vmatpush1.msra.mxu0 0.0
      %5831 = vmatprep.subr.mxu0 0.0
      %5832 = vmatpush1.msra.mxu0 0.0
      %5833 = vmatprep.subr.mxu0 0.0
      %5834 = vmatpush1.msra.mxu0 0.0
      %5835 = vmatprep.subr.mxu0 0.0
      %5836 = vmatpush1.msra.mxu0 0.0
      %5837 = vmatprep.subr.mxu0 0.0
      %5838 = vmatpush1.msra.mxu0 0.0
      %5839 = vmatprep.subr.mxu0 0.0
      %5840 = vmatpush1.msra.mxu0 0.0
      %5841 = vmatprep.subr.mxu0 0.0
      %5842 = vmatpush1.msra.mxu0 0.0
      %5843 = vmatprep.subr.mxu0 0.0
      %5844 = vmatpush1.msra.mxu0 0.0
      %5845 = vmatprep.subr.mxu0 0.0
      %5846 = vmatpush1.msra.mxu0 0.0
      %5847 = vmatprep.mubr.f32.mxu0 0.0
      %5848 = vmatmul.mubr.f32.gmra.mrb[0].mxu0 %v5781
      %v5849 = vpop.f32.mrb[0].mxu0
      %v5850 = vadd.f32 0.0, %v5849
      %v5851 = vpop.f32.mrb[0].mxu0
      %v5852 = vadd.f32 0.0, %v5851
      %5853 = vdwg.mxu0
      %v5855 = vsel %vm2561, %v5650, 0
      %5857 = vmatprep.subr.mxu0 %v5648
      %5858 = vmatpush1.msra.mxu0 %v5646
      %5859 = vmatprep.subr.mxu0 0.0
      %5860 = vmatpush1.msra.mxu0 0.0
      %5861 = vmatprep.subr.mxu0 0.0
      %5862 = vmatpush1.msra.mxu0 0.0
      %5863 = vmatprep.subr.mxu0 0.0
      %5864 = vmatpush1.msra.mxu0 0.0
      %5865 = vmatprep.subr.mxu0 0.0
      %5866 = vmatpush1.msra.mxu0 0.0
      %5867 = vmatprep.subr.mxu0 0.0
      %5868 = vmatpush1.msra.mxu0 0.0
      %5869 = vmatprep.subr.mxu0 0.0
      %5870 = vmatpush1.msra.mxu0 0.0
      %5871 = vmatprep.subr.mxu0 0.0
      %5872 = vmatpush1.msra.mxu0 0.0
      %5873 = vmatprep.subr.mxu0 0.0
      %5874 = vmatpush1.msra.mxu0 0.0
      %5875 = vmatprep.subr.mxu0 0.0
      %5876 = vmatpush1.msra.mxu0 0.0
      %5877 = vmatprep.subr.mxu0 0.0
      %5878 = vmatpush1.msra.mxu0 0.0
      %5879 = vmatprep.subr.mxu0 0.0
      %5880 = vmatpush1.msra.mxu0 0.0
      %5881 = vmatprep.subr.mxu0 0.0
      %5882 = vmatpush1.msra.mxu0 0.0
      %5883 = vmatprep.subr.mxu0 0.0
      %5884 = vmatpush1.msra.mxu0 0.0
      %5885 = vmatprep.subr.mxu0 0.0
      %5886 = vmatpush1.msra.mxu0 0.0
      %5887 = vmatprep.subr.mxu0 0.0
      %5888 = vmatpush1.msra.mxu0 0.0
      %5889 = vmatprep.subr.mxu0 0.0
      %5890 = vmatpush1.msra.mxu0 0.0
      %5891 = vmatprep.subr.mxu0 0.0
      %5892 = vmatpush1.msra.mxu0 0.0
      %5893 = vmatprep.subr.mxu0 0.0
      %5894 = vmatpush1.msra.mxu0 0.0
      %5895 = vmatprep.subr.mxu0 0.0
      %5896 = vmatpush1.msra.mxu0 0.0
      %5897 = vmatprep.subr.mxu0 0.0
      %5898 = vmatpush1.msra.mxu0 0.0
      %5899 = vmatprep.subr.mxu0 0.0
      %5900 = vmatpush1.msra.mxu0 0.0
      %5901 = vmatprep.subr.mxu0 0.0
      %5902 = vmatpush1.msra.mxu0 0.0
      %5903 = vmatprep.subr.mxu0 0.0
      %5904 = vmatpush1.msra.mxu0 0.0
      %5905 = vmatprep.subr.mxu0 0.0
      %5906 = vmatpush1.msra.mxu0 0.0
      %5907 = vmatprep.subr.mxu0 0.0
      %5908 = vmatpush1.msra.mxu0 0.0
      %5909 = vmatprep.subr.mxu0 0.0
      %5910 = vmatpush1.msra.mxu0 0.0
      %5911 = vmatprep.subr.mxu0 0.0
      %5912 = vmatpush1.msra.mxu0 0.0
      %5913 = vmatprep.subr.mxu0 0.0
      %5914 = vmatpush1.msra.mxu0 0.0
      %5915 = vmatprep.subr.mxu0 0.0
      %5916 = vmatpush1.msra.mxu0 0.0
      %5917 = vmatprep.subr.mxu0 0.0
      %5918 = vmatpush1.msra.mxu0 0.0
      %5919 = vmatprep.subr.mxu0 0.0
      %5920 = vmatpush1.msra.mxu0 0.0
      %5921 = vmatprep.mubr.f32.mxu0 0.0
      %5922 = vmatmul.mubr.f32.gmra.mrb[0].mxu0 %v5855
      %v5923 = vpop.f32.mrb[0].mxu0
      %v5924 = vadd.f32 %v5850, %v5923
      %v5925 = vpop.f32.mrb[0].mxu0
      %v5926 = vadd.f32 %v5852, %v5925
      %5927 = vdwg.mxu0
      %v5928 = vadd.s32 %v5494, 4294967295
      %v5929 = vadd.s32 %v5495, 4294967295
      %v5930 = vadd.s32 %v5928, 2
      %v5931 = vadd.s32 %v5929, 2
      %v5932 = vshra.s32 %v5930, 1
      %v5933 = vshra.s32 %v5931, 1
      %v5934 = vsub.s32 %v5932, 1
      %v5935 = vsub.s32 %v5933, 1
      %v5936 = vand.u32 %v5930, 1
      %v5937 = vand.u32 %v5931, 1
      %vm5938 = vcmp.eq.s32.totalorder %v5936, 0
      %vm5939 = vcmp.eq.s32.totalorder %v5937, 0
      %vm5940 = vmand %vm5522, %vm5938
      %vm5941 = vmand %vm5523, %vm5939
      %vm5942 = vcmp.ge.s32.totalorder %v5934, 0
      %vm5943 = vcmp.ge.s32.totalorder %v5935, 0
      %vm5944 = vmand %vm5940, %vm5942
      %vm5945 = vmand %vm5941, %vm5943
      %vm5946 = vcmp.lt.s32.totalorder %v5934, 8
      %vm5947 = vcmp.lt.s32.totalorder %v5935, 8
      %vm5948 = vmand %vm5944, %vm5946
      %vm5949 = vmand %vm5945, %vm5947
      %v5950 = vadd.s32 %v5538, %v5934
      %v5951 = vadd.s32 %v5539, %v5935
      %v5952 = vsel %vm5948, %v5950, 4294967295
      %v5953 = vsel %vm5949, %v5951, 4294967295
      %vm5954 = vcmp.eq.s32.totalorder %v339, %v5952
      %vm5955 = vcmp.eq.s32.totalorder %v339, %v5953
      %vm5956 = vcmp.eq.s32.totalorder %v340, %v5952
      %vm5957 = vcmp.eq.s32.totalorder %v340, %v5953
      %vm5958 = vcmp.eq.s32.totalorder %v341, %v5952
      %vm5959 = vcmp.eq.s32.totalorder %v341, %v5953
      %vm5960 = vcmp.eq.s32.totalorder %v342, %v5952
      %vm5961 = vcmp.eq.s32.totalorder %v342, %v5953
      %vm5962 = vcmp.eq.s32.totalorder %v343, %v5952
      %vm5963 = vcmp.eq.s32.totalorder %v343, %v5953
      %vm5964 = vcmp.eq.s32.totalorder %v344, %v5952
      %vm5965 = vcmp.eq.s32.totalorder %v344, %v5953
      %vm5966 = vcmp.eq.s32.totalorder %v345, %v5952
      %vm5967 = vcmp.eq.s32.totalorder %v345, %v5953
      %vm5968 = vcmp.eq.s32.totalorder %v346, %v5952
      %vm5969 = vcmp.eq.s32.totalorder %v346, %v5953
      %v5970 = vsel %vm5954, 1.0, 0.0
      %v5971 = vsel %vm5955, 1.0, 0.0
      %v5972 = vsel %vm5956, 1.0, 0.0
      %v5973 = vsel %vm5957, 1.0, 0.0
      %v5974 = vsel %vm5958, 1.0, 0.0
      %v5975 = vsel %vm5959, 1.0, 0.0
      %v5976 = vsel %vm5960, 1.0, 0.0
      %v5977 = vsel %vm5961, 1.0, 0.0
      %v5978 = vsel %vm5962, 1.0, 0.0
      %v5979 = vsel %vm5963, 1.0, 0.0
      %v5980 = vsel %vm5964, 1.0, 0.0
      %v5981 = vsel %vm5965, 1.0, 0.0
      %v5982 = vsel %vm5966, 1.0, 0.0
      %v5983 = vsel %vm5967, 1.0, 0.0
      %v5984 = vsel %vm5968, 1.0, 0.0
      %v5985 = vsel %vm5969, 1.0, 0.0
      %5986 = vmatprep.subr.mxu0 %v5971
      %5987 = vmatpush1.msra.mxu0 %v5970
      %5988 = vmatprep.subr.mxu0 %v5973
      %5989 = vmatpush1.msra.mxu0 %v5972
      %5990 = vmatprep.subr.mxu0 %v5975
      %5991 = vmatpush1.msra.mxu0 %v5974
      %5992 = vmatprep.subr.mxu0 %v5977
      %5993 = vmatpush1.msra.mxu0 %v5976
      %5994 = vmatprep.subr.mxu0 %v5979
      %5995 = vmatpush1.msra.mxu0 %v5978
      %5996 = vmatprep.subr.mxu0 %v5981
      %5997 = vmatpush1.msra.mxu0 %v5980
      %5998 = vmatprep.subr.mxu0 %v5983
      %5999 = vmatpush1.msra.mxu0 %v5982
      %6000 = vmatprep.subr.mxu0 %v5985
      %6001 = vmatpush1.msra.mxu0 %v5984
      %6002 = vmatprep.subr.mxu0 0.0
      %6003 = vmatpush1.msra.mxu0 0.0
      %6004 = vmatprep.subr.mxu0 0.0
      %6005 = vmatpush1.msra.mxu0 0.0
      %6006 = vmatprep.subr.mxu0 0.0
      %6007 = vmatpush1.msra.mxu0 0.0
      %6008 = vmatprep.subr.mxu0 0.0
      %6009 = vmatpush1.msra.mxu0 0.0
      %6010 = vmatprep.subr.mxu0 0.0
      %6011 = vmatpush1.msra.mxu0 0.0
      %6012 = vmatprep.subr.mxu0 0.0
      %6013 = vmatpush1.msra.mxu0 0.0
      %6014 = vmatprep.subr.mxu0 0.0
      %6015 = vmatpush1.msra.mxu0 0.0
      %6016 = vmatprep.subr.mxu0 0.0
      %6017 = vmatpush1.msra.mxu0 0.0
      %6018 = vmatprep.subr.mxu0 0.0
      %6019 = vmatpush1.msra.mxu0 0.0
      %6020 = vmatprep.subr.mxu0 0.0
      %6021 = vmatpush1.msra.mxu0 0.0
      %6022 = vmatprep.subr.mxu0 0.0
      %6023 = vmatpush1.msra.mxu0 0.0
      %6024 = vmatprep.subr.mxu0 0.0
      %6025 = vmatpush1.msra.mxu0 0.0
      %6026 = vmatprep.subr.mxu0 0.0
      %6027 = vmatpush1.msra.mxu0 0.0
      %6028 = vmatprep.subr.mxu0 0.0
      %6029 = vmatpush1.msra.mxu0 0.0
      %6030 = vmatprep.subr.mxu0 0.0
      %6031 = vmatpush1.msra.mxu0 0.0
      %6032 = vmatprep.subr.mxu0 0.0
      %6033 = vmatpush1.msra.mxu0 0.0
      %6034 = vmatprep.subr.mxu0 0.0
      %6035 = vmatpush1.msra.mxu0 0.0
      %6036 = vmatprep.subr.mxu0 0.0
      %6037 = vmatpush1.msra.mxu0 0.0
      %6038 = vmatprep.subr.mxu0 0.0
      %6039 = vmatpush1.msra.mxu0 0.0
      %6040 = vmatprep.subr.mxu0 0.0
      %6041 = vmatpush1.msra.mxu0 0.0
      %6042 = vmatprep.subr.mxu0 0.0
      %6043 = vmatpush1.msra.mxu0 0.0
      %6044 = vmatprep.subr.mxu0 0.0
      %6045 = vmatpush1.msra.mxu0 0.0
      %6046 = vmatprep.subr.mxu0 0.0
      %6047 = vmatpush1.msra.mxu0 0.0
      %6048 = vmatprep.subr.mxu0 0.0
      %6049 = vmatpush1.msra.mxu0 0.0
      %6050 = vmatprep.mubr.f32.mxu0 0.0
      %6051 = vmatmul.mubr.f32.gmra.mrb[0].mxu0 %v5577
      %v6052 = vpop.f32.mrb[0].mxu0
      %v6053 = vadd.f32 0.0, %v6052
      %v6054 = vpop.f32.mrb[0].mxu0
      %v6055 = vadd.f32 0.0, %v6054
      %6056 = vdwg.mxu0
      %s6057 = scalar_lea.vmem %s7, 8
      %v6058 = vld [vmem:[%s6057] sm:$0x7]
      %v6060 = vsel %vm2561, %v6058, 0
      %6062 = vmatprep.subr.mxu0 %v6055
      %6063 = vmatpush1.msra.mxu0 %v6053
      %6064 = vmatprep.subr.mxu0 0.0
      %6065 = vmatpush1.msra.mxu0 0.0
      %6066 = vmatprep.subr.mxu0 0.0
      %6067 = vmatpush1.msra.mxu0 0.0
      %6068 = vmatprep.subr.mxu0 0.0
      %6069 = vmatpush1.msra.mxu0 0.0
      %6070 = vmatprep.subr.mxu0 0.0
      %6071 = vmatpush1.msra.mxu0 0.0
      %6072 = vmatprep.subr.mxu0 0.0
      %6073 = vmatpush1.msra.mxu0 0.0
      %6074 = vmatprep.subr.mxu0 0.0
      %6075 = vmatpush1.msra.mxu0 0.0
      %6076 = vmatprep.subr.mxu0 0.0
      %6077 = vmatpush1.msra.mxu0 0.0
      %6078 = vmatprep.subr.mxu0 0.0
      %6079 = vmatpush1.msra.mxu0 0.0
      %6080 = vmatprep.subr.mxu0 0.0
      %6081 = vmatpush1.msra.mxu0 0.0
      %6082 = vmatprep.subr.mxu0 0.0
      %6083 = vmatpush1.msra.mxu0 0.0
      %6084 = vmatprep.subr.mxu0 0.0
      %6085 = vmatpush1.msra.mxu0 0.0
      %6086 = vmatprep.subr.mxu0 0.0
      %6087 = vmatpush1.msra.mxu0 0.0
      %6088 = vmatprep.subr.mxu0 0.0
      %6089 = vmatpush1.msra.mxu0 0.0
      %6090 = vmatprep.subr.mxu0 0.0
      %6091 = vmatpush1.msra.mxu0 0.0
      %6092 = vmatprep.subr.mxu0 0.0
      %6093 = vmatpush1.msra.mxu0 0.0
      %6094 = vmatprep.subr.mxu0 0.0
      %6095 = vmatpush1.msra.mxu0 0.0
      %6096 = vmatprep.subr.mxu0 0.0
      %6097 = vmatpush1.msra.mxu0 0.0
      %6098 = vmatprep.subr.mxu0 0.0
      %6099 = vmatpush1.msra.mxu0 0.0
      %6100 = vmatprep.subr.mxu0 0.0
      %6101 = vmatpush1.msra.mxu0 0.0
      %6102 = vmatprep.subr.mxu0 0.0
      %6103 = vmatpush1.msra.mxu0 0.0
      %6104 = vmatprep.subr.mxu0 0.0
      %6105 = vmatpush1.msra.mxu0 0.0
      %6106 = vmatprep.subr.mxu0 0.0
      %6107 = vmatpush1.msra.mxu0 0.0
      %6108 = vmatprep.subr.mxu0 0.0
      %6109 = vmatpush1.msra.mxu0 0.0
      %6110 = vmatprep.subr.mxu0 0.0
      %6111 = vmatpush1.msra.mxu0 0.0
      %6112 = vmatprep.subr.mxu0 0.0
      %6113 = vmatpush1.msra.mxu0 0.0
      %6114 = vmatprep.subr.mxu0 0.0
      %6115 = vmatpush1.msra.mxu0 0.0
      %6116 = vmatprep.subr.mxu0 0.0
      %6117 = vmatpush1.msra.mxu0 0.0
      %6118 = vmatprep.subr.mxu0 0.0
      %6119 = vmatpush1.msra.mxu0 0.0
      %6120 = vmatprep.subr.mxu0 0.0
      %6121 = vmatpush1.msra.mxu0 0.0
      %6122 = vmatprep.subr.mxu0 0.0
      %6123 = vmatpush1.msra.mxu0 0.0
      %6124 = vmatprep.subr.mxu0 0.0
      %6125 = vmatpush1.msra.mxu0 0.0
      %6126 = vmatprep.mubr.f32.mxu0 0.0
      %6127 = vmatmul.mubr.f32.gmra.mrb[0].mxu0 %v6060
      %v6128 = vpop.f32.mrb[0].mxu0
      %v6129 = vadd.f32 0.0, %v6128
      %v6130 = vpop.f32.mrb[0].mxu0
      %v6131 = vadd.f32 0.0, %v6130
      %6132 = vdwg.mxu0
      %v6133 = vadd.f32 %v5924, %v6129
      %v6134 = vadd.f32 %v5926, %v6131
      %v6135 = vadd.s32 %v5492, 2
      %v6136 = vadd.s32 %v5493, 2
      %v6137 = vshra.s32 %v6135, 1
      %v6138 = vshra.s32 %v6136, 1
      %v6139 = vsub.s32 %v6137, 1
      %v6140 = vsub.s32 %v6138, 1
      %v6141 = vand.u32 %v6135, 1
      %v6142 = vand.u32 %v6136, 1
      %vm6143 = vcmp.eq.s32.totalorder %v6141, 0
      %vm6144 = vcmp.eq.s32.totalorder %v6142, 0
      %vm6145 = vcmp.ge.s32.totalorder %v6139, 0
      %vm6146 = vcmp.ge.s32.totalorder %v6140, 0
      %vm6147 = vmand %vm6143, %vm6145
      %vm6148 = vmand %vm6144, %vm6146
      %vm6149 = vcmp.lt.s32.totalorder %v6139, 8
      %vm6150 = vcmp.lt.s32.totalorder %v6140, 8
      %vm6151 = vmand %vm6147, %vm6149
      %vm6152 = vmand %vm6148, %vm6150
      %vm6153 = vmand %vm6151, %vm5526
      %vm6154 = vmand %vm6152, %vm5527
      %vm6155 = vmand %vm6153, %vm5530
      %vm6156 = vmand %vm6154, %vm5531
      %vm6157 = vmand %vm6155, %vm5534
      %vm6158 = vmand %vm6156, %vm5535
      %v6159 = vmul.u32 %v6139, 8
      %v6160 = vmul.u32 %v6140, 8
      %v6161 = vadd.s32 %v6159, %v5510
      %v6162 = vadd.s32 %v6160, %v5511
      %v6163 = vsel %vm6157, %v6161, 4294967295
      %v6164 = vsel %vm6158, %v6162, 4294967295
      %vm6165 = vcmp.eq.s32.totalorder %v339, %v6163
      %vm6166 = vcmp.eq.s32.totalorder %v339, %v6164
      %vm6167 = vcmp.eq.s32.totalorder %v340, %v6163
      %vm6168 = vcmp.eq.s32.totalorder %v340, %v6164
      %vm6169 = vcmp.eq.s32.totalorder %v341, %v6163
      %vm6170 = vcmp.eq.s32.totalorder %v341, %v6164
      %vm6171 = vcmp.eq.s32.totalorder %v342, %v6163
      %vm6172 = vcmp.eq.s32.totalorder %v342, %v6164
      %vm6173 = vcmp.eq.s32.totalorder %v343, %v6163
      %vm6174 = vcmp.eq.s32.totalorder %v343, %v6164
      %vm6175 = vcmp.eq.s32.totalorder %v344, %v6163
      %vm6176 = vcmp.eq.s32.totalorder %v344, %v6164
      %vm6177 = vcmp.eq.s32.totalorder %v345, %v6163
      %vm6178 = vcmp.eq.s32.totalorder %v345, %v6164
      %vm6179 = vcmp.eq.s32.totalorder %v346, %v6163
      %vm6180 = vcmp.eq.s32.totalorder %v346, %v6164
      %v6181 = vsel %vm6165, 1.0, 0.0
      %v6182 = vsel %vm6166, 1.0, 0.0
      %v6183 = vsel %vm6167, 1.0, 0.0
      %v6184 = vsel %vm6168, 1.0, 0.0
      %v6185 = vsel %vm6169, 1.0, 0.0
      %v6186 = vsel %vm6170, 1.0, 0.0
      %v6187 = vsel %vm6171, 1.0, 0.0
      %v6188 = vsel %vm6172, 1.0, 0.0
      %v6189 = vsel %vm6173, 1.0, 0.0
      %v6190 = vsel %vm6174, 1.0, 0.0
      %v6191 = vsel %vm6175, 1.0, 0.0
      %v6192 = vsel %vm6176, 1.0, 0.0
      %v6193 = vsel %vm6177, 1.0, 0.0
      %v6194 = vsel %vm6178, 1.0, 0.0
      %v6195 = vsel %vm6179, 1.0, 0.0
      %v6196 = vsel %vm6180, 1.0, 0.0
      %6197 = vmatprep.subr.mxu0 %v6182
      %6198 = vmatpush1.msra.mxu0 %v6181
      %6199 = vmatprep.subr.mxu0 %v6184
      %6200 = vmatpush1.msra.mxu0 %v6183
      %6201 = vmatprep.subr.mxu0 %v6186
      %6202 = vmatpush1.msra.mxu0 %v6185
      %6203 = vmatprep.subr.mxu0 %v6188
      %6204 = vmatpush1.msra.mxu0 %v6187
      %6205 = vmatprep.subr.mxu0 %v6190
      %6206 = vmatpush1.msra.mxu0 %v6189
      %6207 = vmatprep.subr.mxu0 %v6192
      %6208 = vmatpush1.msra.mxu0 %v6191
      %6209 = vmatprep.subr.mxu0 %v6194
      %6210 = vmatpush1.msra.mxu0 %v6193
      %6211 = vmatprep.subr.mxu0 %v6196
      %6212 = vmatpush1.msra.mxu0 %v6195
      %6213 = vmatprep.subr.mxu0 0.0
      %6214 = vmatpush1.msra.mxu0 0.0
      %6215 = vmatprep.subr.mxu0 0.0
      %6216 = vmatpush1.msra.mxu0 0.0
      %6217 = vmatprep.subr.mxu0 0.0
      %6218 = vmatpush1.msra.mxu0 0.0
      %6219 = vmatprep.subr.mxu0 0.0
      %6220 = vmatpush1.msra.mxu0 0.0
      %6221 = vmatprep.subr.mxu0 0.0
      %6222 = vmatpush1.msra.mxu0 0.0
      %6223 = vmatprep.subr.mxu0 0.0
      %6224 = vmatpush1.msra.mxu0 0.0
      %6225 = vmatprep.subr.mxu0 0.0
      %6226 = vmatpush1.msra.mxu0 0.0
      %6227 = vmatprep.subr.mxu0 0.0
      %6228 = vmatpush1.msra.mxu0 0.0
      %6229 = vmatprep.subr.mxu0 0.0
      %6230 = vmatpush1.msra.mxu0 0.0
      %6231 = vmatprep.subr.mxu0 0.0
      %6232 = vmatpush1.msra.mxu0 0.0
      %6233 = vmatprep.subr.mxu0 0.0
      %6234 = vmatpush1.msra.mxu0 0.0
      %6235 = vmatprep.subr.mxu0 0.0
      %6236 = vmatpush1.msra.mxu0 0.0
      %6237 = vmatprep.subr.mxu0 0.0
      %6238 = vmatpush1.msra.mxu0 0.0
      %6239 = vmatprep.subr.mxu0 0.0
      %6240 = vmatpush1.msra.mxu0 0.0
      %6241 = vmatprep.subr.mxu0 0.0
      %6242 = vmatpush1.msra.mxu0 0.0
      %6243 = vmatprep.subr.mxu0 0.0
      %6244 = vmatpush1.msra.mxu0 0.0
      %6245 = vmatprep.subr.mxu0 0.0
      %6246 = vmatpush1.msra.mxu0 0.0
      %6247 = vmatprep.subr.mxu0 0.0
      %6248 = vmatpush1.msra.mxu0 0.0
      %6249 = vmatprep.subr.mxu0 0.0
      %6250 = vmatpush1.msra.mxu0 0.0
      %6251 = vmatprep.subr.mxu0 0.0
      %6252 = vmatpush1.msra.mxu0 0.0
      %6253 = vmatprep.subr.mxu0 0.0
      %6254 = vmatpush1.msra.mxu0 0.0
      %6255 = vmatprep.subr.mxu0 0.0
      %6256 = vmatpush1.msra.mxu0 0.0
      %6257 = vmatprep.subr.mxu0 0.0
      %6258 = vmatpush1.msra.mxu0 0.0
      %6259 = vmatprep.subr.mxu0 0.0
      %6260 = vmatpush1.msra.mxu0 0.0
      %6261 = vmatprep.mubr.f32.mxu0 0.0
      %6262 = vmatmul.mubr.f32.gmra.mrb[0].mxu0 %v5577
      %v6263 = vpop.f32.mrb[0].mxu0
      %v6264 = vadd.f32 0.0, %v6263
      %v6265 = vpop.f32.mrb[0].mxu0
      %v6266 = vadd.f32 0.0, %v6265
      %6267 = vdwg.mxu0
      %s6268 = scalar_lea.vmem %s7, 12
      %v6269 = vld [vmem:[%s6268] sm:$0x7]
      %v6271 = vsel %vm2561, %v6269, 0
      %6273 = vmatprep.subr.mxu0 %v6266
      %6274 = vmatpush1.msra.mxu0 %v6264
      %6275 = vmatprep.subr.mxu0 0.0
      %6276 = vmatpush1.msra.mxu0 0.0
      %6277 = vmatprep.subr.mxu0 0.0
      %6278 = vmatpush1.msra.mxu0 0.0
      %6279 = vmatprep.subr.mxu0 0.0
      %6280 = vmatpush1.msra.mxu0 0.0
      %6281 = vmatprep.subr.mxu0 0.0
      %6282 = vmatpush1.msra.mxu0 0.0
      %6283 = vmatprep.subr.mxu0 0.0
      %6284 = vmatpush1.msra.mxu0 0.0
      %6285 = vmatprep.subr.mxu0 0.0
      %6286 = vmatpush1.msra.mxu0 0.0
      %6287 = vmatprep.subr.mxu0 0.0
      %6288 = vmatpush1.msra.mxu0 0.0
      %6289 = vmatprep.subr.mxu0 0.0
      %6290 = vmatpush1.msra.mxu0 0.0
      %6291 = vmatprep.subr.mxu0 0.0
      %6292 = vmatpush1.msra.mxu0 0.0
      %6293 = vmatprep.subr.mxu0 0.0
      %6294 = vmatpush1.msra.mxu0 0.0
      %6295 = vmatprep.subr.mxu0 0.0
      %6296 = vmatpush1.msra.mxu0 0.0
      %6297 = vmatprep.subr.mxu0 0.0
      %6298 = vmatpush1.msra.mxu0 0.0
      %6299 = vmatprep.subr.mxu0 0.0
      %6300 = vmatpush1.msra.mxu0 0.0
      %6301 = vmatprep.subr.mxu0 0.0
      %6302 = vmatpush1.msra.mxu0 0.0
      %6303 = vmatprep.subr.mxu0 0.0
      %6304 = vmatpush1.msra.mxu0 0.0
      %6305 = vmatprep.subr.mxu0 0.0
      %6306 = vmatpush1.msra.mxu0 0.0
      %6307 = vmatprep.subr.mxu0 0.0
      %6308 = vmatpush1.msra.mxu0 0.0
      %6309 = vmatprep.subr.mxu0 0.0
      %6310 = vmatpush1.msra.mxu0 0.0
      %6311 = vmatprep.subr.mxu0 0.0
      %6312 = vmatpush1.msra.mxu0 0.0
      %6313 = vmatprep.subr.mxu0 0.0
      %6314 = vmatpush1.msra.mxu0 0.0
      %6315 = vmatprep.subr.mxu0 0.0
      %6316 = vmatpush1.msra.mxu0 0.0
      %6317 = vmatprep.subr.mxu0 0.0
      %6318 = vmatpush1.msra.mxu0 0.0
      %6319 = vmatprep.subr.mxu0 0.0
      %6320 = vmatpush1.msra.mxu0 0.0
      %6321 = vmatprep.subr.mxu0 0.0
      %6322 = vmatpush1.msra.mxu0 0.0
      %6323 = vmatprep.subr.mxu0 0.0
      %6324 = vmatpush1.msra.mxu0 0.0
      %6325 = vmatprep.subr.mxu0 0.0
      %6326 = vmatpush1.msra.mxu0 0.0
      %6327 = vmatprep.subr.mxu0 0.0
      %6328 = vmatpush1.msra.mxu0 0.0
      %6329 = vmatprep.subr.mxu0 0.0
      %6330 = vmatpush1.msra.mxu0 0.0
      %6331 = vmatprep.subr.mxu0 0.0
      %6332 = vmatpush1.msra.mxu0 0.0
      %6333 = vmatprep.subr.mxu0 0.0
      %6334 = vmatpush1.msra.mxu0 0.0
      %6335 = vmatprep.subr.mxu0 0.0
      %6336 = vmatpush1.msra.mxu0 0.0
      %6337 = vmatprep.mubr.f32.mxu0 0.0
      %6338 = vmatmul.mubr.f32.gmra.mrb[0].mxu0 %v6271
      %v6339 = vpop.f32.mrb[0].mxu0
      %v6340 = vadd.f32 0.0, %v6339
      %v6341 = vpop.f32.mrb[0].mxu0
      %v6342 = vadd.f32 0.0, %v6341
      %6343 = vdwg.mxu0
      %v6344 = vadd.f32 %v6133, %v6340
      %v6345 = vadd.f32 %v6134, %v6342
      %vm6346 = vmand %vm6151, %vm5659
      %vm6347 = vmand %vm6152, %vm5660
      %vm6348 = vmand %vm6346, %vm5663
      %vm6349 = vmand %vm6347, %vm5664
      %vm6350 = vmand %vm6348, %vm5667
      %vm6351 = vmand %vm6349, %vm5668
      %v6352 = vadd.s32 %v6159, %v5655
      %v6353 = vadd.s32 %v6160, %v5656
      %v6354 = vsel %vm6350, %v6352, 4294967295
      %v6355 = vsel %vm6351, %v6353, 4294967295
      %vm6356 = vcmp.eq.s32.totalorder %v339, %v6354
      %vm6357 = vcmp.eq.s32.totalorder %v339, %v6355
      %vm6358 = vcmp.eq.s32.totalorder %v340, %v6354
      %vm6359 = vcmp.eq.s32.totalorder %v340, %v6355
      %vm6360 = vcmp.eq.s32.totalorder %v341, %v6354
      %vm6361 = vcmp.eq.s32.totalorder %v341, %v6355
      %vm6362 = vcmp.eq.s32.totalorder %v342, %v6354
      %vm6363 = vcmp.eq.s32.totalorder %v342, %v6355
      %vm6364 = vcmp.eq.s32.totalorder %v343, %v6354
      %vm6365 = vcmp.eq.s32.totalorder %v343, %v6355
      %vm6366 = vcmp.eq.s32.totalorder %v344, %v6354
      %vm6367 = vcmp.eq.s32.totalorder %v344, %v6355
      %vm6368 = vcmp.eq.s32.totalorder %v345, %v6354
      %vm6369 = vcmp.eq.s32.totalorder %v345, %v6355
      %vm6370 = vcmp.eq.s32.totalorder %v346, %v6354
      %vm6371 = vcmp.eq.s32.totalorder %v346, %v6355
      %v6372 = vsel %vm6356, 1.0, 0.0
      %v6373 = vsel %vm6357, 1.0, 0.0
      %v6374 = vsel %vm6358, 1.0, 0.0
      %v6375 = vsel %vm6359, 1.0, 0.0
      %v6376 = vsel %vm6360, 1.0, 0.0
      %v6377 = vsel %vm6361, 1.0, 0.0
      %v6378 = vsel %vm6362, 1.0, 0.0
      %v6379 = vsel %vm6363, 1.0, 0.0
      %v6380 = vsel %vm6364, 1.0, 0.0
      %v6381 = vsel %vm6365, 1.0, 0.0
      %v6382 = vsel %vm6366, 1.0, 0.0
      %v6383 = vsel %vm6367, 1.0, 0.0
      %v6384 = vsel %vm6368, 1.0, 0.0
      %v6385 = vsel %vm6369, 1.0, 0.0
      %v6386 = vsel %vm6370, 1.0, 0.0
      %v6387 = vsel %vm6371, 1.0, 0.0
      %6388 = vmatprep.subr.mxu0 %v6373
      %6389 = vmatpush1.msra.mxu0 %v6372
      %6390 = vmatprep.subr.mxu0 %v6375
      %6391 = vmatpush1.msra.mxu0 %v6374
      %6392 = vmatprep.subr.mxu0 %v6377
      %6393 = vmatpush1.msra.mxu0 %v6376
      %6394 = vmatprep.subr.mxu0 %v6379
      %6395 = vmatpush1.msra.mxu0 %v6378
      %6396 = vmatprep.subr.mxu0 %v6381
      %6397 = vmatpush1.msra.mxu0 %v6380
      %6398 = vmatprep.subr.mxu0 %v6383
      %6399 = vmatpush1.msra.mxu0 %v6382
      %6400 = vmatprep.subr.mxu0 %v6385
      %6401 = vmatpush1.msra.mxu0 %v6384
      %6402 = vmatprep.subr.mxu0 %v6387
      %6403 = vmatpush1.msra.mxu0 %v6386
      %6404 = vmatprep.subr.mxu0 0.0
      %6405 = vmatpush1.msra.mxu0 0.0
      %6406 = vmatprep.subr.mxu0 0.0
      %6407 = vmatpush1.msra.mxu0 0.0
      %6408 = vmatprep.subr.mxu0 0.0
      %6409 = vmatpush1.msra.mxu0 0.0
      %6410 = vmatprep.subr.mxu0 0.0
      %6411 = vmatpush1.msra.mxu0 0.0
      %6412 = vmatprep.subr.mxu0 0.0
      %6413 = vmatpush1.msra.mxu0 0.0
      %6414 = vmatprep.subr.mxu0 0.0
      %6415 = vmatpush1.msra.mxu0 0.0
      %6416 = vmatprep.subr.mxu0 0.0
      %6417 = vmatpush1.msra.mxu0 0.0
      %6418 = vmatprep.subr.mxu0 0.0
      %6419 = vmatpush1.msra.mxu0 0.0
      %6420 = vmatprep.subr.mxu0 0.0
      %6421 = vmatpush1.msra.mxu0 0.0
      %6422 = vmatprep.subr.mxu0 0.0
      %6423 = vmatpush1.msra.mxu0 0.0
      %6424 = vmatprep.subr.mxu0 0.0
      %6425 = vmatpush1.msra.mxu0 0.0
      %6426 = vmatprep.subr.mxu0 0.0
      %6427 = vmatpush1.msra.mxu0 0.0
      %6428 = vmatprep.subr.mxu0 0.0
      %6429 = vmatpush1.msra.mxu0 0.0
      %6430 = vmatprep.subr.mxu0 0.0
      %6431 = vmatpush1.msra.mxu0 0.0
      %6432 = vmatprep.subr.mxu0 0.0
      %6433 = vmatpush1.msra.mxu0 0.0
      %6434 = vmatprep.subr.mxu0 0.0
      %6435 = vmatpush1.msra.mxu0 0.0
      %6436 = vmatprep.subr.mxu0 0.0
      %6437 = vmatpush1.msra.mxu0 0.0
      %6438 = vmatprep.subr.mxu0 0.0
      %6439 = vmatpush1.msra.mxu0 0.0
      %6440 = vmatprep.subr.mxu0 0.0
      %6441 = vmatpush1.msra.mxu0 0.0
      %6442 = vmatprep.subr.mxu0 0.0
      %6443 = vmatpush1.msra.mxu0 0.0
      %6444 = vmatprep.subr.mxu0 0.0
      %6445 = vmatpush1.msra.mxu0 0.0
      %6446 = vmatprep.subr.mxu0 0.0
      %6447 = vmatpush1.msra.mxu0 0.0
      %6448 = vmatprep.subr.mxu0 0.0
      %6449 = vmatpush1.msra.mxu0 0.0
      %6450 = vmatprep.subr.mxu0 0.0
      %6451 = vmatpush1.msra.mxu0 0.0
      %6452 = vmatprep.mubr.f32.mxu0 0.0
      %6453 = vmatmul.mubr.f32.gmra.mrb[0].mxu0 %v5577
      %v6454 = vpop.f32.mrb[0].mxu0
      %v6455 = vadd.f32 0.0, %v6454
      %v6456 = vpop.f32.mrb[0].mxu0
      %v6457 = vadd.f32 0.0, %v6456
      %6458 = vdwg.mxu0
      %s6459 = scalar_lea.vmem %s7, 16
      %v6460 = vld [vmem:[%s6459] sm:$0x7]
      %v6462 = vsel %vm2561, %v6460, 0
      %6464 = vmatprep.subr.mxu0 %v6457
      %6465 = vmatpush1.msra.mxu0 %v6455
      %6466 = vmatprep.subr.mxu0 0.0
      %6467 = vmatpush1.msra.mxu0 0.0
      %6468 = vmatprep.subr.mxu0 0.0
      %6469 = vmatpush1.msra.mxu0 0.0
      %6470 = vmatprep.subr.mxu0 0.0
      %6471 = vmatpush1.msra.mxu0 0.0
      %6472 = vmatprep.subr.mxu0 0.0
      %6473 = vmatpush1.msra.mxu0 0.0
      %6474 = vmatprep.subr.mxu0 0.0
      %6475 = vmatpush1.msra.mxu0 0.0
      %6476 = vmatprep.subr.mxu0 0.0
      %6477 = vmatpush1.msra.mxu0 0.0
      %6478 = vmatprep.subr.mxu0 0.0
      %6479 = vmatpush1.msra.mxu0 0.0
      %6480 = vmatprep.subr.mxu0 0.0
      %6481 = vmatpush1.msra.mxu0 0.0
      %6482 = vmatprep.subr.mxu0 0.0
      %6483 = vmatpush1.msra.mxu0 0.0
      %6484 = vmatprep.subr.mxu0 0.0
      %6485 = vmatpush1.msra.mxu0 0.0
      %6486 = vmatprep.subr.mxu0 0.0
      %6487 = vmatpush1.msra.mxu0 0.0
      %6488 = vmatprep.subr.mxu0 0.0
      %6489 = vmatpush1.msra.mxu0 0.0
      %6490 = vmatprep.subr.mxu0 0.0
      %6491 = vmatpush1.msra.mxu0 0.0
      %6492 = vmatprep.subr.mxu0 0.0
      %6493 = vmatpush1.msra.mxu0 0.0
      %6494 = vmatprep.subr.mxu0 0.0
      %6495 = vmatpush1.msra.mxu0 0.0
      %6496 = vmatprep.subr.mxu0 0.0
      %6497 = vmatpush1.msra.mxu0 0.0
      %6498 = vmatprep.subr.mxu0 0.0
      %6499 = vmatpush1.msra.mxu0 0.0
      %6500 = vmatprep.subr.mxu0 0.0
      %6501 = vmatpush1.msra.mxu0 0.0
      %6502 = vmatprep.subr.mxu0 0.0
      %6503 = vmatpush1.msra.mxu0 0.0
      %6504 = vmatprep.subr.mxu0 0.0
      %6505 = vmatpush1.msra.mxu0 0.0
      %6506 = vmatprep.subr.mxu0 0.0
      %6507 = vmatpush1.msra.mxu0 0.0
      %6508 = vmatprep.subr.mxu0 0.0
      %6509 = vmatpush1.msra.mxu0 0.0
      %6510 = vmatprep.subr.mxu0 0.0
      %6511 = vmatpush1.msra.mxu0 0.0
      %6512 = vmatprep.subr.mxu0 0.0
      %6513 = vmatpush1.msra.mxu0 0.0
      %6514 = vmatprep.subr.mxu0 0.0
      %6515 = vmatpush1.msra.mxu0 0.0
      %6516 = vmatprep.subr.mxu0 0.0
      %6517 = vmatpush1.msra.mxu0 0.0
      %6518 = vmatprep.subr.mxu0 0.0
      %6519 = vmatpush1.msra.mxu0 0.0
      %6520 = vmatprep.subr.mxu0 0.0
      %6521 = vmatpush1.msra.mxu0 0.0
      %6522 = vmatprep.subr.mxu0 0.0
      %6523 = vmatpush1.msra.mxu0 0.0
      %6524 = vmatprep.subr.mxu0 0.0
      %6525 = vmatpush1.msra.mxu0 0.0
      %6526 = vmatprep.subr.mxu0 0.0
      %6527 = vmatpush1.msra.mxu0 0.0
      %6528 = vmatprep.mubr.f32.mxu0 0.0
      %6529 = vmatmul.mubr.f32.gmra.mrb[0].mxu0 %v6462
      %v6530 = vpop.f32.mrb[0].mxu0
      %v6531 = vadd.f32 0.0, %v6530
      %v6532 = vpop.f32.mrb[0].mxu0
      %v6533 = vadd.f32 0.0, %v6532
      %6534 = vdwg.mxu0
      %v6535 = vadd.f32 %v6344, %v6531
      %v6536 = vadd.f32 %v6345, %v6533
      %vm6537 = vmand %vm6151, %vm5938
      %vm6538 = vmand %vm6152, %vm5939
      %vm6539 = vmand %vm6537, %vm5942
      %vm6540 = vmand %vm6538, %vm5943
      %vm6541 = vmand %vm6539, %vm5946
      %vm6542 = vmand %vm6540, %vm5947
      %v6543 = vadd.s32 %v6159, %v5934
      %v6544 = vadd.s32 %v6160, %v5935
      %v6545 = vsel %vm6541, %v6543, 4294967295
      %v6546 = vsel %vm6542, %v6544, 4294967295
      %vm6547 = vcmp.eq.s32.totalorder %v339, %v6545
      %vm6548 = vcmp.eq.s32.totalorder %v339, %v6546
      %vm6549 = vcmp.eq.s32.totalorder %v340, %v6545
      %vm6550 = vcmp.eq.s32.totalorder %v340, %v6546
      %vm6551 = vcmp.eq.s32.totalorder %v341, %v6545
      %vm6552 = vcmp.eq.s32.totalorder %v341, %v6546
      %vm6553 = vcmp.eq.s32.totalorder %v342, %v6545
      %vm6554 = vcmp.eq.s32.totalorder %v342, %v6546
      %vm6555 = vcmp.eq.s32.totalorder %v343, %v6545
      %vm6556 = vcmp.eq.s32.totalorder %v343, %v6546
      %vm6557 = vcmp.eq.s32.totalorder %v344, %v6545
      %vm6558 = vcmp.eq.s32.totalorder %v344, %v6546
      %vm6559 = vcmp.eq.s32.totalorder %v345, %v6545
      %vm6560 = vcmp.eq.s32.totalorder %v345, %v6546
      %vm6561 = vcmp.eq.s32.totalorder %v346, %v6545
      %vm6562 = vcmp.eq.s32.totalorder %v346, %v6546
      %v6563 = vsel %vm6547, 1.0, 0.0
      %v6564 = vsel %vm6548, 1.0, 0.0
      %v6565 = vsel %vm6549, 1.0, 0.0
      %v6566 = vsel %vm6550, 1.0, 0.0
      %v6567 = vsel %vm6551, 1.0, 0.0
      %v6568 = vsel %vm6552, 1.0, 0.0
      %v6569 = vsel %vm6553, 1.0, 0.0
      %v6570 = vsel %vm6554, 1.0, 0.0
      %v6571 = vsel %vm6555, 1.0, 0.0
      %v6572 = vsel %vm6556, 1.0, 0.0
      %v6573 = vsel %vm6557, 1.0, 0.0
      %v6574 = vsel %vm6558, 1.0, 0.0
      %v6575 = vsel %vm6559, 1.0, 0.0
      %v6576 = vsel %vm6560, 1.0, 0.0
      %v6577 = vsel %vm6561, 1.0, 0.0
      %v6578 = vsel %vm6562, 1.0, 0.0
      %6579 = vmatprep.subr.mxu0 %v6564
      %6580 = vmatpush1.msra.mxu0 %v6563
      %6581 = vmatprep.subr.mxu0 %v6566
      %6582 = vmatpush1.msra.mxu0 %v6565
      %6583 = vmatprep.subr.mxu0 %v6568
      %6584 = vmatpush1.msra.mxu0 %v6567
      %6585 = vmatprep.subr.mxu0 %v6570
      %6586 = vmatpush1.msra.mxu0 %v6569
      %6587 = vmatprep.subr.mxu0 %v6572
      %6588 = vmatpush1.msra.mxu0 %v6571
      %6589 = vmatprep.subr.mxu0 %v6574
      %6590 = vmatpush1.msra.mxu0 %v6573
      %6591 = vmatprep.subr.mxu0 %v6576
      %6592 = vmatpush1.msra.mxu0 %v6575
      %6593 = vmatprep.subr.mxu0 %v6578
      %6594 = vmatpush1.msra.mxu0 %v6577
      %6595 = vmatprep.subr.mxu0 0.0
      %6596 = vmatpush1.msra.mxu0 0.0
      %6597 = vmatprep.subr.mxu0 0.0
      %6598 = vmatpush1.msra.mxu0 0.0
      %6599 = vmatprep.subr.mxu0 0.0
      %6600 = vmatpush1.msra.mxu0 0.0
      %6601 = vmatprep.subr.mxu0 0.0
      %6602 = vmatpush1.msra.mxu0 0.0
      %6603 = vmatprep.subr.mxu0 0.0
      %6604 = vmatpush1.msra.mxu0 0.0
      %6605 = vmatprep.subr.mxu0 0.0
      %6606 = vmatpush1.msra.mxu0 0.0
      %6607 = vmatprep.subr.mxu0 0.0
      %6608 = vmatpush1.msra.mxu0 0.0
      %6609 = vmatprep.subr.mxu0 0.0
      %6610 = vmatpush1.msra.mxu0 0.0
      %6611 = vmatprep.subr.mxu0 0.0
      %6612 = vmatpush1.msra.mxu0 0.0
      %6613 = vmatprep.subr.mxu0 0.0
      %6614 = vmatpush1.msra.mxu0 0.0
      %6615 = vmatprep.subr.mxu0 0.0
      %6616 = vmatpush1.msra.mxu0 0.0
      %6617 = vmatprep.subr.mxu0 0.0
      %6618 = vmatpush1.msra.mxu0 0.0
      %6619 = vmatprep.subr.mxu0 0.0
      %6620 = vmatpush1.msra.mxu0 0.0
      %6621 = vmatprep.subr.mxu0 0.0
      %6622 = vmatpush1.msra.mxu0 0.0
      %6623 = vmatprep.subr.mxu0 0.0
      %6624 = vmatpush1.msra.mxu0 0.0
      %6625 = vmatprep.subr.mxu0 0.0
      %6626 = vmatpush1.msra.mxu0 0.0
      %6627 = vmatprep.subr.mxu0 0.0
      %6628 = vmatpush1.msra.mxu0 0.0
      %6629 = vmatprep.subr.mxu0 0.0
      %6630 = vmatpush1.msra.mxu0 0.0
      %6631 = vmatprep.subr.mxu0 0.0
      %6632 = vmatpush1.msra.mxu0 0.0
      %6633 = vmatprep.subr.mxu0 0.0
      %6634 = vmatpush1.msra.mxu0 0.0
      %6635 = vmatprep.subr.mxu0 0.0
      %6636 = vmatpush1.msra.mxu0 0.0
      %6637 = vmatprep.subr.mxu0 0.0
      %6638 = vmatpush1.msra.mxu0 0.0
      %6639 = vmatprep.subr.mxu0 0.0
      %6640 = vmatpush1.msra.mxu0 0.0
      %6641 = vmatprep.subr.mxu0 0.0
      %6642 = vmatpush1.msra.mxu0 0.0
      %6643 = vmatprep.mubr.f32.mxu0 0.0
      %6644 = vmatmul.mubr.f32.gmra.mrb[0].mxu0 %v5577
      %v6645 = vpop.f32.mrb[0].mxu0
      %v6646 = vadd.f32 0.0, %v6645
      %v6647 = vpop.f32.mrb[0].mxu0
      %v6648 = vadd.f32 0.0, %v6647
      %6649 = vdwg.mxu0
      %s6650 = scalar_lea.vmem %s7, 20
      %v6651 = vld [vmem:[%s6650] sm:$0x7]
      %v6653 = vsel %vm2561, %v6651, 0
      %6655 = vmatprep.subr.mxu0 %v6648
      %6656 = vmatpush1.msra.mxu0 %v6646
      %6657 = vmatprep.subr.mxu0 0.0
      %6658 = vmatpush1.msra.mxu0 0.0
      %6659 = vmatprep.subr.mxu0 0.0
      %6660 = vmatpush1.msra.mxu0 0.0
      %6661 = vmatprep.subr.mxu0 0.0
      %6662 = vmatpush1.msra.mxu0 0.0
      %6663 = vmatprep.subr.mxu0 0.0
      %6664 = vmatpush1.msra.mxu0 0.0
      %6665 = vmatprep.subr.mxu0 0.0
      %6666 = vmatpush1.msra.mxu0 0.0
      %6667 = vmatprep.subr.mxu0 0.0
      %6668 = vmatpush1.msra.mxu0 0.0
      %6669 = vmatprep.subr.mxu0 0.0
      %6670 = vmatpush1.msra.mxu0 0.0
      %6671 = vmatprep.subr.mxu0 0.0
      %6672 = vmatpush1.msra.mxu0 0.0
      %6673 = vmatprep.subr.mxu0 0.0
      %6674 = vmatpush1.msra.mxu0 0.0
      %6675 = vmatprep.subr.mxu0 0.0
      %6676 = vmatpush1.msra.mxu0 0.0
      %6677 = vmatprep.subr.mxu0 0.0
      %6678 = vmatpush1.msra.mxu0 0.0
      %6679 = vmatprep.subr.mxu0 0.0
      %6680 = vmatpush1.msra.mxu0 0.0
      %6681 = vmatprep.subr.mxu0 0.0
      %6682 = vmatpush1.msra.mxu0 0.0
      %6683 = vmatprep.subr.mxu0 0.0
      %6684 = vmatpush1.msra.mxu0 0.0
      %6685 = vmatprep.subr.mxu0 0.0
      %6686 = vmatpush1.msra.mxu0 0.0
      %6687 = vmatprep.subr.mxu0 0.0
      %6688 = vmatpush1.msra.mxu0 0.0
      %6689 = vmatprep.subr.mxu0 0.0
      %6690 = vmatpush1.msra.mxu0 0.0
      %6691 = vmatprep.subr.mxu0 0.0
      %6692 = vmatpush1.msra.mxu0 0.0
      %6693 = vmatprep.subr.mxu0 0.0
      %6694 = vmatpush1.msra.mxu0 0.0
      %6695 = vmatprep.subr.mxu0 0.0
      %6696 = vmatpush1.msra.mxu0 0.0
      %6697 = vmatprep.subr.mxu0 0.0
      %6698 = vmatpush1.msra.mxu0 0.0
      %6699 = vmatprep.subr.mxu0 0.0
      %6700 = vmatpush1.msra.mxu0 0.0
      %6701 = vmatprep.subr.mxu0 0.0
      %6702 = vmatpush1.msra.mxu0 0.0
      %6703 = vmatprep.subr.mxu0 0.0
      %6704 = vmatpush1.msra.mxu0 0.0
      %6705 = vmatprep.subr.mxu0 0.0
      %6706 = vmatpush1.msra.mxu0 0.0
      %6707 = vmatprep.subr.mxu0 0.0
      %6708 = vmatpush1.msra.mxu0 0.0
      %6709 = vmatprep.subr.mxu0 0.0
      %6710 = vmatpush1.msra.mxu0 0.0
      %6711 = vmatprep.subr.mxu0 0.0
      %6712 = vmatpush1.msra.mxu0 0.0
      %6713 = vmatprep.subr.mxu0 0.0
      %6714 = vmatpush1.msra.mxu0 0.0
      %6715 = vmatprep.subr.mxu0 0.0
      %6716 = vmatpush1.msra.mxu0 0.0
      %6717 = vmatprep.subr.mxu0 0.0
      %6718 = vmatpush1.msra.mxu0 0.0
      %6719 = vmatprep.mubr.f32.mxu0 0.0
      %6720 = vmatmul.mubr.f32.gmra.mrb[0].mxu0 %v6653
      %v6721 = vpop.f32.mrb[0].mxu0
      %v6722 = vadd.f32 0.0, %v6721
      %v6723 = vpop.f32.mrb[0].mxu0
      %v6724 = vadd.f32 0.0, %v6723
      %6725 = vdwg.mxu0
      %v6726 = vadd.f32 %v6535, %v6722
      %v6727 = vadd.f32 %v6536, %v6724
      %v6728 = vadd.s32 %v5492, 4294967295
      %v6729 = vadd.s32 %v5493, 4294967295
      %v6730 = vadd.s32 %v6728, 2
      %v6731 = vadd.s32 %v6729, 2
      %v6732 = vshra.s32 %v6730, 1
      %v6733 = vshra.s32 %v6731, 1
      %v6734 = vsub.s32 %v6732, 1
      %v6735 = vsub.s32 %v6733, 1
      %v6736 = vand.u32 %v6730, 1
      %v6737 = vand.u32 %v6731, 1
      %vm6738 = vcmp.eq.s32.totalorder %v6736, 0
      %vm6739 = vcmp.eq.s32.totalorder %v6737, 0
      %vm6740 = vcmp.ge.s32.totalorder %v6734, 0
      %vm6741 = vcmp.ge.s32.totalorder %v6735, 0
      %vm6742 = vmand %vm6738, %vm6740
      %vm6743 = vmand %vm6739, %vm6741
      %vm6744 = vcmp.lt.s32.totalorder %v6734, 8
      %vm6745 = vcmp.lt.s32.totalorder %v6735, 8
      %vm6746 = vmand %vm6742, %vm6744
      %vm6747 = vmand %vm6743, %vm6745
      %vm6748 = vmand %vm6746, %vm5526
      %vm6749 = vmand %vm6747, %vm5527
      %vm6750 = vmand %vm6748, %vm5530
      %vm6751 = vmand %vm6749, %vm5531
      %vm6752 = vmand %vm6750, %vm5534
      %vm6753 = vmand %vm6751, %vm5535
      %v6754 = vmul.u32 %v6734, 8
      %v6755 = vmul.u32 %v6735, 8
      %v6756 = vadd.s32 %v6754, %v5510
      %v6757 = vadd.s32 %v6755, %v5511
      %v6758 = vsel %vm6752, %v6756, 4294967295
      %v6759 = vsel %vm6753, %v6757, 4294967295
      %vm6760 = vcmp.eq.s32.totalorder %v339, %v6758
      %vm6761 = vcmp.eq.s32.totalorder %v339, %v6759
      %vm6762 = vcmp.eq.s32.totalorder %v340, %v6758
      %vm6763 = vcmp.eq.s32.totalorder %v340, %v6759
      %vm6764 = vcmp.eq.s32.totalorder %v341, %v6758
      %vm6765 = vcmp.eq.s32.totalorder %v341, %v6759
      %vm6766 = vcmp.eq.s32.totalorder %v342, %v6758
      %vm6767 = vcmp.eq.s32.totalorder %v342, %v6759
      %vm6768 = vcmp.eq.s32.totalorder %v343, %v6758
      %vm6769 = vcmp.eq.s32.totalorder %v343, %v6759
      %vm6770 = vcmp.eq.s32.totalorder %v344, %v6758
      %vm6771 = vcmp.eq.s32.totalorder %v344, %v6759
      %vm6772 = vcmp.eq.s32.totalorder %v345, %v6758
      %vm6773 = vcmp.eq.s32.totalorder %v345, %v6759
      %vm6774 = vcmp.eq.s32.totalorder %v346, %v6758
      %vm6775 = vcmp.eq.s32.totalorder %v346, %v6759
      %v6776 = vsel %vm6760, 1.0, 0.0
      %v6777 = vsel %vm6761, 1.0, 0.0
      %v6778 = vsel %vm6762, 1.0, 0.0
      %v6779 = vsel %vm6763, 1.0, 0.0
      %v6780 = vsel %vm6764, 1.0, 0.0
      %v6781 = vsel %vm6765, 1.0, 0.0
      %v6782 = vsel %vm6766, 1.0, 0.0
      %v6783 = vsel %vm6767, 1.0, 0.0
      %v6784 = vsel %vm6768, 1.0, 0.0
      %v6785 = vsel %vm6769, 1.0, 0.0
      %v6786 = vsel %vm6770, 1.0, 0.0
      %v6787 = vsel %vm6771, 1.0, 0.0
      %v6788 = vsel %vm6772, 1.0, 0.0
      %v6789 = vsel %vm6773, 1.0, 0.0
      %v6790 = vsel %vm6774, 1.0, 0.0
      %v6791 = vsel %vm6775, 1.0, 0.0
      %6792 = vmatprep.subr.mxu0 %v6777
      %6793 = vmatpush1.msra.mxu0 %v6776
      %6794 = vmatprep.subr.mxu0 %v6779
      %6795 = vmatpush1.msra.mxu0 %v6778
      %6796 = vmatprep.subr.mxu0 %v6781
      %6797 = vmatpush1.msra.mxu0 %v6780
      %6798 = vmatprep.subr.mxu0 %v6783
      %6799 = vmatpush1.msra.mxu0 %v6782
      %6800 = vmatprep.subr.mxu0 %v6785
      %6801 = vmatpush1.msra.mxu0 %v6784
      %6802 = vmatprep.subr.mxu0 %v6787
      %6803 = vmatpush1.msra.mxu0 %v6786
      %6804 = vmatprep.subr.mxu0 %v6789
      %6805 = vmatpush1.msra.mxu0 %v6788
      %6806 = vmatprep.subr.mxu0 %v6791
      %6807 = vmatpush1.msra.mxu0 %v6790
      %6808 = vmatprep.subr.mxu0 0.0
      %6809 = vmatpush1.msra.mxu0 0.0
      %6810 = vmatprep.subr.mxu0 0.0
      %6811 = vmatpush1.msra.mxu0 0.0
      %6812 = vmatprep.subr.mxu0 0.0
      %6813 = vmatpush1.msra.mxu0 0.0
      %6814 = vmatprep.subr.mxu0 0.0
      %6815 = vmatpush1.msra.mxu0 0.0
      %6816 = vmatprep.subr.mxu0 0.0
      %6817 = vmatpush1.msra.mxu0 0.0
      %6818 = vmatprep.subr.mxu0 0.0
      %6819 = vmatpush1.msra.mxu0 0.0
      %6820 = vmatprep.subr.mxu0 0.0
      %6821 = vmatpush1.msra.mxu0 0.0
      %6822 = vmatprep.subr.mxu0 0.0
      %6823 = vmatpush1.msra.mxu0 0.0
      %6824 = vmatprep.subr.mxu0 0.0
      %6825 = vmatpush1.msra.mxu0 0.0
      %6826 = vmatprep.subr.mxu0 0.0
      %6827 = vmatpush1.msra.mxu0 0.0
      %6828 = vmatprep.subr.mxu0 0.0
      %6829 = vmatpush1.msra.mxu0 0.0
      %6830 = vmatprep.subr.mxu0 0.0
      %6831 = vmatpush1.msra.mxu0 0.0
      %6832 = vmatprep.subr.mxu0 0.0
      %6833 = vmatpush1.msra.mxu0 0.0
      %6834 = vmatprep.subr.mxu0 0.0
      %6835 = vmatpush1.msra.mxu0 0.0
      %6836 = vmatprep.subr.mxu0 0.0
      %6837 = vmatpush1.msra.mxu0 0.0
      %6838 = vmatprep.subr.mxu0 0.0
      %6839 = vmatpush1.msra.mxu0 0.0
      %6840 = vmatprep.subr.mxu0 0.0
      %6841 = vmatpush1.msra.mxu0 0.0
      %6842 = vmatprep.subr.mxu0 0.0
      %6843 = vmatpush1.msra.mxu0 0.0
      %6844 = vmatprep.subr.mxu0 0.0
      %6845 = vmatpush1.msra.mxu0 0.0
      %6846 = vmatprep.subr.mxu0 0.0
      %6847 = vmatpush1.msra.mxu0 0.0
      %6848 = vmatprep.subr.mxu0 0.0
      %6849 = vmatpush1.msra.mxu0 0.0
      %6850 = vmatprep.subr.mxu0 0.0
      %6851 = vmatpush1.msra.mxu0 0.0
      %6852 = vmatprep.subr.mxu0 0.0
      %6853 = vmatpush1.msra.mxu0 0.0
      %6854 = vmatprep.subr.mxu0 0.0
      %6855 = vmatpush1.msra.mxu0 0.0
      %6856 = vmatprep.mubr.f32.mxu0 0.0
      %6857 = vmatmul.mubr.f32.gmra.mrb[0].mxu0 %v5577
      %v6858 = vpop.f32.mrb[0].mxu0
      %v6859 = vadd.f32 0.0, %v6858
      %v6860 = vpop.f32.mrb[0].mxu0
      %v6861 = vadd.f32 0.0, %v6860
      %6862 = vdwg.mxu0
      %s6863 = scalar_lea.vmem %s7, 24
      %v6864 = vld [vmem:[%s6863] sm:$0x7]
      %v6866 = vsel %vm2561, %v6864, 0
      %6868 = vmatprep.subr.mxu0 %v6861
      %6869 = vmatpush1.msra.mxu0 %v6859
      %6870 = vmatprep.subr.mxu0 0.0
      %6871 = vmatpush1.msra.mxu0 0.0
      %6872 = vmatprep.subr.mxu0 0.0
      %6873 = vmatpush1.msra.mxu0 0.0
      %6874 = vmatprep.subr.mxu0 0.0
      %6875 = vmatpush1.msra.mxu0 0.0
      %6876 = vmatprep.subr.mxu0 0.0
      %6877 = vmatpush1.msra.mxu0 0.0
      %6878 = vmatprep.subr.mxu0 0.0
      %6879 = vmatpush1.msra.mxu0 0.0
      %6880 = vmatprep.subr.mxu0 0.0
      %6881 = vmatpush1.msra.mxu0 0.0
      %6882 = vmatprep.subr.mxu0 0.0
      %6883 = vmatpush1.msra.mxu0 0.0
      %6884 = vmatprep.subr.mxu0 0.0
      %6885 = vmatpush1.msra.mxu0 0.0
      %6886 = vmatprep.subr.mxu0 0.0
      %6887 = vmatpush1.msra.mxu0 0.0
      %6888 = vmatprep.subr.mxu0 0.0
      %6889 = vmatpush1.msra.mxu0 0.0
      %6890 = vmatprep.subr.mxu0 0.0
      %6891 = vmatpush1.msra.mxu0 0.0
      %6892 = vmatprep.subr.mxu0 0.0
      %6893 = vmatpush1.msra.mxu0 0.0
      %6894 = vmatprep.subr.mxu0 0.0
      %6895 = vmatpush1.msra.mxu0 0.0
      %6896 = vmatprep.subr.mxu0 0.0
      %6897 = vmatpush1.msra.mxu0 0.0
      %6898 = vmatprep.subr.mxu0 0.0
      %6899 = vmatpush1.msra.mxu0 0.0
      %6900 = vmatprep.subr.mxu0 0.0
      %6901 = vmatpush1.msra.mxu0 0.0
      %6902 = vmatprep.subr.mxu0 0.0
      %6903 = vmatpush1.msra.mxu0 0.0
      %6904 = vmatprep.subr.mxu0 0.0
      %6905 = vmatpush1.msra.mxu0 0.0
      %6906 = vmatprep.subr.mxu0 0.0
      %6907 = vmatpush1.msra.mxu0 0.0
      %6908 = vmatprep.subr.mxu0 0.0
      %6909 = vmatpush1.msra.mxu0 0.0
      %6910 = vmatprep.subr.mxu0 0.0
      %6911 = vmatpush1.msra.mxu0 0.0
      %6912 = vmatprep.subr.mxu0 0.0
      %6913 = vmatpush1.msra.mxu0 0.0
      %6914 = vmatprep.subr.mxu0 0.0
      %6915 = vmatpush1.msra.mxu0 0.0
      %6916 = vmatprep.subr.mxu0 0.0
      %6917 = vmatpush1.msra.mxu0 0.0
      %6918 = vmatprep.subr.mxu0 0.0
      %6919 = vmatpush1.msra.mxu0 0.0
      %6920 = vmatprep.subr.mxu0 0.0
      %6921 = vmatpush1.msra.mxu0 0.0
      %6922 = vmatprep.subr.mxu0 0.0
      %6923 = vmatpush1.msra.mxu0 0.0
      %6924 = vmatprep.subr.mxu0 0.0
      %6925 = vmatpush1.msra.mxu0 0.0
      %6926 = vmatprep.subr.mxu0 0.0
      %6927 = vmatpush1.msra.mxu0 0.0
      %6928 = vmatprep.subr.mxu0 0.0
      %6929 = vmatpush1.msra.mxu0 0.0
      %6930 = vmatprep.subr.mxu0 0.0
      %6931 = vmatpush1.msra.mxu0 0.0
      %6932 = vmatprep.mubr.f32.mxu0 0.0
      %6933 = vmatmul.mubr.f32.gmra.mrb[0].mxu0 %v6866
      %v6934 = vpop.f32.mrb[0].mxu0
      %v6935 = vadd.f32 0.0, %v6934
      %v6936 = vpop.f32.mrb[0].mxu0
      %v6937 = vadd.f32 0.0, %v6936
      %6938 = vdwg.mxu0
      %v6939 = vadd.f32 %v6726, %v6935
      %v6940 = vadd.f32 %v6727, %v6937
      %vm6941 = vmand %vm6746, %vm5659
      %vm6942 = vmand %vm6747, %vm5660
      %vm6943 = vmand %vm6941, %vm5663
      %vm6944 = vmand %vm6942, %vm5664
      %vm6945 = vmand %vm6943, %vm5667
      %vm6946 = vmand %vm6944, %vm5668
      %v6947 = vadd.s32 %v6754, %v5655
      %v6948 = vadd.s32 %v6755, %v5656
      %v6949 = vsel %vm6945, %v6947, 4294967295
      %v6950 = vsel %vm6946, %v6948, 4294967295
      %vm6951 = vcmp.eq.s32.totalorder %v339, %v6949
      %vm6952 = vcmp.eq.s32.totalorder %v339, %v6950
      %vm6953 = vcmp.eq.s32.totalorder %v340, %v6949
      %vm6954 = vcmp.eq.s32.totalorder %v340, %v6950
      %vm6955 = vcmp.eq.s32.totalorder %v341, %v6949
      %vm6956 = vcmp.eq.s32.totalorder %v341, %v6950
      %vm6957 = vcmp.eq.s32.totalorder %v342, %v6949
      %vm6958 = vcmp.eq.s32.totalorder %v342, %v6950
      %vm6959 = vcmp.eq.s32.totalorder %v343, %v6949
      %vm6960 = vcmp.eq.s32.totalorder %v343, %v6950
      %vm6961 = vcmp.eq.s32.totalorder %v344, %v6949
      %vm6962 = vcmp.eq.s32.totalorder %v344, %v6950
      %vm6963 = vcmp.eq.s32.totalorder %v345, %v6949
      %vm6964 = vcmp.eq.s32.totalorder %v345, %v6950
      %vm6965 = vcmp.eq.s32.totalorder %v346, %v6949
      %vm6966 = vcmp.eq.s32.totalorder %v346, %v6950
      %v6967 = vsel %vm6951, 1.0, 0.0
      %v6968 = vsel %vm6952, 1.0, 0.0
      %v6969 = vsel %vm6953, 1.0, 0.0
      %v6970 = vsel %vm6954, 1.0, 0.0
      %v6971 = vsel %vm6955, 1.0, 0.0
      %v6972 = vsel %vm6956, 1.0, 0.0
      %v6973 = vsel %vm6957, 1.0, 0.0
      %v6974 = vsel %vm6958, 1.0, 0.0
      %v6975 = vsel %vm6959, 1.0, 0.0
      %v6976 = vsel %vm6960, 1.0, 0.0
      %v6977 = vsel %vm6961, 1.0, 0.0
      %v6978 = vsel %vm6962, 1.0, 0.0
      %v6979 = vsel %vm6963, 1.0, 0.0
      %v6980 = vsel %vm6964, 1.0, 0.0
      %v6981 = vsel %vm6965, 1.0, 0.0
      %v6982 = vsel %vm6966, 1.0, 0.0
      %6983 = vmatprep.subr.mxu0 %v6968
      %6984 = vmatpush1.msra.mxu0 %v6967
      %6985 = vmatprep.subr.mxu0 %v6970
      %6986 = vmatpush1.msra.mxu0 %v6969
      %6987 = vmatprep.subr.mxu0 %v6972
      %6988 = vmatpush1.msra.mxu0 %v6971
      %6989 = vmatprep.subr.mxu0 %v6974
      %6990 = vmatpush1.msra.mxu0 %v6973
      %6991 = vmatprep.subr.mxu0 %v6976
      %6992 = vmatpush1.msra.mxu0 %v6975
      %6993 = vmatprep.subr.mxu0 %v6978
      %6994 = vmatpush1.msra.mxu0 %v6977
      %6995 = vmatprep.subr.mxu0 %v6980
      %6996 = vmatpush1.msra.mxu0 %v6979
      %6997 = vmatprep.subr.mxu0 %v6982
      %6998 = vmatpush1.msra.mxu0 %v6981
      %6999 = vmatprep.subr.mxu0 0.0
      %7000 = vmatpush1.msra.mxu0 0.0
      %7001 = vmatprep.subr.mxu0 0.0
      %7002 = vmatpush1.msra.mxu0 0.0
      %7003 = vmatprep.subr.mxu0 0.0
      %7004 = vmatpush1.msra.mxu0 0.0
      %7005 = vmatprep.subr.mxu0 0.0
      %7006 = vmatpush1.msra.mxu0 0.0
      %7007 = vmatprep.subr.mxu0 0.0
      %7008 = vmatpush1.msra.mxu0 0.0
      %7009 = vmatprep.subr.mxu0 0.0
      %7010 = vmatpush1.msra.mxu0 0.0
      %7011 = vmatprep.subr.mxu0 0.0
      %7012 = vmatpush1.msra.mxu0 0.0
      %7013 = vmatprep.subr.mxu0 0.0
      %7014 = vmatpush1.msra.mxu0 0.0
      %7015 = vmatprep.subr.mxu0 0.0
      %7016 = vmatpush1.msra.mxu0 0.0
      %7017 = vmatprep.subr.mxu0 0.0
      %7018 = vmatpush1.msra.mxu0 0.0
      %7019 = vmatprep.subr.mxu0 0.0
      %7020 = vmatpush1.msra.mxu0 0.0
      %7021 = vmatprep.subr.mxu0 0.0
      %7022 = vmatpush1.msra.mxu0 0.0
      %7023 = vmatprep.subr.mxu0 0.0
      %7024 = vmatpush1.msra.mxu0 0.0
      %7025 = vmatprep.subr.mxu0 0.0
      %7026 = vmatpush1.msra.mxu0 0.0
      %7027 = vmatprep.subr.mxu0 0.0
      %7028 = vmatpush1.msra.mxu0 0.0
      %7029 = vmatprep.subr.mxu0 0.0
      %7030 = vmatpush1.msra.mxu0 0.0
      %7031 = vmatprep.subr.mxu0 0.0
      %7032 = vmatpush1.msra.mxu0 0.0
      %7033 = vmatprep.subr.mxu0 0.0
      %7034 = vmatpush1.msra.mxu0 0.0
      %7035 = vmatprep.subr.mxu0 0.0
      %7036 = vmatpush1.msra.mxu0 0.0
      %7037 = vmatprep.subr.mxu0 0.0
      %7038 = vmatpush1.msra.mxu0 0.0
      %7039 = vmatprep.subr.mxu0 0.0
      %7040 = vmatpush1.msra.mxu0 0.0
      %7041 = vmatprep.subr.mxu0 0.0
      %7042 = vmatpush1.msra.mxu0 0.0
      %7043 = vmatprep.subr.mxu0 0.0
      %7044 = vmatpush1.msra.mxu0 0.0
      %7045 = vmatprep.subr.mxu0 0.0
      %7046 = vmatpush1.msra.mxu0 0.0
      %7047 = vmatprep.mubr.f32.mxu0 0.0
      %7048 = vmatmul.mubr.f32.gmra.mrb[0].mxu0 %v5577
      %v7049 = vpop.f32.mrb[0].mxu0
      %v7050 = vadd.f32 0.0, %v7049
      %v7051 = vpop.f32.mrb[0].mxu0
      %v7052 = vadd.f32 0.0, %v7051
      %7053 = vdwg.mxu0
      %s7054 = scalar_lea.vmem %s7, 28
      %v7055 = vld [vmem:[%s7054] sm:$0x7]
      %v7057 = vsel %vm2561, %v7055, 0
      %7059 = vmatprep.subr.mxu0 %v7052
      %7060 = vmatpush1.msra.mxu0 %v7050
      %7061 = vmatprep.subr.mxu0 0.0
      %7062 = vmatpush1.msra.mxu0 0.0
      %7063 = vmatprep.subr.mxu0 0.0
      %7064 = vmatpush1.msra.mxu0 0.0
      %7065 = vmatprep.subr.mxu0 0.0
      %7066 = vmatpush1.msra.mxu0 0.0
      %7067 = vmatprep.subr.mxu0 0.0
      %7068 = vmatpush1.msra.mxu0 0.0
      %7069 = vmatprep.subr.mxu0 0.0
      %7070 = vmatpush1.msra.mxu0 0.0
      %7071 = vmatprep.subr.mxu0 0.0
      %7072 = vmatpush1.msra.mxu0 0.0
      %7073 = vmatprep.subr.mxu0 0.0
      %7074 = vmatpush1.msra.mxu0 0.0
      %7075 = vmatprep.subr.mxu0 0.0
      %7076 = vmatpush1.msra.mxu0 0.0
      %7077 = vmatprep.subr.mxu0 0.0
      %7078 = vmatpush1.msra.mxu0 0.0
      %7079 = vmatprep.subr.mxu0 0.0
      %7080 = vmatpush1.msra.mxu0 0.0
      %7081 = vmatprep.subr.mxu0 0.0
      %7082 = vmatpush1.msra.mxu0 0.0
      %7083 = vmatprep.subr.mxu0 0.0
      %7084 = vmatpush1.msra.mxu0 0.0
      %7085 = vmatprep.subr.mxu0 0.0
      %7086 = vmatpush1.msra.mxu0 0.0
      %7087 = vmatprep.subr.mxu0 0.0
      %7088 = vmatpush1.msra.mxu0 0.0
      %7089 = vmatprep.subr.mxu0 0.0
      %7090 = vmatpush1.msra.mxu0 0.0
      %7091 = vmatprep.subr.mxu0 0.0
      %7092 = vmatpush1.msra.mxu0 0.0
      %7093 = vmatprep.subr.mxu0 0.0
      %7094 = vmatpush1.msra.mxu0 0.0
      %7095 = vmatprep.subr.mxu0 0.0
      %7096 = vmatpush1.msra.mxu0 0.0
      %7097 = vmatprep.subr.mxu0 0.0
      %7098 = vmatpush1.msra.mxu0 0.0
      %7099 = vmatprep.subr.mxu0 0.0
      %7100 = vmatpush1.msra.mxu0 0.0
      %7101 = vmatprep.subr.mxu0 0.0
      %7102 = vmatpush1.msra.mxu0 0.0
      %7103 = vmatprep.subr.mxu0 0.0
      %7104 = vmatpush1.msra.mxu0 0.0
      %7105 = vmatprep.subr.mxu0 0.0
      %7106 = vmatpush1.msra.mxu0 0.0
      %7107 = vmatprep.subr.mxu0 0.0
      %7108 = vmatpush1.msra.mxu0 0.0
      %7109 = vmatprep.subr.mxu0 0.0
      %7110 = vmatpush1.msra.mxu0 0.0
      %7111 = vmatprep.subr.mxu0 0.0
      %7112 = vmatpush1.msra.mxu0 0.0
      %7113 = vmatprep.subr.mxu0 0.0
      %7114 = vmatpush1.msra.mxu0 0.0
      %7115 = vmatprep.subr.mxu0 0.0
      %7116 = vmatpush1.msra.mxu0 0.0
      %7117 = vmatprep.subr.mxu0 0.0
      %7118 = vmatpush1.msra.mxu0 0.0
      %7119 = vmatprep.subr.mxu0 0.0
      %7120 = vmatpush1.msra.mxu0 0.0
      %7121 = vmatprep.subr.mxu0 0.0
      %7122 = vmatpush1.msra.mxu0 0.0
      %7123 = vmatprep.mubr.f32.mxu0 0.0
      %7124 = vmatmul.mubr.f32.gmra.mrb[0].mxu0 %v7057
      %v7125 = vpop.f32.mrb[0].mxu0
      %v7126 = vadd.f32 0.0, %v7125
      %v7127 = vpop.f32.mrb[0].mxu0
      %v7128 = vadd.f32 0.0, %v7127
      %7129 = vdwg.mxu0
      %v7130 = vadd.f32 %v6939, %v7126
      %v7131 = vadd.f32 %v6940, %v7128
      %vm7132 = vmand %vm6746, %vm5938
      %vm7133 = vmand %vm6747, %vm5939
      %vm7134 = vmand %vm7132, %vm5942
      %vm7135 = vmand %vm7133, %vm5943
      %vm7136 = vmand %vm7134, %vm5946
      %vm7137 = vmand %vm7135, %vm5947
      %v7138 = vadd.s32 %v6754, %v5934
      %v7139 = vadd.s32 %v6755, %v5935
      %v7140 = vsel %vm7136, %v7138, 4294967295
      %v7141 = vsel %vm7137, %v7139, 4294967295
      %vm7142 = vcmp.eq.s32.totalorder %v339, %v7140
      %vm7143 = vcmp.eq.s32.totalorder %v339, %v7141
      %vm7144 = vcmp.eq.s32.totalorder %v340, %v7140
      %vm7145 = vcmp.eq.s32.totalorder %v340, %v7141
      %vm7146 = vcmp.eq.s32.totalorder %v341, %v7140
      %vm7147 = vcmp.eq.s32.totalorder %v341, %v7141
      %vm7148 = vcmp.eq.s32.totalorder %v342, %v7140
      %vm7149 = vcmp.eq.s32.totalorder %v342, %v7141
      %vm7150 = vcmp.eq.s32.totalorder %v343, %v7140
      %vm7151 = vcmp.eq.s32.totalorder %v343, %v7141
      %vm7152 = vcmp.eq.s32.totalorder %v344, %v7140
      %vm7153 = vcmp.eq.s32.totalorder %v344, %v7141
      %vm7154 = vcmp.eq.s32.totalorder %v345, %v7140
      %vm7155 = vcmp.eq.s32.totalorder %v345, %v7141
      %vm7156 = vcmp.eq.s32.totalorder %v346, %v7140
      %vm7157 = vcmp.eq.s32.totalorder %v346, %v7141
      %v7158 = vsel %vm7142, 1.0, 0.0
      %v7159 = vsel %vm7143, 1.0, 0.0
      %v7160 = vsel %vm7144, 1.0, 0.0
      %v7161 = vsel %vm7145, 1.0, 0.0
      %v7162 = vsel %vm7146, 1.0, 0.0
      %v7163 = vsel %vm7147, 1.0, 0.0
      %v7164 = vsel %vm7148, 1.0, 0.0
      %v7165 = vsel %vm7149, 1.0, 0.0
      %v7166 = vsel %vm7150, 1.0, 0.0
      %v7167 = vsel %vm7151, 1.0, 0.0
      %v7168 = vsel %vm7152, 1.0, 0.0
      %v7169 = vsel %vm7153, 1.0, 0.0
      %v7170 = vsel %vm7154, 1.0, 0.0
      %v7171 = vsel %vm7155, 1.0, 0.0
      %v7172 = vsel %vm7156, 1.0, 0.0
      %v7173 = vsel %vm7157, 1.0, 0.0
      %7174 = vmatprep.subr.mxu0 %v7159
      %7175 = vmatpush1.msra.mxu0 %v7158
      %7176 = vmatprep.subr.mxu0 %v7161
      %7177 = vmatpush1.msra.mxu0 %v7160
      %7178 = vmatprep.subr.mxu0 %v7163
      %7179 = vmatpush1.msra.mxu0 %v7162
      %7180 = vmatprep.subr.mxu0 %v7165
      %7181 = vmatpush1.msra.mxu0 %v7164
      %7182 = vmatprep.subr.mxu0 %v7167
      %7183 = vmatpush1.msra.mxu0 %v7166
      %7184 = vmatprep.subr.mxu0 %v7169
      %7185 = vmatpush1.msra.mxu0 %v7168
      %7186 = vmatprep.subr.mxu0 %v7171
      %7187 = vmatpush1.msra.mxu0 %v7170
      %7188 = vmatprep.subr.mxu0 %v7173
      %7189 = vmatpush1.msra.mxu0 %v7172
      %7190 = vmatprep.subr.mxu0 0.0
      %7191 = vmatpush1.msra.mxu0 0.0
      %7192 = vmatprep.subr.mxu0 0.0
      %7193 = vmatpush1.msra.mxu0 0.0
      %7194 = vmatprep.subr.mxu0 0.0
      %7195 = vmatpush1.msra.mxu0 0.0
      %7196 = vmatprep.subr.mxu0 0.0
      %7197 = vmatpush1.msra.mxu0 0.0
      %7198 = vmatprep.subr.mxu0 0.0
      %7199 = vmatpush1.msra.mxu0 0.0
      %7200 = vmatprep.subr.mxu0 0.0
      %7201 = vmatpush1.msra.mxu0 0.0
      %7202 = vmatprep.subr.mxu0 0.0
      %7203 = vmatpush1.msra.mxu0 0.0
      %7204 = vmatprep.subr.mxu0 0.0
      %7205 = vmatpush1.msra.mxu0 0.0
      %7206 = vmatprep.subr.mxu0 0.0
      %7207 = vmatpush1.msra.mxu0 0.0
      %7208 = vmatprep.subr.mxu0 0.0
      %7209 = vmatpush1.msra.mxu0 0.0
      %7210 = vmatprep.subr.mxu0 0.0
      %7211 = vmatpush1.msra.mxu0 0.0
      %7212 = vmatprep.subr.mxu0 0.0
      %7213 = vmatpush1.msra.mxu0 0.0
      %7214 = vmatprep.subr.mxu0 0.0
      %7215 = vmatpush1.msra.mxu0 0.0
      %7216 = vmatprep.subr.mxu0 0.0
      %7217 = vmatpush1.msra.mxu0 0.0
      %7218 = vmatprep.subr.mxu0 0.0
      %7219 = vmatpush1.msra.mxu0 0.0
      %7220 = vmatprep.subr.mxu0 0.0
      %7221 = vmatpush1.msra.mxu0 0.0
      %7222 = vmatprep.subr.mxu0 0.0
      %7223 = vmatpush1.msra.mxu0 0.0
      %7224 = vmatprep.subr.mxu0 0.0
      %7225 = vmatpush1.msra.mxu0 0.0
      %7226 = vmatprep.subr.mxu0 0.0
      %7227 = vmatpush1.msra.mxu0 0.0
      %7228 = vmatprep.subr.mxu0 0.0
      %7229 = vmatpush1.msra.mxu0 0.0
      %7230 = vmatprep.subr.mxu0 0.0
      %7231 = vmatpush1.msra.mxu0 0.0
      %7232 = vmatprep.subr.mxu0 0.0
      %7233 = vmatpush1.msra.mxu0 0.0
      %7234 = vmatprep.subr.mxu0 0.0
      %7235 = vmatpush1.msra.mxu0 0.0
      %7236 = vmatprep.subr.mxu0 0.0
      %7237 = vmatpush1.msra.mxu0 0.0
      %7238 = vmatprep.mubr.f32.mxu0 0.0
      %7239 = vmatmul.mubr.f32.gmra.mrb[0].mxu0 %v5577
      %v7240 = vpop.f32.mrb[0].mxu0
      %v7241 = vadd.f32 0.0, %v7240
      %v7242 = vpop.f32.mrb[0].mxu0
      %v7243 = vadd.f32 0.0, %v7242
      %7244 = vdwg.mxu0
      %s7245 = scalar_lea.vmem %s7, 32
      %v7246 = vld [vmem:[%s7245] sm:$0x7]
      %v7248 = vsel %vm2561, %v7246, 0
      %7250 = vmatprep.subr.mxu0 %v7243
      %7251 = vmatpush1.msra.mxu0 %v7241
      %7252 = vmatprep.subr.mxu0 0.0
      %7253 = vmatpush1.msra.mxu0 0.0
      %7254 = vmatprep.subr.mxu0 0.0
      %7255 = vmatpush1.msra.mxu0 0.0
      %7256 = vmatprep.subr.mxu0 0.0
      %7257 = vmatpush1.msra.mxu0 0.0
      %7258 = vmatprep.subr.mxu0 0.0
      %7259 = vmatpush1.msra.mxu0 0.0
      %7260 = vmatprep.subr.mxu0 0.0
      %7261 = vmatpush1.msra.mxu0 0.0
      %7262 = vmatprep.subr.mxu0 0.0
      %7263 = vmatpush1.msra.mxu0 0.0
      %7264 = vmatprep.subr.mxu0 0.0
      %7265 = vmatpush1.msra.mxu0 0.0
      %7266 = vmatprep.subr.mxu0 0.0
      %7267 = vmatpush1.msra.mxu0 0.0
      %7268 = vmatprep.subr.mxu0 0.0
      %7269 = vmatpush1.msra.mxu0 0.0
      %7270 = vmatprep.subr.mxu0 0.0
      %7271 = vmatpush1.msra.mxu0 0.0
      %7272 = vmatprep.subr.mxu0 0.0
      %7273 = vmatpush1.msra.mxu0 0.0
      %7274 = vmatprep.subr.mxu0 0.0
      %7275 = vmatpush1.msra.mxu0 0.0
      %7276 = vmatprep.subr.mxu0 0.0
      %7277 = vmatpush1.msra.mxu0 0.0
      %7278 = vmatprep.subr.mxu0 0.0
      %7279 = vmatpush1.msra.mxu0 0.0
      %7280 = vmatprep.subr.mxu0 0.0
      %7281 = vmatpush1.msra.mxu0 0.0
      %7282 = vmatprep.subr.mxu0 0.0
      %7283 = vmatpush1.msra.mxu0 0.0
      %7284 = vmatprep.subr.mxu0 0.0
      %7285 = vmatpush1.msra.mxu0 0.0
      %7286 = vmatprep.subr.mxu0 0.0
      %7287 = vmatpush1.msra.mxu0 0.0
      %7288 = vmatprep.subr.mxu0 0.0
      %7289 = vmatpush1.msra.mxu0 0.0
      %7290 = vmatprep.subr.mxu0 0.0
      %7291 = vmatpush1.msra.mxu0 0.0
      %7292 = vmatprep.subr.mxu0 0.0
      %7293 = vmatpush1.msra.mxu0 0.0
      %7294 = vmatprep.subr.mxu0 0.0
      %7295 = vmatpush1.msra.mxu0 0.0
      %7296 = vmatprep.subr.mxu0 0.0
      %7297 = vmatpush1.msra.mxu0 0.0
      %7298 = vmatprep.subr.mxu0 0.0
      %7299 = vmatpush1.msra.mxu0 0.0
      %7300 = vmatprep.subr.mxu0 0.0
      %7301 = vmatpush1.msra.mxu0 0.0
      %7302 = vmatprep.subr.mxu0 0.0
      %7303 = vmatpush1.msra.mxu0 0.0
      %7304 = vmatprep.subr.mxu0 0.0
      %7305 = vmatpush1.msra.mxu0 0.0
      %7306 = vmatprep.subr.mxu0 0.0
      %7307 = vmatpush1.msra.mxu0 0.0
      %7308 = vmatprep.subr.mxu0 0.0
      %7309 = vmatpush1.msra.mxu0 0.0
      %7310 = vmatprep.subr.mxu0 0.0
      %7311 = vmatpush1.msra.mxu0 0.0
      %7312 = vmatprep.subr.mxu0 0.0
      %7313 = vmatpush1.msra.mxu0 0.0
      %7314 = vmatprep.mubr.f32.mxu0 0.0
      %7315 = vmatmul.mubr.f32.gmra.mrb[0].mxu0 %v7248
      %v7316 = vpop.f32.mrb[0].mxu0
      %v7317 = vadd.f32 0.0, %v7316
      %v7318 = vpop.f32.mrb[0].mxu0
      %v7319 = vadd.f32 0.0, %v7318
      %7320 = vdwg.mxu0
      %v7321 = vadd.f32 %v7130, %v7317
      %v7322 = vadd.f32 %v7131, %v7319
      %v7323 = vld [vmem:[%s8] sm:$0x7]
      %7325 = vset.pattern.permute.xlu0 0
      %7326 = vperm.xlu0 %7325, %v7323
      %v7327 = vpop.permute.xlu0 %7326
      %v7329 = vadd.f32 %v7321, %v7327
      %v7330 = vadd.f32 %v7322, %v7327
      %v7331 = vand.u32 2147483647, %v7329
      %v7332 = vand.u32 2147483647, %v7330
      %v7333 = vsub.f32 0.0, %v7331
      %v7334 = vsub.f32 0.0, %v7332
      %v7335 = vmul.f32 %v7333, 1.442695
      %v7336 = vpow.pop %v7335
      %v7337 = vmul.f32 %v7334, 1.442695
      %v7338 = vpow.pop %v7337
      %v7339 = vadd.f32 %v7336, 1.0
      %v7340 = vadd.f32 %v7338, 1.0
      %v7341 = vrcp.pop %v7339
      %v7342 = vrcp.pop %v7340
      %vm7343 = vcmp.ge.f32.partialorder %v7329, 0.0
      %vm7344 = vcmp.ge.f32.partialorder %v7330, 0.0
      %v7345 = vmul.f32 %v7336, %v7341
      %v7346 = vmul.f32 %v7338, %v7342
      %v7347 = vsel %vm7343, %v7341, %v7345
      %v7348 = vsel %vm7344, %v7342, %v7346
      %v7349 = vmax.f32 %v7347, 0.0
      %v7350 = vmax.f32 %v7348, 0.0
      %v7351 = vmin.f32 %v7349, 1.0
      %v7352 = vmin.f32 %v7350, 1.0
      %v7355 = vcombine.low %v7351, %v7352
      %7357 = vst [vmem:[%s332] sm:$0x77] %v7355
      %p7358 = scmp.lt.s32.totalorder %s20, 1
      %s7359 = scalar_select %p7358, %s20, 1
      %s7360 = smul.addr %s7359, 2
      %s7361 = smul.addr %s7360, 4
      %s7362 = scalar_lea.vmem %s9, %s7361
      // Predicated region
      $region57: #{fast_conv_autoencoder.1} parent=55 // pred_check
        %p7363 = pneg %p232
      $region58: #{fast_conv_autoencoder.1} parent=55 // pred_check_branch
        %7365 = sbr.rel (%p7363) target = $region60
      $region59: #{fast_conv_autoencoder.1} parent=55 // pred_region
        _
      $region60: #{fast_conv_autoencoder.1} parent=55 // pred_fallthru
        _
    $region56: #{fast_conv_autoencoder.1} parent=5 // pred_fallthru
      _
    %p7366 = scmp.le.s32.totalorder 2, %s15
    // Predicated region
    $region61: #{fast_conv_autoencoder.1} parent=5 // pred_check
      %p7367 = pneg %p7366
    $region62: #{fast_conv_autoencoder.1} parent=5 // pred_check_branch
      %7369 = sbr.rel (%p7367) target = $region64
    $region63: #{fast_conv_autoencoder.1} parent=5 // pred_region
      %s7370 = ssub.s32 %s15, 2
      // Predicated region
      $region65: #{fast_conv_autoencoder.1} parent=63 // pred_check
        %p7371 = pneg %p238
      $region66: #{fast_conv_autoencoder.1} parent=63 // pred_check_branch
        %7373 = sbr.rel (%p7371) target = $region68
      $region67: #{fast_conv_autoencoder.1} parent=63 // pred_region
        %p7374 = scmp.lt.s32.totalorder %s21, 1
        %s7375 = scalar_select %p7374, %s21, 1
        %s7376 = smul.addr %s7375, 2
        %s7377 = smul.addr %s7376, 4
        %s7378 = scalar_lea.vmem %s9, %s7377
      $region68: #{fast_conv_autoencoder.1} parent=63 // pred_fallthru
        _
    $region64: #{fast_conv_autoencoder.1} parent=5 // pred_fallthru
      _
  $region6: #{fast_conv_autoencoder.1} parent=0 // loop_footer
    %s19 = sadd.s32 1, %s15
  $region7: #{fast_conv_autoencoder.1} parent=0 // loop_footer_branch
    %14 = sbr.rel target = $region3
  $region8: #{fast_conv_autoencoder.1} parent=0 // loop_exit
    _

</llo_original>
